<compile_context>
chip_gen: v5e
topology: v5e:2x2
jax: 0.10.0
libtpu: 0.0.40
codegen_flags: <defaults>
</compile_context>

<pallas_src>
import functools

import jax
import jax.numpy as jnp
from jax.experimental import pallas as pl
from jax.experimental.pallas import tpu as pltpu


_MIN_STEPS = 8               # prefer at least this many grid steps (pipelining / megacore)
_MIN_BLOCK_BYTES = 128 << 10  # ...but never by shrinking blocks below this input size


def _upsample2x_kernel(x_ref, o_ref, *, k, w):
    """Nearest-neighbor 2x upsample of a block of (folded) image rows.

    x_ref: (TB, THg, k*w)    -- THg folded rows, each holding k original rows of
                                width w, for TB (n, c)-planes.
    o_ref: (TB, THg, 4*k*w)  -- lane-dense view of the upsampled rows: for fold
                                group g, out lane g*4w + r*2w + 2j + dj maps to
                                input lane g*w + j  (r = row duplicate,
                                dj = column duplicate).
    """
    tb, thg = x_ref.shape[0], x_ref.shape[1]
    # Static unroll over the (small) fold factor; k == 1 is the common case.
    for g in range(k):
        xg = x_ref[:, :, g * w:(g + 1) * w]                       # (TB, THg, w)
        # W-doubling (the only lane interleave): wide[..., 2j + dj] = xg[..., j]
        wide = jnp.broadcast_to(xg[:, :, :, None], (tb, thg, w, 2))
        wide = wide.reshape(tb, thg, 2 * w).astype(o_ref.dtype)
        # H-doubling = two sliced stores of the same widened value (no 4x-wide
        # concatenated temporary; halves the peak live data per review).
        base = g * 4 * w
        o_ref[:, :, base:base + 2 * w] = wide
        o_ref[:, :, base + 2 * w:base + 4 * w] = wide


def _divisors(n):
    return [d for d in range(1, n + 1) if n % d == 0]


def _pick_block(n, ok, unit_bytes, steps_needed):
    """Largest divisor d of n with ok(d); prefer d that leaves >= steps_needed
    grid steps along this axis while keeping blocks >= _MIN_BLOCK_BYTES."""
    divs = [d for d in _divisors(n) if ok(d)]
    if not divs:
        return None
    pref = [d for d in divs
            if n // d >= steps_needed and d * unit_bytes >= _MIN_BLOCK_BYTES]
    return max(pref) if pref else max(divs)


def _pick_fold(H, W, target_lanes=512, max_fold=64):
    """Smallest row-fold factor k (divisor of H, capped) with 4*k*W >= target."""
    if 4 * W >= target_lanes:
        return 1
    divs = [d for d in _divisors(H) if d <= max_fold]
    for d in divs:
        if d * 4 * W >= target_lanes:
            return d
    return divs[-1]  # best we can do; always contains 1


def _sublane_multiple(dtype):
    return {4: 8, 2: 16, 1: 32}.get(jnp.dtype(dtype).itemsize, 8)


def _tpu_budget():
    """(input-block byte budget, vmem_limit_bytes) per TPU generation."""
    kind = ""
    try:
        kind = jax.devices()[0].device_kind.lower()
    except Exception:
        pass
    if "v5" in kind:
        return 768 << 10, 32 << 20   # v5e: 16 MiB default scoped VMEM -> stay small
    if "v6" in kind:
        return 2 << 20, 64 << 20     # v6e: 128 MiB physical VMEM
    if "7" in kind:
        return 2 << 20, 40 << 20     # v7x: only 64 MiB physical VMEM per TC
    return 1 << 20, 32 << 20         # unknown / older: conservative


def upsample_nearest_2x(x):
    """F.interpolate(x, scale_factor=2, mode='nearest') for NCHW tensors."""
    N, C, H, W = x.shape
    B = N * C
    itemsize = jnp.dtype(x.dtype).itemsize
    budget, vmem_limit = _tpu_budget()

    # Fold rows into the lane axis when the output row (4W) would be narrow,
    # so both input and output blocks are lane dense.
    k = _pick_fold(H, W)
    Hg, Wk = H // k, k * W
    plane_bytes = Hg * Wk * itemsize          # == H * W * itemsize
    row_bytes = Wk * itemsize
    sub = _sublane_multiple(x.dtype)

    if plane_bytes <= budget:
        # Whole (folded) plane per block; batch as many planes as fit the budget.
        THg = Hg
        TB = _pick_block(B, lambda d: d * plane_bytes <= budget,
                         plane_bytes, _MIN_STEPS)
    else:
        # Plane too big: one plane per block, split along the folded-row axis
        # with a dtype-aligned (or full) second-to-last block dim.
        TB = 1
        THg = _pick_block(
            Hg,
            lambda d: (d % sub == 0 or d == Hg) and d * row_bytes <= budget,
            row_bytes,
            max(1, -(-_MIN_STEPS // B)))
        if THg is None:
            # No aligned divisor fits the budget: fall back to the full plane
            # and rely on the raised vmem_limit_bytes.
            THg = Hg

    grid = (B // TB, Hg // THg)

    # Free (row-major) re-views:
    #   input : (N, C, H, W)     -> (B, Hg, k*W)
    #   output: (B, Hg, 4*k*W)   -> (N, C, 2H, 2W)
    x2 = x.reshape(B, Hg, Wk)

    out = pl.pallas_call(
        functools.partial(_upsample2x_kernel, k=k, w=W),
        out_shape=jax.ShapeDtypeStruct((B, Hg, 4 * Wk), x.dtype),
        grid_spec=pltpu.PrefetchScalarGridSpec(
            num_scalar_prefetch=0,
            grid=grid,
            in_specs=[pl.BlockSpec((TB, THg, Wk), lambda b, h: (b, h, 0))],
            out_specs=pl.BlockSpec((TB, THg, 4 * Wk), lambda b, h: (b, h, 0)),
        ),
        compiler_params=pltpu.CompilerParams(
            # Independent blocks -> shard the grid across TensorCores (v7x).
            dimension_semantics=("parallel", "parallel"),
            vmem_limit_bytes=vmem_limit,
        ),
        # Pure data movement: read x once, write 4x its size.
        cost_estimate=pl.CostEstimate(
            flops=0,
            transcendentals=0,
            bytes_accessed=5 * x.size * itemsize,
        ),
    )(x2)

    return out.reshape(N, C, 2 * H, 2 * W)


class Upsample:
    """JAX/Pallas equivalent of the PyTorch Upsample module (scale=2, nearest)."""

    def __init__(self, channels):
        self.channels = channels  # unused in forward (matches the PyTorch module)

    def __call__(self, x):
        return upsample_nearest_2x(x)


if __name__ == "__main__":
    key = jax.random.PRNGKey(0)
    N, C, H, W = 2, 4, 16, 16
    x = jax.random.normal(key, (N, C, H, W), dtype=jnp.float32)

    mod = Upsample(channels=C)
    y = jax.block_until_ready(mod(x))

    # Reference: nearest-neighbor 2x upsample (== F.interpolate mode='nearest').
    y_ref = jnp.repeat(jnp.repeat(x, 2, axis=2), 2, axis=3)
    assert y.shape == (N, C, 2 * H, 2 * W), y.shape
    assert jnp.array_equal(y, y_ref), "mismatch vs reference"

    print("KERNEL_OK")
</pallas_src>

<mosaic_0001>
module attributes {stable_mosaic.version = 11 : i64} {
  func.func @_upsample2x_kernel(%arg0: i32, %arg1: i32, %arg2: memref<8x2x128xf32, #tpu.memory_space<vmem>>, %arg3: memref<8x2x512xf32, #tpu.memory_space<vmem>>) attributes {dimension_semantics = [#tpu.dimension_semantics<parallel>, #tpu.dimension_semantics<parallel>], iteration_bounds = array<i64: 1, 1>, scalar_prefetch = 0 : i64, scratch_operands = 0 : i64, tpu.core_type = #tpu.core_type<tc>, window_params = [{transform_indices = @transform_0, window_bounds = array<i64: 8, 2, 128>}, {transform_indices = @transform_1, window_bounds = array<i64: 8, 2, 512>}]} {
    %c0 = arith.constant 0 : index
    %c0_0 = arith.constant 0 : index
    %c0_1 = arith.constant 0 : index
    %0 = vector.load %arg2[%c0, %c0_0, %c0_1] : memref<8x2x128xf32, #tpu.memory_space<vmem>>, vector<8x2x16xf32>
    %1 = vector.shape_cast %0 : vector<8x2x16xf32> to vector<8x2x16x1xf32>
    %2 = vector.shape_cast %1 : vector<8x2x16x1xf32> to vector<8x2x16x1xf32>
    %3 = vector.broadcast %2 : vector<8x2x16x1xf32> to vector<8x2x16x2xf32>
    %4 = vector.shape_cast %3 : vector<8x2x16x2xf32> to vector<8x2x32xf32>
    %c0_2 = arith.constant 0 : index
    %c0_3 = arith.constant 0 : index
    %c0_4 = arith.constant 0 : index
    %5 = vector.load %arg3[%c0_2, %c0_3, %c0_4] : memref<8x2x512xf32, #tpu.memory_space<vmem>>, vector<8x2x32xf32>
    tpu.vector_store %arg3[%c0_2, %c0_3, %c0_4], %4 {strides = array<i32>} : memref<8x2x512xf32, #tpu.memory_space<vmem>>, vector<8x2x32xf32>,
    %c0_5 = arith.constant 0 : index
    %c0_6 = arith.constant 0 : index
    %c32 = arith.constant 32 : index
    %6 = vector.load %arg3[%c0_5, %c0_6, %c32] : memref<8x2x512xf32, #tpu.memory_space<vmem>>, vector<8x2x32xf32>
    tpu.vector_store %arg3[%c0_5, %c0_6, %c32], %4 {strides = array<i32>} : memref<8x2x512xf32, #tpu.memory_space<vmem>>, vector<8x2x32xf32>,
    %c0_7 = arith.constant 0 : index
    %c0_8 = arith.constant 0 : index
    %c16 = arith.constant 16 : index
    %7 = vector.load %arg2[%c0_7, %c0_8, %c16] : memref<8x2x128xf32, #tpu.memory_space<vmem>>, vector<8x2x16xf32>
    %8 = vector.shape_cast %7 : vector<8x2x16xf32> to vector<8x2x16x1xf32>
    %9 = vector.shape_cast %8 : vector<8x2x16x1xf32> to vector<8x2x16x1xf32>
    %10 = vector.broadcast %9 : vector<8x2x16x1xf32> to vector<8x2x16x2xf32>
    %11 = vector.shape_cast %10 : vector<8x2x16x2xf32> to vector<8x2x32xf32>
    %c0_9 = arith.constant 0 : index
    %c0_10 = arith.constant 0 : index
    %c64 = arith.constant 64 : index
    %12 = vector.load %arg3[%c0_9, %c0_10, %c64] : memref<8x2x512xf32, #tpu.memory_space<vmem>>, vector<8x2x32xf32>
    tpu.vector_store %arg3[%c0_9, %c0_10, %c64], %11 {strides = array<i32>} : memref<8x2x512xf32, #tpu.memory_space<vmem>>, vector<8x2x32xf32>,
    %c0_11 = arith.constant 0 : index
    %c0_12 = arith.constant 0 : index
    %c96 = arith.constant 96 : index
    %13 = vector.load %arg3[%c0_11, %c0_12, %c96] : memref<8x2x512xf32, #tpu.memory_space<vmem>>, vector<8x2x32xf32>
    tpu.vector_store %arg3[%c0_11, %c0_12, %c96], %11 {strides = array<i32>} : memref<8x2x512xf32, #tpu.memory_space<vmem>>, vector<8x2x32xf32>,
    %c0_13 = arith.constant 0 : index
    %c0_14 = arith.constant 0 : index
    %c32_15 = arith.constant 32 : index
    %14 = vector.load %arg2[%c0_13, %c0_14, %c32_15] : memref<8x2x128xf32, #tpu.memory_space<vmem>>, vector<8x2x16xf32>
    %15 = vector.shape_cast %14 : vector<8x2x16xf32> to vector<8x2x16x1xf32>
    %16 = vector.shape_cast %15 : vector<8x2x16x1xf32> to vector<8x2x16x1xf32>
    %17 = vector.broadcast %16 : vector<8x2x16x1xf32> to vector<8x2x16x2xf32>
    %18 = vector.shape_cast %17 : vector<8x2x16x2xf32> to vector<8x2x32xf32>
    %c0_16 = arith.constant 0 : index
    %c0_17 = arith.constant 0 : index
    %c128 = arith.constant 128 : index
    %19 = vector.load %arg3[%c0_16, %c0_17, %c128] : memref<8x2x512xf32, #tpu.memory_space<vmem>>, vector<8x2x32xf32>
    tpu.vector_store %arg3[%c0_16, %c0_17, %c128], %18 {strides = array<i32>} : memref<8x2x512xf32, #tpu.memory_space<vmem>>, vector<8x2x32xf32>,
    %c0_18 = arith.constant 0 : index
    %c0_19 = arith.constant 0 : index
    %c160 = arith.constant 160 : index
    %20 = vector.load %arg3[%c0_18, %c0_19, %c160] : memref<8x2x512xf32, #tpu.memory_space<vmem>>, vector<8x2x32xf32>
    tpu.vector_store %arg3[%c0_18, %c0_19, %c160], %18 {strides = array<i32>} : memref<8x2x512xf32, #tpu.memory_space<vmem>>, vector<8x2x32xf32>,
    %c0_20 = arith.constant 0 : index
    %c0_21 = arith.constant 0 : index
    %c48 = arith.constant 48 : index
    %21 = vector.load %arg2[%c0_20, %c0_21, %c48] : memref<8x2x128xf32, #tpu.memory_space<vmem>>, vector<8x2x16xf32>
    %22 = vector.shape_cast %21 : vector<8x2x16xf32> to vector<8x2x16x1xf32>
    %23 = vector.shape_cast %22 : vector<8x2x16x1xf32> to vector<8x2x16x1xf32>
    %24 = vector.broadcast %23 : vector<8x2x16x1xf32> to vector<8x2x16x2xf32>
    %25 = vector.shape_cast %24 : vector<8x2x16x2xf32> to vector<8x2x32xf32>
    %c0_22 = arith.constant 0 : index
    %c0_23 = arith.constant 0 : index
    %c192 = arith.constant 192 : index
    %26 = vector.load %arg3[%c0_22, %c0_23, %c192] : memref<8x2x512xf32, #tpu.memory_space<vmem>>, vector<8x2x32xf32>
    tpu.vector_store %arg3[%c0_22, %c0_23, %c192], %25 {strides = array<i32>} : memref<8x2x512xf32, #tpu.memory_space<vmem>>, vector<8x2x32xf32>,
    %c0_24 = arith.constant 0 : index
    %c0_25 = arith.constant 0 : index
    %c224 = arith.constant 224 : index
    %27 = vector.load %arg3[%c0_24, %c0_25, %c224] : memref<8x2x512xf32, #tpu.memory_space<vmem>>, vector<8x2x32xf32>
    tpu.vector_store %arg3[%c0_24, %c0_25, %c224], %25 {strides = array<i32>} : memref<8x2x512xf32, #tpu.memory_space<vmem>>, vector<8x2x32xf32>,
    %c0_26 = arith.constant 0 : index
    %c0_27 = arith.constant 0 : index
    %c64_28 = arith.constant 64 : index
    %28 = vector.load %arg2[%c0_26, %c0_27, %c64_28] : memref<8x2x128xf32, #tpu.memory_space<vmem>>, vector<8x2x16xf32>
    %29 = vector.shape_cast %28 : vector<8x2x16xf32> to vector<8x2x16x1xf32>
    %30 = vector.shape_cast %29 : vector<8x2x16x1xf32> to vector<8x2x16x1xf32>
    %31 = vector.broadcast %30 : vector<8x2x16x1xf32> to vector<8x2x16x2xf32>
    %32 = vector.shape_cast %31 : vector<8x2x16x2xf32> to vector<8x2x32xf32>
    %c0_29 = arith.constant 0 : index
    %c0_30 = arith.constant 0 : index
    %c256 = arith.constant 256 : index
    %33 = vector.load %arg3[%c0_29, %c0_30, %c256] : memref<8x2x512xf32, #tpu.memory_space<vmem>>, vector<8x2x32xf32>
    tpu.vector_store %arg3[%c0_29, %c0_30, %c256], %32 {strides = array<i32>} : memref<8x2x512xf32, #tpu.memory_space<vmem>>, vector<8x2x32xf32>,
    %c0_31 = arith.constant 0 : index
    %c0_32 = arith.constant 0 : index
    %c288 = arith.constant 288 : index
    %34 = vector.load %arg3[%c0_31, %c0_32, %c288] : memref<8x2x512xf32, #tpu.memory_space<vmem>>, vector<8x2x32xf32>
    tpu.vector_store %arg3[%c0_31, %c0_32, %c288], %32 {strides = array<i32>} : memref<8x2x512xf32, #tpu.memory_space<vmem>>, vector<8x2x32xf32>,
    %c0_33 = arith.constant 0 : index
    %c0_34 = arith.constant 0 : index
    %c80 = arith.constant 80 : index
    %35 = vector.load %arg2[%c0_33, %c0_34, %c80] : memref<8x2x128xf32, #tpu.memory_space<vmem>>, vector<8x2x16xf32>
    %36 = vector.shape_cast %35 : vector<8x2x16xf32> to vector<8x2x16x1xf32>
    %37 = vector.shape_cast %36 : vector<8x2x16x1xf32> to vector<8x2x16x1xf32>
    %38 = vector.broadcast %37 : vector<8x2x16x1xf32> to vector<8x2x16x2xf32>
    %39 = vector.shape_cast %38 : vector<8x2x16x2xf32> to vector<8x2x32xf32>
    %c0_35 = arith.constant 0 : index
    %c0_36 = arith.constant 0 : index
    %c320 = arith.constant 320 : index
    %40 = vector.load %arg3[%c0_35, %c0_36, %c320] : memref<8x2x512xf32, #tpu.memory_space<vmem>>, vector<8x2x32xf32>
    tpu.vector_store %arg3[%c0_35, %c0_36, %c320], %39 {strides = array<i32>} : memref<8x2x512xf32, #tpu.memory_space<vmem>>, vector<8x2x32xf32>,
    %c0_37 = arith.constant 0 : index
    %c0_38 = arith.constant 0 : index
    %c352 = arith.constant 352 : index
    %41 = vector.load %arg3[%c0_37, %c0_38, %c352] : memref<8x2x512xf32, #tpu.memory_space<vmem>>, vector<8x2x32xf32>
    tpu.vector_store %arg3[%c0_37, %c0_38, %c352], %39 {strides = array<i32>} : memref<8x2x512xf32, #tpu.memory_space<vmem>>, vector<8x2x32xf32>,
    %c0_39 = arith.constant 0 : index
    %c0_40 = arith.constant 0 : index
    %c96_41 = arith.constant 96 : index
    %42 = vector.load %arg2[%c0_39, %c0_40, %c96_41] : memref<8x2x128xf32, #tpu.memory_space<vmem>>, vector<8x2x16xf32>
    %43 = vector.shape_cast %42 : vector<8x2x16xf32> to vector<8x2x16x1xf32>
    %44 = vector.shape_cast %43 : vector<8x2x16x1xf32> to vector<8x2x16x1xf32>
    %45 = vector.broadcast %44 : vector<8x2x16x1xf32> to vector<8x2x16x2xf32>
    %46 = vector.shape_cast %45 : vector<8x2x16x2xf32> to vector<8x2x32xf32>
    %c0_42 = arith.constant 0 : index
    %c0_43 = arith.constant 0 : index
    %c384 = arith.constant 384 : index
    %47 = vector.load %arg3[%c0_42, %c0_43, %c384] : memref<8x2x512xf32, #tpu.memory_space<vmem>>, vector<8x2x32xf32>
    tpu.vector_store %arg3[%c0_42, %c0_43, %c384], %46 {strides = array<i32>} : memref<8x2x512xf32, #tpu.memory_space<vmem>>, vector<8x2x32xf32>,
    %c0_44 = arith.constant 0 : index
    %c0_45 = arith.constant 0 : index
    %c416 = arith.constant 416 : index
    %48 = vector.load %arg3[%c0_44, %c0_45, %c416] : memref<8x2x512xf32, #tpu.memory_space<vmem>>, vector<8x2x32xf32>
    tpu.vector_store %arg3[%c0_44, %c0_45, %c416], %46 {strides = array<i32>} : memref<8x2x512xf32, #tpu.memory_space<vmem>>, vector<8x2x32xf32>,
    %c0_46 = arith.constant 0 : index
    %c0_47 = arith.constant 0 : index
    %c112 = arith.constant 112 : index
    %49 = vector.load %arg2[%c0_46, %c0_47, %c112] : memref<8x2x128xf32, #tpu.memory_space<vmem>>, vector<8x2x16xf32>
    %50 = vector.shape_cast %49 : vector<8x2x16xf32> to vector<8x2x16x1xf32>
    %51 = vector.shape_cast %50 : vector<8x2x16x1xf32> to vector<8x2x16x1xf32>
    %52 = vector.broadcast %51 : vector<8x2x16x1xf32> to vector<8x2x16x2xf32>
    %53 = vector.shape_cast %52 : vector<8x2x16x2xf32> to vector<8x2x32xf32>
    %c0_48 = arith.constant 0 : index
    %c0_49 = arith.constant 0 : index
    %c448 = arith.constant 448 : index
    %54 = vector.load %arg3[%c0_48, %c0_49, %c448] : memref<8x2x512xf32, #tpu.memory_space<vmem>>, vector<8x2x32xf32>
    tpu.vector_store %arg3[%c0_48, %c0_49, %c448], %53 {strides = array<i32>} : memref<8x2x512xf32, #tpu.memory_space<vmem>>, vector<8x2x32xf32>,
    %c0_50 = arith.constant 0 : index
    %c0_51 = arith.constant 0 : index
    %c480 = arith.constant 480 : index
    %55 = vector.load %arg3[%c0_50, %c0_51, %c480] : memref<8x2x512xf32, #tpu.memory_space<vmem>>, vector<8x2x32xf32>
    tpu.vector_store %arg3[%c0_50, %c0_51, %c480], %53 {strides = array<i32>} : memref<8x2x512xf32, #tpu.memory_space<vmem>>, vector<8x2x32xf32>,
    return
  }
  func.func @transform_0(%arg0: i32, %arg1: i32) -> (i32, i32, i32) {
    %c0_i32 = arith.constant 0 : i32
    %c0_i32_0 = arith.constant 0 : i32
    return %arg0, %arg1, %c0_i32 : i32, i32, i32
  }
  func.func @transform_1(%arg0: i32, %arg1: i32) -> (i32, i32, i32) {
    %c0_i32 = arith.constant 0 : i32
    %c0_i32_0 = arith.constant 0 : i32
    return %arg0, %arg1, %c0_i32 : i32, i32, i32
  }
}

</mosaic_0001>

<llo_original>
// kernel: tpu_custom_call.1
$region0: #{tpu_custom_call.1}
  #allocation0 [shape = 'u32[]', space=smem, size = 0x4, offset = 0x4, fixed_abs, tag = 'smem constant byte address 0x4 - core index']
  #allocation1 [shape = 'u32[72,128]{1,0:T(1,128)}', space=vmem, size = 0x9000, scoped, tag = 'internal scratch']
  %s0 = inlined_call_operand.hbm [shape: f32[8,2,128], index: 0, kind: input, shape index: {}]
  %s1 = inlined_call_operand.hbm [shape: f32[8,2,512], index: 1, kind: output, shape index: {}]
  %s2 = sld [smem:[#allocation0]]
  $region18: #{tpu_custom_call.1} parent=0
    _
  %s4 = ssub.s32 1, %s2
  %s5 = scalar_select 0, %s4, %s2
  $region1: #{tpu_custom_call.1} parent=0
    #allocation2 [shape = 'u8[8192]{0}', space=vmem, size = 0x2000, scoped, tag = 'input window, operand 0, single buffered']
    #allocation3 [shape = 's32[1]{0}', space=sflag, size = 0x4, scoped, tag = 'scoped memory for tpu_custom_call.1']
    #allocation4 [shape = 's32[1]{0}', space=sflag, size = 0x4, scoped, tag = 'scoped memory for tpu_custom_call.1']
    #allocation5 [shape = 'u8[32768]{0}', space=vmem, size = 0x8000, scoped, tag = 'output window, operand 0, single buffered']
    %6 = vsyncpa [#allocation3], 0
    %7 = vsyncpa [#allocation4], 0
    // Predicated region
    $region2: #{tpu_custom_call.1} parent=1 // pred_check
      _
    $region3: #{tpu_custom_call.1} parent=1 // pred_check_branch
      %9 = sbr.rel (0) target = $region5
    $region4: #{tpu_custom_call.1} parent=1 // pred_region
      %11 = vsyncadd [#allocation3], 0
      %s12 = sshll.u32 %s0, 4
      %s13 = int_to_ptr.hbm [resolvable:$true] %s12
      %s14 = sshll.u32 [#allocation2], 4
      %s15 = int_to_ptr.vmem [resolvable:$true] %s14
      %20 = dma.hbm_to_vmem [thread:$0]  %s13, 256, %s15, [#allocation3], 32, 32, 2
    $region5: #{tpu_custom_call.1} parent=1 // pred_fallthru
      _
    // Predicated region
    $region6: #{tpu_custom_call.1} parent=1 // pred_check
      _
    $region7: #{tpu_custom_call.1} parent=1 // pred_check_branch
      %22 = sbr.rel (0) target = $region9
    $region8: #{tpu_custom_call.1} parent=1 // pred_region
      %24 = dma.done [#allocation3], 256
    $region9: #{tpu_custom_call.1} parent=1 // pred_fallthru
      _
    %v25 = vld [vmem:[#allocation2] sm:$0x3]
    %v26 = vld [vmem:[#allocation2 + $0x2] sm:$0x3]
    %v27 = vld [vmem:[#allocation2 + $0x4] sm:$0x3]
    %v28 = vld [vmem:[#allocation2 + $0x6] sm:$0x3]
    %v29 = vld [vmem:[#allocation2 + $0x8] sm:$0x3]
    %v30 = vld [vmem:[#allocation2 + $0xa] sm:$0x3]
    %v31 = vld [vmem:[#allocation2 + $0xc] sm:$0x3]
    %v32 = vld [vmem:[#allocation2 + $0xe] sm:$0x3]
    %v33 = vperm.slane %v25, 0
    %v34 = vlaneseq
    %v35 = vshrl.u32 %v34, 7
    %37 = vset.pattern.permute.xlu0 %v35
    %38 = vperm.xlu0 %37, %v33
    %v39 = vpop.permute.xlu0 %38
    %v40 = vlaneseq
    %v41 = vshrl.u32 %v40, 7
    %v42 = vadd.s32 %v41, 8
    %43 = vset.pattern.permute.xlu0 %v42
    %44 = vperm.xlu0 %43, %v33
    %v45 = vpop.permute.xlu0 %44
    %v46 = vperm.slane %v25, 1
    %v47 = vlaneseq
    %v48 = vshrl.u32 %v47, 7
    %50 = vset.pattern.permute.xlu0 %v48
    %51 = vperm.xlu0 %50, %v46
    %v52 = vpop.permute.xlu0 %51
    %v53 = vlaneseq
    %v54 = vshrl.u32 %v53, 7
    %v55 = vadd.s32 %v54, 8
    %56 = vset.pattern.permute.xlu0 %v55
    %57 = vperm.xlu0 %56, %v46
    %v58 = vpop.permute.xlu0 %57
    %v59 = vperm.slane %v26, 0
    %v60 = vlaneseq
    %v61 = vshrl.u32 %v60, 7
    %63 = vset.pattern.permute.xlu0 %v61
    %64 = vperm.xlu0 %63, %v59
    %v65 = vpop.permute.xlu0 %64
    %v66 = vlaneseq
    %v67 = vshrl.u32 %v66, 7
    %v68 = vadd.s32 %v67, 8
    %69 = vset.pattern.permute.xlu0 %v68
    %70 = vperm.xlu0 %69, %v59
    %v71 = vpop.permute.xlu0 %70
    %v72 = vperm.slane %v26, 1
    %v73 = vlaneseq
    %v74 = vshrl.u32 %v73, 7
    %76 = vset.pattern.permute.xlu0 %v74
    %77 = vperm.xlu0 %76, %v72
    %v78 = vpop.permute.xlu0 %77
    %v79 = vlaneseq
    %v80 = vshrl.u32 %v79, 7
    %v81 = vadd.s32 %v80, 8
    %82 = vset.pattern.permute.xlu0 %v81
    %83 = vperm.xlu0 %82, %v72
    %v84 = vpop.permute.xlu0 %83
    %v85 = vperm.slane %v27, 0
    %v86 = vlaneseq
    %v87 = vshrl.u32 %v86, 7
    %89 = vset.pattern.permute.xlu0 %v87
    %90 = vperm.xlu0 %89, %v85
    %v91 = vpop.permute.xlu0 %90
    %v92 = vlaneseq
    %v93 = vshrl.u32 %v92, 7
    %v94 = vadd.s32 %v93, 8
    %95 = vset.pattern.permute.xlu0 %v94
    %96 = vperm.xlu0 %95, %v85
    %v97 = vpop.permute.xlu0 %96
    %v98 = vperm.slane %v27, 1
    %v99 = vlaneseq
    %v100 = vshrl.u32 %v99, 7
    %102 = vset.pattern.permute.xlu0 %v100
    %103 = vperm.xlu0 %102, %v98
    %v104 = vpop.permute.xlu0 %103
    %v105 = vlaneseq
    %v106 = vshrl.u32 %v105, 7
    %v107 = vadd.s32 %v106, 8
    %108 = vset.pattern.permute.xlu0 %v107
    %109 = vperm.xlu0 %108, %v98
    %v110 = vpop.permute.xlu0 %109
    %v111 = vperm.slane %v28, 0
    %v112 = vlaneseq
    %v113 = vshrl.u32 %v112, 7
    %115 = vset.pattern.permute.xlu0 %v113
    %116 = vperm.xlu0 %115, %v111
    %v117 = vpop.permute.xlu0 %116
    %v118 = vlaneseq
    %v119 = vshrl.u32 %v118, 7
    %v120 = vadd.s32 %v119, 8
    %121 = vset.pattern.permute.xlu0 %v120
    %122 = vperm.xlu0 %121, %v111
    %v123 = vpop.permute.xlu0 %122
    %v124 = vperm.slane %v28, 1
    %v125 = vlaneseq
    %v126 = vshrl.u32 %v125, 7
    %128 = vset.pattern.permute.xlu0 %v126
    %129 = vperm.xlu0 %128, %v124
    %v130 = vpop.permute.xlu0 %129
    %v131 = vlaneseq
    %v132 = vshrl.u32 %v131, 7
    %v133 = vadd.s32 %v132, 8
    %134 = vset.pattern.permute.xlu0 %v133
    %135 = vperm.xlu0 %134, %v124
    %v136 = vpop.permute.xlu0 %135
    %v137 = vperm.slane %v29, 0
    %v138 = vlaneseq
    %v139 = vshrl.u32 %v138, 7
    %141 = vset.pattern.permute.xlu0 %v139
    %142 = vperm.xlu0 %141, %v137
    %v143 = vpop.permute.xlu0 %142
    %v144 = vlaneseq
    %v145 = vshrl.u32 %v144, 7
    %v146 = vadd.s32 %v145, 8
    %147 = vset.pattern.permute.xlu0 %v146
    %148 = vperm.xlu0 %147, %v137
    %v149 = vpop.permute.xlu0 %148
    %v150 = vperm.slane %v29, 1
    %v151 = vlaneseq
    %v152 = vshrl.u32 %v151, 7
    %154 = vset.pattern.permute.xlu0 %v152
    %155 = vperm.xlu0 %154, %v150
    %v156 = vpop.permute.xlu0 %155
    %v157 = vlaneseq
    %v158 = vshrl.u32 %v157, 7
    %v159 = vadd.s32 %v158, 8
    %160 = vset.pattern.permute.xlu0 %v159
    %161 = vperm.xlu0 %160, %v150
    %v162 = vpop.permute.xlu0 %161
    %v163 = vperm.slane %v30, 0
    %v164 = vlaneseq
    %v165 = vshrl.u32 %v164, 7
    %167 = vset.pattern.permute.xlu0 %v165
    %168 = vperm.xlu0 %167, %v163
    %v169 = vpop.permute.xlu0 %168
    %v170 = vlaneseq
    %v171 = vshrl.u32 %v170, 7
    %v172 = vadd.s32 %v171, 8
    %173 = vset.pattern.permute.xlu0 %v172
    %174 = vperm.xlu0 %173, %v163
    %v175 = vpop.permute.xlu0 %174
    %v176 = vperm.slane %v30, 1
    %v177 = vlaneseq
    %v178 = vshrl.u32 %v177, 7
    %180 = vset.pattern.permute.xlu0 %v178
    %181 = vperm.xlu0 %180, %v176
    %v182 = vpop.permute.xlu0 %181
    %v183 = vlaneseq
    %v184 = vshrl.u32 %v183, 7
    %v185 = vadd.s32 %v184, 8
    %186 = vset.pattern.permute.xlu0 %v185
    %187 = vperm.xlu0 %186, %v176
    %v188 = vpop.permute.xlu0 %187
    %v189 = vperm.slane %v31, 0
    %v190 = vlaneseq
    %v191 = vshrl.u32 %v190, 7
    %193 = vset.pattern.permute.xlu0 %v191
    %194 = vperm.xlu0 %193, %v189
    %v195 = vpop.permute.xlu0 %194
    %v196 = vlaneseq
    %v197 = vshrl.u32 %v196, 7
    %v198 = vadd.s32 %v197, 8
    %199 = vset.pattern.permute.xlu0 %v198
    %200 = vperm.xlu0 %199, %v189
    %v201 = vpop.permute.xlu0 %200
    %v202 = vperm.slane %v31, 1
    %v203 = vlaneseq
    %v204 = vshrl.u32 %v203, 7
    %206 = vset.pattern.permute.xlu0 %v204
    %207 = vperm.xlu0 %206, %v202
    %v208 = vpop.permute.xlu0 %207
    %v209 = vlaneseq
    %v210 = vshrl.u32 %v209, 7
    %v211 = vadd.s32 %v210, 8
    %212 = vset.pattern.permute.xlu0 %v211
    %213 = vperm.xlu0 %212, %v202
    %v214 = vpop.permute.xlu0 %213
    %v215 = vperm.slane %v32, 0
    %v216 = vlaneseq
    %v217 = vshrl.u32 %v216, 7
    %219 = vset.pattern.permute.xlu0 %v217
    %220 = vperm.xlu0 %219, %v215
    %v221 = vpop.permute.xlu0 %220
    %v222 = vlaneseq
    %v223 = vshrl.u32 %v222, 7
    %v224 = vadd.s32 %v223, 8
    %225 = vset.pattern.permute.xlu0 %v224
    %226 = vperm.xlu0 %225, %v215
    %v227 = vpop.permute.xlu0 %226
    %v228 = vperm.slane %v32, 1
    %v229 = vlaneseq
    %v230 = vshrl.u32 %v229, 7
    %232 = vset.pattern.permute.xlu0 %v230
    %233 = vperm.xlu0 %232, %v228
    %v234 = vpop.permute.xlu0 %233
    %v235 = vlaneseq
    %v236 = vshrl.u32 %v235, 7
    %v237 = vadd.s32 %v236, 8
    %238 = vset.pattern.permute.xlu0 %v237
    %239 = vperm.xlu0 %238, %v228
    %v240 = vpop.permute.xlu0 %239
    %v241 = vrot.slane %v39, 4
    %vm242 = vcmask 1047556
    %v243 = vsel %vm242, 0.0, %v241
    %v245 = vunpack.c.l.s4 1983009808
    %v246 = vunpack.c.0.s8 %v245
    %v247 = vperm.slane %v39, %v246
    %v249 = vunpack.c.l.s4 1983009808
    %v250 = vunpack.c.0.s8 %v249
    %v251 = vperm.slane %v243, %v250
    %v252 = vrot.slane %v52, 4
    %v253 = vsel %vm242, 0.0, %v252
    %v255 = vunpack.c.l.s4 1983009808
    %v256 = vunpack.c.0.s8 %v255
    %v257 = vperm.slane %v52, %v256
    %v259 = vunpack.c.l.s4 1983009808
    %v260 = vunpack.c.0.s8 %v259
    %v261 = vperm.slane %v253, %v260
    %v262 = vrot.slane %v257, 4
    %v263 = vsel %vm242, %v262, %v247
    %v264 = vrot.slane %v247, 4
    %v265 = vsel %vm242, %v257, %v264
    %v267 = vunpack.c.l.s4 1934713408
    %v268 = vunpack.c.0.s8 %v267
    %v269 = vperm.slane %v263, %v268
    %v271 = vunpack.c.l.s4 1934713408
    %v272 = vunpack.c.0.s8 %v271
    %v273 = vperm.slane %v265, %v272
    %v274 = vrot.slane %v261, 4
    %v275 = vsel %vm242, %v274, %v251
    %v276 = vrot.slane %v251, 4
    %v277 = vsel %vm242, %v261, %v276
    %v279 = vunpack.c.l.s4 1934713408
    %v280 = vunpack.c.0.s8 %v279
    %v281 = vperm.slane %v275, %v280
    %v283 = vunpack.c.l.s4 1934713408
    %v284 = vunpack.c.0.s8 %v283
    %v285 = vperm.slane %v277, %v284
    %v286 = vrot.slane %v269, 4
    %v287 = vsel %vm242, 0.0, %v286
    %v288 = vrot.slane %v273, 4
    %v289 = vsel %vm242, 0.0, %v288
    %v290 = vrot.slane %v281, 4
    %v291 = vsel %vm242, 0.0, %v290
    %v292 = vrot.slane %v285, 4
    %v293 = vsel %vm242, 0.0, %v292
    %v294 = vrot.slane %v45, 4
    %v295 = vsel %vm242, 0.0, %v294
    %v297 = vunpack.c.l.s4 1983009808
    %v298 = vunpack.c.0.s8 %v297
    %v299 = vperm.slane %v45, %v298
    %v301 = vunpack.c.l.s4 1983009808
    %v302 = vunpack.c.0.s8 %v301
    %v303 = vperm.slane %v295, %v302
    %v304 = vrot.slane %v58, 4
    %v305 = vsel %vm242, 0.0, %v304
    %v307 = vunpack.c.l.s4 1983009808
    %v308 = vunpack.c.0.s8 %v307
    %v309 = vperm.slane %v58, %v308
    %v311 = vunpack.c.l.s4 1983009808
    %v312 = vunpack.c.0.s8 %v311
    %v313 = vperm.slane %v305, %v312
    %v314 = vrot.slane %v309, 4
    %v315 = vsel %vm242, %v314, %v299
    %v316 = vrot.slane %v299, 4
    %v317 = vsel %vm242, %v309, %v316
    %v319 = vunpack.c.l.s4 1934713408
    %v320 = vunpack.c.0.s8 %v319
    %v321 = vperm.slane %v315, %v320
    %v323 = vunpack.c.l.s4 1934713408
    %v324 = vunpack.c.0.s8 %v323
    %v325 = vperm.slane %v317, %v324
    %v326 = vrot.slane %v313, 4
    %v327 = vsel %vm242, %v326, %v303
    %v328 = vrot.slane %v303, 4
    %v329 = vsel %vm242, %v313, %v328
    %v331 = vunpack.c.l.s4 1934713408
    %v332 = vunpack.c.0.s8 %v331
    %v333 = vperm.slane %v327, %v332
    %v335 = vunpack.c.l.s4 1934713408
    %v336 = vunpack.c.0.s8 %v335
    %v337 = vperm.slane %v329, %v336
    %v338 = vrot.slane %v321, 4
    %v339 = vsel %vm242, 0.0, %v338
    %v340 = vrot.slane %v325, 4
    %v341 = vsel %vm242, 0.0, %v340
    %v342 = vrot.slane %v333, 4
    %v343 = vsel %vm242, 0.0, %v342
    %v344 = vrot.slane %v337, 4
    %v345 = vsel %vm242, 0.0, %v344
    %v346 = vrot.slane %v65, 4
    %v347 = vsel %vm242, 0.0, %v346
    %v349 = vunpack.c.l.s4 1983009808
    %v350 = vunpack.c.0.s8 %v349
    %v351 = vperm.slane %v65, %v350
    %v353 = vunpack.c.l.s4 1983009808
    %v354 = vunpack.c.0.s8 %v353
    %v355 = vperm.slane %v347, %v354
    %v356 = vrot.slane %v78, 4
    %v357 = vsel %vm242, 0.0, %v356
    %v359 = vunpack.c.l.s4 1983009808
    %v360 = vunpack.c.0.s8 %v359
    %v361 = vperm.slane %v78, %v360
    %v363 = vunpack.c.l.s4 1983009808
    %v364 = vunpack.c.0.s8 %v363
    %v365 = vperm.slane %v357, %v364
    %v366 = vrot.slane %v361, 4
    %v367 = vsel %vm242, %v366, %v351
    %v368 = vrot.slane %v351, 4
    %v369 = vsel %vm242, %v361, %v368
    %v371 = vunpack.c.l.s4 1934713408
    %v372 = vunpack.c.0.s8 %v371
    %v373 = vperm.slane %v367, %v372
    %v375 = vunpack.c.l.s4 1934713408
    %v376 = vunpack.c.0.s8 %v375
    %v377 = vperm.slane %v369, %v376
    %v378 = vrot.slane %v365, 4
    %v379 = vsel %vm242, %v378, %v355
    %v380 = vrot.slane %v355, 4
    %v381 = vsel %vm242, %v365, %v380
    %v383 = vunpack.c.l.s4 1934713408
    %v384 = vunpack.c.0.s8 %v383
    %v385 = vperm.slane %v379, %v384
    %v387 = vunpack.c.l.s4 1934713408
    %v388 = vunpack.c.0.s8 %v387
    %v389 = vperm.slane %v381, %v388
    %v390 = vrot.slane %v373, 4
    %v391 = vsel %vm242, 0.0, %v390
    %v392 = vrot.slane %v377, 4
    %v393 = vsel %vm242, 0.0, %v392
    %v394 = vrot.slane %v385, 4
    %v395 = vsel %vm242, 0.0, %v394
    %v396 = vrot.slane %v389, 4
    %v397 = vsel %vm242, 0.0, %v396
    %v398 = vrot.slane %v71, 4
    %v399 = vsel %vm242, 0.0, %v398
    %v401 = vunpack.c.l.s4 1983009808
    %v402 = vunpack.c.0.s8 %v401
    %v403 = vperm.slane %v71, %v402
    %v405 = vunpack.c.l.s4 1983009808
    %v406 = vunpack.c.0.s8 %v405
    %v407 = vperm.slane %v399, %v406
    %v408 = vrot.slane %v84, 4
    %v409 = vsel %vm242, 0.0, %v408
    %v411 = vunpack.c.l.s4 1983009808
    %v412 = vunpack.c.0.s8 %v411
    %v413 = vperm.slane %v84, %v412
    %v415 = vunpack.c.l.s4 1983009808
    %v416 = vunpack.c.0.s8 %v415
    %v417 = vperm.slane %v409, %v416
    %v418 = vrot.slane %v413, 4
    %v419 = vsel %vm242, %v418, %v403
    %v420 = vrot.slane %v403, 4
    %v421 = vsel %vm242, %v413, %v420
    %v423 = vunpack.c.l.s4 1934713408
    %v424 = vunpack.c.0.s8 %v423
    %v425 = vperm.slane %v419, %v424
    %v427 = vunpack.c.l.s4 1934713408
    %v428 = vunpack.c.0.s8 %v427
    %v429 = vperm.slane %v421, %v428
    %v430 = vrot.slane %v417, 4
    %v431 = vsel %vm242, %v430, %v407
    %v432 = vrot.slane %v407, 4
    %v433 = vsel %vm242, %v417, %v432
    %v435 = vunpack.c.l.s4 1934713408
    %v436 = vunpack.c.0.s8 %v435
    %v437 = vperm.slane %v431, %v436
    %v439 = vunpack.c.l.s4 1934713408
    %v440 = vunpack.c.0.s8 %v439
    %v441 = vperm.slane %v433, %v440
    %v442 = vrot.slane %v425, 4
    %v443 = vsel %vm242, 0.0, %v442
    %v444 = vrot.slane %v429, 4
    %v445 = vsel %vm242, 0.0, %v444
    %v446 = vrot.slane %v437, 4
    %v447 = vsel %vm242, 0.0, %v446
    %v448 = vrot.slane %v441, 4
    %v449 = vsel %vm242, 0.0, %v448
    %v450 = vrot.slane %v91, 4
    %v451 = vsel %vm242, 0.0, %v450
    %v453 = vunpack.c.l.s4 1983009808
    %v454 = vunpack.c.0.s8 %v453
    %v455 = vperm.slane %v91, %v454
    %v457 = vunpack.c.l.s4 1983009808
    %v458 = vunpack.c.0.s8 %v457
    %v459 = vperm.slane %v451, %v458
    %v460 = vrot.slane %v104, 4
    %v461 = vsel %vm242, 0.0, %v460
    %v463 = vunpack.c.l.s4 1983009808
    %v464 = vunpack.c.0.s8 %v463
    %v465 = vperm.slane %v104, %v464
    %v467 = vunpack.c.l.s4 1983009808
    %v468 = vunpack.c.0.s8 %v467
    %v469 = vperm.slane %v461, %v468
    %v470 = vrot.slane %v465, 4
    %v471 = vsel %vm242, %v470, %v455
    %v472 = vrot.slane %v455, 4
    %v473 = vsel %vm242, %v465, %v472
    %v475 = vunpack.c.l.s4 1934713408
    %v476 = vunpack.c.0.s8 %v475
    %v477 = vperm.slane %v471, %v476
    %v479 = vunpack.c.l.s4 1934713408
    %v480 = vunpack.c.0.s8 %v479
    %v481 = vperm.slane %v473, %v480
    %v482 = vrot.slane %v469, 4
    %v483 = vsel %vm242, %v482, %v459
    %v484 = vrot.slane %v459, 4
    %v485 = vsel %vm242, %v469, %v484
    %v487 = vunpack.c.l.s4 1934713408
    %v488 = vunpack.c.0.s8 %v487
    %v489 = vperm.slane %v483, %v488
    %v491 = vunpack.c.l.s4 1934713408
    %v492 = vunpack.c.0.s8 %v491
    %v493 = vperm.slane %v485, %v492
    %v494 = vrot.slane %v477, 4
    %v495 = vsel %vm242, 0.0, %v494
    %v496 = vrot.slane %v481, 4
    %v497 = vsel %vm242, 0.0, %v496
    %v498 = vrot.slane %v489, 4
    %v499 = vsel %vm242, 0.0, %v498
    %v500 = vrot.slane %v493, 4
    %v501 = vsel %vm242, 0.0, %v500
    %v502 = vrot.slane %v97, 4
    %v503 = vsel %vm242, 0.0, %v502
    %v505 = vunpack.c.l.s4 1983009808
    %v506 = vunpack.c.0.s8 %v505
    %v507 = vperm.slane %v97, %v506
    %v509 = vunpack.c.l.s4 1983009808
    %v510 = vunpack.c.0.s8 %v509
    %v511 = vperm.slane %v503, %v510
    %v512 = vrot.slane %v110, 4
    %v513 = vsel %vm242, 0.0, %v512
    %v515 = vunpack.c.l.s4 1983009808
    %v516 = vunpack.c.0.s8 %v515
    %v517 = vperm.slane %v110, %v516
    %v519 = vunpack.c.l.s4 1983009808
    %v520 = vunpack.c.0.s8 %v519
    %v521 = vperm.slane %v513, %v520
    %v522 = vrot.slane %v517, 4
    %v523 = vsel %vm242, %v522, %v507
    %v524 = vrot.slane %v507, 4
    %v525 = vsel %vm242, %v517, %v524
    %v527 = vunpack.c.l.s4 1934713408
    %v528 = vunpack.c.0.s8 %v527
    %v529 = vperm.slane %v523, %v528
    %v531 = vunpack.c.l.s4 1934713408
    %v532 = vunpack.c.0.s8 %v531
    %v533 = vperm.slane %v525, %v532
    %v534 = vrot.slane %v521, 4
    %v535 = vsel %vm242, %v534, %v511
    %v536 = vrot.slane %v511, 4
    %v537 = vsel %vm242, %v521, %v536
    %v539 = vunpack.c.l.s4 1934713408
    %v540 = vunpack.c.0.s8 %v539
    %v541 = vperm.slane %v535, %v540
    %v543 = vunpack.c.l.s4 1934713408
    %v544 = vunpack.c.0.s8 %v543
    %v545 = vperm.slane %v537, %v544
    %v546 = vrot.slane %v529, 4
    %v547 = vsel %vm242, 0.0, %v546
    %v548 = vrot.slane %v533, 4
    %v549 = vsel %vm242, 0.0, %v548
    %v550 = vrot.slane %v541, 4
    %v551 = vsel %vm242, 0.0, %v550
    %v552 = vrot.slane %v545, 4
    %v553 = vsel %vm242, 0.0, %v552
    %v554 = vrot.slane %v117, 4
    %v555 = vsel %vm242, 0.0, %v554
    %v557 = vunpack.c.l.s4 1983009808
    %v558 = vunpack.c.0.s8 %v557
    %v559 = vperm.slane %v117, %v558
    %v561 = vunpack.c.l.s4 1983009808
    %v562 = vunpack.c.0.s8 %v561
    %v563 = vperm.slane %v555, %v562
    %v564 = vrot.slane %v130, 4
    %v565 = vsel %vm242, 0.0, %v564
    %v567 = vunpack.c.l.s4 1983009808
    %v568 = vunpack.c.0.s8 %v567
    %v569 = vperm.slane %v130, %v568
    %v571 = vunpack.c.l.s4 1983009808
    %v572 = vunpack.c.0.s8 %v571
    %v573 = vperm.slane %v565, %v572
    %v574 = vrot.slane %v569, 4
    %v575 = vsel %vm242, %v574, %v559
    %v576 = vrot.slane %v559, 4
    %v577 = vsel %vm242, %v569, %v576
    %v579 = vunpack.c.l.s4 1934713408
    %v580 = vunpack.c.0.s8 %v579
    %v581 = vperm.slane %v575, %v580
    %v583 = vunpack.c.l.s4 1934713408
    %v584 = vunpack.c.0.s8 %v583
    %v585 = vperm.slane %v577, %v584
    %v586 = vrot.slane %v573, 4
    %v587 = vsel %vm242, %v586, %v563
    %v588 = vrot.slane %v563, 4
    %v589 = vsel %vm242, %v573, %v588
    %v591 = vunpack.c.l.s4 1934713408
    %v592 = vunpack.c.0.s8 %v591
    %v593 = vperm.slane %v587, %v592
    %v595 = vunpack.c.l.s4 1934713408
    %v596 = vunpack.c.0.s8 %v595
    %v597 = vperm.slane %v589, %v596
    %v598 = vrot.slane %v581, 4
    %v599 = vsel %vm242, 0.0, %v598
    %v600 = vrot.slane %v585, 4
    %v601 = vsel %vm242, 0.0, %v600
    %v602 = vrot.slane %v593, 4
    %v603 = vsel %vm242, 0.0, %v602
    %v604 = vrot.slane %v597, 4
    %v605 = vsel %vm242, 0.0, %v604
    %v606 = vrot.slane %v123, 4
    %v607 = vsel %vm242, 0.0, %v606
    %v609 = vunpack.c.l.s4 1983009808
    %v610 = vunpack.c.0.s8 %v609
    %v611 = vperm.slane %v123, %v610
    %v613 = vunpack.c.l.s4 1983009808
    %v614 = vunpack.c.0.s8 %v613
    %v615 = vperm.slane %v607, %v614
    %v616 = vrot.slane %v136, 4
    %v617 = vsel %vm242, 0.0, %v616
    %v619 = vunpack.c.l.s4 1983009808
    %v620 = vunpack.c.0.s8 %v619
    %v621 = vperm.slane %v136, %v620
    %v623 = vunpack.c.l.s4 1983009808
    %v624 = vunpack.c.0.s8 %v623
    %v625 = vperm.slane %v617, %v624
    %v626 = vrot.slane %v621, 4
    %v627 = vsel %vm242, %v626, %v611
    %v628 = vrot.slane %v611, 4
    %v629 = vsel %vm242, %v621, %v628
    %v631 = vunpack.c.l.s4 1934713408
    %v632 = vunpack.c.0.s8 %v631
    %v633 = vperm.slane %v627, %v632
    %v635 = vunpack.c.l.s4 1934713408
    %v636 = vunpack.c.0.s8 %v635
    %v637 = vperm.slane %v629, %v636
    %v638 = vrot.slane %v625, 4
    %v639 = vsel %vm242, %v638, %v615
    %v640 = vrot.slane %v615, 4
    %v641 = vsel %vm242, %v625, %v640
    %v643 = vunpack.c.l.s4 1934713408
    %v644 = vunpack.c.0.s8 %v643
    %v645 = vperm.slane %v639, %v644
    %v647 = vunpack.c.l.s4 1934713408
    %v648 = vunpack.c.0.s8 %v647
    %v649 = vperm.slane %v641, %v648
    %v650 = vrot.slane %v633, 4
    %v651 = vsel %vm242, 0.0, %v650
    %v652 = vrot.slane %v637, 4
    %v653 = vsel %vm242, 0.0, %v652
    %v654 = vrot.slane %v645, 4
    %v655 = vsel %vm242, 0.0, %v654
    %v656 = vrot.slane %v649, 4
    %v657 = vsel %vm242, 0.0, %v656
    %v658 = vrot.slane %v143, 4
    %v659 = vsel %vm242, 0.0, %v658
    %v661 = vunpack.c.l.s4 1983009808
    %v662 = vunpack.c.0.s8 %v661
    %v663 = vperm.slane %v143, %v662
    %v665 = vunpack.c.l.s4 1983009808
    %v666 = vunpack.c.0.s8 %v665
    %v667 = vperm.slane %v659, %v666
    %v668 = vrot.slane %v156, 4
    %v669 = vsel %vm242, 0.0, %v668
    %v671 = vunpack.c.l.s4 1983009808
    %v672 = vunpack.c.0.s8 %v671
    %v673 = vperm.slane %v156, %v672
    %v675 = vunpack.c.l.s4 1983009808
    %v676 = vunpack.c.0.s8 %v675
    %v677 = vperm.slane %v669, %v676
    %v678 = vrot.slane %v673, 4
    %v679 = vsel %vm242, %v678, %v663
    %v680 = vrot.slane %v663, 4
    %v681 = vsel %vm242, %v673, %v680
    %v683 = vunpack.c.l.s4 1934713408
    %v684 = vunpack.c.0.s8 %v683
    %v685 = vperm.slane %v679, %v684
    %v687 = vunpack.c.l.s4 1934713408
    %v688 = vunpack.c.0.s8 %v687
    %v689 = vperm.slane %v681, %v688
    %v690 = vrot.slane %v677, 4
    %v691 = vsel %vm242, %v690, %v667
    %v692 = vrot.slane %v667, 4
    %v693 = vsel %vm242, %v677, %v692
    %v695 = vunpack.c.l.s4 1934713408
    %v696 = vunpack.c.0.s8 %v695
    %v697 = vperm.slane %v691, %v696
    %v699 = vunpack.c.l.s4 1934713408
    %v700 = vunpack.c.0.s8 %v699
    %v701 = vperm.slane %v693, %v700
    %v702 = vrot.slane %v685, 4
    %v703 = vsel %vm242, 0.0, %v702
    %v704 = vrot.slane %v689, 4
    %v705 = vsel %vm242, 0.0, %v704
    %v706 = vrot.slane %v697, 4
    %v707 = vsel %vm242, 0.0, %v706
    %v708 = vrot.slane %v701, 4
    %v709 = vsel %vm242, 0.0, %v708
    %v710 = vrot.slane %v149, 4
    %v711 = vsel %vm242, 0.0, %v710
    %v713 = vunpack.c.l.s4 1983009808
    %v714 = vunpack.c.0.s8 %v713
    %v715 = vperm.slane %v149, %v714
    %v717 = vunpack.c.l.s4 1983009808
    %v718 = vunpack.c.0.s8 %v717
    %v719 = vperm.slane %v711, %v718
    %v720 = vrot.slane %v162, 4
    %v721 = vsel %vm242, 0.0, %v720
    %v723 = vunpack.c.l.s4 1983009808
    %v724 = vunpack.c.0.s8 %v723
    %v725 = vperm.slane %v162, %v724
    %v727 = vunpack.c.l.s4 1983009808
    %v728 = vunpack.c.0.s8 %v727
    %v729 = vperm.slane %v721, %v728
    %v730 = vrot.slane %v725, 4
    %v731 = vsel %vm242, %v730, %v715
    %v732 = vrot.slane %v715, 4
    %v733 = vsel %vm242, %v725, %v732
    %v735 = vunpack.c.l.s4 1934713408
    %v736 = vunpack.c.0.s8 %v735
    %v737 = vperm.slane %v731, %v736
    %v739 = vunpack.c.l.s4 1934713408
    %v740 = vunpack.c.0.s8 %v739
    %v741 = vperm.slane %v733, %v740
    %v742 = vrot.slane %v729, 4
    %v743 = vsel %vm242, %v742, %v719
    %v744 = vrot.slane %v719, 4
    %v745 = vsel %vm242, %v729, %v744
    %v747 = vunpack.c.l.s4 1934713408
    %v748 = vunpack.c.0.s8 %v747
    %v749 = vperm.slane %v743, %v748
    %v751 = vunpack.c.l.s4 1934713408
    %v752 = vunpack.c.0.s8 %v751
    %v753 = vperm.slane %v745, %v752
    %v754 = vrot.slane %v737, 4
    %v755 = vsel %vm242, 0.0, %v754
    %v756 = vrot.slane %v741, 4
    %v757 = vsel %vm242, 0.0, %v756
    %v758 = vrot.slane %v749, 4
    %v759 = vsel %vm242, 0.0, %v758
    %v760 = vrot.slane %v753, 4
    %v761 = vsel %vm242, 0.0, %v760
    %v762 = vrot.slane %v169, 4
    %v763 = vsel %vm242, 0.0, %v762
    %v765 = vunpack.c.l.s4 1983009808
    %v766 = vunpack.c.0.s8 %v765
    %v767 = vperm.slane %v169, %v766
    %v769 = vunpack.c.l.s4 1983009808
    %v770 = vunpack.c.0.s8 %v769
    %v771 = vperm.slane %v763, %v770
    %v772 = vrot.slane %v182, 4
    %v773 = vsel %vm242, 0.0, %v772
    %v775 = vunpack.c.l.s4 1983009808
    %v776 = vunpack.c.0.s8 %v775
    %v777 = vperm.slane %v182, %v776
    %v779 = vunpack.c.l.s4 1983009808
    %v780 = vunpack.c.0.s8 %v779
    %v781 = vperm.slane %v773, %v780
    %v782 = vrot.slane %v777, 4
    %v783 = vsel %vm242, %v782, %v767
    %v784 = vrot.slane %v767, 4
    %v785 = vsel %vm242, %v777, %v784
    %v787 = vunpack.c.l.s4 1934713408
    %v788 = vunpack.c.0.s8 %v787
    %v789 = vperm.slane %v783, %v788
    %v791 = vunpack.c.l.s4 1934713408
    %v792 = vunpack.c.0.s8 %v791
    %v793 = vperm.slane %v785, %v792
    %v794 = vrot.slane %v781, 4
    %v795 = vsel %vm242, %v794, %v771
    %v796 = vrot.slane %v771, 4
    %v797 = vsel %vm242, %v781, %v796
    %v799 = vunpack.c.l.s4 1934713408
    %v800 = vunpack.c.0.s8 %v799
    %v801 = vperm.slane %v795, %v800
    %v803 = vunpack.c.l.s4 1934713408
    %v804 = vunpack.c.0.s8 %v803
    %v805 = vperm.slane %v797, %v804
    %v806 = vrot.slane %v789, 4
    %v807 = vsel %vm242, 0.0, %v806
    %v808 = vrot.slane %v793, 4
    %v809 = vsel %vm242, 0.0, %v808
    %v810 = vrot.slane %v801, 4
    %v811 = vsel %vm242, 0.0, %v810
    %v812 = vrot.slane %v805, 4
    %v813 = vsel %vm242, 0.0, %v812
    %v814 = vrot.slane %v175, 4
    %v815 = vsel %vm242, 0.0, %v814
    %v817 = vunpack.c.l.s4 1983009808
    %v818 = vunpack.c.0.s8 %v817
    %v819 = vperm.slane %v175, %v818
    %v821 = vunpack.c.l.s4 1983009808
    %v822 = vunpack.c.0.s8 %v821
    %v823 = vperm.slane %v815, %v822
    %v824 = vrot.slane %v188, 4
    %v825 = vsel %vm242, 0.0, %v824
    %v827 = vunpack.c.l.s4 1983009808
    %v828 = vunpack.c.0.s8 %v827
    %v829 = vperm.slane %v188, %v828
    %v831 = vunpack.c.l.s4 1983009808
    %v832 = vunpack.c.0.s8 %v831
    %v833 = vperm.slane %v825, %v832
    %v834 = vrot.slane %v829, 4
    %v835 = vsel %vm242, %v834, %v819
    %v836 = vrot.slane %v819, 4
    %v837 = vsel %vm242, %v829, %v836
    %v839 = vunpack.c.l.s4 1934713408
    %v840 = vunpack.c.0.s8 %v839
    %v841 = vperm.slane %v835, %v840
    %v843 = vunpack.c.l.s4 1934713408
    %v844 = vunpack.c.0.s8 %v843
    %v845 = vperm.slane %v837, %v844
    %v846 = vrot.slane %v833, 4
    %v847 = vsel %vm242, %v846, %v823
    %v848 = vrot.slane %v823, 4
    %v849 = vsel %vm242, %v833, %v848
    %v851 = vunpack.c.l.s4 1934713408
    %v852 = vunpack.c.0.s8 %v851
    %v853 = vperm.slane %v847, %v852
    %v855 = vunpack.c.l.s4 1934713408
    %v856 = vunpack.c.0.s8 %v855
    %v857 = vperm.slane %v849, %v856
    %v858 = vrot.slane %v841, 4
    %v859 = vsel %vm242, 0.0, %v858
    %v860 = vrot.slane %v845, 4
    %v861 = vsel %vm242, 0.0, %v860
    %v862 = vrot.slane %v853, 4
    %v863 = vsel %vm242, 0.0, %v862
    %v864 = vrot.slane %v857, 4
    %v865 = vsel %vm242, 0.0, %v864
    %v866 = vrot.slane %v195, 4
    %v867 = vsel %vm242, 0.0, %v866
    %v869 = vunpack.c.l.s4 1983009808
    %v870 = vunpack.c.0.s8 %v869
    %v871 = vperm.slane %v195, %v870
    %v873 = vunpack.c.l.s4 1983009808
    %v874 = vunpack.c.0.s8 %v873
    %v875 = vperm.slane %v867, %v874
    %v876 = vrot.slane %v208, 4
    %v877 = vsel %vm242, 0.0, %v876
    %v879 = vunpack.c.l.s4 1983009808
    %v880 = vunpack.c.0.s8 %v879
    %v881 = vperm.slane %v208, %v880
    %v883 = vunpack.c.l.s4 1983009808
    %v884 = vunpack.c.0.s8 %v883
    %v885 = vperm.slane %v877, %v884
    %v886 = vrot.slane %v881, 4
    %v887 = vsel %vm242, %v886, %v871
    %v888 = vrot.slane %v871, 4
    %v889 = vsel %vm242, %v881, %v888
    %v891 = vunpack.c.l.s4 1934713408
    %v892 = vunpack.c.0.s8 %v891
    %v893 = vperm.slane %v887, %v892
    %v895 = vunpack.c.l.s4 1934713408
    %v896 = vunpack.c.0.s8 %v895
    %v897 = vperm.slane %v889, %v896
    %v898 = vrot.slane %v885, 4
    %v899 = vsel %vm242, %v898, %v875
    %v900 = vrot.slane %v875, 4
    %v901 = vsel %vm242, %v885, %v900
    %v903 = vunpack.c.l.s4 1934713408
    %v904 = vunpack.c.0.s8 %v903
    %v905 = vperm.slane %v899, %v904
    %v907 = vunpack.c.l.s4 1934713408
    %v908 = vunpack.c.0.s8 %v907
    %v909 = vperm.slane %v901, %v908
    %v910 = vrot.slane %v893, 4
    %v911 = vsel %vm242, 0.0, %v910
    %v912 = vrot.slane %v897, 4
    %v913 = vsel %vm242, 0.0, %v912
    %v914 = vrot.slane %v905, 4
    %v915 = vsel %vm242, 0.0, %v914
    %v916 = vrot.slane %v909, 4
    %v917 = vsel %vm242, 0.0, %v916
    %v918 = vrot.slane %v201, 4
    %v919 = vsel %vm242, 0.0, %v918
    %v921 = vunpack.c.l.s4 1983009808
    %v922 = vunpack.c.0.s8 %v921
    %v923 = vperm.slane %v201, %v922
    %v925 = vunpack.c.l.s4 1983009808
    %v926 = vunpack.c.0.s8 %v925
    %v927 = vperm.slane %v919, %v926
    %v928 = vrot.slane %v214, 4
    %v929 = vsel %vm242, 0.0, %v928
    %v931 = vunpack.c.l.s4 1983009808
    %v932 = vunpack.c.0.s8 %v931
    %v933 = vperm.slane %v214, %v932
    %v935 = vunpack.c.l.s4 1983009808
    %v936 = vunpack.c.0.s8 %v935
    %v937 = vperm.slane %v929, %v936
    %v938 = vrot.slane %v933, 4
    %v939 = vsel %vm242, %v938, %v923
    %v940 = vrot.slane %v923, 4
    %v941 = vsel %vm242, %v933, %v940
    %v943 = vunpack.c.l.s4 1934713408
    %v944 = vunpack.c.0.s8 %v943
    %v945 = vperm.slane %v939, %v944
    %v947 = vunpack.c.l.s4 1934713408
    %v948 = vunpack.c.0.s8 %v947
    %v949 = vperm.slane %v941, %v948
    %v950 = vrot.slane %v937, 4
    %v951 = vsel %vm242, %v950, %v927
    %v952 = vrot.slane %v927, 4
    %v953 = vsel %vm242, %v937, %v952
    %v955 = vunpack.c.l.s4 1934713408
    %v956 = vunpack.c.0.s8 %v955
    %v957 = vperm.slane %v951, %v956
    %v959 = vunpack.c.l.s4 1934713408
    %v960 = vunpack.c.0.s8 %v959
    %v961 = vperm.slane %v953, %v960
    %v962 = vrot.slane %v945, 4
    %v963 = vsel %vm242, 0.0, %v962
    %v964 = vrot.slane %v949, 4
    %v965 = vsel %vm242, 0.0, %v964
    %v966 = vrot.slane %v957, 4
    %v967 = vsel %vm242, 0.0, %v966
    %v968 = vrot.slane %v961, 4
    %v969 = vsel %vm242, 0.0, %v968
    %v970 = vrot.slane %v221, 4
    %v971 = vsel %vm242, 0.0, %v970
    %v973 = vunpack.c.l.s4 1983009808
    %v974 = vunpack.c.0.s8 %v973
    %v975 = vperm.slane %v221, %v974
    %v977 = vunpack.c.l.s4 1983009808
    %v978 = vunpack.c.0.s8 %v977
    %v979 = vperm.slane %v971, %v978
    %v980 = vrot.slane %v234, 4
    %v981 = vsel %vm242, 0.0, %v980
    %v983 = vunpack.c.l.s4 1983009808
    %v984 = vunpack.c.0.s8 %v983
    %v985 = vperm.slane %v234, %v984
    %v987 = vunpack.c.l.s4 1983009808
    %v988 = vunpack.c.0.s8 %v987
    %v989 = vperm.slane %v981, %v988
    %v990 = vrot.slane %v985, 4
    %v991 = vsel %vm242, %v990, %v975
    %v992 = vrot.slane %v975, 4
    %v993 = vsel %vm242, %v985, %v992
    %v995 = vunpack.c.l.s4 1934713408
    %v996 = vunpack.c.0.s8 %v995
    %v997 = vperm.slane %v991, %v996
    %v999 = vunpack.c.l.s4 1934713408
    %v1000 = vunpack.c.0.s8 %v999
    %v1001 = vperm.slane %v993, %v1000
    %v1002 = vrot.slane %v989, 4
    %v1003 = vsel %vm242, %v1002, %v979
    %v1004 = vrot.slane %v979, 4
    %v1005 = vsel %vm242, %v989, %v1004
    %v1007 = vunpack.c.l.s4 1934713408
    %v1008 = vunpack.c.0.s8 %v1007
    %v1009 = vperm.slane %v1003, %v1008
    %v1011 = vunpack.c.l.s4 1934713408
    %v1012 = vunpack.c.0.s8 %v1011
    %v1013 = vperm.slane %v1005, %v1012
    %v1014 = vrot.slane %v997, 4
    %v1015 = vsel %vm242, 0.0, %v1014
    %v1016 = vrot.slane %v1001, 4
    %v1017 = vsel %vm242, 0.0, %v1016
    %v1018 = vrot.slane %v1009, 4
    %v1019 = vsel %vm242, 0.0, %v1018
    %v1020 = vrot.slane %v1013, 4
    %v1021 = vsel %vm242, 0.0, %v1020
    %v1022 = vrot.slane %v227, 4
    %v1023 = vsel %vm242, 0.0, %v1022
    %v1025 = vunpack.c.l.s4 1983009808
    %v1026 = vunpack.c.0.s8 %v1025
    %v1027 = vperm.slane %v227, %v1026
    %v1029 = vunpack.c.l.s4 1983009808
    %v1030 = vunpack.c.0.s8 %v1029
    %v1031 = vperm.slane %v1023, %v1030
    %v1032 = vrot.slane %v240, 4
    %v1033 = vsel %vm242, 0.0, %v1032
    %v1035 = vunpack.c.l.s4 1983009808
    %v1036 = vunpack.c.0.s8 %v1035
    %v1037 = vperm.slane %v240, %v1036
    %v1039 = vunpack.c.l.s4 1983009808
    %v1040 = vunpack.c.0.s8 %v1039
    %v1041 = vperm.slane %v1033, %v1040
    %v1042 = vrot.slane %v1037, 4
    %v1043 = vsel %vm242, %v1042, %v1027
    %v1044 = vrot.slane %v1027, 4
    %v1045 = vsel %vm242, %v1037, %v1044
    %v1047 = vunpack.c.l.s4 1934713408
    %v1048 = vunpack.c.0.s8 %v1047
    %v1049 = vperm.slane %v1043, %v1048
    %v1051 = vunpack.c.l.s4 1934713408
    %v1052 = vunpack.c.0.s8 %v1051
    %v1053 = vperm.slane %v1045, %v1052
    %v1054 = vrot.slane %v1041, 4
    %v1055 = vsel %vm242, %v1054, %v1031
    %v1056 = vrot.slane %v1031, 4
    %v1057 = vsel %vm242, %v1041, %v1056
    %v1059 = vunpack.c.l.s4 1934713408
    %v1060 = vunpack.c.0.s8 %v1059
    %v1061 = vperm.slane %v1055, %v1060
    %v1063 = vunpack.c.l.s4 1934713408
    %v1064 = vunpack.c.0.s8 %v1063
    %v1065 = vperm.slane %v1057, %v1064
    %v1066 = vrot.slane %v1049, 4
    %v1067 = vsel %vm242, 0.0, %v1066
    %v1068 = vrot.slane %v1053, 4
    %v1069 = vsel %vm242, 0.0, %v1068
    %v1070 = vrot.slane %v1061, 4
    %v1071 = vsel %vm242, 0.0, %v1070
    %v1072 = vrot.slane %v1065, 4
    %v1073 = vsel %vm242, 0.0, %v1072
    %1082 = vrot.lane.b32.xlu0 %v287, 2
    %v1083 = vpop.permute.xlu0 %1082
    %1084 = vrot.lane.b32.xlu0 %v391, 2
    %v1085 = vpop.permute.xlu0 %1084
    %1086 = vrot.lane.b32.xlu0 %v495, 2
    %v1087 = vpop.permute.xlu0 %1086
    %1088 = vrot.lane.b32.xlu0 %v599, 2
    %v1089 = vpop.permute.xlu0 %1088
    %1090 = vrot.lane.b32.xlu0 %v703, 2
    %v1091 = vpop.permute.xlu0 %1090
    %1092 = vrot.lane.b32.xlu0 %v807, 2
    %v1093 = vpop.permute.xlu0 %1092
    %1094 = vrot.lane.b32.xlu0 %v911, 2
    %v1095 = vpop.permute.xlu0 %1094
    %1096 = vrot.lane.b32.xlu0 %v1015, 2
    %v1097 = vpop.permute.xlu0 %1096
    %1114 = vrot.lane.b32.xlu0 %v273, 4
    %v1115 = vpop.permute.xlu0 %1114
    %1116 = vrot.lane.b32.xlu0 %v377, 4
    %v1117 = vpop.permute.xlu0 %1116
    %1118 = vrot.lane.b32.xlu0 %v481, 4
    %v1119 = vpop.permute.xlu0 %1118
    %1120 = vrot.lane.b32.xlu0 %v585, 4
    %v1121 = vpop.permute.xlu0 %1120
    %1122 = vrot.lane.b32.xlu0 %v689, 4
    %v1123 = vpop.permute.xlu0 %1122
    %1124 = vrot.lane.b32.xlu0 %v793, 4
    %v1125 = vpop.permute.xlu0 %1124
    %1126 = vrot.lane.b32.xlu0 %v897, 4
    %v1127 = vpop.permute.xlu0 %1126
    %1128 = vrot.lane.b32.xlu0 %v1001, 4
    %v1129 = vpop.permute.xlu0 %1128
    %1146 = vrot.lane.b32.xlu0 %v289, 6
    %v1147 = vpop.permute.xlu0 %1146
    %1148 = vrot.lane.b32.xlu0 %v393, 6
    %v1149 = vpop.permute.xlu0 %1148
    %1150 = vrot.lane.b32.xlu0 %v497, 6
    %v1151 = vpop.permute.xlu0 %1150
    %1152 = vrot.lane.b32.xlu0 %v601, 6
    %v1153 = vpop.permute.xlu0 %1152
    %1154 = vrot.lane.b32.xlu0 %v705, 6
    %v1155 = vpop.permute.xlu0 %1154
    %1156 = vrot.lane.b32.xlu0 %v809, 6
    %v1157 = vpop.permute.xlu0 %1156
    %1158 = vrot.lane.b32.xlu0 %v913, 6
    %v1159 = vpop.permute.xlu0 %1158
    %1160 = vrot.lane.b32.xlu0 %v1017, 6
    %v1161 = vpop.permute.xlu0 %1160
    %1178 = vrot.lane.b32.xlu0 %v281, 8
    %v1179 = vpop.permute.xlu0 %1178
    %1180 = vrot.lane.b32.xlu0 %v385, 8
    %v1181 = vpop.permute.xlu0 %1180
    %1182 = vrot.lane.b32.xlu0 %v489, 8
    %v1183 = vpop.permute.xlu0 %1182
    %1184 = vrot.lane.b32.xlu0 %v593, 8
    %v1185 = vpop.permute.xlu0 %1184
    %1186 = vrot.lane.b32.xlu0 %v697, 8
    %v1187 = vpop.permute.xlu0 %1186
    %1188 = vrot.lane.b32.xlu0 %v801, 8
    %v1189 = vpop.permute.xlu0 %1188
    %1190 = vrot.lane.b32.xlu0 %v905, 8
    %v1191 = vpop.permute.xlu0 %1190
    %1192 = vrot.lane.b32.xlu0 %v1009, 8
    %v1193 = vpop.permute.xlu0 %1192
    %1210 = vrot.lane.b32.xlu0 %v291, 10
    %v1211 = vpop.permute.xlu0 %1210
    %1212 = vrot.lane.b32.xlu0 %v395, 10
    %v1213 = vpop.permute.xlu0 %1212
    %1214 = vrot.lane.b32.xlu0 %v499, 10
    %v1215 = vpop.permute.xlu0 %1214
    %1216 = vrot.lane.b32.xlu0 %v603, 10
    %v1217 = vpop.permute.xlu0 %1216
    %1218 = vrot.lane.b32.xlu0 %v707, 10
    %v1219 = vpop.permute.xlu0 %1218
    %1220 = vrot.lane.b32.xlu0 %v811, 10
    %v1221 = vpop.permute.xlu0 %1220
    %1222 = vrot.lane.b32.xlu0 %v915, 10
    %v1223 = vpop.permute.xlu0 %1222
    %1224 = vrot.lane.b32.xlu0 %v1019, 10
    %v1225 = vpop.permute.xlu0 %1224
    %1242 = vrot.lane.b32.xlu0 %v285, 12
    %v1243 = vpop.permute.xlu0 %1242
    %1244 = vrot.lane.b32.xlu0 %v389, 12
    %v1245 = vpop.permute.xlu0 %1244
    %1246 = vrot.lane.b32.xlu0 %v493, 12
    %v1247 = vpop.permute.xlu0 %1246
    %1248 = vrot.lane.b32.xlu0 %v597, 12
    %v1249 = vpop.permute.xlu0 %1248
    %1250 = vrot.lane.b32.xlu0 %v701, 12
    %v1251 = vpop.permute.xlu0 %1250
    %1252 = vrot.lane.b32.xlu0 %v805, 12
    %v1253 = vpop.permute.xlu0 %1252
    %1254 = vrot.lane.b32.xlu0 %v909, 12
    %v1255 = vpop.permute.xlu0 %1254
    %1256 = vrot.lane.b32.xlu0 %v1013, 12
    %v1257 = vpop.permute.xlu0 %1256
    %1274 = vrot.lane.b32.xlu0 %v293, 14
    %v1275 = vpop.permute.xlu0 %1274
    %1276 = vrot.lane.b32.xlu0 %v397, 14
    %v1277 = vpop.permute.xlu0 %1276
    %1278 = vrot.lane.b32.xlu0 %v501, 14
    %v1279 = vpop.permute.xlu0 %1278
    %1280 = vrot.lane.b32.xlu0 %v605, 14
    %v1281 = vpop.permute.xlu0 %1280
    %1282 = vrot.lane.b32.xlu0 %v709, 14
    %v1283 = vpop.permute.xlu0 %1282
    %1284 = vrot.lane.b32.xlu0 %v813, 14
    %v1285 = vpop.permute.xlu0 %1284
    %1286 = vrot.lane.b32.xlu0 %v917, 14
    %v1287 = vpop.permute.xlu0 %1286
    %1288 = vrot.lane.b32.xlu0 %v1021, 14
    %v1289 = vpop.permute.xlu0 %1288
    %1306 = vrot.lane.b32.xlu0 %v321, 16
    %v1307 = vpop.permute.xlu0 %1306
    %1308 = vrot.lane.b32.xlu0 %v425, 16
    %v1309 = vpop.permute.xlu0 %1308
    %1310 = vrot.lane.b32.xlu0 %v529, 16
    %v1311 = vpop.permute.xlu0 %1310
    %1312 = vrot.lane.b32.xlu0 %v633, 16
    %v1313 = vpop.permute.xlu0 %1312
    %1314 = vrot.lane.b32.xlu0 %v737, 16
    %v1315 = vpop.permute.xlu0 %1314
    %1316 = vrot.lane.b32.xlu0 %v841, 16
    %v1317 = vpop.permute.xlu0 %1316
    %1318 = vrot.lane.b32.xlu0 %v945, 16
    %v1319 = vpop.permute.xlu0 %1318
    %1320 = vrot.lane.b32.xlu0 %v1049, 16
    %v1321 = vpop.permute.xlu0 %1320
    %1338 = vrot.lane.b32.xlu0 %v339, 18
    %v1339 = vpop.permute.xlu0 %1338
    %1340 = vrot.lane.b32.xlu0 %v443, 18
    %v1341 = vpop.permute.xlu0 %1340
    %1342 = vrot.lane.b32.xlu0 %v547, 18
    %v1343 = vpop.permute.xlu0 %1342
    %1344 = vrot.lane.b32.xlu0 %v651, 18
    %v1345 = vpop.permute.xlu0 %1344
    %1346 = vrot.lane.b32.xlu0 %v755, 18
    %v1347 = vpop.permute.xlu0 %1346
    %1348 = vrot.lane.b32.xlu0 %v859, 18
    %v1349 = vpop.permute.xlu0 %1348
    %1350 = vrot.lane.b32.xlu0 %v963, 18
    %v1351 = vpop.permute.xlu0 %1350
    %1352 = vrot.lane.b32.xlu0 %v1067, 18
    %v1353 = vpop.permute.xlu0 %1352
    %1370 = vrot.lane.b32.xlu0 %v325, 20
    %v1371 = vpop.permute.xlu0 %1370
    %1372 = vrot.lane.b32.xlu0 %v429, 20
    %v1373 = vpop.permute.xlu0 %1372
    %1374 = vrot.lane.b32.xlu0 %v533, 20
    %v1375 = vpop.permute.xlu0 %1374
    %1376 = vrot.lane.b32.xlu0 %v637, 20
    %v1377 = vpop.permute.xlu0 %1376
    %1378 = vrot.lane.b32.xlu0 %v741, 20
    %v1379 = vpop.permute.xlu0 %1378
    %1380 = vrot.lane.b32.xlu0 %v845, 20
    %v1381 = vpop.permute.xlu0 %1380
    %1382 = vrot.lane.b32.xlu0 %v949, 20
    %v1383 = vpop.permute.xlu0 %1382
    %1384 = vrot.lane.b32.xlu0 %v1053, 20
    %v1385 = vpop.permute.xlu0 %1384
    %1402 = vrot.lane.b32.xlu0 %v341, 22
    %v1403 = vpop.permute.xlu0 %1402
    %1404 = vrot.lane.b32.xlu0 %v445, 22
    %v1405 = vpop.permute.xlu0 %1404
    %1406 = vrot.lane.b32.xlu0 %v549, 22
    %v1407 = vpop.permute.xlu0 %1406
    %1408 = vrot.lane.b32.xlu0 %v653, 22
    %v1409 = vpop.permute.xlu0 %1408
    %1410 = vrot.lane.b32.xlu0 %v757, 22
    %v1411 = vpop.permute.xlu0 %1410
    %1412 = vrot.lane.b32.xlu0 %v861, 22
    %v1413 = vpop.permute.xlu0 %1412
    %1414 = vrot.lane.b32.xlu0 %v965, 22
    %v1415 = vpop.permute.xlu0 %1414
    %1416 = vrot.lane.b32.xlu0 %v1069, 22
    %v1417 = vpop.permute.xlu0 %1416
    %1434 = vrot.lane.b32.xlu0 %v333, 24
    %v1435 = vpop.permute.xlu0 %1434
    %1436 = vrot.lane.b32.xlu0 %v437, 24
    %v1437 = vpop.permute.xlu0 %1436
    %1438 = vrot.lane.b32.xlu0 %v541, 24
    %v1439 = vpop.permute.xlu0 %1438
    %1440 = vrot.lane.b32.xlu0 %v645, 24
    %v1441 = vpop.permute.xlu0 %1440
    %1442 = vrot.lane.b32.xlu0 %v749, 24
    %v1443 = vpop.permute.xlu0 %1442
    %1444 = vrot.lane.b32.xlu0 %v853, 24
    %v1445 = vpop.permute.xlu0 %1444
    %1446 = vrot.lane.b32.xlu0 %v957, 24
    %v1447 = vpop.permute.xlu0 %1446
    %1448 = vrot.lane.b32.xlu0 %v1061, 24
    %v1449 = vpop.permute.xlu0 %1448
    %1466 = vrot.lane.b32.xlu0 %v343, 26
    %v1467 = vpop.permute.xlu0 %1466
    %1468 = vrot.lane.b32.xlu0 %v447, 26
    %v1469 = vpop.permute.xlu0 %1468
    %1470 = vrot.lane.b32.xlu0 %v551, 26
    %v1471 = vpop.permute.xlu0 %1470
    %1472 = vrot.lane.b32.xlu0 %v655, 26
    %v1473 = vpop.permute.xlu0 %1472
    %1474 = vrot.lane.b32.xlu0 %v759, 26
    %v1475 = vpop.permute.xlu0 %1474
    %1476 = vrot.lane.b32.xlu0 %v863, 26
    %v1477 = vpop.permute.xlu0 %1476
    %1478 = vrot.lane.b32.xlu0 %v967, 26
    %v1479 = vpop.permute.xlu0 %1478
    %1480 = vrot.lane.b32.xlu0 %v1071, 26
    %v1481 = vpop.permute.xlu0 %1480
    %1498 = vrot.lane.b32.xlu0 %v337, 28
    %v1499 = vpop.permute.xlu0 %1498
    %1500 = vrot.lane.b32.xlu0 %v441, 28
    %v1501 = vpop.permute.xlu0 %1500
    %1502 = vrot.lane.b32.xlu0 %v545, 28
    %v1503 = vpop.permute.xlu0 %1502
    %1504 = vrot.lane.b32.xlu0 %v649, 28
    %v1505 = vpop.permute.xlu0 %1504
    %1506 = vrot.lane.b32.xlu0 %v753, 28
    %v1507 = vpop.permute.xlu0 %1506
    %1508 = vrot.lane.b32.xlu0 %v857, 28
    %v1509 = vpop.permute.xlu0 %1508
    %1510 = vrot.lane.b32.xlu0 %v961, 28
    %v1511 = vpop.permute.xlu0 %1510
    %1512 = vrot.lane.b32.xlu0 %v1065, 28
    %v1513 = vpop.permute.xlu0 %1512
    %1530 = vrot.lane.b32.xlu0 %v345, 30
    %v1531 = vpop.permute.xlu0 %1530
    %1532 = vrot.lane.b32.xlu0 %v449, 30
    %v1533 = vpop.permute.xlu0 %1532
    %1534 = vrot.lane.b32.xlu0 %v553, 30
    %v1535 = vpop.permute.xlu0 %1534
    %1536 = vrot.lane.b32.xlu0 %v657, 30
    %v1537 = vpop.permute.xlu0 %1536
    %1538 = vrot.lane.b32.xlu0 %v761, 30
    %v1539 = vpop.permute.xlu0 %1538
    %1540 = vrot.lane.b32.xlu0 %v865, 30
    %v1541 = vpop.permute.xlu0 %1540
    %1542 = vrot.lane.b32.xlu0 %v969, 30
    %v1543 = vpop.permute.xlu0 %1542
    %1544 = vrot.lane.b32.xlu0 %v1073, 30
    %v1545 = vpop.permute.xlu0 %1544
    %vm1554 = vcmask 15360
    %v1555 = vsel %vm1554, %v269, %v1083
    %v1556 = vsel %vm1554, %v373, %v1085
    %v1557 = vsel %vm1554, %v477, %v1087
    %v1558 = vsel %vm1554, %v581, %v1089
    %v1559 = vsel %vm1554, %v685, %v1091
    %v1560 = vsel %vm1554, %v789, %v1093
    %v1561 = vsel %vm1554, %v893, %v1095
    %v1562 = vsel %vm1554, %v997, %v1097
    %vm1563 = vcmask 31744
    %v1564 = vsel %vm1563, %v1555, %v1115
    %v1565 = vsel %vm1563, %v1556, %v1117
    %v1566 = vsel %vm1563, %v1557, %v1119
    %v1567 = vsel %vm1563, %v1558, %v1121
    %v1568 = vsel %vm1563, %v1559, %v1123
    %v1569 = vsel %vm1563, %v1560, %v1125
    %v1570 = vsel %vm1563, %v1561, %v1127
    %v1571 = vsel %vm1563, %v1562, %v1129
    %vm1572 = vcmask 48128
    %v1573 = vsel %vm1572, %v1564, %v1147
    %v1574 = vsel %vm1572, %v1565, %v1149
    %v1575 = vsel %vm1572, %v1566, %v1151
    %v1576 = vsel %vm1572, %v1567, %v1153
    %v1577 = vsel %vm1572, %v1568, %v1155
    %v1578 = vsel %vm1572, %v1569, %v1157
    %v1579 = vsel %vm1572, %v1570, %v1159
    %v1580 = vsel %vm1572, %v1571, %v1161
    %vm1581 = vcmask 64512
    %v1582 = vsel %vm1581, %v1573, %v1179
    %v1583 = vsel %vm1581, %v1574, %v1181
    %v1584 = vsel %vm1581, %v1575, %v1183
    %v1585 = vsel %vm1581, %v1576, %v1185
    %v1586 = vsel %vm1581, %v1577, %v1187
    %v1587 = vsel %vm1581, %v1578, %v1189
    %v1588 = vsel %vm1581, %v1579, %v1191
    %v1589 = vsel %vm1581, %v1580, %v1193
    %vm1590 = vcmask 80896
    %v1591 = vsel %vm1590, %v1582, %v1211
    %v1592 = vsel %vm1590, %v1583, %v1213
    %v1593 = vsel %vm1590, %v1584, %v1215
    %v1594 = vsel %vm1590, %v1585, %v1217
    %v1595 = vsel %vm1590, %v1586, %v1219
    %v1596 = vsel %vm1590, %v1587, %v1221
    %v1597 = vsel %vm1590, %v1588, %v1223
    %v1598 = vsel %vm1590, %v1589, %v1225
    %vm1599 = vcmask 97280
    %v1600 = vsel %vm1599, %v1591, %v1243
    %v1601 = vsel %vm1599, %v1592, %v1245
    %v1602 = vsel %vm1599, %v1593, %v1247
    %v1603 = vsel %vm1599, %v1594, %v1249
    %v1604 = vsel %vm1599, %v1595, %v1251
    %v1605 = vsel %vm1599, %v1596, %v1253
    %v1606 = vsel %vm1599, %v1597, %v1255
    %v1607 = vsel %vm1599, %v1598, %v1257
    %vm1608 = vcmask 113664
    %v1609 = vsel %vm1608, %v1600, %v1275
    %v1610 = vsel %vm1608, %v1601, %v1277
    %v1611 = vsel %vm1608, %v1602, %v1279
    %v1612 = vsel %vm1608, %v1603, %v1281
    %v1613 = vsel %vm1608, %v1604, %v1283
    %v1614 = vsel %vm1608, %v1605, %v1285
    %v1615 = vsel %vm1608, %v1606, %v1287
    %v1616 = vsel %vm1608, %v1607, %v1289
    %vm1617 = vcmask 130048
    %v1618 = vsel %vm1617, %v1609, %v1307
    %v1619 = vsel %vm1617, %v1610, %v1309
    %v1620 = vsel %vm1617, %v1611, %v1311
    %v1621 = vsel %vm1617, %v1612, %v1313
    %v1622 = vsel %vm1617, %v1613, %v1315
    %v1623 = vsel %vm1617, %v1614, %v1317
    %v1624 = vsel %vm1617, %v1615, %v1319
    %v1625 = vsel %vm1617, %v1616, %v1321
    %vm1626 = vcmask 146432
    %v1627 = vsel %vm1626, %v1618, %v1339
    %v1628 = vsel %vm1626, %v1619, %v1341
    %v1629 = vsel %vm1626, %v1620, %v1343
    %v1630 = vsel %vm1626, %v1621, %v1345
    %v1631 = vsel %vm1626, %v1622, %v1347
    %v1632 = vsel %vm1626, %v1623, %v1349
    %v1633 = vsel %vm1626, %v1624, %v1351
    %v1634 = vsel %vm1626, %v1625, %v1353
    %vm1635 = vcmask 162816
    %v1636 = vsel %vm1635, %v1627, %v1371
    %v1637 = vsel %vm1635, %v1628, %v1373
    %v1638 = vsel %vm1635, %v1629, %v1375
    %v1639 = vsel %vm1635, %v1630, %v1377
    %v1640 = vsel %vm1635, %v1631, %v1379
    %v1641 = vsel %vm1635, %v1632, %v1381
    %v1642 = vsel %vm1635, %v1633, %v1383
    %v1643 = vsel %vm1635, %v1634, %v1385
    %vm1644 = vcmask 179200
    %v1645 = vsel %vm1644, %v1636, %v1403
    %v1646 = vsel %vm1644, %v1637, %v1405
    %v1647 = vsel %vm1644, %v1638, %v1407
    %v1648 = vsel %vm1644, %v1639, %v1409
    %v1649 = vsel %vm1644, %v1640, %v1411
    %v1650 = vsel %vm1644, %v1641, %v1413
    %v1651 = vsel %vm1644, %v1642, %v1415
    %v1652 = vsel %vm1644, %v1643, %v1417
    %vm1653 = vcmask 195584
    %v1654 = vsel %vm1653, %v1645, %v1435
    %v1655 = vsel %vm1653, %v1646, %v1437
    %v1656 = vsel %vm1653, %v1647, %v1439
    %v1657 = vsel %vm1653, %v1648, %v1441
    %v1658 = vsel %vm1653, %v1649, %v1443
    %v1659 = vsel %vm1653, %v1650, %v1445
    %v1660 = vsel %vm1653, %v1651, %v1447
    %v1661 = vsel %vm1653, %v1652, %v1449
    %vm1662 = vcmask 211968
    %v1663 = vsel %vm1662, %v1654, %v1467
    %v1664 = vsel %vm1662, %v1655, %v1469
    %v1665 = vsel %vm1662, %v1656, %v1471
    %v1666 = vsel %vm1662, %v1657, %v1473
    %v1667 = vsel %vm1662, %v1658, %v1475
    %v1668 = vsel %vm1662, %v1659, %v1477
    %v1669 = vsel %vm1662, %v1660, %v1479
    %v1670 = vsel %vm1662, %v1661, %v1481
    %vm1671 = vcmask 228352
    %v1672 = vsel %vm1671, %v1663, %v1499
    %v1673 = vsel %vm1671, %v1664, %v1501
    %v1674 = vsel %vm1671, %v1665, %v1503
    %v1675 = vsel %vm1671, %v1666, %v1505
    %v1676 = vsel %vm1671, %v1667, %v1507
    %v1677 = vsel %vm1671, %v1668, %v1509
    %v1678 = vsel %vm1671, %v1669, %v1511
    %v1679 = vsel %vm1671, %v1670, %v1513
    %vm1680 = vcmask 244736
    %v1681 = vsel %vm1680, %v1672, %v1531
    %v1682 = vsel %vm1680, %v1673, %v1533
    %v1683 = vsel %vm1680, %v1674, %v1535
    %v1684 = vsel %vm1680, %v1675, %v1537
    %v1685 = vsel %vm1680, %v1676, %v1539
    %v1686 = vsel %vm1680, %v1677, %v1541
    %v1687 = vsel %vm1680, %v1678, %v1543
    %v1688 = vsel %vm1680, %v1679, %v1545
    %vm1689 = vcmask 254976
    %1690 = vst.msk [vmem:[#allocation5] sm:$0x3] %vm1689, %v1681
    %1691 = vst.msk [vmem:[#allocation5 + $0x8] sm:$0x3] %vm1689, %v1682
    %1692 = vst.msk [vmem:[#allocation5 + $0x10] sm:$0x3] %vm1689, %v1683
    %1693 = vst.msk [vmem:[#allocation5 + $0x18] sm:$0x3] %vm1689, %v1684
    %1694 = vst.msk [vmem:[#allocation5 + $0x20] sm:$0x3] %vm1689, %v1685
    %1695 = vst.msk [vmem:[#allocation5 + $0x28] sm:$0x3] %vm1689, %v1686
    %1696 = vst.msk [vmem:[#allocation5 + $0x30] sm:$0x3] %vm1689, %v1687
    %1697 = vst.msk [vmem:[#allocation5 + $0x38] sm:$0x3] %vm1689, %v1688
    %1706 = vrot.lane.b32.xlu0 %v1681, 32
    %v1707 = vpop.permute.xlu0 %1706
    %1708 = vrot.lane.b32.xlu0 %v1682, 32
    %v1709 = vpop.permute.xlu0 %1708
    %1710 = vrot.lane.b32.xlu0 %v1683, 32
    %v1711 = vpop.permute.xlu0 %1710
    %1712 = vrot.lane.b32.xlu0 %v1684, 32
    %v1713 = vpop.permute.xlu0 %1712
    %1714 = vrot.lane.b32.xlu0 %v1685, 32
    %v1715 = vpop.permute.xlu0 %1714
    %1716 = vrot.lane.b32.xlu0 %v1686, 32
    %v1717 = vpop.permute.xlu0 %1716
    %1718 = vrot.lane.b32.xlu0 %v1687, 32
    %v1719 = vpop.permute.xlu0 %1718
    %1720 = vrot.lane.b32.xlu0 %v1688, 32
    %v1721 = vpop.permute.xlu0 %1720
    %vm1730 = vcmask 517376
    %1731 = vst.msk [vmem:[#allocation5] sm:$0x3] %vm1730, %v1707
    %1732 = vst.msk [vmem:[#allocation5 + $0x8] sm:$0x3] %vm1730, %v1709
    %1733 = vst.msk [vmem:[#allocation5 + $0x10] sm:$0x3] %vm1730, %v1711
    %1734 = vst.msk [vmem:[#allocation5 + $0x18] sm:$0x3] %vm1730, %v1713
    %1735 = vst.msk [vmem:[#allocation5 + $0x20] sm:$0x3] %vm1730, %v1715
    %1736 = vst.msk [vmem:[#allocation5 + $0x28] sm:$0x3] %vm1730, %v1717
    %1737 = vst.msk [vmem:[#allocation5 + $0x30] sm:$0x3] %vm1730, %v1719
    %1738 = vst.msk [vmem:[#allocation5 + $0x38] sm:$0x3] %vm1730, %v1721
    %v1739 = vld [vmem:[#allocation2] sm:$0x3]
    %v1740 = vld [vmem:[#allocation2 + $0x2] sm:$0x3]
    %v1741 = vld [vmem:[#allocation2 + $0x4] sm:$0x3]
    %v1742 = vld [vmem:[#allocation2 + $0x6] sm:$0x3]
    %v1743 = vld [vmem:[#allocation2 + $0x8] sm:$0x3]
    %v1744 = vld [vmem:[#allocation2 + $0xa] sm:$0x3]
    %v1745 = vld [vmem:[#allocation2 + $0xc] sm:$0x3]
    %v1746 = vld [vmem:[#allocation2 + $0xe] sm:$0x3]
    %v1747 = vperm.slane %v1739, 0
    %v1748 = vlaneseq
    %v1749 = vshrl.u32 %v1748, 7
    %v1750 = vadd.s32 %v1749, 16
    %1751 = vset.pattern.permute.xlu0 %v1750
    %1752 = vperm.xlu0 %1751, %v1747
    %v1753 = vpop.permute.xlu0 %1752
    %v1754 = vlaneseq
    %v1755 = vshrl.u32 %v1754, 7
    %v1756 = vadd.s32 %v1755, 24
    %1757 = vset.pattern.permute.xlu0 %v1756
    %1758 = vperm.xlu0 %1757, %v1747
    %v1759 = vpop.permute.xlu0 %1758
    %v1760 = vperm.slane %v1739, 1
    %v1761 = vlaneseq
    %v1762 = vshrl.u32 %v1761, 7
    %v1763 = vadd.s32 %v1762, 16
    %1764 = vset.pattern.permute.xlu0 %v1763
    %1765 = vperm.xlu0 %1764, %v1760
    %v1766 = vpop.permute.xlu0 %1765
    %v1767 = vlaneseq
    %v1768 = vshrl.u32 %v1767, 7
    %v1769 = vadd.s32 %v1768, 24
    %1770 = vset.pattern.permute.xlu0 %v1769
    %1771 = vperm.xlu0 %1770, %v1760
    %v1772 = vpop.permute.xlu0 %1771
    %v1773 = vperm.slane %v1740, 0
    %v1774 = vlaneseq
    %v1775 = vshrl.u32 %v1774, 7
    %v1776 = vadd.s32 %v1775, 16
    %1777 = vset.pattern.permute.xlu0 %v1776
    %1778 = vperm.xlu0 %1777, %v1773
    %v1779 = vpop.permute.xlu0 %1778
    %v1780 = vlaneseq
    %v1781 = vshrl.u32 %v1780, 7
    %v1782 = vadd.s32 %v1781, 24
    %1783 = vset.pattern.permute.xlu0 %v1782
    %1784 = vperm.xlu0 %1783, %v1773
    %v1785 = vpop.permute.xlu0 %1784
    %v1786 = vperm.slane %v1740, 1
    %v1787 = vlaneseq
    %v1788 = vshrl.u32 %v1787, 7
    %v1789 = vadd.s32 %v1788, 16
    %1790 = vset.pattern.permute.xlu0 %v1789
    %1791 = vperm.xlu0 %1790, %v1786
    %v1792 = vpop.permute.xlu0 %1791
    %v1793 = vlaneseq
    %v1794 = vshrl.u32 %v1793, 7
    %v1795 = vadd.s32 %v1794, 24
    %1796 = vset.pattern.permute.xlu0 %v1795
    %1797 = vperm.xlu0 %1796, %v1786
    %v1798 = vpop.permute.xlu0 %1797
    %v1799 = vperm.slane %v1741, 0
    %v1800 = vlaneseq
    %v1801 = vshrl.u32 %v1800, 7
    %v1802 = vadd.s32 %v1801, 16
    %1803 = vset.pattern.permute.xlu0 %v1802
    %1804 = vperm.xlu0 %1803, %v1799
    %v1805 = vpop.permute.xlu0 %1804
    %v1806 = vlaneseq
    %v1807 = vshrl.u32 %v1806, 7
    %v1808 = vadd.s32 %v1807, 24
    %1809 = vset.pattern.permute.xlu0 %v1808
    %1810 = vperm.xlu0 %1809, %v1799
    %v1811 = vpop.permute.xlu0 %1810
    %v1812 = vperm.slane %v1741, 1
    %v1813 = vlaneseq
    %v1814 = vshrl.u32 %v1813, 7
    %v1815 = vadd.s32 %v1814, 16
    %1816 = vset.pattern.permute.xlu0 %v1815
    %1817 = vperm.xlu0 %1816, %v1812
    %v1818 = vpop.permute.xlu0 %1817
    %v1819 = vlaneseq
    %v1820 = vshrl.u32 %v1819, 7
    %v1821 = vadd.s32 %v1820, 24
    %1822 = vset.pattern.permute.xlu0 %v1821
    %1823 = vperm.xlu0 %1822, %v1812
    %v1824 = vpop.permute.xlu0 %1823
    %v1825 = vperm.slane %v1742, 0
    %v1826 = vlaneseq
    %v1827 = vshrl.u32 %v1826, 7
    %v1828 = vadd.s32 %v1827, 16
    %1829 = vset.pattern.permute.xlu0 %v1828
    %1830 = vperm.xlu0 %1829, %v1825
    %v1831 = vpop.permute.xlu0 %1830
    %v1832 = vlaneseq
    %v1833 = vshrl.u32 %v1832, 7
    %v1834 = vadd.s32 %v1833, 24
    %1835 = vset.pattern.permute.xlu0 %v1834
    %1836 = vperm.xlu0 %1835, %v1825
    %v1837 = vpop.permute.xlu0 %1836
    %v1838 = vperm.slane %v1742, 1
    %v1839 = vlaneseq
    %v1840 = vshrl.u32 %v1839, 7
    %v1841 = vadd.s32 %v1840, 16
    %1842 = vset.pattern.permute.xlu0 %v1841
    %1843 = vperm.xlu0 %1842, %v1838
    %v1844 = vpop.permute.xlu0 %1843
    %v1845 = vlaneseq
    %v1846 = vshrl.u32 %v1845, 7
    %v1847 = vadd.s32 %v1846, 24
    %1848 = vset.pattern.permute.xlu0 %v1847
    %1849 = vperm.xlu0 %1848, %v1838
    %v1850 = vpop.permute.xlu0 %1849
    %v1851 = vperm.slane %v1743, 0
    %v1852 = vlaneseq
    %v1853 = vshrl.u32 %v1852, 7
    %v1854 = vadd.s32 %v1853, 16
    %1855 = vset.pattern.permute.xlu0 %v1854
    %1856 = vperm.xlu0 %1855, %v1851
    %v1857 = vpop.permute.xlu0 %1856
    %v1858 = vlaneseq
    %v1859 = vshrl.u32 %v1858, 7
    %v1860 = vadd.s32 %v1859, 24
    %1861 = vset.pattern.permute.xlu0 %v1860
    %1862 = vperm.xlu0 %1861, %v1851
    %v1863 = vpop.permute.xlu0 %1862
    %v1864 = vperm.slane %v1743, 1
    %v1865 = vlaneseq
    %v1866 = vshrl.u32 %v1865, 7
    %v1867 = vadd.s32 %v1866, 16
    %1868 = vset.pattern.permute.xlu0 %v1867
    %1869 = vperm.xlu0 %1868, %v1864
    %v1870 = vpop.permute.xlu0 %1869
    %v1871 = vlaneseq
    %v1872 = vshrl.u32 %v1871, 7
    %v1873 = vadd.s32 %v1872, 24
    %1874 = vset.pattern.permute.xlu0 %v1873
    %1875 = vperm.xlu0 %1874, %v1864
    %v1876 = vpop.permute.xlu0 %1875
    %v1877 = vperm.slane %v1744, 0
    %v1878 = vlaneseq
    %v1879 = vshrl.u32 %v1878, 7
    %v1880 = vadd.s32 %v1879, 16
    %1881 = vset.pattern.permute.xlu0 %v1880
    %1882 = vperm.xlu0 %1881, %v1877
    %v1883 = vpop.permute.xlu0 %1882
    %v1884 = vlaneseq
    %v1885 = vshrl.u32 %v1884, 7
    %v1886 = vadd.s32 %v1885, 24
    %1887 = vset.pattern.permute.xlu0 %v1886
    %1888 = vperm.xlu0 %1887, %v1877
    %v1889 = vpop.permute.xlu0 %1888
    %v1890 = vperm.slane %v1744, 1
    %v1891 = vlaneseq
    %v1892 = vshrl.u32 %v1891, 7
    %v1893 = vadd.s32 %v1892, 16
    %1894 = vset.pattern.permute.xlu0 %v1893
    %1895 = vperm.xlu0 %1894, %v1890
    %v1896 = vpop.permute.xlu0 %1895
    %v1897 = vlaneseq
    %v1898 = vshrl.u32 %v1897, 7
    %v1899 = vadd.s32 %v1898, 24
    %1900 = vset.pattern.permute.xlu0 %v1899
    %1901 = vperm.xlu0 %1900, %v1890
    %v1902 = vpop.permute.xlu0 %1901
    %v1903 = vperm.slane %v1745, 0
    %v1904 = vlaneseq
    %v1905 = vshrl.u32 %v1904, 7
    %v1906 = vadd.s32 %v1905, 16
    %1907 = vset.pattern.permute.xlu0 %v1906
    %1908 = vperm.xlu0 %1907, %v1903
    %v1909 = vpop.permute.xlu0 %1908
    %v1910 = vlaneseq
    %v1911 = vshrl.u32 %v1910, 7
    %v1912 = vadd.s32 %v1911, 24
    %1913 = vset.pattern.permute.xlu0 %v1912
    %1914 = vperm.xlu0 %1913, %v1903
    %v1915 = vpop.permute.xlu0 %1914
    %v1916 = vperm.slane %v1745, 1
    %v1917 = vlaneseq
    %v1918 = vshrl.u32 %v1917, 7
    %v1919 = vadd.s32 %v1918, 16
    %1920 = vset.pattern.permute.xlu0 %v1919
    %1921 = vperm.xlu0 %1920, %v1916
    %v1922 = vpop.permute.xlu0 %1921
    %v1923 = vlaneseq
    %v1924 = vshrl.u32 %v1923, 7
    %v1925 = vadd.s32 %v1924, 24
    %1926 = vset.pattern.permute.xlu0 %v1925
    %1927 = vperm.xlu0 %1926, %v1916
    %v1928 = vpop.permute.xlu0 %1927
    %v1929 = vperm.slane %v1746, 0
    %v1930 = vlaneseq
    %v1931 = vshrl.u32 %v1930, 7
    %v1932 = vadd.s32 %v1931, 16
    %1933 = vset.pattern.permute.xlu0 %v1932
    %1934 = vperm.xlu0 %1933, %v1929
    %v1935 = vpop.permute.xlu0 %1934
    %v1936 = vlaneseq
    %v1937 = vshrl.u32 %v1936, 7
    %v1938 = vadd.s32 %v1937, 24
    %1939 = vset.pattern.permute.xlu0 %v1938
    %1940 = vperm.xlu0 %1939, %v1929
    %v1941 = vpop.permute.xlu0 %1940
    %v1942 = vperm.slane %v1746, 1
    %v1943 = vlaneseq
    %v1944 = vshrl.u32 %v1943, 7
    %v1945 = vadd.s32 %v1944, 16
    %1946 = vset.pattern.permute.xlu0 %v1945
    %1947 = vperm.xlu0 %1946, %v1942
    %v1948 = vpop.permute.xlu0 %1947
    %v1949 = vlaneseq
    %v1950 = vshrl.u32 %v1949, 7
    %v1951 = vadd.s32 %v1950, 24
    %1952 = vset.pattern.permute.xlu0 %v1951
    %1953 = vperm.xlu0 %1952, %v1942
    %v1954 = vpop.permute.xlu0 %1953
    %v1955 = vrot.slane %v1753, 4
    %v1956 = vsel %vm242, 0.0, %v1955
    %v1958 = vunpack.c.l.s4 1983009808
    %v1959 = vunpack.c.0.s8 %v1958
    %v1960 = vperm.slane %v1753, %v1959
    %v1962 = vunpack.c.l.s4 1983009808
    %v1963 = vunpack.c.0.s8 %v1962
    %v1964 = vperm.slane %v1956, %v1963
    %v1965 = vrot.slane %v1766, 4
    %v1966 = vsel %vm242, 0.0, %v1965
    %v1968 = vunpack.c.l.s4 1983009808
    %v1969 = vunpack.c.0.s8 %v1968
    %v1970 = vperm.slane %v1766, %v1969
    %v1972 = vunpack.c.l.s4 1983009808
    %v1973 = vunpack.c.0.s8 %v1972
    %v1974 = vperm.slane %v1966, %v1973
    %v1975 = vrot.slane %v1970, 4
    %v1976 = vsel %vm242, %v1975, %v1960
    %v1977 = vrot.slane %v1960, 4
    %v1978 = vsel %vm242, %v1970, %v1977
    %v1980 = vunpack.c.l.s4 1934713408
    %v1981 = vunpack.c.0.s8 %v1980
    %v1982 = vperm.slane %v1976, %v1981
    %v1984 = vunpack.c.l.s4 1934713408
    %v1985 = vunpack.c.0.s8 %v1984
    %v1986 = vperm.slane %v1978, %v1985
    %v1987 = vrot.slane %v1974, 4
    %v1988 = vsel %vm242, %v1987, %v1964
    %v1989 = vrot.slane %v1964, 4
    %v1990 = vsel %vm242, %v1974, %v1989
    %v1992 = vunpack.c.l.s4 1934713408
    %v1993 = vunpack.c.0.s8 %v1992
    %v1994 = vperm.slane %v1988, %v1993
    %v1996 = vunpack.c.l.s4 1934713408
    %v1997 = vunpack.c.0.s8 %v1996
    %v1998 = vperm.slane %v1990, %v1997
    %v1999 = vrot.slane %v1982, 4
    %v2000 = vsel %vm242, 0.0, %v1999
    %v2001 = vrot.slane %v1986, 4
    %v2002 = vsel %vm242, 0.0, %v2001
    %v2003 = vrot.slane %v1994, 4
    %v2004 = vsel %vm242, 0.0, %v2003
    %v2005 = vrot.slane %v1998, 4
    %v2006 = vsel %vm242, 0.0, %v2005
    %v2007 = vrot.slane %v1759, 4
    %v2008 = vsel %vm242, 0.0, %v2007
    %v2010 = vunpack.c.l.s4 1983009808
    %v2011 = vunpack.c.0.s8 %v2010
    %v2012 = vperm.slane %v1759, %v2011
    %v2014 = vunpack.c.l.s4 1983009808
    %v2015 = vunpack.c.0.s8 %v2014
    %v2016 = vperm.slane %v2008, %v2015
    %v2017 = vrot.slane %v1772, 4
    %v2018 = vsel %vm242, 0.0, %v2017
    %v2020 = vunpack.c.l.s4 1983009808
    %v2021 = vunpack.c.0.s8 %v2020
    %v2022 = vperm.slane %v1772, %v2021
    %v2024 = vunpack.c.l.s4 1983009808
    %v2025 = vunpack.c.0.s8 %v2024
    %v2026 = vperm.slane %v2018, %v2025
    %v2027 = vrot.slane %v2022, 4
    %v2028 = vsel %vm242, %v2027, %v2012
    %v2029 = vrot.slane %v2012, 4
    %v2030 = vsel %vm242, %v2022, %v2029
    %v2032 = vunpack.c.l.s4 1934713408
    %v2033 = vunpack.c.0.s8 %v2032
    %v2034 = vperm.slane %v2028, %v2033
    %v2036 = vunpack.c.l.s4 1934713408
    %v2037 = vunpack.c.0.s8 %v2036
    %v2038 = vperm.slane %v2030, %v2037
    %v2039 = vrot.slane %v2026, 4
    %v2040 = vsel %vm242, %v2039, %v2016
    %v2041 = vrot.slane %v2016, 4
    %v2042 = vsel %vm242, %v2026, %v2041
    %v2044 = vunpack.c.l.s4 1934713408
    %v2045 = vunpack.c.0.s8 %v2044
    %v2046 = vperm.slane %v2040, %v2045
    %v2048 = vunpack.c.l.s4 1934713408
    %v2049 = vunpack.c.0.s8 %v2048
    %v2050 = vperm.slane %v2042, %v2049
    %v2051 = vrot.slane %v2034, 4
    %v2052 = vsel %vm242, 0.0, %v2051
    %v2053 = vrot.slane %v2038, 4
    %v2054 = vsel %vm242, 0.0, %v2053
    %v2055 = vrot.slane %v2046, 4
    %v2056 = vsel %vm242, 0.0, %v2055
    %v2057 = vrot.slane %v2050, 4
    %v2058 = vsel %vm242, 0.0, %v2057
    %v2059 = vrot.slane %v1779, 4
    %v2060 = vsel %vm242, 0.0, %v2059
    %v2062 = vunpack.c.l.s4 1983009808
    %v2063 = vunpack.c.0.s8 %v2062
    %v2064 = vperm.slane %v1779, %v2063
    %v2066 = vunpack.c.l.s4 1983009808
    %v2067 = vunpack.c.0.s8 %v2066
    %v2068 = vperm.slane %v2060, %v2067
    %v2069 = vrot.slane %v1792, 4
    %v2070 = vsel %vm242, 0.0, %v2069
    %v2072 = vunpack.c.l.s4 1983009808
    %v2073 = vunpack.c.0.s8 %v2072
    %v2074 = vperm.slane %v1792, %v2073
    %v2076 = vunpack.c.l.s4 1983009808
    %v2077 = vunpack.c.0.s8 %v2076
    %v2078 = vperm.slane %v2070, %v2077
    %v2079 = vrot.slane %v2074, 4
    %v2080 = vsel %vm242, %v2079, %v2064
    %v2081 = vrot.slane %v2064, 4
    %v2082 = vsel %vm242, %v2074, %v2081
    %v2084 = vunpack.c.l.s4 1934713408
    %v2085 = vunpack.c.0.s8 %v2084
    %v2086 = vperm.slane %v2080, %v2085
    %v2088 = vunpack.c.l.s4 1934713408
    %v2089 = vunpack.c.0.s8 %v2088
    %v2090 = vperm.slane %v2082, %v2089
    %v2091 = vrot.slane %v2078, 4
    %v2092 = vsel %vm242, %v2091, %v2068
    %v2093 = vrot.slane %v2068, 4
    %v2094 = vsel %vm242, %v2078, %v2093
    %v2096 = vunpack.c.l.s4 1934713408
    %v2097 = vunpack.c.0.s8 %v2096
    %v2098 = vperm.slane %v2092, %v2097
    %v2100 = vunpack.c.l.s4 1934713408
    %v2101 = vunpack.c.0.s8 %v2100
    %v2102 = vperm.slane %v2094, %v2101
    %v2103 = vrot.slane %v2086, 4
    %v2104 = vsel %vm242, 0.0, %v2103
    %v2105 = vrot.slane %v2090, 4
    %v2106 = vsel %vm242, 0.0, %v2105
    %v2107 = vrot.slane %v2098, 4
    %v2108 = vsel %vm242, 0.0, %v2107
    %v2109 = vrot.slane %v2102, 4
    %v2110 = vsel %vm242, 0.0, %v2109
    %v2111 = vrot.slane %v1785, 4
    %v2112 = vsel %vm242, 0.0, %v2111
    %v2114 = vunpack.c.l.s4 1983009808
    %v2115 = vunpack.c.0.s8 %v2114
    %v2116 = vperm.slane %v1785, %v2115
    %v2118 = vunpack.c.l.s4 1983009808
    %v2119 = vunpack.c.0.s8 %v2118
    %v2120 = vperm.slane %v2112, %v2119
    %v2121 = vrot.slane %v1798, 4
    %v2122 = vsel %vm242, 0.0, %v2121
    %v2124 = vunpack.c.l.s4 1983009808
    %v2125 = vunpack.c.0.s8 %v2124
    %v2126 = vperm.slane %v1798, %v2125
    %v2128 = vunpack.c.l.s4 1983009808
    %v2129 = vunpack.c.0.s8 %v2128
    %v2130 = vperm.slane %v2122, %v2129
    %v2131 = vrot.slane %v2126, 4
    %v2132 = vsel %vm242, %v2131, %v2116
    %v2133 = vrot.slane %v2116, 4
    %v2134 = vsel %vm242, %v2126, %v2133
    %v2136 = vunpack.c.l.s4 1934713408
    %v2137 = vunpack.c.0.s8 %v2136
    %v2138 = vperm.slane %v2132, %v2137
    %v2140 = vunpack.c.l.s4 1934713408
    %v2141 = vunpack.c.0.s8 %v2140
    %v2142 = vperm.slane %v2134, %v2141
    %v2143 = vrot.slane %v2130, 4
    %v2144 = vsel %vm242, %v2143, %v2120
    %v2145 = vrot.slane %v2120, 4
    %v2146 = vsel %vm242, %v2130, %v2145
    %v2148 = vunpack.c.l.s4 1934713408
    %v2149 = vunpack.c.0.s8 %v2148
    %v2150 = vperm.slane %v2144, %v2149
    %v2152 = vunpack.c.l.s4 1934713408
    %v2153 = vunpack.c.0.s8 %v2152
    %v2154 = vperm.slane %v2146, %v2153
    %v2155 = vrot.slane %v2138, 4
    %v2156 = vsel %vm242, 0.0, %v2155
    %v2157 = vrot.slane %v2142, 4
    %v2158 = vsel %vm242, 0.0, %v2157
    %v2159 = vrot.slane %v2150, 4
    %v2160 = vsel %vm242, 0.0, %v2159
    %v2161 = vrot.slane %v2154, 4
    %v2162 = vsel %vm242, 0.0, %v2161
    %v2163 = vrot.slane %v1805, 4
    %v2164 = vsel %vm242, 0.0, %v2163
    %v2166 = vunpack.c.l.s4 1983009808
    %v2167 = vunpack.c.0.s8 %v2166
    %v2168 = vperm.slane %v1805, %v2167
    %v2170 = vunpack.c.l.s4 1983009808
    %v2171 = vunpack.c.0.s8 %v2170
    %v2172 = vperm.slane %v2164, %v2171
    %v2173 = vrot.slane %v1818, 4
    %v2174 = vsel %vm242, 0.0, %v2173
    %v2176 = vunpack.c.l.s4 1983009808
    %v2177 = vunpack.c.0.s8 %v2176
    %v2178 = vperm.slane %v1818, %v2177
    %v2180 = vunpack.c.l.s4 1983009808
    %v2181 = vunpack.c.0.s8 %v2180
    %v2182 = vperm.slane %v2174, %v2181
    %v2183 = vrot.slane %v2178, 4
    %v2184 = vsel %vm242, %v2183, %v2168
    %v2185 = vrot.slane %v2168, 4
    %v2186 = vsel %vm242, %v2178, %v2185
    %v2188 = vunpack.c.l.s4 1934713408
    %v2189 = vunpack.c.0.s8 %v2188
    %v2190 = vperm.slane %v2184, %v2189
    %v2192 = vunpack.c.l.s4 1934713408
    %v2193 = vunpack.c.0.s8 %v2192
    %v2194 = vperm.slane %v2186, %v2193
    %v2195 = vrot.slane %v2182, 4
    %v2196 = vsel %vm242, %v2195, %v2172
    %v2197 = vrot.slane %v2172, 4
    %v2198 = vsel %vm242, %v2182, %v2197
    %v2200 = vunpack.c.l.s4 1934713408
    %v2201 = vunpack.c.0.s8 %v2200
    %v2202 = vperm.slane %v2196, %v2201
    %v2204 = vunpack.c.l.s4 1934713408
    %v2205 = vunpack.c.0.s8 %v2204
    %v2206 = vperm.slane %v2198, %v2205
    %v2207 = vrot.slane %v2190, 4
    %v2208 = vsel %vm242, 0.0, %v2207
    %v2209 = vrot.slane %v2194, 4
    %v2210 = vsel %vm242, 0.0, %v2209
    %v2211 = vrot.slane %v2202, 4
    %v2212 = vsel %vm242, 0.0, %v2211
    %v2213 = vrot.slane %v2206, 4
    %v2214 = vsel %vm242, 0.0, %v2213
    %v2215 = vrot.slane %v1811, 4
    %v2216 = vsel %vm242, 0.0, %v2215
    %v2218 = vunpack.c.l.s4 1983009808
    %v2219 = vunpack.c.0.s8 %v2218
    %v2220 = vperm.slane %v1811, %v2219
    %v2222 = vunpack.c.l.s4 1983009808
    %v2223 = vunpack.c.0.s8 %v2222
    %v2224 = vperm.slane %v2216, %v2223
    %v2225 = vrot.slane %v1824, 4
    %v2226 = vsel %vm242, 0.0, %v2225
    %v2228 = vunpack.c.l.s4 1983009808
    %v2229 = vunpack.c.0.s8 %v2228
    %v2230 = vperm.slane %v1824, %v2229
    %v2232 = vunpack.c.l.s4 1983009808
    %v2233 = vunpack.c.0.s8 %v2232
    %v2234 = vperm.slane %v2226, %v2233
    %v2235 = vrot.slane %v2230, 4
    %v2236 = vsel %vm242, %v2235, %v2220
    %v2237 = vrot.slane %v2220, 4
    %v2238 = vsel %vm242, %v2230, %v2237
    %v2240 = vunpack.c.l.s4 1934713408
    %v2241 = vunpack.c.0.s8 %v2240
    %v2242 = vperm.slane %v2236, %v2241
    %v2244 = vunpack.c.l.s4 1934713408
    %v2245 = vunpack.c.0.s8 %v2244
    %v2246 = vperm.slane %v2238, %v2245
    %v2247 = vrot.slane %v2234, 4
    %v2248 = vsel %vm242, %v2247, %v2224
    %v2249 = vrot.slane %v2224, 4
    %v2250 = vsel %vm242, %v2234, %v2249
    %v2252 = vunpack.c.l.s4 1934713408
    %v2253 = vunpack.c.0.s8 %v2252
    %v2254 = vperm.slane %v2248, %v2253
    %v2256 = vunpack.c.l.s4 1934713408
    %v2257 = vunpack.c.0.s8 %v2256
    %v2258 = vperm.slane %v2250, %v2257
    %v2259 = vrot.slane %v2242, 4
    %v2260 = vsel %vm242, 0.0, %v2259
    %v2261 = vrot.slane %v2246, 4
    %v2262 = vsel %vm242, 0.0, %v2261
    %v2263 = vrot.slane %v2254, 4
    %v2264 = vsel %vm242, 0.0, %v2263
    %v2265 = vrot.slane %v2258, 4
    %v2266 = vsel %vm242, 0.0, %v2265
    %v2267 = vrot.slane %v1831, 4
    %v2268 = vsel %vm242, 0.0, %v2267
    %v2270 = vunpack.c.l.s4 1983009808
    %v2271 = vunpack.c.0.s8 %v2270
    %v2272 = vperm.slane %v1831, %v2271
    %v2274 = vunpack.c.l.s4 1983009808
    %v2275 = vunpack.c.0.s8 %v2274
    %v2276 = vperm.slane %v2268, %v2275
    %v2277 = vrot.slane %v1844, 4
    %v2278 = vsel %vm242, 0.0, %v2277
    %v2280 = vunpack.c.l.s4 1983009808
    %v2281 = vunpack.c.0.s8 %v2280
    %v2282 = vperm.slane %v1844, %v2281
    %v2284 = vunpack.c.l.s4 1983009808
    %v2285 = vunpack.c.0.s8 %v2284
    %v2286 = vperm.slane %v2278, %v2285
    %v2287 = vrot.slane %v2282, 4
    %v2288 = vsel %vm242, %v2287, %v2272
    %v2289 = vrot.slane %v2272, 4
    %v2290 = vsel %vm242, %v2282, %v2289
    %v2292 = vunpack.c.l.s4 1934713408
    %v2293 = vunpack.c.0.s8 %v2292
    %v2294 = vperm.slane %v2288, %v2293
    %v2296 = vunpack.c.l.s4 1934713408
    %v2297 = vunpack.c.0.s8 %v2296
    %v2298 = vperm.slane %v2290, %v2297
    %v2299 = vrot.slane %v2286, 4
    %v2300 = vsel %vm242, %v2299, %v2276
    %v2301 = vrot.slane %v2276, 4
    %v2302 = vsel %vm242, %v2286, %v2301
    %v2304 = vunpack.c.l.s4 1934713408
    %v2305 = vunpack.c.0.s8 %v2304
    %v2306 = vperm.slane %v2300, %v2305
    %v2308 = vunpack.c.l.s4 1934713408
    %v2309 = vunpack.c.0.s8 %v2308
    %v2310 = vperm.slane %v2302, %v2309
    %v2311 = vrot.slane %v2294, 4
    %v2312 = vsel %vm242, 0.0, %v2311
    %v2313 = vrot.slane %v2298, 4
    %v2314 = vsel %vm242, 0.0, %v2313
    %v2315 = vrot.slane %v2306, 4
    %v2316 = vsel %vm242, 0.0, %v2315
    %v2317 = vrot.slane %v2310, 4
    %v2318 = vsel %vm242, 0.0, %v2317
    %v2319 = vrot.slane %v1837, 4
    %v2320 = vsel %vm242, 0.0, %v2319
    %v2322 = vunpack.c.l.s4 1983009808
    %v2323 = vunpack.c.0.s8 %v2322
    %v2324 = vperm.slane %v1837, %v2323
    %v2326 = vunpack.c.l.s4 1983009808
    %v2327 = vunpack.c.0.s8 %v2326
    %v2328 = vperm.slane %v2320, %v2327
    %v2329 = vrot.slane %v1850, 4
    %v2330 = vsel %vm242, 0.0, %v2329
    %v2332 = vunpack.c.l.s4 1983009808
    %v2333 = vunpack.c.0.s8 %v2332
    %v2334 = vperm.slane %v1850, %v2333
    %v2336 = vunpack.c.l.s4 1983009808
    %v2337 = vunpack.c.0.s8 %v2336
    %v2338 = vperm.slane %v2330, %v2337
    %v2339 = vrot.slane %v2334, 4
    %v2340 = vsel %vm242, %v2339, %v2324
    %v2341 = vrot.slane %v2324, 4
    %v2342 = vsel %vm242, %v2334, %v2341
    %v2344 = vunpack.c.l.s4 1934713408
    %v2345 = vunpack.c.0.s8 %v2344
    %v2346 = vperm.slane %v2340, %v2345
    %v2348 = vunpack.c.l.s4 1934713408
    %v2349 = vunpack.c.0.s8 %v2348
    %v2350 = vperm.slane %v2342, %v2349
    %v2351 = vrot.slane %v2338, 4
    %v2352 = vsel %vm242, %v2351, %v2328
    %v2353 = vrot.slane %v2328, 4
    %v2354 = vsel %vm242, %v2338, %v2353
    %v2356 = vunpack.c.l.s4 1934713408
    %v2357 = vunpack.c.0.s8 %v2356
    %v2358 = vperm.slane %v2352, %v2357
    %v2360 = vunpack.c.l.s4 1934713408
    %v2361 = vunpack.c.0.s8 %v2360
    %v2362 = vperm.slane %v2354, %v2361
    %v2363 = vrot.slane %v2346, 4
    %v2364 = vsel %vm242, 0.0, %v2363
    %v2365 = vrot.slane %v2350, 4
    %v2366 = vsel %vm242, 0.0, %v2365
    %v2367 = vrot.slane %v2358, 4
    %v2368 = vsel %vm242, 0.0, %v2367
    %v2369 = vrot.slane %v2362, 4
    %v2370 = vsel %vm242, 0.0, %v2369
    %v2371 = vrot.slane %v1857, 4
    %v2372 = vsel %vm242, 0.0, %v2371
    %v2374 = vunpack.c.l.s4 1983009808
    %v2375 = vunpack.c.0.s8 %v2374
    %v2376 = vperm.slane %v1857, %v2375
    %v2378 = vunpack.c.l.s4 1983009808
    %v2379 = vunpack.c.0.s8 %v2378
    %v2380 = vperm.slane %v2372, %v2379
    %v2381 = vrot.slane %v1870, 4
    %v2382 = vsel %vm242, 0.0, %v2381
    %v2384 = vunpack.c.l.s4 1983009808
    %v2385 = vunpack.c.0.s8 %v2384
    %v2386 = vperm.slane %v1870, %v2385
    %v2388 = vunpack.c.l.s4 1983009808
    %v2389 = vunpack.c.0.s8 %v2388
    %v2390 = vperm.slane %v2382, %v2389
    %v2391 = vrot.slane %v2386, 4
    %v2392 = vsel %vm242, %v2391, %v2376
    %v2393 = vrot.slane %v2376, 4
    %v2394 = vsel %vm242, %v2386, %v2393
    %v2396 = vunpack.c.l.s4 1934713408
    %v2397 = vunpack.c.0.s8 %v2396
    %v2398 = vperm.slane %v2392, %v2397
    %v2400 = vunpack.c.l.s4 1934713408
    %v2401 = vunpack.c.0.s8 %v2400
    %v2402 = vperm.slane %v2394, %v2401
    %v2403 = vrot.slane %v2390, 4
    %v2404 = vsel %vm242, %v2403, %v2380
    %v2405 = vrot.slane %v2380, 4
    %v2406 = vsel %vm242, %v2390, %v2405
    %v2408 = vunpack.c.l.s4 1934713408
    %v2409 = vunpack.c.0.s8 %v2408
    %v2410 = vperm.slane %v2404, %v2409
    %v2412 = vunpack.c.l.s4 1934713408
    %v2413 = vunpack.c.0.s8 %v2412
    %v2414 = vperm.slane %v2406, %v2413
    %v2415 = vrot.slane %v2398, 4
    %v2416 = vsel %vm242, 0.0, %v2415
    %v2417 = vrot.slane %v2402, 4
    %v2418 = vsel %vm242, 0.0, %v2417
    %v2419 = vrot.slane %v2410, 4
    %v2420 = vsel %vm242, 0.0, %v2419
    %v2421 = vrot.slane %v2414, 4
    %v2422 = vsel %vm242, 0.0, %v2421
    %v2423 = vrot.slane %v1863, 4
    %v2424 = vsel %vm242, 0.0, %v2423
    %v2426 = vunpack.c.l.s4 1983009808
    %v2427 = vunpack.c.0.s8 %v2426
    %v2428 = vperm.slane %v1863, %v2427
    %v2430 = vunpack.c.l.s4 1983009808
    %v2431 = vunpack.c.0.s8 %v2430
    %v2432 = vperm.slane %v2424, %v2431
    %v2433 = vrot.slane %v1876, 4
    %v2434 = vsel %vm242, 0.0, %v2433
    %v2436 = vunpack.c.l.s4 1983009808
    %v2437 = vunpack.c.0.s8 %v2436
    %v2438 = vperm.slane %v1876, %v2437
    %v2440 = vunpack.c.l.s4 1983009808
    %v2441 = vunpack.c.0.s8 %v2440
    %v2442 = vperm.slane %v2434, %v2441
    %v2443 = vrot.slane %v2438, 4
    %v2444 = vsel %vm242, %v2443, %v2428
    %v2445 = vrot.slane %v2428, 4
    %v2446 = vsel %vm242, %v2438, %v2445
    %v2448 = vunpack.c.l.s4 1934713408
    %v2449 = vunpack.c.0.s8 %v2448
    %v2450 = vperm.slane %v2444, %v2449
    %v2452 = vunpack.c.l.s4 1934713408
    %v2453 = vunpack.c.0.s8 %v2452
    %v2454 = vperm.slane %v2446, %v2453
    %v2455 = vrot.slane %v2442, 4
    %v2456 = vsel %vm242, %v2455, %v2432
    %v2457 = vrot.slane %v2432, 4
    %v2458 = vsel %vm242, %v2442, %v2457
    %v2460 = vunpack.c.l.s4 1934713408
    %v2461 = vunpack.c.0.s8 %v2460
    %v2462 = vperm.slane %v2456, %v2461
    %v2464 = vunpack.c.l.s4 1934713408
    %v2465 = vunpack.c.0.s8 %v2464
    %v2466 = vperm.slane %v2458, %v2465
    %v2467 = vrot.slane %v2450, 4
    %v2468 = vsel %vm242, 0.0, %v2467
    %v2469 = vrot.slane %v2454, 4
    %v2470 = vsel %vm242, 0.0, %v2469
    %v2471 = vrot.slane %v2462, 4
    %v2472 = vsel %vm242, 0.0, %v2471
    %v2473 = vrot.slane %v2466, 4
    %v2474 = vsel %vm242, 0.0, %v2473
    %v2475 = vrot.slane %v1883, 4
    %v2476 = vsel %vm242, 0.0, %v2475
    %v2478 = vunpack.c.l.s4 1983009808
    %v2479 = vunpack.c.0.s8 %v2478
    %v2480 = vperm.slane %v1883, %v2479
    %v2482 = vunpack.c.l.s4 1983009808
    %v2483 = vunpack.c.0.s8 %v2482
    %v2484 = vperm.slane %v2476, %v2483
    %v2485 = vrot.slane %v1896, 4
    %v2486 = vsel %vm242, 0.0, %v2485
    %v2488 = vunpack.c.l.s4 1983009808
    %v2489 = vunpack.c.0.s8 %v2488
    %v2490 = vperm.slane %v1896, %v2489
    %v2492 = vunpack.c.l.s4 1983009808
    %v2493 = vunpack.c.0.s8 %v2492
    %v2494 = vperm.slane %v2486, %v2493
    %v2495 = vrot.slane %v2490, 4
    %v2496 = vsel %vm242, %v2495, %v2480
    %v2497 = vrot.slane %v2480, 4
    %v2498 = vsel %vm242, %v2490, %v2497
    %v2500 = vunpack.c.l.s4 1934713408
    %v2501 = vunpack.c.0.s8 %v2500
    %v2502 = vperm.slane %v2496, %v2501
    %v2504 = vunpack.c.l.s4 1934713408
    %v2505 = vunpack.c.0.s8 %v2504
    %v2506 = vperm.slane %v2498, %v2505
    %v2507 = vrot.slane %v2494, 4
    %v2508 = vsel %vm242, %v2507, %v2484
    %v2509 = vrot.slane %v2484, 4
    %v2510 = vsel %vm242, %v2494, %v2509
    %v2512 = vunpack.c.l.s4 1934713408
    %v2513 = vunpack.c.0.s8 %v2512
    %v2514 = vperm.slane %v2508, %v2513
    %v2516 = vunpack.c.l.s4 1934713408
    %v2517 = vunpack.c.0.s8 %v2516
    %v2518 = vperm.slane %v2510, %v2517
    %v2519 = vrot.slane %v2502, 4
    %v2520 = vsel %vm242, 0.0, %v2519
    %v2521 = vrot.slane %v2506, 4
    %v2522 = vsel %vm242, 0.0, %v2521
    %v2523 = vrot.slane %v2514, 4
    %v2524 = vsel %vm242, 0.0, %v2523
    %v2525 = vrot.slane %v2518, 4
    %v2526 = vsel %vm242, 0.0, %v2525
    %v2527 = vrot.slane %v1889, 4
    %v2528 = vsel %vm242, 0.0, %v2527
    %v2530 = vunpack.c.l.s4 1983009808
    %v2531 = vunpack.c.0.s8 %v2530
    %v2532 = vperm.slane %v1889, %v2531
    %v2534 = vunpack.c.l.s4 1983009808
    %v2535 = vunpack.c.0.s8 %v2534
    %v2536 = vperm.slane %v2528, %v2535
    %v2537 = vrot.slane %v1902, 4
    %v2538 = vsel %vm242, 0.0, %v2537
    %v2540 = vunpack.c.l.s4 1983009808
    %v2541 = vunpack.c.0.s8 %v2540
    %v2542 = vperm.slane %v1902, %v2541
    %v2544 = vunpack.c.l.s4 1983009808
    %v2545 = vunpack.c.0.s8 %v2544
    %v2546 = vperm.slane %v2538, %v2545
    %v2547 = vrot.slane %v2542, 4
    %v2548 = vsel %vm242, %v2547, %v2532
    %v2549 = vrot.slane %v2532, 4
    %v2550 = vsel %vm242, %v2542, %v2549
    %v2552 = vunpack.c.l.s4 1934713408
    %v2553 = vunpack.c.0.s8 %v2552
    %v2554 = vperm.slane %v2548, %v2553
    %v2556 = vunpack.c.l.s4 1934713408
    %v2557 = vunpack.c.0.s8 %v2556
    %v2558 = vperm.slane %v2550, %v2557
    %v2559 = vrot.slane %v2546, 4
    %v2560 = vsel %vm242, %v2559, %v2536
    %v2561 = vrot.slane %v2536, 4
    %v2562 = vsel %vm242, %v2546, %v2561
    %v2564 = vunpack.c.l.s4 1934713408
    %v2565 = vunpack.c.0.s8 %v2564
    %v2566 = vperm.slane %v2560, %v2565
    %v2568 = vunpack.c.l.s4 1934713408
    %v2569 = vunpack.c.0.s8 %v2568
    %v2570 = vperm.slane %v2562, %v2569
    %v2571 = vrot.slane %v2554, 4
    %v2572 = vsel %vm242, 0.0, %v2571
    %v2573 = vrot.slane %v2558, 4
    %v2574 = vsel %vm242, 0.0, %v2573
    %v2575 = vrot.slane %v2566, 4
    %v2576 = vsel %vm242, 0.0, %v2575
    %v2577 = vrot.slane %v2570, 4
    %v2578 = vsel %vm242, 0.0, %v2577
    %v2579 = vrot.slane %v1909, 4
    %v2580 = vsel %vm242, 0.0, %v2579
    %v2582 = vunpack.c.l.s4 1983009808
    %v2583 = vunpack.c.0.s8 %v2582
    %v2584 = vperm.slane %v1909, %v2583
    %v2586 = vunpack.c.l.s4 1983009808
    %v2587 = vunpack.c.0.s8 %v2586
    %v2588 = vperm.slane %v2580, %v2587
    %v2589 = vrot.slane %v1922, 4
    %v2590 = vsel %vm242, 0.0, %v2589
    %v2592 = vunpack.c.l.s4 1983009808
    %v2593 = vunpack.c.0.s8 %v2592
    %v2594 = vperm.slane %v1922, %v2593
    %v2596 = vunpack.c.l.s4 1983009808
    %v2597 = vunpack.c.0.s8 %v2596
    %v2598 = vperm.slane %v2590, %v2597
    %v2599 = vrot.slane %v2594, 4
    %v2600 = vsel %vm242, %v2599, %v2584
    %v2601 = vrot.slane %v2584, 4
    %v2602 = vsel %vm242, %v2594, %v2601
    %v2604 = vunpack.c.l.s4 1934713408
    %v2605 = vunpack.c.0.s8 %v2604
    %v2606 = vperm.slane %v2600, %v2605
    %v2608 = vunpack.c.l.s4 1934713408
    %v2609 = vunpack.c.0.s8 %v2608
    %v2610 = vperm.slane %v2602, %v2609
    %v2611 = vrot.slane %v2598, 4
    %v2612 = vsel %vm242, %v2611, %v2588
    %v2613 = vrot.slane %v2588, 4
    %v2614 = vsel %vm242, %v2598, %v2613
    %v2616 = vunpack.c.l.s4 1934713408
    %v2617 = vunpack.c.0.s8 %v2616
    %v2618 = vperm.slane %v2612, %v2617
    %v2620 = vunpack.c.l.s4 1934713408
    %v2621 = vunpack.c.0.s8 %v2620
    %v2622 = vperm.slane %v2614, %v2621
    %v2623 = vrot.slane %v2606, 4
    %v2624 = vsel %vm242, 0.0, %v2623
    %v2625 = vrot.slane %v2610, 4
    %v2626 = vsel %vm242, 0.0, %v2625
    %v2627 = vrot.slane %v2618, 4
    %v2628 = vsel %vm242, 0.0, %v2627
    %v2629 = vrot.slane %v2622, 4
    %v2630 = vsel %vm242, 0.0, %v2629
    %v2631 = vrot.slane %v1915, 4
    %v2632 = vsel %vm242, 0.0, %v2631
    %v2634 = vunpack.c.l.s4 1983009808
    %v2635 = vunpack.c.0.s8 %v2634
    %v2636 = vperm.slane %v1915, %v2635
    %v2638 = vunpack.c.l.s4 1983009808
    %v2639 = vunpack.c.0.s8 %v2638
    %v2640 = vperm.slane %v2632, %v2639
    %v2641 = vrot.slane %v1928, 4
    %v2642 = vsel %vm242, 0.0, %v2641
    %v2644 = vunpack.c.l.s4 1983009808
    %v2645 = vunpack.c.0.s8 %v2644
    %v2646 = vperm.slane %v1928, %v2645
    %v2648 = vunpack.c.l.s4 1983009808
    %v2649 = vunpack.c.0.s8 %v2648
    %v2650 = vperm.slane %v2642, %v2649
    %v2651 = vrot.slane %v2646, 4
    %v2652 = vsel %vm242, %v2651, %v2636
    %v2653 = vrot.slane %v2636, 4
    %v2654 = vsel %vm242, %v2646, %v2653
    %v2656 = vunpack.c.l.s4 1934713408
    %v2657 = vunpack.c.0.s8 %v2656
    %v2658 = vperm.slane %v2652, %v2657
    %v2660 = vunpack.c.l.s4 1934713408
    %v2661 = vunpack.c.0.s8 %v2660
    %v2662 = vperm.slane %v2654, %v2661
    %v2663 = vrot.slane %v2650, 4
    %v2664 = vsel %vm242, %v2663, %v2640
    %v2665 = vrot.slane %v2640, 4
    %v2666 = vsel %vm242, %v2650, %v2665
    %v2668 = vunpack.c.l.s4 1934713408
    %v2669 = vunpack.c.0.s8 %v2668
    %v2670 = vperm.slane %v2664, %v2669
    %v2672 = vunpack.c.l.s4 1934713408
    %v2673 = vunpack.c.0.s8 %v2672
    %v2674 = vperm.slane %v2666, %v2673
    %v2675 = vrot.slane %v2658, 4
    %v2676 = vsel %vm242, 0.0, %v2675
    %v2677 = vrot.slane %v2662, 4
    %v2678 = vsel %vm242, 0.0, %v2677
    %v2679 = vrot.slane %v2670, 4
    %v2680 = vsel %vm242, 0.0, %v2679
    %v2681 = vrot.slane %v2674, 4
    %v2682 = vsel %vm242, 0.0, %v2681
    %v2683 = vrot.slane %v1935, 4
    %v2684 = vsel %vm242, 0.0, %v2683
    %v2686 = vunpack.c.l.s4 1983009808
    %v2687 = vunpack.c.0.s8 %v2686
    %v2688 = vperm.slane %v1935, %v2687
    %v2690 = vunpack.c.l.s4 1983009808
    %v2691 = vunpack.c.0.s8 %v2690
    %v2692 = vperm.slane %v2684, %v2691
    %v2693 = vrot.slane %v1948, 4
    %v2694 = vsel %vm242, 0.0, %v2693
    %v2696 = vunpack.c.l.s4 1983009808
    %v2697 = vunpack.c.0.s8 %v2696
    %v2698 = vperm.slane %v1948, %v2697
    %v2700 = vunpack.c.l.s4 1983009808
    %v2701 = vunpack.c.0.s8 %v2700
    %v2702 = vperm.slane %v2694, %v2701
    %v2703 = vrot.slane %v2698, 4
    %v2704 = vsel %vm242, %v2703, %v2688
    %v2705 = vrot.slane %v2688, 4
    %v2706 = vsel %vm242, %v2698, %v2705
    %v2708 = vunpack.c.l.s4 1934713408
    %v2709 = vunpack.c.0.s8 %v2708
    %v2710 = vperm.slane %v2704, %v2709
    %v2712 = vunpack.c.l.s4 1934713408
    %v2713 = vunpack.c.0.s8 %v2712
    %v2714 = vperm.slane %v2706, %v2713
    %v2715 = vrot.slane %v2702, 4
    %v2716 = vsel %vm242, %v2715, %v2692
    %v2717 = vrot.slane %v2692, 4
    %v2718 = vsel %vm242, %v2702, %v2717
    %v2720 = vunpack.c.l.s4 1934713408
    %v2721 = vunpack.c.0.s8 %v2720
    %v2722 = vperm.slane %v2716, %v2721
    %v2724 = vunpack.c.l.s4 1934713408
    %v2725 = vunpack.c.0.s8 %v2724
    %v2726 = vperm.slane %v2718, %v2725
    %v2727 = vrot.slane %v2710, 4
    %v2728 = vsel %vm242, 0.0, %v2727
    %v2729 = vrot.slane %v2714, 4
    %v2730 = vsel %vm242, 0.0, %v2729
    %v2731 = vrot.slane %v2722, 4
    %v2732 = vsel %vm242, 0.0, %v2731
    %v2733 = vrot.slane %v2726, 4
    %v2734 = vsel %vm242, 0.0, %v2733
    %v2735 = vrot.slane %v1941, 4
    %v2736 = vsel %vm242, 0.0, %v2735
    %v2738 = vunpack.c.l.s4 1983009808
    %v2739 = vunpack.c.0.s8 %v2738
    %v2740 = vperm.slane %v1941, %v2739
    %v2742 = vunpack.c.l.s4 1983009808
    %v2743 = vunpack.c.0.s8 %v2742
    %v2744 = vperm.slane %v2736, %v2743
    %v2745 = vrot.slane %v1954, 4
    %v2746 = vsel %vm242, 0.0, %v2745
    %v2748 = vunpack.c.l.s4 1983009808
    %v2749 = vunpack.c.0.s8 %v2748
    %v2750 = vperm.slane %v1954, %v2749
    %v2752 = vunpack.c.l.s4 1983009808
    %v2753 = vunpack.c.0.s8 %v2752
    %v2754 = vperm.slane %v2746, %v2753
    %v2755 = vrot.slane %v2750, 4
    %v2756 = vsel %vm242, %v2755, %v2740
    %v2757 = vrot.slane %v2740, 4
    %v2758 = vsel %vm242, %v2750, %v2757
    %v2760 = vunpack.c.l.s4 1934713408
    %v2761 = vunpack.c.0.s8 %v2760
    %v2762 = vperm.slane %v2756, %v2761
    %v2764 = vunpack.c.l.s4 1934713408
    %v2765 = vunpack.c.0.s8 %v2764
    %v2766 = vperm.slane %v2758, %v2765
    %v2767 = vrot.slane %v2754, 4
    %v2768 = vsel %vm242, %v2767, %v2744
    %v2769 = vrot.slane %v2744, 4
    %v2770 = vsel %vm242, %v2754, %v2769
    %v2772 = vunpack.c.l.s4 1934713408
    %v2773 = vunpack.c.0.s8 %v2772
    %v2774 = vperm.slane %v2768, %v2773
    %v2776 = vunpack.c.l.s4 1934713408
    %v2777 = vunpack.c.0.s8 %v2776
    %v2778 = vperm.slane %v2770, %v2777
    %v2779 = vrot.slane %v2762, 4
    %v2780 = vsel %vm242, 0.0, %v2779
    %v2781 = vrot.slane %v2766, 4
    %v2782 = vsel %vm242, 0.0, %v2781
    %v2783 = vrot.slane %v2774, 4
    %v2784 = vsel %vm242, 0.0, %v2783
    %v2785 = vrot.slane %v2778, 4
    %v2786 = vsel %vm242, 0.0, %v2785
    %2795 = vrot.lane.b32.xlu0 %v2000, 2
    %v2796 = vpop.permute.xlu0 %2795
    %2797 = vrot.lane.b32.xlu0 %v2104, 2
    %v2798 = vpop.permute.xlu0 %2797
    %2799 = vrot.lane.b32.xlu0 %v2208, 2
    %v2800 = vpop.permute.xlu0 %2799
    %2801 = vrot.lane.b32.xlu0 %v2312, 2
    %v2802 = vpop.permute.xlu0 %2801
    %2803 = vrot.lane.b32.xlu0 %v2416, 2
    %v2804 = vpop.permute.xlu0 %2803
    %2805 = vrot.lane.b32.xlu0 %v2520, 2
    %v2806 = vpop.permute.xlu0 %2805
    %2807 = vrot.lane.b32.xlu0 %v2624, 2
    %v2808 = vpop.permute.xlu0 %2807
    %2809 = vrot.lane.b32.xlu0 %v2728, 2
    %v2810 = vpop.permute.xlu0 %2809
    %2827 = vrot.lane.b32.xlu0 %v1986, 4
    %v2828 = vpop.permute.xlu0 %2827
    %2829 = vrot.lane.b32.xlu0 %v2090, 4
    %v2830 = vpop.permute.xlu0 %2829
    %2831 = vrot.lane.b32.xlu0 %v2194, 4
    %v2832 = vpop.permute.xlu0 %2831
    %2833 = vrot.lane.b32.xlu0 %v2298, 4
    %v2834 = vpop.permute.xlu0 %2833
    %2835 = vrot.lane.b32.xlu0 %v2402, 4
    %v2836 = vpop.permute.xlu0 %2835
    %2837 = vrot.lane.b32.xlu0 %v2506, 4
    %v2838 = vpop.permute.xlu0 %2837
    %2839 = vrot.lane.b32.xlu0 %v2610, 4
    %v2840 = vpop.permute.xlu0 %2839
    %2841 = vrot.lane.b32.xlu0 %v2714, 4
    %v2842 = vpop.permute.xlu0 %2841
    %2859 = vrot.lane.b32.xlu0 %v2002, 6
    %v2860 = vpop.permute.xlu0 %2859
    %2861 = vrot.lane.b32.xlu0 %v2106, 6
    %v2862 = vpop.permute.xlu0 %2861
    %2863 = vrot.lane.b32.xlu0 %v2210, 6
    %v2864 = vpop.permute.xlu0 %2863
    %2865 = vrot.lane.b32.xlu0 %v2314, 6
    %v2866 = vpop.permute.xlu0 %2865
    %2867 = vrot.lane.b32.xlu0 %v2418, 6
    %v2868 = vpop.permute.xlu0 %2867
    %2869 = vrot.lane.b32.xlu0 %v2522, 6
    %v2870 = vpop.permute.xlu0 %2869
    %2871 = vrot.lane.b32.xlu0 %v2626, 6
    %v2872 = vpop.permute.xlu0 %2871
    %2873 = vrot.lane.b32.xlu0 %v2730, 6
    %v2874 = vpop.permute.xlu0 %2873
    %2891 = vrot.lane.b32.xlu0 %v1994, 8
    %v2892 = vpop.permute.xlu0 %2891
    %2893 = vrot.lane.b32.xlu0 %v2098, 8
    %v2894 = vpop.permute.xlu0 %2893
    %2895 = vrot.lane.b32.xlu0 %v2202, 8
    %v2896 = vpop.permute.xlu0 %2895
    %2897 = vrot.lane.b32.xlu0 %v2306, 8
    %v2898 = vpop.permute.xlu0 %2897
    %2899 = vrot.lane.b32.xlu0 %v2410, 8
    %v2900 = vpop.permute.xlu0 %2899
    %2901 = vrot.lane.b32.xlu0 %v2514, 8
    %v2902 = vpop.permute.xlu0 %2901
    %2903 = vrot.lane.b32.xlu0 %v2618, 8
    %v2904 = vpop.permute.xlu0 %2903
    %2905 = vrot.lane.b32.xlu0 %v2722, 8
    %v2906 = vpop.permute.xlu0 %2905
    %2923 = vrot.lane.b32.xlu0 %v2004, 10
    %v2924 = vpop.permute.xlu0 %2923
    %2925 = vrot.lane.b32.xlu0 %v2108, 10
    %v2926 = vpop.permute.xlu0 %2925
    %2927 = vrot.lane.b32.xlu0 %v2212, 10
    %v2928 = vpop.permute.xlu0 %2927
    %2929 = vrot.lane.b32.xlu0 %v2316, 10
    %v2930 = vpop.permute.xlu0 %2929
    %2931 = vrot.lane.b32.xlu0 %v2420, 10
    %v2932 = vpop.permute.xlu0 %2931
    %2933 = vrot.lane.b32.xlu0 %v2524, 10
    %v2934 = vpop.permute.xlu0 %2933
    %2935 = vrot.lane.b32.xlu0 %v2628, 10
    %v2936 = vpop.permute.xlu0 %2935
    %2937 = vrot.lane.b32.xlu0 %v2732, 10
    %v2938 = vpop.permute.xlu0 %2937
    %2955 = vrot.lane.b32.xlu0 %v1998, 12
    %v2956 = vpop.permute.xlu0 %2955
    %2957 = vrot.lane.b32.xlu0 %v2102, 12
    %v2958 = vpop.permute.xlu0 %2957
    %2959 = vrot.lane.b32.xlu0 %v2206, 12
    %v2960 = vpop.permute.xlu0 %2959
    %2961 = vrot.lane.b32.xlu0 %v2310, 12
    %v2962 = vpop.permute.xlu0 %2961
    %2963 = vrot.lane.b32.xlu0 %v2414, 12
    %v2964 = vpop.permute.xlu0 %2963
    %2965 = vrot.lane.b32.xlu0 %v2518, 12
    %v2966 = vpop.permute.xlu0 %2965
    %2967 = vrot.lane.b32.xlu0 %v2622, 12
    %v2968 = vpop.permute.xlu0 %2967
    %2969 = vrot.lane.b32.xlu0 %v2726, 12
    %v2970 = vpop.permute.xlu0 %2969
    %2987 = vrot.lane.b32.xlu0 %v2006, 14
    %v2988 = vpop.permute.xlu0 %2987
    %2989 = vrot.lane.b32.xlu0 %v2110, 14
    %v2990 = vpop.permute.xlu0 %2989
    %2991 = vrot.lane.b32.xlu0 %v2214, 14
    %v2992 = vpop.permute.xlu0 %2991
    %2993 = vrot.lane.b32.xlu0 %v2318, 14
    %v2994 = vpop.permute.xlu0 %2993
    %2995 = vrot.lane.b32.xlu0 %v2422, 14
    %v2996 = vpop.permute.xlu0 %2995
    %2997 = vrot.lane.b32.xlu0 %v2526, 14
    %v2998 = vpop.permute.xlu0 %2997
    %2999 = vrot.lane.b32.xlu0 %v2630, 14
    %v3000 = vpop.permute.xlu0 %2999
    %3001 = vrot.lane.b32.xlu0 %v2734, 14
    %v3002 = vpop.permute.xlu0 %3001
    %3019 = vrot.lane.b32.xlu0 %v2034, 16
    %v3020 = vpop.permute.xlu0 %3019
    %3021 = vrot.lane.b32.xlu0 %v2138, 16
    %v3022 = vpop.permute.xlu0 %3021
    %3023 = vrot.lane.b32.xlu0 %v2242, 16
    %v3024 = vpop.permute.xlu0 %3023
    %3025 = vrot.lane.b32.xlu0 %v2346, 16
    %v3026 = vpop.permute.xlu0 %3025
    %3027 = vrot.lane.b32.xlu0 %v2450, 16
    %v3028 = vpop.permute.xlu0 %3027
    %3029 = vrot.lane.b32.xlu0 %v2554, 16
    %v3030 = vpop.permute.xlu0 %3029
    %3031 = vrot.lane.b32.xlu0 %v2658, 16
    %v3032 = vpop.permute.xlu0 %3031
    %3033 = vrot.lane.b32.xlu0 %v2762, 16
    %v3034 = vpop.permute.xlu0 %3033
    %3051 = vrot.lane.b32.xlu0 %v2052, 18
    %v3052 = vpop.permute.xlu0 %3051
    %3053 = vrot.lane.b32.xlu0 %v2156, 18
    %v3054 = vpop.permute.xlu0 %3053
    %3055 = vrot.lane.b32.xlu0 %v2260, 18
    %v3056 = vpop.permute.xlu0 %3055
    %3057 = vrot.lane.b32.xlu0 %v2364, 18
    %v3058 = vpop.permute.xlu0 %3057
    %3059 = vrot.lane.b32.xlu0 %v2468, 18
    %v3060 = vpop.permute.xlu0 %3059
    %3061 = vrot.lane.b32.xlu0 %v2572, 18
    %v3062 = vpop.permute.xlu0 %3061
    %3063 = vrot.lane.b32.xlu0 %v2676, 18
    %v3064 = vpop.permute.xlu0 %3063
    %3065 = vrot.lane.b32.xlu0 %v2780, 18
    %v3066 = vpop.permute.xlu0 %3065
    %3083 = vrot.lane.b32.xlu0 %v2038, 20
    %v3084 = vpop.permute.xlu0 %3083
    %3085 = vrot.lane.b32.xlu0 %v2142, 20
    %v3086 = vpop.permute.xlu0 %3085
    %3087 = vrot.lane.b32.xlu0 %v2246, 20
    %v3088 = vpop.permute.xlu0 %3087
    %3089 = vrot.lane.b32.xlu0 %v2350, 20
    %v3090 = vpop.permute.xlu0 %3089
    %3091 = vrot.lane.b32.xlu0 %v2454, 20
    %v3092 = vpop.permute.xlu0 %3091
    %3093 = vrot.lane.b32.xlu0 %v2558, 20
    %v3094 = vpop.permute.xlu0 %3093
    %3095 = vrot.lane.b32.xlu0 %v2662, 20
    %v3096 = vpop.permute.xlu0 %3095
    %3097 = vrot.lane.b32.xlu0 %v2766, 20
    %v3098 = vpop.permute.xlu0 %3097
    %3115 = vrot.lane.b32.xlu0 %v2054, 22
    %v3116 = vpop.permute.xlu0 %3115
    %3117 = vrot.lane.b32.xlu0 %v2158, 22
    %v3118 = vpop.permute.xlu0 %3117
    %3119 = vrot.lane.b32.xlu0 %v2262, 22
    %v3120 = vpop.permute.xlu0 %3119
    %3121 = vrot.lane.b32.xlu0 %v2366, 22
    %v3122 = vpop.permute.xlu0 %3121
    %3123 = vrot.lane.b32.xlu0 %v2470, 22
    %v3124 = vpop.permute.xlu0 %3123
    %3125 = vrot.lane.b32.xlu0 %v2574, 22
    %v3126 = vpop.permute.xlu0 %3125
    %3127 = vrot.lane.b32.xlu0 %v2678, 22
    %v3128 = vpop.permute.xlu0 %3127
    %3129 = vrot.lane.b32.xlu0 %v2782, 22
    %v3130 = vpop.permute.xlu0 %3129
    %3147 = vrot.lane.b32.xlu0 %v2046, 24
    %v3148 = vpop.permute.xlu0 %3147
    %3149 = vrot.lane.b32.xlu0 %v2150, 24
    %v3150 = vpop.permute.xlu0 %3149
    %3151 = vrot.lane.b32.xlu0 %v2254, 24
    %v3152 = vpop.permute.xlu0 %3151
    %3153 = vrot.lane.b32.xlu0 %v2358, 24
    %v3154 = vpop.permute.xlu0 %3153
    %3155 = vrot.lane.b32.xlu0 %v2462, 24
    %v3156 = vpop.permute.xlu0 %3155
    %3157 = vrot.lane.b32.xlu0 %v2566, 24
    %v3158 = vpop.permute.xlu0 %3157
    %3159 = vrot.lane.b32.xlu0 %v2670, 24
    %v3160 = vpop.permute.xlu0 %3159
    %3161 = vrot.lane.b32.xlu0 %v2774, 24
    %v3162 = vpop.permute.xlu0 %3161
    %3179 = vrot.lane.b32.xlu0 %v2056, 26
    %v3180 = vpop.permute.xlu0 %3179
    %3181 = vrot.lane.b32.xlu0 %v2160, 26
    %v3182 = vpop.permute.xlu0 %3181
    %3183 = vrot.lane.b32.xlu0 %v2264, 26
    %v3184 = vpop.permute.xlu0 %3183
    %3185 = vrot.lane.b32.xlu0 %v2368, 26
    %v3186 = vpop.permute.xlu0 %3185
    %3187 = vrot.lane.b32.xlu0 %v2472, 26
    %v3188 = vpop.permute.xlu0 %3187
    %3189 = vrot.lane.b32.xlu0 %v2576, 26
    %v3190 = vpop.permute.xlu0 %3189
    %3191 = vrot.lane.b32.xlu0 %v2680, 26
    %v3192 = vpop.permute.xlu0 %3191
    %3193 = vrot.lane.b32.xlu0 %v2784, 26
    %v3194 = vpop.permute.xlu0 %3193
    %3211 = vrot.lane.b32.xlu0 %v2050, 28
    %v3212 = vpop.permute.xlu0 %3211
    %3213 = vrot.lane.b32.xlu0 %v2154, 28
    %v3214 = vpop.permute.xlu0 %3213
    %3215 = vrot.lane.b32.xlu0 %v2258, 28
    %v3216 = vpop.permute.xlu0 %3215
    %3217 = vrot.lane.b32.xlu0 %v2362, 28
    %v3218 = vpop.permute.xlu0 %3217
    %3219 = vrot.lane.b32.xlu0 %v2466, 28
    %v3220 = vpop.permute.xlu0 %3219
    %3221 = vrot.lane.b32.xlu0 %v2570, 28
    %v3222 = vpop.permute.xlu0 %3221
    %3223 = vrot.lane.b32.xlu0 %v2674, 28
    %v3224 = vpop.permute.xlu0 %3223
    %3225 = vrot.lane.b32.xlu0 %v2778, 28
    %v3226 = vpop.permute.xlu0 %3225
    %3243 = vrot.lane.b32.xlu0 %v2058, 30
    %v3244 = vpop.permute.xlu0 %3243
    %3245 = vrot.lane.b32.xlu0 %v2162, 30
    %v3246 = vpop.permute.xlu0 %3245
    %3247 = vrot.lane.b32.xlu0 %v2266, 30
    %v3248 = vpop.permute.xlu0 %3247
    %3249 = vrot.lane.b32.xlu0 %v2370, 30
    %v3250 = vpop.permute.xlu0 %3249
    %3251 = vrot.lane.b32.xlu0 %v2474, 30
    %v3252 = vpop.permute.xlu0 %3251
    %3253 = vrot.lane.b32.xlu0 %v2578, 30
    %v3254 = vpop.permute.xlu0 %3253
    %3255 = vrot.lane.b32.xlu0 %v2682, 30
    %v3256 = vpop.permute.xlu0 %3255
    %3257 = vrot.lane.b32.xlu0 %v2786, 30
    %v3258 = vpop.permute.xlu0 %3257
    %v3267 = vsel %vm1554, %v1982, %v2796
    %v3268 = vsel %vm1554, %v2086, %v2798
    %v3269 = vsel %vm1554, %v2190, %v2800
    %v3270 = vsel %vm1554, %v2294, %v2802
    %v3271 = vsel %vm1554, %v2398, %v2804
    %v3272 = vsel %vm1554, %v2502, %v2806
    %v3273 = vsel %vm1554, %v2606, %v2808
    %v3274 = vsel %vm1554, %v2710, %v2810
    %v3275 = vsel %vm1563, %v3267, %v2828
    %v3276 = vsel %vm1563, %v3268, %v2830
    %v3277 = vsel %vm1563, %v3269, %v2832
    %v3278 = vsel %vm1563, %v3270, %v2834
    %v3279 = vsel %vm1563, %v3271, %v2836
    %v3280 = vsel %vm1563, %v3272, %v2838
    %v3281 = vsel %vm1563, %v3273, %v2840
    %v3282 = vsel %vm1563, %v3274, %v2842
    %v3283 = vsel %vm1572, %v3275, %v2860
    %v3284 = vsel %vm1572, %v3276, %v2862
    %v3285 = vsel %vm1572, %v3277, %v2864
    %v3286 = vsel %vm1572, %v3278, %v2866
    %v3287 = vsel %vm1572, %v3279, %v2868
    %v3288 = vsel %vm1572, %v3280, %v2870
    %v3289 = vsel %vm1572, %v3281, %v2872
    %v3290 = vsel %vm1572, %v3282, %v2874
    %v3291 = vsel %vm1581, %v3283, %v2892
    %v3292 = vsel %vm1581, %v3284, %v2894
    %v3293 = vsel %vm1581, %v3285, %v2896
    %v3294 = vsel %vm1581, %v3286, %v2898
    %v3295 = vsel %vm1581, %v3287, %v2900
    %v3296 = vsel %vm1581, %v3288, %v2902
    %v3297 = vsel %vm1581, %v3289, %v2904
    %v3298 = vsel %vm1581, %v3290, %v2906
    %v3299 = vsel %vm1590, %v3291, %v2924
    %v3300 = vsel %vm1590, %v3292, %v2926
    %v3301 = vsel %vm1590, %v3293, %v2928
    %v3302 = vsel %vm1590, %v3294, %v2930
    %v3303 = vsel %vm1590, %v3295, %v2932
    %v3304 = vsel %vm1590, %v3296, %v2934
    %v3305 = vsel %vm1590, %v3297, %v2936
    %v3306 = vsel %vm1590, %v3298, %v2938
    %v3307 = vsel %vm1599, %v3299, %v2956
    %v3308 = vsel %vm1599, %v3300, %v2958
    %v3309 = vsel %vm1599, %v3301, %v2960
    %v3310 = vsel %vm1599, %v3302, %v2962
    %v3311 = vsel %vm1599, %v3303, %v2964
    %v3312 = vsel %vm1599, %v3304, %v2966
    %v3313 = vsel %vm1599, %v3305, %v2968
    %v3314 = vsel %vm1599, %v3306, %v2970
    %v3315 = vsel %vm1608, %v3307, %v2988
    %v3316 = vsel %vm1608, %v3308, %v2990
    %v3317 = vsel %vm1608, %v3309, %v2992
    %v3318 = vsel %vm1608, %v3310, %v2994
    %v3319 = vsel %vm1608, %v3311, %v2996
    %v3320 = vsel %vm1608, %v3312, %v2998
    %v3321 = vsel %vm1608, %v3313, %v3000
    %v3322 = vsel %vm1608, %v3314, %v3002
    %v3323 = vsel %vm1617, %v3315, %v3020
    %v3324 = vsel %vm1617, %v3316, %v3022
    %v3325 = vsel %vm1617, %v3317, %v3024
    %v3326 = vsel %vm1617, %v3318, %v3026
    %v3327 = vsel %vm1617, %v3319, %v3028
    %v3328 = vsel %vm1617, %v3320, %v3030
    %v3329 = vsel %vm1617, %v3321, %v3032
    %v3330 = vsel %vm1617, %v3322, %v3034
    %v3331 = vsel %vm1626, %v3323, %v3052
    %v3332 = vsel %vm1626, %v3324, %v3054
    %v3333 = vsel %vm1626, %v3325, %v3056
    %v3334 = vsel %vm1626, %v3326, %v3058
    %v3335 = vsel %vm1626, %v3327, %v3060
    %v3336 = vsel %vm1626, %v3328, %v3062
    %v3337 = vsel %vm1626, %v3329, %v3064
    %v3338 = vsel %vm1626, %v3330, %v3066
    %v3339 = vsel %vm1635, %v3331, %v3084
    %v3340 = vsel %vm1635, %v3332, %v3086
    %v3341 = vsel %vm1635, %v3333, %v3088
    %v3342 = vsel %vm1635, %v3334, %v3090
    %v3343 = vsel %vm1635, %v3335, %v3092
    %v3344 = vsel %vm1635, %v3336, %v3094
    %v3345 = vsel %vm1635, %v3337, %v3096
    %v3346 = vsel %vm1635, %v3338, %v3098
    %v3347 = vsel %vm1644, %v3339, %v3116
    %v3348 = vsel %vm1644, %v3340, %v3118
    %v3349 = vsel %vm1644, %v3341, %v3120
    %v3350 = vsel %vm1644, %v3342, %v3122
    %v3351 = vsel %vm1644, %v3343, %v3124
    %v3352 = vsel %vm1644, %v3344, %v3126
    %v3353 = vsel %vm1644, %v3345, %v3128
    %v3354 = vsel %vm1644, %v3346, %v3130
    %v3355 = vsel %vm1653, %v3347, %v3148
    %v3356 = vsel %vm1653, %v3348, %v3150
    %v3357 = vsel %vm1653, %v3349, %v3152
    %v3358 = vsel %vm1653, %v3350, %v3154
    %v3359 = vsel %vm1653, %v3351, %v3156
    %v3360 = vsel %vm1653, %v3352, %v3158
    %v3361 = vsel %vm1653, %v3353, %v3160
    %v3362 = vsel %vm1653, %v3354, %v3162
    %v3363 = vsel %vm1662, %v3355, %v3180
    %v3364 = vsel %vm1662, %v3356, %v3182
    %v3365 = vsel %vm1662, %v3357, %v3184
    %v3366 = vsel %vm1662, %v3358, %v3186
    %v3367 = vsel %vm1662, %v3359, %v3188
    %v3368 = vsel %vm1662, %v3360, %v3190
    %v3369 = vsel %vm1662, %v3361, %v3192
    %v3370 = vsel %vm1662, %v3362, %v3194
    %v3371 = vsel %vm1671, %v3363, %v3212
    %v3372 = vsel %vm1671, %v3364, %v3214
    %v3373 = vsel %vm1671, %v3365, %v3216
    %v3374 = vsel %vm1671, %v3366, %v3218
    %v3375 = vsel %vm1671, %v3367, %v3220
    %v3376 = vsel %vm1671, %v3368, %v3222
    %v3377 = vsel %vm1671, %v3369, %v3224
    %v3378 = vsel %vm1671, %v3370, %v3226
    %v3379 = vsel %vm1680, %v3371, %v3244
    %v3380 = vsel %vm1680, %v3372, %v3246
    %v3381 = vsel %vm1680, %v3373, %v3248
    %v3382 = vsel %vm1680, %v3374, %v3250
    %v3383 = vsel %vm1680, %v3375, %v3252
    %v3384 = vsel %vm1680, %v3376, %v3254
    %v3385 = vsel %vm1680, %v3377, %v3256
    %v3386 = vsel %vm1680, %v3378, %v3258
    %3395 = vrot.lane.b32.xlu0 %v3379, 64
    %v3396 = vpop.permute.xlu0 %3395
    %3397 = vrot.lane.b32.xlu0 %v3380, 64
    %v3398 = vpop.permute.xlu0 %3397
    %3399 = vrot.lane.b32.xlu0 %v3381, 64
    %v3400 = vpop.permute.xlu0 %3399
    %3401 = vrot.lane.b32.xlu0 %v3382, 64
    %v3402 = vpop.permute.xlu0 %3401
    %3403 = vrot.lane.b32.xlu0 %v3383, 64
    %v3404 = vpop.permute.xlu0 %3403
    %3405 = vrot.lane.b32.xlu0 %v3384, 64
    %v3406 = vpop.permute.xlu0 %3405
    %3407 = vrot.lane.b32.xlu0 %v3385, 64
    %v3408 = vpop.permute.xlu0 %3407
    %3409 = vrot.lane.b32.xlu0 %v3386, 64
    %v3410 = vpop.permute.xlu0 %3409
    %vm3419 = vcmask 779776
    %3420 = vst.msk [vmem:[#allocation5] sm:$0x3] %vm3419, %v3396
    %3421 = vst.msk [vmem:[#allocation5 + $0x8] sm:$0x3] %vm3419, %v3398
    %3422 = vst.msk [vmem:[#allocation5 + $0x10] sm:$0x3] %vm3419, %v3400
    %3423 = vst.msk [vmem:[#allocation5 + $0x18] sm:$0x3] %vm3419, %v3402
    %3424 = vst.msk [vmem:[#allocation5 + $0x20] sm:$0x3] %vm3419, %v3404
    %3425 = vst.msk [vmem:[#allocation5 + $0x28] sm:$0x3] %vm3419, %v3406
    %3426 = vst.msk [vmem:[#allocation5 + $0x30] sm:$0x3] %vm3419, %v3408
    %3427 = vst.msk [vmem:[#allocation5 + $0x38] sm:$0x3] %vm3419, %v3410
    %3428 = vrot.lane.b32.xlu0 %v3379, 96
    %v3429 = vpop.permute.xlu0 %3428
    %3430 = vrot.lane.b32.xlu0 %v3380, 96
    %v3431 = vpop.permute.xlu0 %3430
    %3432 = vrot.lane.b32.xlu0 %v3381, 96
    %v3433 = vpop.permute.xlu0 %3432
    %3434 = vrot.lane.b32.xlu0 %v3382, 96
    %v3435 = vpop.permute.xlu0 %3434
    %3436 = vrot.lane.b32.xlu0 %v3383, 96
    %v3437 = vpop.permute.xlu0 %3436
    %3438 = vrot.lane.b32.xlu0 %v3384, 96
    %v3439 = vpop.permute.xlu0 %3438
    %3440 = vrot.lane.b32.xlu0 %v3385, 96
    %v3441 = vpop.permute.xlu0 %3440
    %3442 = vrot.lane.b32.xlu0 %v3386, 96
    %v3443 = vpop.permute.xlu0 %3442
    %vm3452 = vcmask 1042176
    %3453 = vst.msk [vmem:[#allocation5] sm:$0x3] %vm3452, %v3429
    %3454 = vst.msk [vmem:[#allocation5 + $0x8] sm:$0x3] %vm3452, %v3431
    %3455 = vst.msk [vmem:[#allocation5 + $0x10] sm:$0x3] %vm3452, %v3433
    %3456 = vst.msk [vmem:[#allocation5 + $0x18] sm:$0x3] %vm3452, %v3435
    %3457 = vst.msk [vmem:[#allocation5 + $0x20] sm:$0x3] %vm3452, %v3437
    %3458 = vst.msk [vmem:[#allocation5 + $0x28] sm:$0x3] %vm3452, %v3439
    %3459 = vst.msk [vmem:[#allocation5 + $0x30] sm:$0x3] %vm3452, %v3441
    %3460 = vst.msk [vmem:[#allocation5 + $0x38] sm:$0x3] %vm3452, %v3443
    %v3461 = vld [vmem:[#allocation2] sm:$0x3]
    %v3462 = vld [vmem:[#allocation2 + $0x2] sm:$0x3]
    %v3463 = vld [vmem:[#allocation2 + $0x4] sm:$0x3]
    %v3464 = vld [vmem:[#allocation2 + $0x6] sm:$0x3]
    %v3465 = vld [vmem:[#allocation2 + $0x8] sm:$0x3]
    %v3466 = vld [vmem:[#allocation2 + $0xa] sm:$0x3]
    %v3467 = vld [vmem:[#allocation2 + $0xc] sm:$0x3]
    %v3468 = vld [vmem:[#allocation2 + $0xe] sm:$0x3]
    %v3469 = vperm.slane %v3461, 0
    %v3470 = vlaneseq
    %v3471 = vshrl.u32 %v3470, 7
    %v3472 = vadd.s32 %v3471, 32
    %3473 = vset.pattern.permute.xlu0 %v3472
    %3474 = vperm.xlu0 %3473, %v3469
    %v3475 = vpop.permute.xlu0 %3474
    %v3476 = vlaneseq
    %v3477 = vshrl.u32 %v3476, 7
    %v3478 = vadd.s32 %v3477, 40
    %3479 = vset.pattern.permute.xlu0 %v3478
    %3480 = vperm.xlu0 %3479, %v3469
    %v3481 = vpop.permute.xlu0 %3480
    %v3482 = vperm.slane %v3461, 1
    %v3483 = vlaneseq
    %v3484 = vshrl.u32 %v3483, 7
    %v3485 = vadd.s32 %v3484, 32
    %3486 = vset.pattern.permute.xlu0 %v3485
    %3487 = vperm.xlu0 %3486, %v3482
    %v3488 = vpop.permute.xlu0 %3487
    %v3489 = vlaneseq
    %v3490 = vshrl.u32 %v3489, 7
    %v3491 = vadd.s32 %v3490, 40
    %3492 = vset.pattern.permute.xlu0 %v3491
    %3493 = vperm.xlu0 %3492, %v3482
    %v3494 = vpop.permute.xlu0 %3493
    %v3495 = vperm.slane %v3462, 0
    %v3496 = vlaneseq
    %v3497 = vshrl.u32 %v3496, 7
    %v3498 = vadd.s32 %v3497, 32
    %3499 = vset.pattern.permute.xlu0 %v3498
    %3500 = vperm.xlu0 %3499, %v3495
    %v3501 = vpop.permute.xlu0 %3500
    %v3502 = vlaneseq
    %v3503 = vshrl.u32 %v3502, 7
    %v3504 = vadd.s32 %v3503, 40
    %3505 = vset.pattern.permute.xlu0 %v3504
    %3506 = vperm.xlu0 %3505, %v3495
    %v3507 = vpop.permute.xlu0 %3506
    %v3508 = vperm.slane %v3462, 1
    %v3509 = vlaneseq
    %v3510 = vshrl.u32 %v3509, 7
    %v3511 = vadd.s32 %v3510, 32
    %3512 = vset.pattern.permute.xlu0 %v3511
    %3513 = vperm.xlu0 %3512, %v3508
    %v3514 = vpop.permute.xlu0 %3513
    %v3515 = vlaneseq
    %v3516 = vshrl.u32 %v3515, 7
    %v3517 = vadd.s32 %v3516, 40
    %3518 = vset.pattern.permute.xlu0 %v3517
    %3519 = vperm.xlu0 %3518, %v3508
    %v3520 = vpop.permute.xlu0 %3519
    %v3521 = vperm.slane %v3463, 0
    %v3522 = vlaneseq
    %v3523 = vshrl.u32 %v3522, 7
    %v3524 = vadd.s32 %v3523, 32
    %3525 = vset.pattern.permute.xlu0 %v3524
    %3526 = vperm.xlu0 %3525, %v3521
    %v3527 = vpop.permute.xlu0 %3526
    %v3528 = vlaneseq
    %v3529 = vshrl.u32 %v3528, 7
    %v3530 = vadd.s32 %v3529, 40
    %3531 = vset.pattern.permute.xlu0 %v3530
    %3532 = vperm.xlu0 %3531, %v3521
    %v3533 = vpop.permute.xlu0 %3532
    %v3534 = vperm.slane %v3463, 1
    %v3535 = vlaneseq
    %v3536 = vshrl.u32 %v3535, 7
    %v3537 = vadd.s32 %v3536, 32
    %3538 = vset.pattern.permute.xlu0 %v3537
    %3539 = vperm.xlu0 %3538, %v3534
    %v3540 = vpop.permute.xlu0 %3539
    %v3541 = vlaneseq
    %v3542 = vshrl.u32 %v3541, 7
    %v3543 = vadd.s32 %v3542, 40
    %3544 = vset.pattern.permute.xlu0 %v3543
    %3545 = vperm.xlu0 %3544, %v3534
    %v3546 = vpop.permute.xlu0 %3545
    %v3547 = vperm.slane %v3464, 0
    %v3548 = vlaneseq
    %v3549 = vshrl.u32 %v3548, 7
    %v3550 = vadd.s32 %v3549, 32
    %3551 = vset.pattern.permute.xlu0 %v3550
    %3552 = vperm.xlu0 %3551, %v3547
    %v3553 = vpop.permute.xlu0 %3552
    %v3554 = vlaneseq
    %v3555 = vshrl.u32 %v3554, 7
    %v3556 = vadd.s32 %v3555, 40
    %3557 = vset.pattern.permute.xlu0 %v3556
    %3558 = vperm.xlu0 %3557, %v3547
    %v3559 = vpop.permute.xlu0 %3558
    %v3560 = vperm.slane %v3464, 1
    %v3561 = vlaneseq
    %v3562 = vshrl.u32 %v3561, 7
    %v3563 = vadd.s32 %v3562, 32
    %3564 = vset.pattern.permute.xlu0 %v3563
    %3565 = vperm.xlu0 %3564, %v3560
    %v3566 = vpop.permute.xlu0 %3565
    %v3567 = vlaneseq
    %v3568 = vshrl.u32 %v3567, 7
    %v3569 = vadd.s32 %v3568, 40
    %3570 = vset.pattern.permute.xlu0 %v3569
    %3571 = vperm.xlu0 %3570, %v3560
    %v3572 = vpop.permute.xlu0 %3571
    %v3573 = vperm.slane %v3465, 0
    %v3574 = vlaneseq
    %v3575 = vshrl.u32 %v3574, 7
    %v3576 = vadd.s32 %v3575, 32
    %3577 = vset.pattern.permute.xlu0 %v3576
    %3578 = vperm.xlu0 %3577, %v3573
    %v3579 = vpop.permute.xlu0 %3578
    %v3580 = vlaneseq
    %v3581 = vshrl.u32 %v3580, 7
    %v3582 = vadd.s32 %v3581, 40
    %3583 = vset.pattern.permute.xlu0 %v3582
    %3584 = vperm.xlu0 %3583, %v3573
    %v3585 = vpop.permute.xlu0 %3584
    %v3586 = vperm.slane %v3465, 1
    %v3587 = vlaneseq
    %v3588 = vshrl.u32 %v3587, 7
    %v3589 = vadd.s32 %v3588, 32
    %3590 = vset.pattern.permute.xlu0 %v3589
    %3591 = vperm.xlu0 %3590, %v3586
    %v3592 = vpop.permute.xlu0 %3591
    %v3593 = vlaneseq
    %v3594 = vshrl.u32 %v3593, 7
    %v3595 = vadd.s32 %v3594, 40
    %3596 = vset.pattern.permute.xlu0 %v3595
    %3597 = vperm.xlu0 %3596, %v3586
    %v3598 = vpop.permute.xlu0 %3597
    %v3599 = vperm.slane %v3466, 0
    %v3600 = vlaneseq
    %v3601 = vshrl.u32 %v3600, 7
    %v3602 = vadd.s32 %v3601, 32
    %3603 = vset.pattern.permute.xlu0 %v3602
    %3604 = vperm.xlu0 %3603, %v3599
    %v3605 = vpop.permute.xlu0 %3604
    %v3606 = vlaneseq
    %v3607 = vshrl.u32 %v3606, 7
    %v3608 = vadd.s32 %v3607, 40
    %3609 = vset.pattern.permute.xlu0 %v3608
    %3610 = vperm.xlu0 %3609, %v3599
    %v3611 = vpop.permute.xlu0 %3610
    %v3612 = vperm.slane %v3466, 1
    %v3613 = vlaneseq
    %v3614 = vshrl.u32 %v3613, 7
    %v3615 = vadd.s32 %v3614, 32
    %3616 = vset.pattern.permute.xlu0 %v3615
    %3617 = vperm.xlu0 %3616, %v3612
    %v3618 = vpop.permute.xlu0 %3617
    %v3619 = vlaneseq
    %v3620 = vshrl.u32 %v3619, 7
    %v3621 = vadd.s32 %v3620, 40
    %3622 = vset.pattern.permute.xlu0 %v3621
    %3623 = vperm.xlu0 %3622, %v3612
    %v3624 = vpop.permute.xlu0 %3623
    %v3625 = vperm.slane %v3467, 0
    %v3626 = vlaneseq
    %v3627 = vshrl.u32 %v3626, 7
    %v3628 = vadd.s32 %v3627, 32
    %3629 = vset.pattern.permute.xlu0 %v3628
    %3630 = vperm.xlu0 %3629, %v3625
    %v3631 = vpop.permute.xlu0 %3630
    %v3632 = vlaneseq
    %v3633 = vshrl.u32 %v3632, 7
    %v3634 = vadd.s32 %v3633, 40
    %3635 = vset.pattern.permute.xlu0 %v3634
    %3636 = vperm.xlu0 %3635, %v3625
    %v3637 = vpop.permute.xlu0 %3636
    %v3638 = vperm.slane %v3467, 1
    %v3639 = vlaneseq
    %v3640 = vshrl.u32 %v3639, 7
    %v3641 = vadd.s32 %v3640, 32
    %3642 = vset.pattern.permute.xlu0 %v3641
    %3643 = vperm.xlu0 %3642, %v3638
    %v3644 = vpop.permute.xlu0 %3643
    %v3645 = vlaneseq
    %v3646 = vshrl.u32 %v3645, 7
    %v3647 = vadd.s32 %v3646, 40
    %3648 = vset.pattern.permute.xlu0 %v3647
    %3649 = vperm.xlu0 %3648, %v3638
    %v3650 = vpop.permute.xlu0 %3649
    %v3651 = vperm.slane %v3468, 0
    %v3652 = vlaneseq
    %v3653 = vshrl.u32 %v3652, 7
    %v3654 = vadd.s32 %v3653, 32
    %3655 = vset.pattern.permute.xlu0 %v3654
    %3656 = vperm.xlu0 %3655, %v3651
    %v3657 = vpop.permute.xlu0 %3656
    %v3658 = vlaneseq
    %v3659 = vshrl.u32 %v3658, 7
    %v3660 = vadd.s32 %v3659, 40
    %3661 = vset.pattern.permute.xlu0 %v3660
    %3662 = vperm.xlu0 %3661, %v3651
    %v3663 = vpop.permute.xlu0 %3662
    %v3664 = vperm.slane %v3468, 1
    %v3665 = vlaneseq
    %v3666 = vshrl.u32 %v3665, 7
    %v3667 = vadd.s32 %v3666, 32
    %3668 = vset.pattern.permute.xlu0 %v3667
    %3669 = vperm.xlu0 %3668, %v3664
    %v3670 = vpop.permute.xlu0 %3669
    %v3671 = vlaneseq
    %v3672 = vshrl.u32 %v3671, 7
    %v3673 = vadd.s32 %v3672, 40
    %3674 = vset.pattern.permute.xlu0 %v3673
    %3675 = vperm.xlu0 %3674, %v3664
    %v3676 = vpop.permute.xlu0 %3675
    %v3677 = vrot.slane %v3475, 4
    %v3678 = vsel %vm242, 0.0, %v3677
    %v3680 = vunpack.c.l.s4 1983009808
    %v3681 = vunpack.c.0.s8 %v3680
    %v3682 = vperm.slane %v3475, %v3681
    %v3684 = vunpack.c.l.s4 1983009808
    %v3685 = vunpack.c.0.s8 %v3684
    %v3686 = vperm.slane %v3678, %v3685
    %v3687 = vrot.slane %v3488, 4
    %v3688 = vsel %vm242, 0.0, %v3687
    %v3690 = vunpack.c.l.s4 1983009808
    %v3691 = vunpack.c.0.s8 %v3690
    %v3692 = vperm.slane %v3488, %v3691
    %v3694 = vunpack.c.l.s4 1983009808
    %v3695 = vunpack.c.0.s8 %v3694
    %v3696 = vperm.slane %v3688, %v3695
    %v3697 = vrot.slane %v3692, 4
    %v3698 = vsel %vm242, %v3697, %v3682
    %v3699 = vrot.slane %v3682, 4
    %v3700 = vsel %vm242, %v3692, %v3699
    %v3702 = vunpack.c.l.s4 1934713408
    %v3703 = vunpack.c.0.s8 %v3702
    %v3704 = vperm.slane %v3698, %v3703
    %v3706 = vunpack.c.l.s4 1934713408
    %v3707 = vunpack.c.0.s8 %v3706
    %v3708 = vperm.slane %v3700, %v3707
    %v3709 = vrot.slane %v3696, 4
    %v3710 = vsel %vm242, %v3709, %v3686
    %v3711 = vrot.slane %v3686, 4
    %v3712 = vsel %vm242, %v3696, %v3711
    %v3714 = vunpack.c.l.s4 1934713408
    %v3715 = vunpack.c.0.s8 %v3714
    %v3716 = vperm.slane %v3710, %v3715
    %v3718 = vunpack.c.l.s4 1934713408
    %v3719 = vunpack.c.0.s8 %v3718
    %v3720 = vperm.slane %v3712, %v3719
    %v3721 = vrot.slane %v3704, 4
    %v3722 = vsel %vm242, 0.0, %v3721
    %v3723 = vrot.slane %v3708, 4
    %v3724 = vsel %vm242, 0.0, %v3723
    %v3725 = vrot.slane %v3716, 4
    %v3726 = vsel %vm242, 0.0, %v3725
    %v3727 = vrot.slane %v3720, 4
    %v3728 = vsel %vm242, 0.0, %v3727
    %v3729 = vrot.slane %v3481, 4
    %v3730 = vsel %vm242, 0.0, %v3729
    %v3732 = vunpack.c.l.s4 1983009808
    %v3733 = vunpack.c.0.s8 %v3732
    %v3734 = vperm.slane %v3481, %v3733
    %v3736 = vunpack.c.l.s4 1983009808
    %v3737 = vunpack.c.0.s8 %v3736
    %v3738 = vperm.slane %v3730, %v3737
    %v3739 = vrot.slane %v3494, 4
    %v3740 = vsel %vm242, 0.0, %v3739
    %v3742 = vunpack.c.l.s4 1983009808
    %v3743 = vunpack.c.0.s8 %v3742
    %v3744 = vperm.slane %v3494, %v3743
    %v3746 = vunpack.c.l.s4 1983009808
    %v3747 = vunpack.c.0.s8 %v3746
    %v3748 = vperm.slane %v3740, %v3747
    %v3749 = vrot.slane %v3744, 4
    %v3750 = vsel %vm242, %v3749, %v3734
    %v3751 = vrot.slane %v3734, 4
    %v3752 = vsel %vm242, %v3744, %v3751
    %v3754 = vunpack.c.l.s4 1934713408
    %v3755 = vunpack.c.0.s8 %v3754
    %v3756 = vperm.slane %v3750, %v3755
    %v3758 = vunpack.c.l.s4 1934713408
    %v3759 = vunpack.c.0.s8 %v3758
    %v3760 = vperm.slane %v3752, %v3759
    %v3761 = vrot.slane %v3748, 4
    %v3762 = vsel %vm242, %v3761, %v3738
    %v3763 = vrot.slane %v3738, 4
    %v3764 = vsel %vm242, %v3748, %v3763
    %v3766 = vunpack.c.l.s4 1934713408
    %v3767 = vunpack.c.0.s8 %v3766
    %v3768 = vperm.slane %v3762, %v3767
    %v3770 = vunpack.c.l.s4 1934713408
    %v3771 = vunpack.c.0.s8 %v3770
    %v3772 = vperm.slane %v3764, %v3771
    %v3773 = vrot.slane %v3756, 4
    %v3774 = vsel %vm242, 0.0, %v3773
    %v3775 = vrot.slane %v3760, 4
    %v3776 = vsel %vm242, 0.0, %v3775
    %v3777 = vrot.slane %v3768, 4
    %v3778 = vsel %vm242, 0.0, %v3777
    %v3779 = vrot.slane %v3772, 4
    %v3780 = vsel %vm242, 0.0, %v3779
    %v3781 = vrot.slane %v3501, 4
    %v3782 = vsel %vm242, 0.0, %v3781
    %v3784 = vunpack.c.l.s4 1983009808
    %v3785 = vunpack.c.0.s8 %v3784
    %v3786 = vperm.slane %v3501, %v3785
    %v3788 = vunpack.c.l.s4 1983009808
    %v3789 = vunpack.c.0.s8 %v3788
    %v3790 = vperm.slane %v3782, %v3789
    %v3791 = vrot.slane %v3514, 4
    %v3792 = vsel %vm242, 0.0, %v3791
    %v3794 = vunpack.c.l.s4 1983009808
    %v3795 = vunpack.c.0.s8 %v3794
    %v3796 = vperm.slane %v3514, %v3795
    %v3798 = vunpack.c.l.s4 1983009808
    %v3799 = vunpack.c.0.s8 %v3798
    %v3800 = vperm.slane %v3792, %v3799
    %v3801 = vrot.slane %v3796, 4
    %v3802 = vsel %vm242, %v3801, %v3786
    %v3803 = vrot.slane %v3786, 4
    %v3804 = vsel %vm242, %v3796, %v3803
    %v3806 = vunpack.c.l.s4 1934713408
    %v3807 = vunpack.c.0.s8 %v3806
    %v3808 = vperm.slane %v3802, %v3807
    %v3810 = vunpack.c.l.s4 1934713408
    %v3811 = vunpack.c.0.s8 %v3810
    %v3812 = vperm.slane %v3804, %v3811
    %v3813 = vrot.slane %v3800, 4
    %v3814 = vsel %vm242, %v3813, %v3790
    %v3815 = vrot.slane %v3790, 4
    %v3816 = vsel %vm242, %v3800, %v3815
    %v3818 = vunpack.c.l.s4 1934713408
    %v3819 = vunpack.c.0.s8 %v3818
    %v3820 = vperm.slane %v3814, %v3819
    %v3822 = vunpack.c.l.s4 1934713408
    %v3823 = vunpack.c.0.s8 %v3822
    %v3824 = vperm.slane %v3816, %v3823
    %v3825 = vrot.slane %v3808, 4
    %v3826 = vsel %vm242, 0.0, %v3825
    %v3827 = vrot.slane %v3812, 4
    %v3828 = vsel %vm242, 0.0, %v3827
    %v3829 = vrot.slane %v3820, 4
    %v3830 = vsel %vm242, 0.0, %v3829
    %v3831 = vrot.slane %v3824, 4
    %v3832 = vsel %vm242, 0.0, %v3831
    %v3833 = vrot.slane %v3507, 4
    %v3834 = vsel %vm242, 0.0, %v3833
    %v3836 = vunpack.c.l.s4 1983009808
    %v3837 = vunpack.c.0.s8 %v3836
    %v3838 = vperm.slane %v3507, %v3837
    %v3840 = vunpack.c.l.s4 1983009808
    %v3841 = vunpack.c.0.s8 %v3840
    %v3842 = vperm.slane %v3834, %v3841
    %v3843 = vrot.slane %v3520, 4
    %v3844 = vsel %vm242, 0.0, %v3843
    %v3846 = vunpack.c.l.s4 1983009808
    %v3847 = vunpack.c.0.s8 %v3846
    %v3848 = vperm.slane %v3520, %v3847
    %v3850 = vunpack.c.l.s4 1983009808
    %v3851 = vunpack.c.0.s8 %v3850
    %v3852 = vperm.slane %v3844, %v3851
    %v3853 = vrot.slane %v3848, 4
    %v3854 = vsel %vm242, %v3853, %v3838
    %v3855 = vrot.slane %v3838, 4
    %v3856 = vsel %vm242, %v3848, %v3855
    %v3858 = vunpack.c.l.s4 1934713408
    %v3859 = vunpack.c.0.s8 %v3858
    %v3860 = vperm.slane %v3854, %v3859
    %v3862 = vunpack.c.l.s4 1934713408
    %v3863 = vunpack.c.0.s8 %v3862
    %v3864 = vperm.slane %v3856, %v3863
    %v3865 = vrot.slane %v3852, 4
    %v3866 = vsel %vm242, %v3865, %v3842
    %v3867 = vrot.slane %v3842, 4
    %v3868 = vsel %vm242, %v3852, %v3867
    %v3870 = vunpack.c.l.s4 1934713408
    %v3871 = vunpack.c.0.s8 %v3870
    %v3872 = vperm.slane %v3866, %v3871
    %v3874 = vunpack.c.l.s4 1934713408
    %v3875 = vunpack.c.0.s8 %v3874
    %v3876 = vperm.slane %v3868, %v3875
    %v3877 = vrot.slane %v3860, 4
    %v3878 = vsel %vm242, 0.0, %v3877
    %v3879 = vrot.slane %v3864, 4
    %v3880 = vsel %vm242, 0.0, %v3879
    %v3881 = vrot.slane %v3872, 4
    %v3882 = vsel %vm242, 0.0, %v3881
    %v3883 = vrot.slane %v3876, 4
    %v3884 = vsel %vm242, 0.0, %v3883
    %v3885 = vrot.slane %v3527, 4
    %v3886 = vsel %vm242, 0.0, %v3885
    %v3888 = vunpack.c.l.s4 1983009808
    %v3889 = vunpack.c.0.s8 %v3888
    %v3890 = vperm.slane %v3527, %v3889
    %v3892 = vunpack.c.l.s4 1983009808
    %v3893 = vunpack.c.0.s8 %v3892
    %v3894 = vperm.slane %v3886, %v3893
    %v3895 = vrot.slane %v3540, 4
    %v3896 = vsel %vm242, 0.0, %v3895
    %v3898 = vunpack.c.l.s4 1983009808
    %v3899 = vunpack.c.0.s8 %v3898
    %v3900 = vperm.slane %v3540, %v3899
    %v3902 = vunpack.c.l.s4 1983009808
    %v3903 = vunpack.c.0.s8 %v3902
    %v3904 = vperm.slane %v3896, %v3903
    %v3905 = vrot.slane %v3900, 4
    %v3906 = vsel %vm242, %v3905, %v3890
    %v3907 = vrot.slane %v3890, 4
    %v3908 = vsel %vm242, %v3900, %v3907
    %v3910 = vunpack.c.l.s4 1934713408
    %v3911 = vunpack.c.0.s8 %v3910
    %v3912 = vperm.slane %v3906, %v3911
    %v3914 = vunpack.c.l.s4 1934713408
    %v3915 = vunpack.c.0.s8 %v3914
    %v3916 = vperm.slane %v3908, %v3915
    %v3917 = vrot.slane %v3904, 4
    %v3918 = vsel %vm242, %v3917, %v3894
    %v3919 = vrot.slane %v3894, 4
    %v3920 = vsel %vm242, %v3904, %v3919
    %v3922 = vunpack.c.l.s4 1934713408
    %v3923 = vunpack.c.0.s8 %v3922
    %v3924 = vperm.slane %v3918, %v3923
    %v3926 = vunpack.c.l.s4 1934713408
    %v3927 = vunpack.c.0.s8 %v3926
    %v3928 = vperm.slane %v3920, %v3927
    %v3929 = vrot.slane %v3912, 4
    %v3930 = vsel %vm242, 0.0, %v3929
    %v3931 = vrot.slane %v3916, 4
    %v3932 = vsel %vm242, 0.0, %v3931
    %v3933 = vrot.slane %v3924, 4
    %v3934 = vsel %vm242, 0.0, %v3933
    %v3935 = vrot.slane %v3928, 4
    %v3936 = vsel %vm242, 0.0, %v3935
    %v3937 = vrot.slane %v3533, 4
    %v3938 = vsel %vm242, 0.0, %v3937
    %v3940 = vunpack.c.l.s4 1983009808
    %v3941 = vunpack.c.0.s8 %v3940
    %v3942 = vperm.slane %v3533, %v3941
    %v3944 = vunpack.c.l.s4 1983009808
    %v3945 = vunpack.c.0.s8 %v3944
    %v3946 = vperm.slane %v3938, %v3945
    %v3947 = vrot.slane %v3546, 4
    %v3948 = vsel %vm242, 0.0, %v3947
    %v3950 = vunpack.c.l.s4 1983009808
    %v3951 = vunpack.c.0.s8 %v3950
    %v3952 = vperm.slane %v3546, %v3951
    %v3954 = vunpack.c.l.s4 1983009808
    %v3955 = vunpack.c.0.s8 %v3954
    %v3956 = vperm.slane %v3948, %v3955
    %v3957 = vrot.slane %v3952, 4
    %v3958 = vsel %vm242, %v3957, %v3942
    %v3959 = vrot.slane %v3942, 4
    %v3960 = vsel %vm242, %v3952, %v3959
    %v3962 = vunpack.c.l.s4 1934713408
    %v3963 = vunpack.c.0.s8 %v3962
    %v3964 = vperm.slane %v3958, %v3963
    %v3966 = vunpack.c.l.s4 1934713408
    %v3967 = vunpack.c.0.s8 %v3966
    %v3968 = vperm.slane %v3960, %v3967
    %v3969 = vrot.slane %v3956, 4
    %v3970 = vsel %vm242, %v3969, %v3946
    %v3971 = vrot.slane %v3946, 4
    %v3972 = vsel %vm242, %v3956, %v3971
    %v3974 = vunpack.c.l.s4 1934713408
    %v3975 = vunpack.c.0.s8 %v3974
    %v3976 = vperm.slane %v3970, %v3975
    %v3978 = vunpack.c.l.s4 1934713408
    %v3979 = vunpack.c.0.s8 %v3978
    %v3980 = vperm.slane %v3972, %v3979
    %v3981 = vrot.slane %v3964, 4
    %v3982 = vsel %vm242, 0.0, %v3981
    %v3983 = vrot.slane %v3968, 4
    %v3984 = vsel %vm242, 0.0, %v3983
    %v3985 = vrot.slane %v3976, 4
    %v3986 = vsel %vm242, 0.0, %v3985
    %v3987 = vrot.slane %v3980, 4
    %v3988 = vsel %vm242, 0.0, %v3987
    %v3989 = vrot.slane %v3553, 4
    %v3990 = vsel %vm242, 0.0, %v3989
    %v3992 = vunpack.c.l.s4 1983009808
    %v3993 = vunpack.c.0.s8 %v3992
    %v3994 = vperm.slane %v3553, %v3993
    %v3996 = vunpack.c.l.s4 1983009808
    %v3997 = vunpack.c.0.s8 %v3996
    %v3998 = vperm.slane %v3990, %v3997
    %v3999 = vrot.slane %v3566, 4
    %v4000 = vsel %vm242, 0.0, %v3999
    %v4002 = vunpack.c.l.s4 1983009808
    %v4003 = vunpack.c.0.s8 %v4002
    %v4004 = vperm.slane %v3566, %v4003
    %v4006 = vunpack.c.l.s4 1983009808
    %v4007 = vunpack.c.0.s8 %v4006
    %v4008 = vperm.slane %v4000, %v4007
    %v4009 = vrot.slane %v4004, 4
    %v4010 = vsel %vm242, %v4009, %v3994
    %v4011 = vrot.slane %v3994, 4
    %v4012 = vsel %vm242, %v4004, %v4011
    %v4014 = vunpack.c.l.s4 1934713408
    %v4015 = vunpack.c.0.s8 %v4014
    %v4016 = vperm.slane %v4010, %v4015
    %v4018 = vunpack.c.l.s4 1934713408
    %v4019 = vunpack.c.0.s8 %v4018
    %v4020 = vperm.slane %v4012, %v4019
    %v4021 = vrot.slane %v4008, 4
    %v4022 = vsel %vm242, %v4021, %v3998
    %v4023 = vrot.slane %v3998, 4
    %v4024 = vsel %vm242, %v4008, %v4023
    %v4026 = vunpack.c.l.s4 1934713408
    %v4027 = vunpack.c.0.s8 %v4026
    %v4028 = vperm.slane %v4022, %v4027
    %v4030 = vunpack.c.l.s4 1934713408
    %v4031 = vunpack.c.0.s8 %v4030
    %v4032 = vperm.slane %v4024, %v4031
    %v4033 = vrot.slane %v4016, 4
    %v4034 = vsel %vm242, 0.0, %v4033
    %v4035 = vrot.slane %v4020, 4
    %v4036 = vsel %vm242, 0.0, %v4035
    %v4037 = vrot.slane %v4028, 4
    %v4038 = vsel %vm242, 0.0, %v4037
    %v4039 = vrot.slane %v4032, 4
    %v4040 = vsel %vm242, 0.0, %v4039
    %v4041 = vrot.slane %v3559, 4
    %v4042 = vsel %vm242, 0.0, %v4041
    %v4044 = vunpack.c.l.s4 1983009808
    %v4045 = vunpack.c.0.s8 %v4044
    %v4046 = vperm.slane %v3559, %v4045
    %v4048 = vunpack.c.l.s4 1983009808
    %v4049 = vunpack.c.0.s8 %v4048
    %v4050 = vperm.slane %v4042, %v4049
    %v4051 = vrot.slane %v3572, 4
    %v4052 = vsel %vm242, 0.0, %v4051
    %v4054 = vunpack.c.l.s4 1983009808
    %v4055 = vunpack.c.0.s8 %v4054
    %v4056 = vperm.slane %v3572, %v4055
    %v4058 = vunpack.c.l.s4 1983009808
    %v4059 = vunpack.c.0.s8 %v4058
    %v4060 = vperm.slane %v4052, %v4059
    %v4061 = vrot.slane %v4056, 4
    %v4062 = vsel %vm242, %v4061, %v4046
    %v4063 = vrot.slane %v4046, 4
    %v4064 = vsel %vm242, %v4056, %v4063
    %v4066 = vunpack.c.l.s4 1934713408
    %v4067 = vunpack.c.0.s8 %v4066
    %v4068 = vperm.slane %v4062, %v4067
    %v4070 = vunpack.c.l.s4 1934713408
    %v4071 = vunpack.c.0.s8 %v4070
    %v4072 = vperm.slane %v4064, %v4071
    %v4073 = vrot.slane %v4060, 4
    %v4074 = vsel %vm242, %v4073, %v4050
    %v4075 = vrot.slane %v4050, 4
    %v4076 = vsel %vm242, %v4060, %v4075
    %v4078 = vunpack.c.l.s4 1934713408
    %v4079 = vunpack.c.0.s8 %v4078
    %v4080 = vperm.slane %v4074, %v4079
    %v4082 = vunpack.c.l.s4 1934713408
    %v4083 = vunpack.c.0.s8 %v4082
    %v4084 = vperm.slane %v4076, %v4083
    %v4085 = vrot.slane %v4068, 4
    %v4086 = vsel %vm242, 0.0, %v4085
    %v4087 = vrot.slane %v4072, 4
    %v4088 = vsel %vm242, 0.0, %v4087
    %v4089 = vrot.slane %v4080, 4
    %v4090 = vsel %vm242, 0.0, %v4089
    %v4091 = vrot.slane %v4084, 4
    %v4092 = vsel %vm242, 0.0, %v4091
    %v4093 = vrot.slane %v3579, 4
    %v4094 = vsel %vm242, 0.0, %v4093
    %v4096 = vunpack.c.l.s4 1983009808
    %v4097 = vunpack.c.0.s8 %v4096
    %v4098 = vperm.slane %v3579, %v4097
    %v4100 = vunpack.c.l.s4 1983009808
    %v4101 = vunpack.c.0.s8 %v4100
    %v4102 = vperm.slane %v4094, %v4101
    %v4103 = vrot.slane %v3592, 4
    %v4104 = vsel %vm242, 0.0, %v4103
    %v4106 = vunpack.c.l.s4 1983009808
    %v4107 = vunpack.c.0.s8 %v4106
    %v4108 = vperm.slane %v3592, %v4107
    %v4110 = vunpack.c.l.s4 1983009808
    %v4111 = vunpack.c.0.s8 %v4110
    %v4112 = vperm.slane %v4104, %v4111
    %v4113 = vrot.slane %v4108, 4
    %v4114 = vsel %vm242, %v4113, %v4098
    %v4115 = vrot.slane %v4098, 4
    %v4116 = vsel %vm242, %v4108, %v4115
    %v4118 = vunpack.c.l.s4 1934713408
    %v4119 = vunpack.c.0.s8 %v4118
    %v4120 = vperm.slane %v4114, %v4119
    %v4122 = vunpack.c.l.s4 1934713408
    %v4123 = vunpack.c.0.s8 %v4122
    %v4124 = vperm.slane %v4116, %v4123
    %v4125 = vrot.slane %v4112, 4
    %v4126 = vsel %vm242, %v4125, %v4102
    %v4127 = vrot.slane %v4102, 4
    %v4128 = vsel %vm242, %v4112, %v4127
    %v4130 = vunpack.c.l.s4 1934713408
    %v4131 = vunpack.c.0.s8 %v4130
    %v4132 = vperm.slane %v4126, %v4131
    %v4134 = vunpack.c.l.s4 1934713408
    %v4135 = vunpack.c.0.s8 %v4134
    %v4136 = vperm.slane %v4128, %v4135
    %v4137 = vrot.slane %v4120, 4
    %v4138 = vsel %vm242, 0.0, %v4137
    %v4139 = vrot.slane %v4124, 4
    %v4140 = vsel %vm242, 0.0, %v4139
    %v4141 = vrot.slane %v4132, 4
    %v4142 = vsel %vm242, 0.0, %v4141
    %v4143 = vrot.slane %v4136, 4
    %v4144 = vsel %vm242, 0.0, %v4143
    %v4145 = vrot.slane %v3585, 4
    %v4146 = vsel %vm242, 0.0, %v4145
    %v4148 = vunpack.c.l.s4 1983009808
    %v4149 = vunpack.c.0.s8 %v4148
    %v4150 = vperm.slane %v3585, %v4149
    %v4152 = vunpack.c.l.s4 1983009808
    %v4153 = vunpack.c.0.s8 %v4152
    %v4154 = vperm.slane %v4146, %v4153
    %v4155 = vrot.slane %v3598, 4
    %v4156 = vsel %vm242, 0.0, %v4155
    %v4158 = vunpack.c.l.s4 1983009808
    %v4159 = vunpack.c.0.s8 %v4158
    %v4160 = vperm.slane %v3598, %v4159
    %v4162 = vunpack.c.l.s4 1983009808
    %v4163 = vunpack.c.0.s8 %v4162
    %v4164 = vperm.slane %v4156, %v4163
    %v4165 = vrot.slane %v4160, 4
    %v4166 = vsel %vm242, %v4165, %v4150
    %v4167 = vrot.slane %v4150, 4
    %v4168 = vsel %vm242, %v4160, %v4167
    %v4170 = vunpack.c.l.s4 1934713408
    %v4171 = vunpack.c.0.s8 %v4170
    %v4172 = vperm.slane %v4166, %v4171
    %v4174 = vunpack.c.l.s4 1934713408
    %v4175 = vunpack.c.0.s8 %v4174
    %v4176 = vperm.slane %v4168, %v4175
    %v4177 = vrot.slane %v4164, 4
    %v4178 = vsel %vm242, %v4177, %v4154
    %v4179 = vrot.slane %v4154, 4
    %v4180 = vsel %vm242, %v4164, %v4179
    %v4182 = vunpack.c.l.s4 1934713408
    %v4183 = vunpack.c.0.s8 %v4182
    %v4184 = vperm.slane %v4178, %v4183
    %v4186 = vunpack.c.l.s4 1934713408
    %v4187 = vunpack.c.0.s8 %v4186
    %v4188 = vperm.slane %v4180, %v4187
    %v4189 = vrot.slane %v4172, 4
    %v4190 = vsel %vm242, 0.0, %v4189
    %v4191 = vrot.slane %v4176, 4
    %v4192 = vsel %vm242, 0.0, %v4191
    %v4193 = vrot.slane %v4184, 4
    %v4194 = vsel %vm242, 0.0, %v4193
    %v4195 = vrot.slane %v4188, 4
    %v4196 = vsel %vm242, 0.0, %v4195
    %v4197 = vrot.slane %v3605, 4
    %v4198 = vsel %vm242, 0.0, %v4197
    %v4200 = vunpack.c.l.s4 1983009808
    %v4201 = vunpack.c.0.s8 %v4200
    %v4202 = vperm.slane %v3605, %v4201
    %v4204 = vunpack.c.l.s4 1983009808
    %v4205 = vunpack.c.0.s8 %v4204
    %v4206 = vperm.slane %v4198, %v4205
    %v4207 = vrot.slane %v3618, 4
    %v4208 = vsel %vm242, 0.0, %v4207
    %v4210 = vunpack.c.l.s4 1983009808
    %v4211 = vunpack.c.0.s8 %v4210
    %v4212 = vperm.slane %v3618, %v4211
    %v4214 = vunpack.c.l.s4 1983009808
    %v4215 = vunpack.c.0.s8 %v4214
    %v4216 = vperm.slane %v4208, %v4215
    %v4217 = vrot.slane %v4212, 4
    %v4218 = vsel %vm242, %v4217, %v4202
    %v4219 = vrot.slane %v4202, 4
    %v4220 = vsel %vm242, %v4212, %v4219
    %v4222 = vunpack.c.l.s4 1934713408
    %v4223 = vunpack.c.0.s8 %v4222
    %v4224 = vperm.slane %v4218, %v4223
    %v4226 = vunpack.c.l.s4 1934713408
    %v4227 = vunpack.c.0.s8 %v4226
    %v4228 = vperm.slane %v4220, %v4227
    %v4229 = vrot.slane %v4216, 4
    %v4230 = vsel %vm242, %v4229, %v4206
    %v4231 = vrot.slane %v4206, 4
    %v4232 = vsel %vm242, %v4216, %v4231
    %v4234 = vunpack.c.l.s4 1934713408
    %v4235 = vunpack.c.0.s8 %v4234
    %v4236 = vperm.slane %v4230, %v4235
    %v4238 = vunpack.c.l.s4 1934713408
    %v4239 = vunpack.c.0.s8 %v4238
    %v4240 = vperm.slane %v4232, %v4239
    %v4241 = vrot.slane %v4224, 4
    %v4242 = vsel %vm242, 0.0, %v4241
    %v4243 = vrot.slane %v4228, 4
    %v4244 = vsel %vm242, 0.0, %v4243
    %v4245 = vrot.slane %v4236, 4
    %v4246 = vsel %vm242, 0.0, %v4245
    %v4247 = vrot.slane %v4240, 4
    %v4248 = vsel %vm242, 0.0, %v4247
    %v4249 = vrot.slane %v3611, 4
    %v4250 = vsel %vm242, 0.0, %v4249
    %v4252 = vunpack.c.l.s4 1983009808
    %v4253 = vunpack.c.0.s8 %v4252
    %v4254 = vperm.slane %v3611, %v4253
    %v4256 = vunpack.c.l.s4 1983009808
    %v4257 = vunpack.c.0.s8 %v4256
    %v4258 = vperm.slane %v4250, %v4257
    %v4259 = vrot.slane %v3624, 4
    %v4260 = vsel %vm242, 0.0, %v4259
    %v4262 = vunpack.c.l.s4 1983009808
    %v4263 = vunpack.c.0.s8 %v4262
    %v4264 = vperm.slane %v3624, %v4263
    %v4266 = vunpack.c.l.s4 1983009808
    %v4267 = vunpack.c.0.s8 %v4266
    %v4268 = vperm.slane %v4260, %v4267
    %v4269 = vrot.slane %v4264, 4
    %v4270 = vsel %vm242, %v4269, %v4254
    %v4271 = vrot.slane %v4254, 4
    %v4272 = vsel %vm242, %v4264, %v4271
    %v4274 = vunpack.c.l.s4 1934713408
    %v4275 = vunpack.c.0.s8 %v4274
    %v4276 = vperm.slane %v4270, %v4275
    %v4278 = vunpack.c.l.s4 1934713408
    %v4279 = vunpack.c.0.s8 %v4278
    %v4280 = vperm.slane %v4272, %v4279
    %v4281 = vrot.slane %v4268, 4
    %v4282 = vsel %vm242, %v4281, %v4258
    %v4283 = vrot.slane %v4258, 4
    %v4284 = vsel %vm242, %v4268, %v4283
    %v4286 = vunpack.c.l.s4 1934713408
    %v4287 = vunpack.c.0.s8 %v4286
    %v4288 = vperm.slane %v4282, %v4287
    %v4290 = vunpack.c.l.s4 1934713408
    %v4291 = vunpack.c.0.s8 %v4290
    %v4292 = vperm.slane %v4284, %v4291
    %v4293 = vrot.slane %v4276, 4
    %v4294 = vsel %vm242, 0.0, %v4293
    %v4295 = vrot.slane %v4280, 4
    %v4296 = vsel %vm242, 0.0, %v4295
    %v4297 = vrot.slane %v4288, 4
    %v4298 = vsel %vm242, 0.0, %v4297
    %v4299 = vrot.slane %v4292, 4
    %v4300 = vsel %vm242, 0.0, %v4299
    %v4301 = vrot.slane %v3631, 4
    %v4302 = vsel %vm242, 0.0, %v4301
    %v4304 = vunpack.c.l.s4 1983009808
    %v4305 = vunpack.c.0.s8 %v4304
    %v4306 = vperm.slane %v3631, %v4305
    %v4308 = vunpack.c.l.s4 1983009808
    %v4309 = vunpack.c.0.s8 %v4308
    %v4310 = vperm.slane %v4302, %v4309
    %v4311 = vrot.slane %v3644, 4
    %v4312 = vsel %vm242, 0.0, %v4311
    %v4314 = vunpack.c.l.s4 1983009808
    %v4315 = vunpack.c.0.s8 %v4314
    %v4316 = vperm.slane %v3644, %v4315
    %v4318 = vunpack.c.l.s4 1983009808
    %v4319 = vunpack.c.0.s8 %v4318
    %v4320 = vperm.slane %v4312, %v4319
    %v4321 = vrot.slane %v4316, 4
    %v4322 = vsel %vm242, %v4321, %v4306
    %v4323 = vrot.slane %v4306, 4
    %v4324 = vsel %vm242, %v4316, %v4323
    %v4326 = vunpack.c.l.s4 1934713408
    %v4327 = vunpack.c.0.s8 %v4326
    %v4328 = vperm.slane %v4322, %v4327
    %v4330 = vunpack.c.l.s4 1934713408
    %v4331 = vunpack.c.0.s8 %v4330
    %v4332 = vperm.slane %v4324, %v4331
    %v4333 = vrot.slane %v4320, 4
    %v4334 = vsel %vm242, %v4333, %v4310
    %v4335 = vrot.slane %v4310, 4
    %v4336 = vsel %vm242, %v4320, %v4335
    %v4338 = vunpack.c.l.s4 1934713408
    %v4339 = vunpack.c.0.s8 %v4338
    %v4340 = vperm.slane %v4334, %v4339
    %v4342 = vunpack.c.l.s4 1934713408
    %v4343 = vunpack.c.0.s8 %v4342
    %v4344 = vperm.slane %v4336, %v4343
    %v4345 = vrot.slane %v4328, 4
    %v4346 = vsel %vm242, 0.0, %v4345
    %v4347 = vrot.slane %v4332, 4
    %v4348 = vsel %vm242, 0.0, %v4347
    %v4349 = vrot.slane %v4340, 4
    %v4350 = vsel %vm242, 0.0, %v4349
    %v4351 = vrot.slane %v4344, 4
    %v4352 = vsel %vm242, 0.0, %v4351
    %v4353 = vrot.slane %v3637, 4
    %v4354 = vsel %vm242, 0.0, %v4353
    %v4356 = vunpack.c.l.s4 1983009808
    %v4357 = vunpack.c.0.s8 %v4356
    %v4358 = vperm.slane %v3637, %v4357
    %v4360 = vunpack.c.l.s4 1983009808
    %v4361 = vunpack.c.0.s8 %v4360
    %v4362 = vperm.slane %v4354, %v4361
    %v4363 = vrot.slane %v3650, 4
    %v4364 = vsel %vm242, 0.0, %v4363
    %v4366 = vunpack.c.l.s4 1983009808
    %v4367 = vunpack.c.0.s8 %v4366
    %v4368 = vperm.slane %v3650, %v4367
    %v4370 = vunpack.c.l.s4 1983009808
    %v4371 = vunpack.c.0.s8 %v4370
    %v4372 = vperm.slane %v4364, %v4371
    %v4373 = vrot.slane %v4368, 4
    %v4374 = vsel %vm242, %v4373, %v4358
    %v4375 = vrot.slane %v4358, 4
    %v4376 = vsel %vm242, %v4368, %v4375
    %v4378 = vunpack.c.l.s4 1934713408
    %v4379 = vunpack.c.0.s8 %v4378
    %v4380 = vperm.slane %v4374, %v4379
    %v4382 = vunpack.c.l.s4 1934713408
    %v4383 = vunpack.c.0.s8 %v4382
    %v4384 = vperm.slane %v4376, %v4383
    %v4385 = vrot.slane %v4372, 4
    %v4386 = vsel %vm242, %v4385, %v4362
    %v4387 = vrot.slane %v4362, 4
    %v4388 = vsel %vm242, %v4372, %v4387
    %v4390 = vunpack.c.l.s4 1934713408
    %v4391 = vunpack.c.0.s8 %v4390
    %v4392 = vperm.slane %v4386, %v4391
    %v4394 = vunpack.c.l.s4 1934713408
    %v4395 = vunpack.c.0.s8 %v4394
    %v4396 = vperm.slane %v4388, %v4395
    %v4397 = vrot.slane %v4380, 4
    %v4398 = vsel %vm242, 0.0, %v4397
    %v4399 = vrot.slane %v4384, 4
    %v4400 = vsel %vm242, 0.0, %v4399
    %v4401 = vrot.slane %v4392, 4
    %v4402 = vsel %vm242, 0.0, %v4401
    %v4403 = vrot.slane %v4396, 4
    %v4404 = vsel %vm242, 0.0, %v4403
    %v4405 = vrot.slane %v3657, 4
    %v4406 = vsel %vm242, 0.0, %v4405
    %v4408 = vunpack.c.l.s4 1983009808
    %v4409 = vunpack.c.0.s8 %v4408
    %v4410 = vperm.slane %v3657, %v4409
    %v4412 = vunpack.c.l.s4 1983009808
    %v4413 = vunpack.c.0.s8 %v4412
    %v4414 = vperm.slane %v4406, %v4413
    %v4415 = vrot.slane %v3670, 4
    %v4416 = vsel %vm242, 0.0, %v4415
    %v4418 = vunpack.c.l.s4 1983009808
    %v4419 = vunpack.c.0.s8 %v4418
    %v4420 = vperm.slane %v3670, %v4419
    %v4422 = vunpack.c.l.s4 1983009808
    %v4423 = vunpack.c.0.s8 %v4422
    %v4424 = vperm.slane %v4416, %v4423
    %v4425 = vrot.slane %v4420, 4
    %v4426 = vsel %vm242, %v4425, %v4410
    %v4427 = vrot.slane %v4410, 4
    %v4428 = vsel %vm242, %v4420, %v4427
    %v4430 = vunpack.c.l.s4 1934713408
    %v4431 = vunpack.c.0.s8 %v4430
    %v4432 = vperm.slane %v4426, %v4431
    %v4434 = vunpack.c.l.s4 1934713408
    %v4435 = vunpack.c.0.s8 %v4434
    %v4436 = vperm.slane %v4428, %v4435
    %v4437 = vrot.slane %v4424, 4
    %v4438 = vsel %vm242, %v4437, %v4414
    %v4439 = vrot.slane %v4414, 4
    %v4440 = vsel %vm242, %v4424, %v4439
    %v4442 = vunpack.c.l.s4 1934713408
    %v4443 = vunpack.c.0.s8 %v4442
    %v4444 = vperm.slane %v4438, %v4443
    %v4446 = vunpack.c.l.s4 1934713408
    %v4447 = vunpack.c.0.s8 %v4446
    %v4448 = vperm.slane %v4440, %v4447
    %v4449 = vrot.slane %v4432, 4
    %v4450 = vsel %vm242, 0.0, %v4449
    %v4451 = vrot.slane %v4436, 4
    %v4452 = vsel %vm242, 0.0, %v4451
    %v4453 = vrot.slane %v4444, 4
    %v4454 = vsel %vm242, 0.0, %v4453
    %v4455 = vrot.slane %v4448, 4
    %v4456 = vsel %vm242, 0.0, %v4455
    %v4457 = vrot.slane %v3663, 4
    %v4458 = vsel %vm242, 0.0, %v4457
    %v4460 = vunpack.c.l.s4 1983009808
    %v4461 = vunpack.c.0.s8 %v4460
    %v4462 = vperm.slane %v3663, %v4461
    %v4464 = vunpack.c.l.s4 1983009808
    %v4465 = vunpack.c.0.s8 %v4464
    %v4466 = vperm.slane %v4458, %v4465
    %v4467 = vrot.slane %v3676, 4
    %v4468 = vsel %vm242, 0.0, %v4467
    %v4470 = vunpack.c.l.s4 1983009808
    %v4471 = vunpack.c.0.s8 %v4470
    %v4472 = vperm.slane %v3676, %v4471
    %v4474 = vunpack.c.l.s4 1983009808
    %v4475 = vunpack.c.0.s8 %v4474
    %v4476 = vperm.slane %v4468, %v4475
    %v4477 = vrot.slane %v4472, 4
    %v4478 = vsel %vm242, %v4477, %v4462
    %v4479 = vrot.slane %v4462, 4
    %v4480 = vsel %vm242, %v4472, %v4479
    %v4482 = vunpack.c.l.s4 1934713408
    %v4483 = vunpack.c.0.s8 %v4482
    %v4484 = vperm.slane %v4478, %v4483
    %v4486 = vunpack.c.l.s4 1934713408
    %v4487 = vunpack.c.0.s8 %v4486
    %v4488 = vperm.slane %v4480, %v4487
    %v4489 = vrot.slane %v4476, 4
    %v4490 = vsel %vm242, %v4489, %v4466
    %v4491 = vrot.slane %v4466, 4
    %v4492 = vsel %vm242, %v4476, %v4491
    %v4494 = vunpack.c.l.s4 1934713408
    %v4495 = vunpack.c.0.s8 %v4494
    %v4496 = vperm.slane %v4490, %v4495
    %v4498 = vunpack.c.l.s4 1934713408
    %v4499 = vunpack.c.0.s8 %v4498
    %v4500 = vperm.slane %v4492, %v4499
    %v4501 = vrot.slane %v4484, 4
    %v4502 = vsel %vm242, 0.0, %v4501
    %v4503 = vrot.slane %v4488, 4
    %v4504 = vsel %vm242, 0.0, %v4503
    %v4505 = vrot.slane %v4496, 4
    %v4506 = vsel %vm242, 0.0, %v4505
    %v4507 = vrot.slane %v4500, 4
    %v4508 = vsel %vm242, 0.0, %v4507
    %4517 = vrot.lane.b32.xlu0 %v3722, 2
    %v4518 = vpop.permute.xlu0 %4517
    %4519 = vrot.lane.b32.xlu0 %v3826, 2
    %v4520 = vpop.permute.xlu0 %4519
    %4521 = vrot.lane.b32.xlu0 %v3930, 2
    %v4522 = vpop.permute.xlu0 %4521
    %4523 = vrot.lane.b32.xlu0 %v4034, 2
    %v4524 = vpop.permute.xlu0 %4523
    %4525 = vrot.lane.b32.xlu0 %v4138, 2
    %v4526 = vpop.permute.xlu0 %4525
    %4527 = vrot.lane.b32.xlu0 %v4242, 2
    %v4528 = vpop.permute.xlu0 %4527
    %4529 = vrot.lane.b32.xlu0 %v4346, 2
    %v4530 = vpop.permute.xlu0 %4529
    %4531 = vrot.lane.b32.xlu0 %v4450, 2
    %v4532 = vpop.permute.xlu0 %4531
    %4549 = vrot.lane.b32.xlu0 %v3708, 4
    %v4550 = vpop.permute.xlu0 %4549
    %4551 = vrot.lane.b32.xlu0 %v3812, 4
    %v4552 = vpop.permute.xlu0 %4551
    %4553 = vrot.lane.b32.xlu0 %v3916, 4
    %v4554 = vpop.permute.xlu0 %4553
    %4555 = vrot.lane.b32.xlu0 %v4020, 4
    %v4556 = vpop.permute.xlu0 %4555
    %4557 = vrot.lane.b32.xlu0 %v4124, 4
    %v4558 = vpop.permute.xlu0 %4557
    %4559 = vrot.lane.b32.xlu0 %v4228, 4
    %v4560 = vpop.permute.xlu0 %4559
    %4561 = vrot.lane.b32.xlu0 %v4332, 4
    %v4562 = vpop.permute.xlu0 %4561
    %4563 = vrot.lane.b32.xlu0 %v4436, 4
    %v4564 = vpop.permute.xlu0 %4563
    %4581 = vrot.lane.b32.xlu0 %v3724, 6
    %v4582 = vpop.permute.xlu0 %4581
    %4583 = vrot.lane.b32.xlu0 %v3828, 6
    %v4584 = vpop.permute.xlu0 %4583
    %4585 = vrot.lane.b32.xlu0 %v3932, 6
    %v4586 = vpop.permute.xlu0 %4585
    %4587 = vrot.lane.b32.xlu0 %v4036, 6
    %v4588 = vpop.permute.xlu0 %4587
    %4589 = vrot.lane.b32.xlu0 %v4140, 6
    %v4590 = vpop.permute.xlu0 %4589
    %4591 = vrot.lane.b32.xlu0 %v4244, 6
    %v4592 = vpop.permute.xlu0 %4591
    %4593 = vrot.lane.b32.xlu0 %v4348, 6
    %v4594 = vpop.permute.xlu0 %4593
    %4595 = vrot.lane.b32.xlu0 %v4452, 6
    %v4596 = vpop.permute.xlu0 %4595
    %4613 = vrot.lane.b32.xlu0 %v3716, 8
    %v4614 = vpop.permute.xlu0 %4613
    %4615 = vrot.lane.b32.xlu0 %v3820, 8
    %v4616 = vpop.permute.xlu0 %4615
    %4617 = vrot.lane.b32.xlu0 %v3924, 8
    %v4618 = vpop.permute.xlu0 %4617
    %4619 = vrot.lane.b32.xlu0 %v4028, 8
    %v4620 = vpop.permute.xlu0 %4619
    %4621 = vrot.lane.b32.xlu0 %v4132, 8
    %v4622 = vpop.permute.xlu0 %4621
    %4623 = vrot.lane.b32.xlu0 %v4236, 8
    %v4624 = vpop.permute.xlu0 %4623
    %4625 = vrot.lane.b32.xlu0 %v4340, 8
    %v4626 = vpop.permute.xlu0 %4625
    %4627 = vrot.lane.b32.xlu0 %v4444, 8
    %v4628 = vpop.permute.xlu0 %4627
    %4645 = vrot.lane.b32.xlu0 %v3726, 10
    %v4646 = vpop.permute.xlu0 %4645
    %4647 = vrot.lane.b32.xlu0 %v3830, 10
    %v4648 = vpop.permute.xlu0 %4647
    %4649 = vrot.lane.b32.xlu0 %v3934, 10
    %v4650 = vpop.permute.xlu0 %4649
    %4651 = vrot.lane.b32.xlu0 %v4038, 10
    %v4652 = vpop.permute.xlu0 %4651
    %4653 = vrot.lane.b32.xlu0 %v4142, 10
    %v4654 = vpop.permute.xlu0 %4653
    %4655 = vrot.lane.b32.xlu0 %v4246, 10
    %v4656 = vpop.permute.xlu0 %4655
    %4657 = vrot.lane.b32.xlu0 %v4350, 10
    %v4658 = vpop.permute.xlu0 %4657
    %4659 = vrot.lane.b32.xlu0 %v4454, 10
    %v4660 = vpop.permute.xlu0 %4659
    %4677 = vrot.lane.b32.xlu0 %v3720, 12
    %v4678 = vpop.permute.xlu0 %4677
    %4679 = vrot.lane.b32.xlu0 %v3824, 12
    %v4680 = vpop.permute.xlu0 %4679
    %4681 = vrot.lane.b32.xlu0 %v3928, 12
    %v4682 = vpop.permute.xlu0 %4681
    %4683 = vrot.lane.b32.xlu0 %v4032, 12
    %v4684 = vpop.permute.xlu0 %4683
    %4685 = vrot.lane.b32.xlu0 %v4136, 12
    %v4686 = vpop.permute.xlu0 %4685
    %4687 = vrot.lane.b32.xlu0 %v4240, 12
    %v4688 = vpop.permute.xlu0 %4687
    %4689 = vrot.lane.b32.xlu0 %v4344, 12
    %v4690 = vpop.permute.xlu0 %4689
    %4691 = vrot.lane.b32.xlu0 %v4448, 12
    %v4692 = vpop.permute.xlu0 %4691
    %4709 = vrot.lane.b32.xlu0 %v3728, 14
    %v4710 = vpop.permute.xlu0 %4709
    %4711 = vrot.lane.b32.xlu0 %v3832, 14
    %v4712 = vpop.permute.xlu0 %4711
    %4713 = vrot.lane.b32.xlu0 %v3936, 14
    %v4714 = vpop.permute.xlu0 %4713
    %4715 = vrot.lane.b32.xlu0 %v4040, 14
    %v4716 = vpop.permute.xlu0 %4715
    %4717 = vrot.lane.b32.xlu0 %v4144, 14
    %v4718 = vpop.permute.xlu0 %4717
    %4719 = vrot.lane.b32.xlu0 %v4248, 14
    %v4720 = vpop.permute.xlu0 %4719
    %4721 = vrot.lane.b32.xlu0 %v4352, 14
    %v4722 = vpop.permute.xlu0 %4721
    %4723 = vrot.lane.b32.xlu0 %v4456, 14
    %v4724 = vpop.permute.xlu0 %4723
    %4741 = vrot.lane.b32.xlu0 %v3756, 16
    %v4742 = vpop.permute.xlu0 %4741
    %4743 = vrot.lane.b32.xlu0 %v3860, 16
    %v4744 = vpop.permute.xlu0 %4743
    %4745 = vrot.lane.b32.xlu0 %v3964, 16
    %v4746 = vpop.permute.xlu0 %4745
    %4747 = vrot.lane.b32.xlu0 %v4068, 16
    %v4748 = vpop.permute.xlu0 %4747
    %4749 = vrot.lane.b32.xlu0 %v4172, 16
    %v4750 = vpop.permute.xlu0 %4749
    %4751 = vrot.lane.b32.xlu0 %v4276, 16
    %v4752 = vpop.permute.xlu0 %4751
    %4753 = vrot.lane.b32.xlu0 %v4380, 16
    %v4754 = vpop.permute.xlu0 %4753
    %4755 = vrot.lane.b32.xlu0 %v4484, 16
    %v4756 = vpop.permute.xlu0 %4755
    %4773 = vrot.lane.b32.xlu0 %v3774, 18
    %v4774 = vpop.permute.xlu0 %4773
    %4775 = vrot.lane.b32.xlu0 %v3878, 18
    %v4776 = vpop.permute.xlu0 %4775
    %4777 = vrot.lane.b32.xlu0 %v3982, 18
    %v4778 = vpop.permute.xlu0 %4777
    %4779 = vrot.lane.b32.xlu0 %v4086, 18
    %v4780 = vpop.permute.xlu0 %4779
    %4781 = vrot.lane.b32.xlu0 %v4190, 18
    %v4782 = vpop.permute.xlu0 %4781
    %4783 = vrot.lane.b32.xlu0 %v4294, 18
    %v4784 = vpop.permute.xlu0 %4783
    %4785 = vrot.lane.b32.xlu0 %v4398, 18
    %v4786 = vpop.permute.xlu0 %4785
    %4787 = vrot.lane.b32.xlu0 %v4502, 18
    %v4788 = vpop.permute.xlu0 %4787
    %4805 = vrot.lane.b32.xlu0 %v3760, 20
    %v4806 = vpop.permute.xlu0 %4805
    %4807 = vrot.lane.b32.xlu0 %v3864, 20
    %v4808 = vpop.permute.xlu0 %4807
    %4809 = vrot.lane.b32.xlu0 %v3968, 20
    %v4810 = vpop.permute.xlu0 %4809
    %4811 = vrot.lane.b32.xlu0 %v4072, 20
    %v4812 = vpop.permute.xlu0 %4811
    %4813 = vrot.lane.b32.xlu0 %v4176, 20
    %v4814 = vpop.permute.xlu0 %4813
    %4815 = vrot.lane.b32.xlu0 %v4280, 20
    %v4816 = vpop.permute.xlu0 %4815
    %4817 = vrot.lane.b32.xlu0 %v4384, 20
    %v4818 = vpop.permute.xlu0 %4817
    %4819 = vrot.lane.b32.xlu0 %v4488, 20
    %v4820 = vpop.permute.xlu0 %4819
    %4837 = vrot.lane.b32.xlu0 %v3776, 22
    %v4838 = vpop.permute.xlu0 %4837
    %4839 = vrot.lane.b32.xlu0 %v3880, 22
    %v4840 = vpop.permute.xlu0 %4839
    %4841 = vrot.lane.b32.xlu0 %v3984, 22
    %v4842 = vpop.permute.xlu0 %4841
    %4843 = vrot.lane.b32.xlu0 %v4088, 22
    %v4844 = vpop.permute.xlu0 %4843
    %4845 = vrot.lane.b32.xlu0 %v4192, 22
    %v4846 = vpop.permute.xlu0 %4845
    %4847 = vrot.lane.b32.xlu0 %v4296, 22
    %v4848 = vpop.permute.xlu0 %4847
    %4849 = vrot.lane.b32.xlu0 %v4400, 22
    %v4850 = vpop.permute.xlu0 %4849
    %4851 = vrot.lane.b32.xlu0 %v4504, 22
    %v4852 = vpop.permute.xlu0 %4851
    %4869 = vrot.lane.b32.xlu0 %v3768, 24
    %v4870 = vpop.permute.xlu0 %4869
    %4871 = vrot.lane.b32.xlu0 %v3872, 24
    %v4872 = vpop.permute.xlu0 %4871
    %4873 = vrot.lane.b32.xlu0 %v3976, 24
    %v4874 = vpop.permute.xlu0 %4873
    %4875 = vrot.lane.b32.xlu0 %v4080, 24
    %v4876 = vpop.permute.xlu0 %4875
    %4877 = vrot.lane.b32.xlu0 %v4184, 24
    %v4878 = vpop.permute.xlu0 %4877
    %4879 = vrot.lane.b32.xlu0 %v4288, 24
    %v4880 = vpop.permute.xlu0 %4879
    %4881 = vrot.lane.b32.xlu0 %v4392, 24
    %v4882 = vpop.permute.xlu0 %4881
    %4883 = vrot.lane.b32.xlu0 %v4496, 24
    %v4884 = vpop.permute.xlu0 %4883
    %4901 = vrot.lane.b32.xlu0 %v3778, 26
    %v4902 = vpop.permute.xlu0 %4901
    %4903 = vrot.lane.b32.xlu0 %v3882, 26
    %v4904 = vpop.permute.xlu0 %4903
    %4905 = vrot.lane.b32.xlu0 %v3986, 26
    %v4906 = vpop.permute.xlu0 %4905
    %4907 = vrot.lane.b32.xlu0 %v4090, 26
    %v4908 = vpop.permute.xlu0 %4907
    %4909 = vrot.lane.b32.xlu0 %v4194, 26
    %v4910 = vpop.permute.xlu0 %4909
    %4911 = vrot.lane.b32.xlu0 %v4298, 26
    %v4912 = vpop.permute.xlu0 %4911
    %4913 = vrot.lane.b32.xlu0 %v4402, 26
    %v4914 = vpop.permute.xlu0 %4913
    %4915 = vrot.lane.b32.xlu0 %v4506, 26
    %v4916 = vpop.permute.xlu0 %4915
    %4933 = vrot.lane.b32.xlu0 %v3772, 28
    %v4934 = vpop.permute.xlu0 %4933
    %4935 = vrot.lane.b32.xlu0 %v3876, 28
    %v4936 = vpop.permute.xlu0 %4935
    %4937 = vrot.lane.b32.xlu0 %v3980, 28
    %v4938 = vpop.permute.xlu0 %4937
    %4939 = vrot.lane.b32.xlu0 %v4084, 28
    %v4940 = vpop.permute.xlu0 %4939
    %4941 = vrot.lane.b32.xlu0 %v4188, 28
    %v4942 = vpop.permute.xlu0 %4941
    %4943 = vrot.lane.b32.xlu0 %v4292, 28
    %v4944 = vpop.permute.xlu0 %4943
    %4945 = vrot.lane.b32.xlu0 %v4396, 28
    %v4946 = vpop.permute.xlu0 %4945
    %4947 = vrot.lane.b32.xlu0 %v4500, 28
    %v4948 = vpop.permute.xlu0 %4947
    %4965 = vrot.lane.b32.xlu0 %v3780, 30
    %v4966 = vpop.permute.xlu0 %4965
    %4967 = vrot.lane.b32.xlu0 %v3884, 30
    %v4968 = vpop.permute.xlu0 %4967
    %4969 = vrot.lane.b32.xlu0 %v3988, 30
    %v4970 = vpop.permute.xlu0 %4969
    %4971 = vrot.lane.b32.xlu0 %v4092, 30
    %v4972 = vpop.permute.xlu0 %4971
    %4973 = vrot.lane.b32.xlu0 %v4196, 30
    %v4974 = vpop.permute.xlu0 %4973
    %4975 = vrot.lane.b32.xlu0 %v4300, 30
    %v4976 = vpop.permute.xlu0 %4975
    %4977 = vrot.lane.b32.xlu0 %v4404, 30
    %v4978 = vpop.permute.xlu0 %4977
    %4979 = vrot.lane.b32.xlu0 %v4508, 30
    %v4980 = vpop.permute.xlu0 %4979
    %v4989 = vsel %vm1554, %v3704, %v4518
    %v4990 = vsel %vm1554, %v3808, %v4520
    %v4991 = vsel %vm1554, %v3912, %v4522
    %v4992 = vsel %vm1554, %v4016, %v4524
    %v4993 = vsel %vm1554, %v4120, %v4526
    %v4994 = vsel %vm1554, %v4224, %v4528
    %v4995 = vsel %vm1554, %v4328, %v4530
    %v4996 = vsel %vm1554, %v4432, %v4532
    %v4997 = vsel %vm1563, %v4989, %v4550
    %v4998 = vsel %vm1563, %v4990, %v4552
    %v4999 = vsel %vm1563, %v4991, %v4554
    %v5000 = vsel %vm1563, %v4992, %v4556
    %v5001 = vsel %vm1563, %v4993, %v4558
    %v5002 = vsel %vm1563, %v4994, %v4560
    %v5003 = vsel %vm1563, %v4995, %v4562
    %v5004 = vsel %vm1563, %v4996, %v4564
    %v5005 = vsel %vm1572, %v4997, %v4582
    %v5006 = vsel %vm1572, %v4998, %v4584
    %v5007 = vsel %vm1572, %v4999, %v4586
    %v5008 = vsel %vm1572, %v5000, %v4588
    %v5009 = vsel %vm1572, %v5001, %v4590
    %v5010 = vsel %vm1572, %v5002, %v4592
    %v5011 = vsel %vm1572, %v5003, %v4594
    %v5012 = vsel %vm1572, %v5004, %v4596
    %v5013 = vsel %vm1581, %v5005, %v4614
    %v5014 = vsel %vm1581, %v5006, %v4616
    %v5015 = vsel %vm1581, %v5007, %v4618
    %v5016 = vsel %vm1581, %v5008, %v4620
    %v5017 = vsel %vm1581, %v5009, %v4622
    %v5018 = vsel %vm1581, %v5010, %v4624
    %v5019 = vsel %vm1581, %v5011, %v4626
    %v5020 = vsel %vm1581, %v5012, %v4628
    %v5021 = vsel %vm1590, %v5013, %v4646
    %v5022 = vsel %vm1590, %v5014, %v4648
    %v5023 = vsel %vm1590, %v5015, %v4650
    %v5024 = vsel %vm1590, %v5016, %v4652
    %v5025 = vsel %vm1590, %v5017, %v4654
    %v5026 = vsel %vm1590, %v5018, %v4656
    %v5027 = vsel %vm1590, %v5019, %v4658
    %v5028 = vsel %vm1590, %v5020, %v4660
    %v5029 = vsel %vm1599, %v5021, %v4678
    %v5030 = vsel %vm1599, %v5022, %v4680
    %v5031 = vsel %vm1599, %v5023, %v4682
    %v5032 = vsel %vm1599, %v5024, %v4684
    %v5033 = vsel %vm1599, %v5025, %v4686
    %v5034 = vsel %vm1599, %v5026, %v4688
    %v5035 = vsel %vm1599, %v5027, %v4690
    %v5036 = vsel %vm1599, %v5028, %v4692
    %v5037 = vsel %vm1608, %v5029, %v4710
    %v5038 = vsel %vm1608, %v5030, %v4712
    %v5039 = vsel %vm1608, %v5031, %v4714
    %v5040 = vsel %vm1608, %v5032, %v4716
    %v5041 = vsel %vm1608, %v5033, %v4718
    %v5042 = vsel %vm1608, %v5034, %v4720
    %v5043 = vsel %vm1608, %v5035, %v4722
    %v5044 = vsel %vm1608, %v5036, %v4724
    %v5045 = vsel %vm1617, %v5037, %v4742
    %v5046 = vsel %vm1617, %v5038, %v4744
    %v5047 = vsel %vm1617, %v5039, %v4746
    %v5048 = vsel %vm1617, %v5040, %v4748
    %v5049 = vsel %vm1617, %v5041, %v4750
    %v5050 = vsel %vm1617, %v5042, %v4752
    %v5051 = vsel %vm1617, %v5043, %v4754
    %v5052 = vsel %vm1617, %v5044, %v4756
    %v5053 = vsel %vm1626, %v5045, %v4774
    %v5054 = vsel %vm1626, %v5046, %v4776
    %v5055 = vsel %vm1626, %v5047, %v4778
    %v5056 = vsel %vm1626, %v5048, %v4780
    %v5057 = vsel %vm1626, %v5049, %v4782
    %v5058 = vsel %vm1626, %v5050, %v4784
    %v5059 = vsel %vm1626, %v5051, %v4786
    %v5060 = vsel %vm1626, %v5052, %v4788
    %v5061 = vsel %vm1635, %v5053, %v4806
    %v5062 = vsel %vm1635, %v5054, %v4808
    %v5063 = vsel %vm1635, %v5055, %v4810
    %v5064 = vsel %vm1635, %v5056, %v4812
    %v5065 = vsel %vm1635, %v5057, %v4814
    %v5066 = vsel %vm1635, %v5058, %v4816
    %v5067 = vsel %vm1635, %v5059, %v4818
    %v5068 = vsel %vm1635, %v5060, %v4820
    %v5069 = vsel %vm1644, %v5061, %v4838
    %v5070 = vsel %vm1644, %v5062, %v4840
    %v5071 = vsel %vm1644, %v5063, %v4842
    %v5072 = vsel %vm1644, %v5064, %v4844
    %v5073 = vsel %vm1644, %v5065, %v4846
    %v5074 = vsel %vm1644, %v5066, %v4848
    %v5075 = vsel %vm1644, %v5067, %v4850
    %v5076 = vsel %vm1644, %v5068, %v4852
    %v5077 = vsel %vm1653, %v5069, %v4870
    %v5078 = vsel %vm1653, %v5070, %v4872
    %v5079 = vsel %vm1653, %v5071, %v4874
    %v5080 = vsel %vm1653, %v5072, %v4876
    %v5081 = vsel %vm1653, %v5073, %v4878
    %v5082 = vsel %vm1653, %v5074, %v4880
    %v5083 = vsel %vm1653, %v5075, %v4882
    %v5084 = vsel %vm1653, %v5076, %v4884
    %v5085 = vsel %vm1662, %v5077, %v4902
    %v5086 = vsel %vm1662, %v5078, %v4904
    %v5087 = vsel %vm1662, %v5079, %v4906
    %v5088 = vsel %vm1662, %v5080, %v4908
    %v5089 = vsel %vm1662, %v5081, %v4910
    %v5090 = vsel %vm1662, %v5082, %v4912
    %v5091 = vsel %vm1662, %v5083, %v4914
    %v5092 = vsel %vm1662, %v5084, %v4916
    %v5093 = vsel %vm1671, %v5085, %v4934
    %v5094 = vsel %vm1671, %v5086, %v4936
    %v5095 = vsel %vm1671, %v5087, %v4938
    %v5096 = vsel %vm1671, %v5088, %v4940
    %v5097 = vsel %vm1671, %v5089, %v4942
    %v5098 = vsel %vm1671, %v5090, %v4944
    %v5099 = vsel %vm1671, %v5091, %v4946
    %v5100 = vsel %vm1671, %v5092, %v4948
    %v5101 = vsel %vm1680, %v5093, %v4966
    %v5102 = vsel %vm1680, %v5094, %v4968
    %v5103 = vsel %vm1680, %v5095, %v4970
    %v5104 = vsel %vm1680, %v5096, %v4972
    %v5105 = vsel %vm1680, %v5097, %v4974
    %v5106 = vsel %vm1680, %v5098, %v4976
    %v5107 = vsel %vm1680, %v5099, %v4978
    %v5108 = vsel %vm1680, %v5100, %v4980
    %5109 = vst.msk [vmem:[#allocation5 + $0x2] sm:$0x3] %vm1689, %v5101
    %5110 = vst.msk [vmem:[#allocation5 + $0xa] sm:$0x3] %vm1689, %v5102
    %5111 = vst.msk [vmem:[#allocation5 + $0x12] sm:$0x3] %vm1689, %v5103
    %5112 = vst.msk [vmem:[#allocation5 + $0x1a] sm:$0x3] %vm1689, %v5104
    %5113 = vst.msk [vmem:[#allocation5 + $0x22] sm:$0x3] %vm1689, %v5105
    %5114 = vst.msk [vmem:[#allocation5 + $0x2a] sm:$0x3] %vm1689, %v5106
    %5115 = vst.msk [vmem:[#allocation5 + $0x32] sm:$0x3] %vm1689, %v5107
    %5116 = vst.msk [vmem:[#allocation5 + $0x3a] sm:$0x3] %vm1689, %v5108
    %5125 = vrot.lane.b32.xlu0 %v5101, 32
    %v5126 = vpop.permute.xlu0 %5125
    %5127 = vrot.lane.b32.xlu0 %v5102, 32
    %v5128 = vpop.permute.xlu0 %5127
    %5129 = vrot.lane.b32.xlu0 %v5103, 32
    %v5130 = vpop.permute.xlu0 %5129
    %5131 = vrot.lane.b32.xlu0 %v5104, 32
    %v5132 = vpop.permute.xlu0 %5131
    %5133 = vrot.lane.b32.xlu0 %v5105, 32
    %v5134 = vpop.permute.xlu0 %5133
    %5135 = vrot.lane.b32.xlu0 %v5106, 32
    %v5136 = vpop.permute.xlu0 %5135
    %5137 = vrot.lane.b32.xlu0 %v5107, 32
    %v5138 = vpop.permute.xlu0 %5137
    %5139 = vrot.lane.b32.xlu0 %v5108, 32
    %v5140 = vpop.permute.xlu0 %5139
    %5149 = vst.msk [vmem:[#allocation5 + $0x2] sm:$0x3] %vm1730, %v5126
    %5150 = vst.msk [vmem:[#allocation5 + $0xa] sm:$0x3] %vm1730, %v5128
    %5151 = vst.msk [vmem:[#allocation5 + $0x12] sm:$0x3] %vm1730, %v5130
    %5152 = vst.msk [vmem:[#allocation5 + $0x1a] sm:$0x3] %vm1730, %v5132
    %5153 = vst.msk [vmem:[#allocation5 + $0x22] sm:$0x3] %vm1730, %v5134
    %5154 = vst.msk [vmem:[#allocation5 + $0x2a] sm:$0x3] %vm1730, %v5136
    %5155 = vst.msk [vmem:[#allocation5 + $0x32] sm:$0x3] %vm1730, %v5138
    %5156 = vst.msk [vmem:[#allocation5 + $0x3a] sm:$0x3] %vm1730, %v5140
    %v5157 = vld [vmem:[#allocation2] sm:$0x3]
    %v5158 = vld [vmem:[#allocation2 + $0x2] sm:$0x3]
    %v5159 = vld [vmem:[#allocation2 + $0x4] sm:$0x3]
    %v5160 = vld [vmem:[#allocation2 + $0x6] sm:$0x3]
    %v5161 = vld [vmem:[#allocation2 + $0x8] sm:$0x3]
    %v5162 = vld [vmem:[#allocation2 + $0xa] sm:$0x3]
    %v5163 = vld [vmem:[#allocation2 + $0xc] sm:$0x3]
    %v5164 = vld [vmem:[#allocation2 + $0xe] sm:$0x3]
    %v5165 = vperm.slane %v5157, 0
    %v5166 = vlaneseq
    %v5167 = vshrl.u32 %v5166, 7
    %v5168 = vadd.s32 %v5167, 48
    %5169 = vset.pattern.permute.xlu0 %v5168
    %5170 = vperm.xlu0 %5169, %v5165
    %v5171 = vpop.permute.xlu0 %5170
    %v5172 = vlaneseq
    %v5173 = vshrl.u32 %v5172, 7
    %v5174 = vadd.s32 %v5173, 56
    %5175 = vset.pattern.permute.xlu0 %v5174
    %5176 = vperm.xlu0 %5175, %v5165
    %v5177 = vpop.permute.xlu0 %5176
    %v5178 = vperm.slane %v5157, 1
    %v5179 = vlaneseq
    %v5180 = vshrl.u32 %v5179, 7
    %v5181 = vadd.s32 %v5180, 48
    %5182 = vset.pattern.permute.xlu0 %v5181
    %5183 = vperm.xlu0 %5182, %v5178
    %v5184 = vpop.permute.xlu0 %5183
    %v5185 = vlaneseq
    %v5186 = vshrl.u32 %v5185, 7
    %v5187 = vadd.s32 %v5186, 56
    %5188 = vset.pattern.permute.xlu0 %v5187
    %5189 = vperm.xlu0 %5188, %v5178
    %v5190 = vpop.permute.xlu0 %5189
    %v5191 = vperm.slane %v5158, 0
    %v5192 = vlaneseq
    %v5193 = vshrl.u32 %v5192, 7
    %v5194 = vadd.s32 %v5193, 48
    %5195 = vset.pattern.permute.xlu0 %v5194
    %5196 = vperm.xlu0 %5195, %v5191
    %v5197 = vpop.permute.xlu0 %5196
    %v5198 = vlaneseq
    %v5199 = vshrl.u32 %v5198, 7
    %v5200 = vadd.s32 %v5199, 56
    %5201 = vset.pattern.permute.xlu0 %v5200
    %5202 = vperm.xlu0 %5201, %v5191
    %v5203 = vpop.permute.xlu0 %5202
    %v5204 = vperm.slane %v5158, 1
    %v5205 = vlaneseq
    %v5206 = vshrl.u32 %v5205, 7
    %v5207 = vadd.s32 %v5206, 48
    %5208 = vset.pattern.permute.xlu0 %v5207
    %5209 = vperm.xlu0 %5208, %v5204
    %v5210 = vpop.permute.xlu0 %5209
    %v5211 = vlaneseq
    %v5212 = vshrl.u32 %v5211, 7
    %v5213 = vadd.s32 %v5212, 56
    %5214 = vset.pattern.permute.xlu0 %v5213
    %5215 = vperm.xlu0 %5214, %v5204
    %v5216 = vpop.permute.xlu0 %5215
    %v5217 = vperm.slane %v5159, 0
    %v5218 = vlaneseq
    %v5219 = vshrl.u32 %v5218, 7
    %v5220 = vadd.s32 %v5219, 48
    %5221 = vset.pattern.permute.xlu0 %v5220
    %5222 = vperm.xlu0 %5221, %v5217
    %v5223 = vpop.permute.xlu0 %5222
    %v5224 = vlaneseq
    %v5225 = vshrl.u32 %v5224, 7
    %v5226 = vadd.s32 %v5225, 56
    %5227 = vset.pattern.permute.xlu0 %v5226
    %5228 = vperm.xlu0 %5227, %v5217
    %v5229 = vpop.permute.xlu0 %5228
    %v5230 = vperm.slane %v5159, 1
    %v5231 = vlaneseq
    %v5232 = vshrl.u32 %v5231, 7
    %v5233 = vadd.s32 %v5232, 48
    %5234 = vset.pattern.permute.xlu0 %v5233
    %5235 = vperm.xlu0 %5234, %v5230
    %v5236 = vpop.permute.xlu0 %5235
    %v5237 = vlaneseq
    %v5238 = vshrl.u32 %v5237, 7
    %v5239 = vadd.s32 %v5238, 56
    %5240 = vset.pattern.permute.xlu0 %v5239
    %5241 = vperm.xlu0 %5240, %v5230
    %v5242 = vpop.permute.xlu0 %5241
    %v5243 = vperm.slane %v5160, 0
    %v5244 = vlaneseq
    %v5245 = vshrl.u32 %v5244, 7
    %v5246 = vadd.s32 %v5245, 48
    %5247 = vset.pattern.permute.xlu0 %v5246
    %5248 = vperm.xlu0 %5247, %v5243
    %v5249 = vpop.permute.xlu0 %5248
    %v5250 = vlaneseq
    %v5251 = vshrl.u32 %v5250, 7
    %v5252 = vadd.s32 %v5251, 56
    %5253 = vset.pattern.permute.xlu0 %v5252
    %5254 = vperm.xlu0 %5253, %v5243
    %v5255 = vpop.permute.xlu0 %5254
    %v5256 = vperm.slane %v5160, 1
    %v5257 = vlaneseq
    %v5258 = vshrl.u32 %v5257, 7
    %v5259 = vadd.s32 %v5258, 48
    %5260 = vset.pattern.permute.xlu0 %v5259
    %5261 = vperm.xlu0 %5260, %v5256
    %v5262 = vpop.permute.xlu0 %5261
    %v5263 = vlaneseq
    %v5264 = vshrl.u32 %v5263, 7
    %v5265 = vadd.s32 %v5264, 56
    %5266 = vset.pattern.permute.xlu0 %v5265
    %5267 = vperm.xlu0 %5266, %v5256
    %v5268 = vpop.permute.xlu0 %5267
    %v5269 = vperm.slane %v5161, 0
    %v5270 = vlaneseq
    %v5271 = vshrl.u32 %v5270, 7
    %v5272 = vadd.s32 %v5271, 48
    %5273 = vset.pattern.permute.xlu0 %v5272
    %5274 = vperm.xlu0 %5273, %v5269
    %v5275 = vpop.permute.xlu0 %5274
    %v5276 = vlaneseq
    %v5277 = vshrl.u32 %v5276, 7
    %v5278 = vadd.s32 %v5277, 56
    %5279 = vset.pattern.permute.xlu0 %v5278
    %5280 = vperm.xlu0 %5279, %v5269
    %v5281 = vpop.permute.xlu0 %5280
    %v5282 = vperm.slane %v5161, 1
    %v5283 = vlaneseq
    %v5284 = vshrl.u32 %v5283, 7
    %v5285 = vadd.s32 %v5284, 48
    %5286 = vset.pattern.permute.xlu0 %v5285
    %5287 = vperm.xlu0 %5286, %v5282
    %v5288 = vpop.permute.xlu0 %5287
    %v5289 = vlaneseq
    %v5290 = vshrl.u32 %v5289, 7
    %v5291 = vadd.s32 %v5290, 56
    %5292 = vset.pattern.permute.xlu0 %v5291
    %5293 = vperm.xlu0 %5292, %v5282
    %v5294 = vpop.permute.xlu0 %5293
    %v5295 = vperm.slane %v5162, 0
    %v5296 = vlaneseq
    %v5297 = vshrl.u32 %v5296, 7
    %v5298 = vadd.s32 %v5297, 48
    %5299 = vset.pattern.permute.xlu0 %v5298
    %5300 = vperm.xlu0 %5299, %v5295
    %v5301 = vpop.permute.xlu0 %5300
    %v5302 = vlaneseq
    %v5303 = vshrl.u32 %v5302, 7
    %v5304 = vadd.s32 %v5303, 56
    %5305 = vset.pattern.permute.xlu0 %v5304
    %5306 = vperm.xlu0 %5305, %v5295
    %v5307 = vpop.permute.xlu0 %5306
    %v5308 = vperm.slane %v5162, 1
    %v5309 = vlaneseq
    %v5310 = vshrl.u32 %v5309, 7
    %v5311 = vadd.s32 %v5310, 48
    %5312 = vset.pattern.permute.xlu0 %v5311
    %5313 = vperm.xlu0 %5312, %v5308
    %v5314 = vpop.permute.xlu0 %5313
    %v5315 = vlaneseq
    %v5316 = vshrl.u32 %v5315, 7
    %v5317 = vadd.s32 %v5316, 56
    %5318 = vset.pattern.permute.xlu0 %v5317
    %5319 = vperm.xlu0 %5318, %v5308
    %v5320 = vpop.permute.xlu0 %5319
    %v5321 = vperm.slane %v5163, 0
    %v5322 = vlaneseq
    %v5323 = vshrl.u32 %v5322, 7
    %v5324 = vadd.s32 %v5323, 48
    %5325 = vset.pattern.permute.xlu0 %v5324
    %5326 = vperm.xlu0 %5325, %v5321
    %v5327 = vpop.permute.xlu0 %5326
    %v5328 = vlaneseq
    %v5329 = vshrl.u32 %v5328, 7
    %v5330 = vadd.s32 %v5329, 56
    %5331 = vset.pattern.permute.xlu0 %v5330
    %5332 = vperm.xlu0 %5331, %v5321
    %v5333 = vpop.permute.xlu0 %5332
    %v5334 = vperm.slane %v5163, 1
    %v5335 = vlaneseq
    %v5336 = vshrl.u32 %v5335, 7
    %v5337 = vadd.s32 %v5336, 48
    %5338 = vset.pattern.permute.xlu0 %v5337
    %5339 = vperm.xlu0 %5338, %v5334
    %v5340 = vpop.permute.xlu0 %5339
    %v5341 = vlaneseq
    %v5342 = vshrl.u32 %v5341, 7
    %v5343 = vadd.s32 %v5342, 56
    %5344 = vset.pattern.permute.xlu0 %v5343
    %5345 = vperm.xlu0 %5344, %v5334
    %v5346 = vpop.permute.xlu0 %5345
    %v5347 = vperm.slane %v5164, 0
    %v5348 = vlaneseq
    %v5349 = vshrl.u32 %v5348, 7
    %v5350 = vadd.s32 %v5349, 48
    %5351 = vset.pattern.permute.xlu0 %v5350
    %5352 = vperm.xlu0 %5351, %v5347
    %v5353 = vpop.permute.xlu0 %5352
    %v5354 = vlaneseq
    %v5355 = vshrl.u32 %v5354, 7
    %v5356 = vadd.s32 %v5355, 56
    %5357 = vset.pattern.permute.xlu0 %v5356
    %5358 = vperm.xlu0 %5357, %v5347
    %v5359 = vpop.permute.xlu0 %5358
    %v5360 = vperm.slane %v5164, 1
    %v5361 = vlaneseq
    %v5362 = vshrl.u32 %v5361, 7
    %v5363 = vadd.s32 %v5362, 48
    %5364 = vset.pattern.permute.xlu0 %v5363
    %5365 = vperm.xlu0 %5364, %v5360
    %v5366 = vpop.permute.xlu0 %5365
    %v5367 = vlaneseq
    %v5368 = vshrl.u32 %v5367, 7
    %v5369 = vadd.s32 %v5368, 56
    %5370 = vset.pattern.permute.xlu0 %v5369
    %5371 = vperm.xlu0 %5370, %v5360
    %v5372 = vpop.permute.xlu0 %5371
    %v5373 = vrot.slane %v5171, 4
    %v5374 = vsel %vm242, 0.0, %v5373
    %v5376 = vunpack.c.l.s4 1983009808
    %v5377 = vunpack.c.0.s8 %v5376
    %v5378 = vperm.slane %v5171, %v5377
    %v5380 = vunpack.c.l.s4 1983009808
    %v5381 = vunpack.c.0.s8 %v5380
    %v5382 = vperm.slane %v5374, %v5381
    %v5383 = vrot.slane %v5184, 4
    %v5384 = vsel %vm242, 0.0, %v5383
    %v5386 = vunpack.c.l.s4 1983009808
    %v5387 = vunpack.c.0.s8 %v5386
    %v5388 = vperm.slane %v5184, %v5387
    %v5390 = vunpack.c.l.s4 1983009808
    %v5391 = vunpack.c.0.s8 %v5390
    %v5392 = vperm.slane %v5384, %v5391
    %v5393 = vrot.slane %v5388, 4
    %v5394 = vsel %vm242, %v5393, %v5378
    %v5395 = vrot.slane %v5378, 4
    %v5396 = vsel %vm242, %v5388, %v5395
    %v5398 = vunpack.c.l.s4 1934713408
    %v5399 = vunpack.c.0.s8 %v5398
    %v5400 = vperm.slane %v5394, %v5399
    %v5402 = vunpack.c.l.s4 1934713408
    %v5403 = vunpack.c.0.s8 %v5402
    %v5404 = vperm.slane %v5396, %v5403
    %v5405 = vrot.slane %v5392, 4
    %v5406 = vsel %vm242, %v5405, %v5382
    %v5407 = vrot.slane %v5382, 4
    %v5408 = vsel %vm242, %v5392, %v5407
    %v5410 = vunpack.c.l.s4 1934713408
    %v5411 = vunpack.c.0.s8 %v5410
    %v5412 = vperm.slane %v5406, %v5411
    %v5414 = vunpack.c.l.s4 1934713408
    %v5415 = vunpack.c.0.s8 %v5414
    %v5416 = vperm.slane %v5408, %v5415
    %v5417 = vrot.slane %v5400, 4
    %v5418 = vsel %vm242, 0.0, %v5417
    %v5419 = vrot.slane %v5404, 4
    %v5420 = vsel %vm242, 0.0, %v5419
    %v5421 = vrot.slane %v5412, 4
    %v5422 = vsel %vm242, 0.0, %v5421
    %v5423 = vrot.slane %v5416, 4
    %v5424 = vsel %vm242, 0.0, %v5423
    %v5425 = vrot.slane %v5177, 4
    %v5426 = vsel %vm242, 0.0, %v5425
    %v5428 = vunpack.c.l.s4 1983009808
    %v5429 = vunpack.c.0.s8 %v5428
    %v5430 = vperm.slane %v5177, %v5429
    %v5432 = vunpack.c.l.s4 1983009808
    %v5433 = vunpack.c.0.s8 %v5432
    %v5434 = vperm.slane %v5426, %v5433
    %v5435 = vrot.slane %v5190, 4
    %v5436 = vsel %vm242, 0.0, %v5435
    %v5438 = vunpack.c.l.s4 1983009808
    %v5439 = vunpack.c.0.s8 %v5438
    %v5440 = vperm.slane %v5190, %v5439
    %v5442 = vunpack.c.l.s4 1983009808
    %v5443 = vunpack.c.0.s8 %v5442
    %v5444 = vperm.slane %v5436, %v5443
    %v5445 = vrot.slane %v5440, 4
    %v5446 = vsel %vm242, %v5445, %v5430
    %v5447 = vrot.slane %v5430, 4
    %v5448 = vsel %vm242, %v5440, %v5447
    %v5450 = vunpack.c.l.s4 1934713408
    %v5451 = vunpack.c.0.s8 %v5450
    %v5452 = vperm.slane %v5446, %v5451
    %v5454 = vunpack.c.l.s4 1934713408
    %v5455 = vunpack.c.0.s8 %v5454
    %v5456 = vperm.slane %v5448, %v5455
    %v5457 = vrot.slane %v5444, 4
    %v5458 = vsel %vm242, %v5457, %v5434
    %v5459 = vrot.slane %v5434, 4
    %v5460 = vsel %vm242, %v5444, %v5459
    %v5462 = vunpack.c.l.s4 1934713408
    %v5463 = vunpack.c.0.s8 %v5462
    %v5464 = vperm.slane %v5458, %v5463
    %v5466 = vunpack.c.l.s4 1934713408
    %v5467 = vunpack.c.0.s8 %v5466
    %v5468 = vperm.slane %v5460, %v5467
    %v5469 = vrot.slane %v5452, 4
    %v5470 = vsel %vm242, 0.0, %v5469
    %v5471 = vrot.slane %v5456, 4
    %v5472 = vsel %vm242, 0.0, %v5471
    %v5473 = vrot.slane %v5464, 4
    %v5474 = vsel %vm242, 0.0, %v5473
    %v5475 = vrot.slane %v5468, 4
    %v5476 = vsel %vm242, 0.0, %v5475
    %v5477 = vrot.slane %v5197, 4
    %v5478 = vsel %vm242, 0.0, %v5477
    %v5480 = vunpack.c.l.s4 1983009808
    %v5481 = vunpack.c.0.s8 %v5480
    %v5482 = vperm.slane %v5197, %v5481
    %v5484 = vunpack.c.l.s4 1983009808
    %v5485 = vunpack.c.0.s8 %v5484
    %v5486 = vperm.slane %v5478, %v5485
    %v5487 = vrot.slane %v5210, 4
    %v5488 = vsel %vm242, 0.0, %v5487
    %v5490 = vunpack.c.l.s4 1983009808
    %v5491 = vunpack.c.0.s8 %v5490
    %v5492 = vperm.slane %v5210, %v5491
    %v5494 = vunpack.c.l.s4 1983009808
    %v5495 = vunpack.c.0.s8 %v5494
    %v5496 = vperm.slane %v5488, %v5495
    %v5497 = vrot.slane %v5492, 4
    %v5498 = vsel %vm242, %v5497, %v5482
    %v5499 = vrot.slane %v5482, 4
    %v5500 = vsel %vm242, %v5492, %v5499
    %v5502 = vunpack.c.l.s4 1934713408
    %v5503 = vunpack.c.0.s8 %v5502
    %v5504 = vperm.slane %v5498, %v5503
    %v5506 = vunpack.c.l.s4 1934713408
    %v5507 = vunpack.c.0.s8 %v5506
    %v5508 = vperm.slane %v5500, %v5507
    %v5509 = vrot.slane %v5496, 4
    %v5510 = vsel %vm242, %v5509, %v5486
    %v5511 = vrot.slane %v5486, 4
    %v5512 = vsel %vm242, %v5496, %v5511
    %v5514 = vunpack.c.l.s4 1934713408
    %v5515 = vunpack.c.0.s8 %v5514
    %v5516 = vperm.slane %v5510, %v5515
    %v5518 = vunpack.c.l.s4 1934713408
    %v5519 = vunpack.c.0.s8 %v5518
    %v5520 = vperm.slane %v5512, %v5519
    %v5521 = vrot.slane %v5504, 4
    %v5522 = vsel %vm242, 0.0, %v5521
    %v5523 = vrot.slane %v5508, 4
    %v5524 = vsel %vm242, 0.0, %v5523
    %v5525 = vrot.slane %v5516, 4
    %v5526 = vsel %vm242, 0.0, %v5525
    %v5527 = vrot.slane %v5520, 4
    %v5528 = vsel %vm242, 0.0, %v5527
    %v5529 = vrot.slane %v5203, 4
    %v5530 = vsel %vm242, 0.0, %v5529
    %v5532 = vunpack.c.l.s4 1983009808
    %v5533 = vunpack.c.0.s8 %v5532
    %v5534 = vperm.slane %v5203, %v5533
    %v5536 = vunpack.c.l.s4 1983009808
    %v5537 = vunpack.c.0.s8 %v5536
    %v5538 = vperm.slane %v5530, %v5537
    %v5539 = vrot.slane %v5216, 4
    %v5540 = vsel %vm242, 0.0, %v5539
    %v5542 = vunpack.c.l.s4 1983009808
    %v5543 = vunpack.c.0.s8 %v5542
    %v5544 = vperm.slane %v5216, %v5543
    %v5546 = vunpack.c.l.s4 1983009808
    %v5547 = vunpack.c.0.s8 %v5546
    %v5548 = vperm.slane %v5540, %v5547
    %v5549 = vrot.slane %v5544, 4
    %v5550 = vsel %vm242, %v5549, %v5534
    %v5551 = vrot.slane %v5534, 4
    %v5552 = vsel %vm242, %v5544, %v5551
    %v5554 = vunpack.c.l.s4 1934713408
    %v5555 = vunpack.c.0.s8 %v5554
    %v5556 = vperm.slane %v5550, %v5555
    %v5558 = vunpack.c.l.s4 1934713408
    %v5559 = vunpack.c.0.s8 %v5558
    %v5560 = vperm.slane %v5552, %v5559
    %v5561 = vrot.slane %v5548, 4
    %v5562 = vsel %vm242, %v5561, %v5538
    %v5563 = vrot.slane %v5538, 4
    %v5564 = vsel %vm242, %v5548, %v5563
    %v5566 = vunpack.c.l.s4 1934713408
    %v5567 = vunpack.c.0.s8 %v5566
    %v5568 = vperm.slane %v5562, %v5567
    %v5570 = vunpack.c.l.s4 1934713408
    %v5571 = vunpack.c.0.s8 %v5570
    %v5572 = vperm.slane %v5564, %v5571
    %v5573 = vrot.slane %v5556, 4
    %v5574 = vsel %vm242, 0.0, %v5573
    %v5575 = vrot.slane %v5560, 4
    %v5576 = vsel %vm242, 0.0, %v5575
    %v5577 = vrot.slane %v5568, 4
    %v5578 = vsel %vm242, 0.0, %v5577
    %v5579 = vrot.slane %v5572, 4
    %v5580 = vsel %vm242, 0.0, %v5579
    %v5581 = vrot.slane %v5223, 4
    %v5582 = vsel %vm242, 0.0, %v5581
    %v5584 = vunpack.c.l.s4 1983009808
    %v5585 = vunpack.c.0.s8 %v5584
    %v5586 = vperm.slane %v5223, %v5585
    %v5588 = vunpack.c.l.s4 1983009808
    %v5589 = vunpack.c.0.s8 %v5588
    %v5590 = vperm.slane %v5582, %v5589
    %v5591 = vrot.slane %v5236, 4
    %v5592 = vsel %vm242, 0.0, %v5591
    %v5594 = vunpack.c.l.s4 1983009808
    %v5595 = vunpack.c.0.s8 %v5594
    %v5596 = vperm.slane %v5236, %v5595
    %v5598 = vunpack.c.l.s4 1983009808
    %v5599 = vunpack.c.0.s8 %v5598
    %v5600 = vperm.slane %v5592, %v5599
    %v5601 = vrot.slane %v5596, 4
    %v5602 = vsel %vm242, %v5601, %v5586
    %v5603 = vrot.slane %v5586, 4
    %v5604 = vsel %vm242, %v5596, %v5603
    %v5606 = vunpack.c.l.s4 1934713408
    %v5607 = vunpack.c.0.s8 %v5606
    %v5608 = vperm.slane %v5602, %v5607
    %v5610 = vunpack.c.l.s4 1934713408
    %v5611 = vunpack.c.0.s8 %v5610
    %v5612 = vperm.slane %v5604, %v5611
    %v5613 = vrot.slane %v5600, 4
    %v5614 = vsel %vm242, %v5613, %v5590
    %v5615 = vrot.slane %v5590, 4
    %v5616 = vsel %vm242, %v5600, %v5615
    %v5618 = vunpack.c.l.s4 1934713408
    %v5619 = vunpack.c.0.s8 %v5618
    %v5620 = vperm.slane %v5614, %v5619
    %v5622 = vunpack.c.l.s4 1934713408
    %v5623 = vunpack.c.0.s8 %v5622
    %v5624 = vperm.slane %v5616, %v5623
    %v5625 = vrot.slane %v5608, 4
    %v5626 = vsel %vm242, 0.0, %v5625
    %v5627 = vrot.slane %v5612, 4
    %v5628 = vsel %vm242, 0.0, %v5627
    %v5629 = vrot.slane %v5620, 4
    %v5630 = vsel %vm242, 0.0, %v5629
    %v5631 = vrot.slane %v5624, 4
    %v5632 = vsel %vm242, 0.0, %v5631
    %v5633 = vrot.slane %v5229, 4
    %v5634 = vsel %vm242, 0.0, %v5633
    %v5636 = vunpack.c.l.s4 1983009808
    %v5637 = vunpack.c.0.s8 %v5636
    %v5638 = vperm.slane %v5229, %v5637
    %v5640 = vunpack.c.l.s4 1983009808
    %v5641 = vunpack.c.0.s8 %v5640
    %v5642 = vperm.slane %v5634, %v5641
    %v5643 = vrot.slane %v5242, 4
    %v5644 = vsel %vm242, 0.0, %v5643
    %v5646 = vunpack.c.l.s4 1983009808
    %v5647 = vunpack.c.0.s8 %v5646
    %v5648 = vperm.slane %v5242, %v5647
    %v5650 = vunpack.c.l.s4 1983009808
    %v5651 = vunpack.c.0.s8 %v5650
    %v5652 = vperm.slane %v5644, %v5651
    %v5653 = vrot.slane %v5648, 4
    %v5654 = vsel %vm242, %v5653, %v5638
    %v5655 = vrot.slane %v5638, 4
    %v5656 = vsel %vm242, %v5648, %v5655
    %v5658 = vunpack.c.l.s4 1934713408
    %v5659 = vunpack.c.0.s8 %v5658
    %v5660 = vperm.slane %v5654, %v5659
    %v5662 = vunpack.c.l.s4 1934713408
    %v5663 = vunpack.c.0.s8 %v5662
    %v5664 = vperm.slane %v5656, %v5663
    %v5665 = vrot.slane %v5652, 4
    %v5666 = vsel %vm242, %v5665, %v5642
    %v5667 = vrot.slane %v5642, 4
    %v5668 = vsel %vm242, %v5652, %v5667
    %v5670 = vunpack.c.l.s4 1934713408
    %v5671 = vunpack.c.0.s8 %v5670
    %v5672 = vperm.slane %v5666, %v5671
    %v5674 = vunpack.c.l.s4 1934713408
    %v5675 = vunpack.c.0.s8 %v5674
    %v5676 = vperm.slane %v5668, %v5675
    %v5677 = vrot.slane %v5660, 4
    %v5678 = vsel %vm242, 0.0, %v5677
    %v5679 = vrot.slane %v5664, 4
    %v5680 = vsel %vm242, 0.0, %v5679
    %v5681 = vrot.slane %v5672, 4
    %v5682 = vsel %vm242, 0.0, %v5681
    %v5683 = vrot.slane %v5676, 4
    %v5684 = vsel %vm242, 0.0, %v5683
    %v5685 = vrot.slane %v5249, 4
    %v5686 = vsel %vm242, 0.0, %v5685
    %v5688 = vunpack.c.l.s4 1983009808
    %v5689 = vunpack.c.0.s8 %v5688
    %v5690 = vperm.slane %v5249, %v5689
    %v5692 = vunpack.c.l.s4 1983009808
    %v5693 = vunpack.c.0.s8 %v5692
    %v5694 = vperm.slane %v5686, %v5693
    %v5695 = vrot.slane %v5262, 4
    %v5696 = vsel %vm242, 0.0, %v5695
    %v5698 = vunpack.c.l.s4 1983009808
    %v5699 = vunpack.c.0.s8 %v5698
    %v5700 = vperm.slane %v5262, %v5699
    %v5702 = vunpack.c.l.s4 1983009808
    %v5703 = vunpack.c.0.s8 %v5702
    %v5704 = vperm.slane %v5696, %v5703
    %v5705 = vrot.slane %v5700, 4
    %v5706 = vsel %vm242, %v5705, %v5690
    %v5707 = vrot.slane %v5690, 4
    %v5708 = vsel %vm242, %v5700, %v5707
    %v5710 = vunpack.c.l.s4 1934713408
    %v5711 = vunpack.c.0.s8 %v5710
    %v5712 = vperm.slane %v5706, %v5711
    %v5714 = vunpack.c.l.s4 1934713408
    %v5715 = vunpack.c.0.s8 %v5714
    %v5716 = vperm.slane %v5708, %v5715
    %v5717 = vrot.slane %v5704, 4
    %v5718 = vsel %vm242, %v5717, %v5694
    %v5719 = vrot.slane %v5694, 4
    %v5720 = vsel %vm242, %v5704, %v5719
    %v5722 = vunpack.c.l.s4 1934713408
    %v5723 = vunpack.c.0.s8 %v5722
    %v5724 = vperm.slane %v5718, %v5723
    %v5726 = vunpack.c.l.s4 1934713408
    %v5727 = vunpack.c.0.s8 %v5726
    %v5728 = vperm.slane %v5720, %v5727
    %v5729 = vrot.slane %v5712, 4
    %v5730 = vsel %vm242, 0.0, %v5729
    %v5731 = vrot.slane %v5716, 4
    %v5732 = vsel %vm242, 0.0, %v5731
    %v5733 = vrot.slane %v5724, 4
    %v5734 = vsel %vm242, 0.0, %v5733
    %v5735 = vrot.slane %v5728, 4
    %v5736 = vsel %vm242, 0.0, %v5735
    %v5737 = vrot.slane %v5255, 4
    %v5738 = vsel %vm242, 0.0, %v5737
    %v5740 = vunpack.c.l.s4 1983009808
    %v5741 = vunpack.c.0.s8 %v5740
    %v5742 = vperm.slane %v5255, %v5741
    %v5744 = vunpack.c.l.s4 1983009808
    %v5745 = vunpack.c.0.s8 %v5744
    %v5746 = vperm.slane %v5738, %v5745
    %v5747 = vrot.slane %v5268, 4
    %v5748 = vsel %vm242, 0.0, %v5747
    %v5750 = vunpack.c.l.s4 1983009808
    %v5751 = vunpack.c.0.s8 %v5750
    %v5752 = vperm.slane %v5268, %v5751
    %v5754 = vunpack.c.l.s4 1983009808
    %v5755 = vunpack.c.0.s8 %v5754
    %v5756 = vperm.slane %v5748, %v5755
    %v5757 = vrot.slane %v5752, 4
    %v5758 = vsel %vm242, %v5757, %v5742
    %v5759 = vrot.slane %v5742, 4
    %v5760 = vsel %vm242, %v5752, %v5759
    %v5762 = vunpack.c.l.s4 1934713408
    %v5763 = vunpack.c.0.s8 %v5762
    %v5764 = vperm.slane %v5758, %v5763
    %v5766 = vunpack.c.l.s4 1934713408
    %v5767 = vunpack.c.0.s8 %v5766
    %v5768 = vperm.slane %v5760, %v5767
    %v5769 = vrot.slane %v5756, 4
    %v5770 = vsel %vm242, %v5769, %v5746
    %v5771 = vrot.slane %v5746, 4
    %v5772 = vsel %vm242, %v5756, %v5771
    %v5774 = vunpack.c.l.s4 1934713408
    %v5775 = vunpack.c.0.s8 %v5774
    %v5776 = vperm.slane %v5770, %v5775
    %v5778 = vunpack.c.l.s4 1934713408
    %v5779 = vunpack.c.0.s8 %v5778
    %v5780 = vperm.slane %v5772, %v5779
    %v5781 = vrot.slane %v5764, 4
    %v5782 = vsel %vm242, 0.0, %v5781
    %v5783 = vrot.slane %v5768, 4
    %v5784 = vsel %vm242, 0.0, %v5783
    %v5785 = vrot.slane %v5776, 4
    %v5786 = vsel %vm242, 0.0, %v5785
    %v5787 = vrot.slane %v5780, 4
    %v5788 = vsel %vm242, 0.0, %v5787
    %v5789 = vrot.slane %v5275, 4
    %v5790 = vsel %vm242, 0.0, %v5789
    %v5792 = vunpack.c.l.s4 1983009808
    %v5793 = vunpack.c.0.s8 %v5792
    %v5794 = vperm.slane %v5275, %v5793
    %v5796 = vunpack.c.l.s4 1983009808
    %v5797 = vunpack.c.0.s8 %v5796
    %v5798 = vperm.slane %v5790, %v5797
    %v5799 = vrot.slane %v5288, 4
    %v5800 = vsel %vm242, 0.0, %v5799
    %v5802 = vunpack.c.l.s4 1983009808
    %v5803 = vunpack.c.0.s8 %v5802
    %v5804 = vperm.slane %v5288, %v5803
    %v5806 = vunpack.c.l.s4 1983009808
    %v5807 = vunpack.c.0.s8 %v5806
    %v5808 = vperm.slane %v5800, %v5807
    %v5809 = vrot.slane %v5804, 4
    %v5810 = vsel %vm242, %v5809, %v5794
    %v5811 = vrot.slane %v5794, 4
    %v5812 = vsel %vm242, %v5804, %v5811
    %v5814 = vunpack.c.l.s4 1934713408
    %v5815 = vunpack.c.0.s8 %v5814
    %v5816 = vperm.slane %v5810, %v5815
    %v5818 = vunpack.c.l.s4 1934713408
    %v5819 = vunpack.c.0.s8 %v5818
    %v5820 = vperm.slane %v5812, %v5819
    %v5821 = vrot.slane %v5808, 4
    %v5822 = vsel %vm242, %v5821, %v5798
    %v5823 = vrot.slane %v5798, 4
    %v5824 = vsel %vm242, %v5808, %v5823
    %v5826 = vunpack.c.l.s4 1934713408
    %v5827 = vunpack.c.0.s8 %v5826
    %v5828 = vperm.slane %v5822, %v5827
    %v5830 = vunpack.c.l.s4 1934713408
    %v5831 = vunpack.c.0.s8 %v5830
    %v5832 = vperm.slane %v5824, %v5831
    %v5833 = vrot.slane %v5816, 4
    %v5834 = vsel %vm242, 0.0, %v5833
    %v5835 = vrot.slane %v5820, 4
    %v5836 = vsel %vm242, 0.0, %v5835
    %v5837 = vrot.slane %v5828, 4
    %v5838 = vsel %vm242, 0.0, %v5837
    %v5839 = vrot.slane %v5832, 4
    %v5840 = vsel %vm242, 0.0, %v5839
    %v5841 = vrot.slane %v5281, 4
    %v5842 = vsel %vm242, 0.0, %v5841
    %v5844 = vunpack.c.l.s4 1983009808
    %v5845 = vunpack.c.0.s8 %v5844
    %v5846 = vperm.slane %v5281, %v5845
    %v5848 = vunpack.c.l.s4 1983009808
    %v5849 = vunpack.c.0.s8 %v5848
    %v5850 = vperm.slane %v5842, %v5849
    %v5851 = vrot.slane %v5294, 4
    %v5852 = vsel %vm242, 0.0, %v5851
    %v5854 = vunpack.c.l.s4 1983009808
    %v5855 = vunpack.c.0.s8 %v5854
    %v5856 = vperm.slane %v5294, %v5855
    %v5858 = vunpack.c.l.s4 1983009808
    %v5859 = vunpack.c.0.s8 %v5858
    %v5860 = vperm.slane %v5852, %v5859
    %v5861 = vrot.slane %v5856, 4
    %v5862 = vsel %vm242, %v5861, %v5846
    %v5863 = vrot.slane %v5846, 4
    %v5864 = vsel %vm242, %v5856, %v5863
    %v5866 = vunpack.c.l.s4 1934713408
    %v5867 = vunpack.c.0.s8 %v5866
    %v5868 = vperm.slane %v5862, %v5867
    %v5870 = vunpack.c.l.s4 1934713408
    %v5871 = vunpack.c.0.s8 %v5870
    %v5872 = vperm.slane %v5864, %v5871
    %v5873 = vrot.slane %v5860, 4
    %v5874 = vsel %vm242, %v5873, %v5850
    %v5875 = vrot.slane %v5850, 4
    %v5876 = vsel %vm242, %v5860, %v5875
    %v5878 = vunpack.c.l.s4 1934713408
    %v5879 = vunpack.c.0.s8 %v5878
    %v5880 = vperm.slane %v5874, %v5879
    %v5882 = vunpack.c.l.s4 1934713408
    %v5883 = vunpack.c.0.s8 %v5882
    %v5884 = vperm.slane %v5876, %v5883
    %v5885 = vrot.slane %v5868, 4
    %v5886 = vsel %vm242, 0.0, %v5885
    %v5887 = vrot.slane %v5872, 4
    %v5888 = vsel %vm242, 0.0, %v5887
    %v5889 = vrot.slane %v5880, 4
    %v5890 = vsel %vm242, 0.0, %v5889
    %v5891 = vrot.slane %v5884, 4
    %v5892 = vsel %vm242, 0.0, %v5891
    %v5893 = vrot.slane %v5301, 4
    %v5894 = vsel %vm242, 0.0, %v5893
    %v5896 = vunpack.c.l.s4 1983009808
    %v5897 = vunpack.c.0.s8 %v5896
    %v5898 = vperm.slane %v5301, %v5897
    %v5900 = vunpack.c.l.s4 1983009808
    %v5901 = vunpack.c.0.s8 %v5900
    %v5902 = vperm.slane %v5894, %v5901
    %v5903 = vrot.slane %v5314, 4
    %v5904 = vsel %vm242, 0.0, %v5903
    %v5906 = vunpack.c.l.s4 1983009808
    %v5907 = vunpack.c.0.s8 %v5906
    %v5908 = vperm.slane %v5314, %v5907
    %v5910 = vunpack.c.l.s4 1983009808
    %v5911 = vunpack.c.0.s8 %v5910
    %v5912 = vperm.slane %v5904, %v5911
    %v5913 = vrot.slane %v5908, 4
    %v5914 = vsel %vm242, %v5913, %v5898
    %v5915 = vrot.slane %v5898, 4
    %v5916 = vsel %vm242, %v5908, %v5915
    %v5918 = vunpack.c.l.s4 1934713408
    %v5919 = vunpack.c.0.s8 %v5918
    %v5920 = vperm.slane %v5914, %v5919
    %v5922 = vunpack.c.l.s4 1934713408
    %v5923 = vunpack.c.0.s8 %v5922
    %v5924 = vperm.slane %v5916, %v5923
    %v5925 = vrot.slane %v5912, 4
    %v5926 = vsel %vm242, %v5925, %v5902
    %v5927 = vrot.slane %v5902, 4
    %v5928 = vsel %vm242, %v5912, %v5927
    %v5930 = vunpack.c.l.s4 1934713408
    %v5931 = vunpack.c.0.s8 %v5930
    %v5932 = vperm.slane %v5926, %v5931
    %v5934 = vunpack.c.l.s4 1934713408
    %v5935 = vunpack.c.0.s8 %v5934
    %v5936 = vperm.slane %v5928, %v5935
    %v5937 = vrot.slane %v5920, 4
    %v5938 = vsel %vm242, 0.0, %v5937
    %v5939 = vrot.slane %v5924, 4
    %v5940 = vsel %vm242, 0.0, %v5939
    %v5941 = vrot.slane %v5932, 4
    %v5942 = vsel %vm242, 0.0, %v5941
    %v5943 = vrot.slane %v5936, 4
    %v5944 = vsel %vm242, 0.0, %v5943
    %v5945 = vrot.slane %v5307, 4
    %v5946 = vsel %vm242, 0.0, %v5945
    %v5948 = vunpack.c.l.s4 1983009808
    %v5949 = vunpack.c.0.s8 %v5948
    %v5950 = vperm.slane %v5307, %v5949
    %v5952 = vunpack.c.l.s4 1983009808
    %v5953 = vunpack.c.0.s8 %v5952
    %v5954 = vperm.slane %v5946, %v5953
    %v5955 = vrot.slane %v5320, 4
    %v5956 = vsel %vm242, 0.0, %v5955
    %v5958 = vunpack.c.l.s4 1983009808
    %v5959 = vunpack.c.0.s8 %v5958
    %v5960 = vperm.slane %v5320, %v5959
    %v5962 = vunpack.c.l.s4 1983009808
    %v5963 = vunpack.c.0.s8 %v5962
    %v5964 = vperm.slane %v5956, %v5963
    %v5965 = vrot.slane %v5960, 4
    %v5966 = vsel %vm242, %v5965, %v5950
    %v5967 = vrot.slane %v5950, 4
    %v5968 = vsel %vm242, %v5960, %v5967
    %v5970 = vunpack.c.l.s4 1934713408
    %v5971 = vunpack.c.0.s8 %v5970
    %v5972 = vperm.slane %v5966, %v5971
    %v5974 = vunpack.c.l.s4 1934713408
    %v5975 = vunpack.c.0.s8 %v5974
    %v5976 = vperm.slane %v5968, %v5975
    %v5977 = vrot.slane %v5964, 4
    %v5978 = vsel %vm242, %v5977, %v5954
    %v5979 = vrot.slane %v5954, 4
    %v5980 = vsel %vm242, %v5964, %v5979
    %v5982 = vunpack.c.l.s4 1934713408
    %v5983 = vunpack.c.0.s8 %v5982
    %v5984 = vperm.slane %v5978, %v5983
    %v5986 = vunpack.c.l.s4 1934713408
    %v5987 = vunpack.c.0.s8 %v5986
    %v5988 = vperm.slane %v5980, %v5987
    %v5989 = vrot.slane %v5972, 4
    %v5990 = vsel %vm242, 0.0, %v5989
    %v5991 = vrot.slane %v5976, 4
    %v5992 = vsel %vm242, 0.0, %v5991
    %v5993 = vrot.slane %v5984, 4
    %v5994 = vsel %vm242, 0.0, %v5993
    %v5995 = vrot.slane %v5988, 4
    %v5996 = vsel %vm242, 0.0, %v5995
    %v5997 = vrot.slane %v5327, 4
    %v5998 = vsel %vm242, 0.0, %v5997
    %v6000 = vunpack.c.l.s4 1983009808
    %v6001 = vunpack.c.0.s8 %v6000
    %v6002 = vperm.slane %v5327, %v6001
    %v6004 = vunpack.c.l.s4 1983009808
    %v6005 = vunpack.c.0.s8 %v6004
    %v6006 = vperm.slane %v5998, %v6005
    %v6007 = vrot.slane %v5340, 4
    %v6008 = vsel %vm242, 0.0, %v6007
    %v6010 = vunpack.c.l.s4 1983009808
    %v6011 = vunpack.c.0.s8 %v6010
    %v6012 = vperm.slane %v5340, %v6011
    %v6014 = vunpack.c.l.s4 1983009808
    %v6015 = vunpack.c.0.s8 %v6014
    %v6016 = vperm.slane %v6008, %v6015
    %v6017 = vrot.slane %v6012, 4
    %v6018 = vsel %vm242, %v6017, %v6002
    %v6019 = vrot.slane %v6002, 4
    %v6020 = vsel %vm242, %v6012, %v6019
    %v6022 = vunpack.c.l.s4 1934713408
    %v6023 = vunpack.c.0.s8 %v6022
    %v6024 = vperm.slane %v6018, %v6023
    %v6026 = vunpack.c.l.s4 1934713408
    %v6027 = vunpack.c.0.s8 %v6026
    %v6028 = vperm.slane %v6020, %v6027
    %v6029 = vrot.slane %v6016, 4
    %v6030 = vsel %vm242, %v6029, %v6006
    %v6031 = vrot.slane %v6006, 4
    %v6032 = vsel %vm242, %v6016, %v6031
    %v6034 = vunpack.c.l.s4 1934713408
    %v6035 = vunpack.c.0.s8 %v6034
    %v6036 = vperm.slane %v6030, %v6035
    %v6038 = vunpack.c.l.s4 1934713408
    %v6039 = vunpack.c.0.s8 %v6038
    %v6040 = vperm.slane %v6032, %v6039
    %v6041 = vrot.slane %v6024, 4
    %v6042 = vsel %vm242, 0.0, %v6041
    %v6043 = vrot.slane %v6028, 4
    %v6044 = vsel %vm242, 0.0, %v6043
    %v6045 = vrot.slane %v6036, 4
    %v6046 = vsel %vm242, 0.0, %v6045
    %v6047 = vrot.slane %v6040, 4
    %v6048 = vsel %vm242, 0.0, %v6047
    %v6049 = vrot.slane %v5333, 4
    %v6050 = vsel %vm242, 0.0, %v6049
    %v6052 = vunpack.c.l.s4 1983009808
    %v6053 = vunpack.c.0.s8 %v6052
    %v6054 = vperm.slane %v5333, %v6053
    %v6056 = vunpack.c.l.s4 1983009808
    %v6057 = vunpack.c.0.s8 %v6056
    %v6058 = vperm.slane %v6050, %v6057
    %v6059 = vrot.slane %v5346, 4
    %v6060 = vsel %vm242, 0.0, %v6059
    %v6062 = vunpack.c.l.s4 1983009808
    %v6063 = vunpack.c.0.s8 %v6062
    %v6064 = vperm.slane %v5346, %v6063
    %v6066 = vunpack.c.l.s4 1983009808
    %v6067 = vunpack.c.0.s8 %v6066
    %v6068 = vperm.slane %v6060, %v6067
    %v6069 = vrot.slane %v6064, 4
    %v6070 = vsel %vm242, %v6069, %v6054
    %v6071 = vrot.slane %v6054, 4
    %v6072 = vsel %vm242, %v6064, %v6071
    %v6074 = vunpack.c.l.s4 1934713408
    %v6075 = vunpack.c.0.s8 %v6074
    %v6076 = vperm.slane %v6070, %v6075
    %v6078 = vunpack.c.l.s4 1934713408
    %v6079 = vunpack.c.0.s8 %v6078
    %v6080 = vperm.slane %v6072, %v6079
    %v6081 = vrot.slane %v6068, 4
    %v6082 = vsel %vm242, %v6081, %v6058
    %v6083 = vrot.slane %v6058, 4
    %v6084 = vsel %vm242, %v6068, %v6083
    %v6086 = vunpack.c.l.s4 1934713408
    %v6087 = vunpack.c.0.s8 %v6086
    %v6088 = vperm.slane %v6082, %v6087
    %v6090 = vunpack.c.l.s4 1934713408
    %v6091 = vunpack.c.0.s8 %v6090
    %v6092 = vperm.slane %v6084, %v6091
    %v6093 = vrot.slane %v6076, 4
    %v6094 = vsel %vm242, 0.0, %v6093
    %v6095 = vrot.slane %v6080, 4
    %v6096 = vsel %vm242, 0.0, %v6095
    %v6097 = vrot.slane %v6088, 4
    %v6098 = vsel %vm242, 0.0, %v6097
    %v6099 = vrot.slane %v6092, 4
    %v6100 = vsel %vm242, 0.0, %v6099
    %v6101 = vrot.slane %v5353, 4
    %v6102 = vsel %vm242, 0.0, %v6101
    %v6104 = vunpack.c.l.s4 1983009808
    %v6105 = vunpack.c.0.s8 %v6104
    %v6106 = vperm.slane %v5353, %v6105
    %v6108 = vunpack.c.l.s4 1983009808
    %v6109 = vunpack.c.0.s8 %v6108
    %v6110 = vperm.slane %v6102, %v6109
    %v6111 = vrot.slane %v5366, 4
    %v6112 = vsel %vm242, 0.0, %v6111
    %v6114 = vunpack.c.l.s4 1983009808
    %v6115 = vunpack.c.0.s8 %v6114
    %v6116 = vperm.slane %v5366, %v6115
    %v6118 = vunpack.c.l.s4 1983009808
    %v6119 = vunpack.c.0.s8 %v6118
    %v6120 = vperm.slane %v6112, %v6119
    %v6121 = vrot.slane %v6116, 4
    %v6122 = vsel %vm242, %v6121, %v6106
    %v6123 = vrot.slane %v6106, 4
    %v6124 = vsel %vm242, %v6116, %v6123
    %v6126 = vunpack.c.l.s4 1934713408
    %v6127 = vunpack.c.0.s8 %v6126
    %v6128 = vperm.slane %v6122, %v6127
    %v6130 = vunpack.c.l.s4 1934713408
    %v6131 = vunpack.c.0.s8 %v6130
    %v6132 = vperm.slane %v6124, %v6131
    %v6133 = vrot.slane %v6120, 4
    %v6134 = vsel %vm242, %v6133, %v6110
    %v6135 = vrot.slane %v6110, 4
    %v6136 = vsel %vm242, %v6120, %v6135
    %v6138 = vunpack.c.l.s4 1934713408
    %v6139 = vunpack.c.0.s8 %v6138
    %v6140 = vperm.slane %v6134, %v6139
    %v6142 = vunpack.c.l.s4 1934713408
    %v6143 = vunpack.c.0.s8 %v6142
    %v6144 = vperm.slane %v6136, %v6143
    %v6145 = vrot.slane %v6128, 4
    %v6146 = vsel %vm242, 0.0, %v6145
    %v6147 = vrot.slane %v6132, 4
    %v6148 = vsel %vm242, 0.0, %v6147
    %v6149 = vrot.slane %v6140, 4
    %v6150 = vsel %vm242, 0.0, %v6149
    %v6151 = vrot.slane %v6144, 4
    %v6152 = vsel %vm242, 0.0, %v6151
    %v6153 = vrot.slane %v5359, 4
    %v6154 = vsel %vm242, 0.0, %v6153
    %v6156 = vunpack.c.l.s4 1983009808
    %v6157 = vunpack.c.0.s8 %v6156
    %v6158 = vperm.slane %v5359, %v6157
    %v6160 = vunpack.c.l.s4 1983009808
    %v6161 = vunpack.c.0.s8 %v6160
    %v6162 = vperm.slane %v6154, %v6161
    %v6163 = vrot.slane %v5372, 4
    %v6164 = vsel %vm242, 0.0, %v6163
    %v6166 = vunpack.c.l.s4 1983009808
    %v6167 = vunpack.c.0.s8 %v6166
    %v6168 = vperm.slane %v5372, %v6167
    %v6170 = vunpack.c.l.s4 1983009808
    %v6171 = vunpack.c.0.s8 %v6170
    %v6172 = vperm.slane %v6164, %v6171
    %v6173 = vrot.slane %v6168, 4
    %v6174 = vsel %vm242, %v6173, %v6158
    %v6175 = vrot.slane %v6158, 4
    %v6176 = vsel %vm242, %v6168, %v6175
    %v6178 = vunpack.c.l.s4 1934713408
    %v6179 = vunpack.c.0.s8 %v6178
    %v6180 = vperm.slane %v6174, %v6179
    %v6182 = vunpack.c.l.s4 1934713408
    %v6183 = vunpack.c.0.s8 %v6182
    %v6184 = vperm.slane %v6176, %v6183
    %v6185 = vrot.slane %v6172, 4
    %v6186 = vsel %vm242, %v6185, %v6162
    %v6187 = vrot.slane %v6162, 4
    %v6188 = vsel %vm242, %v6172, %v6187
    %v6190 = vunpack.c.l.s4 1934713408
    %v6191 = vunpack.c.0.s8 %v6190
    %v6192 = vperm.slane %v6186, %v6191
    %v6194 = vunpack.c.l.s4 1934713408
    %v6195 = vunpack.c.0.s8 %v6194
    %v6196 = vperm.slane %v6188, %v6195
    %v6197 = vrot.slane %v6180, 4
    %v6198 = vsel %vm242, 0.0, %v6197
    %v6199 = vrot.slane %v6184, 4
    %v6200 = vsel %vm242, 0.0, %v6199
    %v6201 = vrot.slane %v6192, 4
    %v6202 = vsel %vm242, 0.0, %v6201
    %v6203 = vrot.slane %v6196, 4
    %v6204 = vsel %vm242, 0.0, %v6203
    %6213 = vrot.lane.b32.xlu0 %v5418, 2
    %v6214 = vpop.permute.xlu0 %6213
    %6215 = vrot.lane.b32.xlu0 %v5522, 2
    %v6216 = vpop.permute.xlu0 %6215
    %6217 = vrot.lane.b32.xlu0 %v5626, 2
    %v6218 = vpop.permute.xlu0 %6217
    %6219 = vrot.lane.b32.xlu0 %v5730, 2
    %v6220 = vpop.permute.xlu0 %6219
    %6221 = vrot.lane.b32.xlu0 %v5834, 2
    %v6222 = vpop.permute.xlu0 %6221
    %6223 = vrot.lane.b32.xlu0 %v5938, 2
    %v6224 = vpop.permute.xlu0 %6223
    %6225 = vrot.lane.b32.xlu0 %v6042, 2
    %v6226 = vpop.permute.xlu0 %6225
    %6227 = vrot.lane.b32.xlu0 %v6146, 2
    %v6228 = vpop.permute.xlu0 %6227
    %6245 = vrot.lane.b32.xlu0 %v5404, 4
    %v6246 = vpop.permute.xlu0 %6245
    %6247 = vrot.lane.b32.xlu0 %v5508, 4
    %v6248 = vpop.permute.xlu0 %6247
    %6249 = vrot.lane.b32.xlu0 %v5612, 4
    %v6250 = vpop.permute.xlu0 %6249
    %6251 = vrot.lane.b32.xlu0 %v5716, 4
    %v6252 = vpop.permute.xlu0 %6251
    %6253 = vrot.lane.b32.xlu0 %v5820, 4
    %v6254 = vpop.permute.xlu0 %6253
    %6255 = vrot.lane.b32.xlu0 %v5924, 4
    %v6256 = vpop.permute.xlu0 %6255
    %6257 = vrot.lane.b32.xlu0 %v6028, 4
    %v6258 = vpop.permute.xlu0 %6257
    %6259 = vrot.lane.b32.xlu0 %v6132, 4
    %v6260 = vpop.permute.xlu0 %6259
    %6277 = vrot.lane.b32.xlu0 %v5420, 6
    %v6278 = vpop.permute.xlu0 %6277
    %6279 = vrot.lane.b32.xlu0 %v5524, 6
    %v6280 = vpop.permute.xlu0 %6279
    %6281 = vrot.lane.b32.xlu0 %v5628, 6
    %v6282 = vpop.permute.xlu0 %6281
    %6283 = vrot.lane.b32.xlu0 %v5732, 6
    %v6284 = vpop.permute.xlu0 %6283
    %6285 = vrot.lane.b32.xlu0 %v5836, 6
    %v6286 = vpop.permute.xlu0 %6285
    %6287 = vrot.lane.b32.xlu0 %v5940, 6
    %v6288 = vpop.permute.xlu0 %6287
    %6289 = vrot.lane.b32.xlu0 %v6044, 6
    %v6290 = vpop.permute.xlu0 %6289
    %6291 = vrot.lane.b32.xlu0 %v6148, 6
    %v6292 = vpop.permute.xlu0 %6291
    %6309 = vrot.lane.b32.xlu0 %v5412, 8
    %v6310 = vpop.permute.xlu0 %6309
    %6311 = vrot.lane.b32.xlu0 %v5516, 8
    %v6312 = vpop.permute.xlu0 %6311
    %6313 = vrot.lane.b32.xlu0 %v5620, 8
    %v6314 = vpop.permute.xlu0 %6313
    %6315 = vrot.lane.b32.xlu0 %v5724, 8
    %v6316 = vpop.permute.xlu0 %6315
    %6317 = vrot.lane.b32.xlu0 %v5828, 8
    %v6318 = vpop.permute.xlu0 %6317
    %6319 = vrot.lane.b32.xlu0 %v5932, 8
    %v6320 = vpop.permute.xlu0 %6319
    %6321 = vrot.lane.b32.xlu0 %v6036, 8
    %v6322 = vpop.permute.xlu0 %6321
    %6323 = vrot.lane.b32.xlu0 %v6140, 8
    %v6324 = vpop.permute.xlu0 %6323
    %6341 = vrot.lane.b32.xlu0 %v5422, 10
    %v6342 = vpop.permute.xlu0 %6341
    %6343 = vrot.lane.b32.xlu0 %v5526, 10
    %v6344 = vpop.permute.xlu0 %6343
    %6345 = vrot.lane.b32.xlu0 %v5630, 10
    %v6346 = vpop.permute.xlu0 %6345
    %6347 = vrot.lane.b32.xlu0 %v5734, 10
    %v6348 = vpop.permute.xlu0 %6347
    %6349 = vrot.lane.b32.xlu0 %v5838, 10
    %v6350 = vpop.permute.xlu0 %6349
    %6351 = vrot.lane.b32.xlu0 %v5942, 10
    %v6352 = vpop.permute.xlu0 %6351
    %6353 = vrot.lane.b32.xlu0 %v6046, 10
    %v6354 = vpop.permute.xlu0 %6353
    %6355 = vrot.lane.b32.xlu0 %v6150, 10
    %v6356 = vpop.permute.xlu0 %6355
    %6373 = vrot.lane.b32.xlu0 %v5416, 12
    %v6374 = vpop.permute.xlu0 %6373
    %6375 = vrot.lane.b32.xlu0 %v5520, 12
    %v6376 = vpop.permute.xlu0 %6375
    %6377 = vrot.lane.b32.xlu0 %v5624, 12
    %v6378 = vpop.permute.xlu0 %6377
    %6379 = vrot.lane.b32.xlu0 %v5728, 12
    %v6380 = vpop.permute.xlu0 %6379
    %6381 = vrot.lane.b32.xlu0 %v5832, 12
    %v6382 = vpop.permute.xlu0 %6381
    %6383 = vrot.lane.b32.xlu0 %v5936, 12
    %v6384 = vpop.permute.xlu0 %6383
    %6385 = vrot.lane.b32.xlu0 %v6040, 12
    %v6386 = vpop.permute.xlu0 %6385
    %6387 = vrot.lane.b32.xlu0 %v6144, 12
    %v6388 = vpop.permute.xlu0 %6387
    %6405 = vrot.lane.b32.xlu0 %v5424, 14
    %v6406 = vpop.permute.xlu0 %6405
    %6407 = vrot.lane.b32.xlu0 %v5528, 14
    %v6408 = vpop.permute.xlu0 %6407
    %6409 = vrot.lane.b32.xlu0 %v5632, 14
    %v6410 = vpop.permute.xlu0 %6409
    %6411 = vrot.lane.b32.xlu0 %v5736, 14
    %v6412 = vpop.permute.xlu0 %6411
    %6413 = vrot.lane.b32.xlu0 %v5840, 14
    %v6414 = vpop.permute.xlu0 %6413
    %6415 = vrot.lane.b32.xlu0 %v5944, 14
    %v6416 = vpop.permute.xlu0 %6415
    %6417 = vrot.lane.b32.xlu0 %v6048, 14
    %v6418 = vpop.permute.xlu0 %6417
    %6419 = vrot.lane.b32.xlu0 %v6152, 14
    %v6420 = vpop.permute.xlu0 %6419
    %6437 = vrot.lane.b32.xlu0 %v5452, 16
    %v6438 = vpop.permute.xlu0 %6437
    %6439 = vrot.lane.b32.xlu0 %v5556, 16
    %v6440 = vpop.permute.xlu0 %6439
    %6441 = vrot.lane.b32.xlu0 %v5660, 16
    %v6442 = vpop.permute.xlu0 %6441
    %6443 = vrot.lane.b32.xlu0 %v5764, 16
    %v6444 = vpop.permute.xlu0 %6443
    %6445 = vrot.lane.b32.xlu0 %v5868, 16
    %v6446 = vpop.permute.xlu0 %6445
    %6447 = vrot.lane.b32.xlu0 %v5972, 16
    %v6448 = vpop.permute.xlu0 %6447
    %6449 = vrot.lane.b32.xlu0 %v6076, 16
    %v6450 = vpop.permute.xlu0 %6449
    %6451 = vrot.lane.b32.xlu0 %v6180, 16
    %v6452 = vpop.permute.xlu0 %6451
    %6469 = vrot.lane.b32.xlu0 %v5470, 18
    %v6470 = vpop.permute.xlu0 %6469
    %6471 = vrot.lane.b32.xlu0 %v5574, 18
    %v6472 = vpop.permute.xlu0 %6471
    %6473 = vrot.lane.b32.xlu0 %v5678, 18
    %v6474 = vpop.permute.xlu0 %6473
    %6475 = vrot.lane.b32.xlu0 %v5782, 18
    %v6476 = vpop.permute.xlu0 %6475
    %6477 = vrot.lane.b32.xlu0 %v5886, 18
    %v6478 = vpop.permute.xlu0 %6477
    %6479 = vrot.lane.b32.xlu0 %v5990, 18
    %v6480 = vpop.permute.xlu0 %6479
    %6481 = vrot.lane.b32.xlu0 %v6094, 18
    %v6482 = vpop.permute.xlu0 %6481
    %6483 = vrot.lane.b32.xlu0 %v6198, 18
    %v6484 = vpop.permute.xlu0 %6483
    %6501 = vrot.lane.b32.xlu0 %v5456, 20
    %v6502 = vpop.permute.xlu0 %6501
    %6503 = vrot.lane.b32.xlu0 %v5560, 20
    %v6504 = vpop.permute.xlu0 %6503
    %6505 = vrot.lane.b32.xlu0 %v5664, 20
    %v6506 = vpop.permute.xlu0 %6505
    %6507 = vrot.lane.b32.xlu0 %v5768, 20
    %v6508 = vpop.permute.xlu0 %6507
    %6509 = vrot.lane.b32.xlu0 %v5872, 20
    %v6510 = vpop.permute.xlu0 %6509
    %6511 = vrot.lane.b32.xlu0 %v5976, 20
    %v6512 = vpop.permute.xlu0 %6511
    %6513 = vrot.lane.b32.xlu0 %v6080, 20
    %v6514 = vpop.permute.xlu0 %6513
    %6515 = vrot.lane.b32.xlu0 %v6184, 20
    %v6516 = vpop.permute.xlu0 %6515
    %6533 = vrot.lane.b32.xlu0 %v5472, 22
    %v6534 = vpop.permute.xlu0 %6533
    %6535 = vrot.lane.b32.xlu0 %v5576, 22
    %v6536 = vpop.permute.xlu0 %6535
    %6537 = vrot.lane.b32.xlu0 %v5680, 22
    %v6538 = vpop.permute.xlu0 %6537
    %6539 = vrot.lane.b32.xlu0 %v5784, 22
    %v6540 = vpop.permute.xlu0 %6539
    %6541 = vrot.lane.b32.xlu0 %v5888, 22
    %v6542 = vpop.permute.xlu0 %6541
    %6543 = vrot.lane.b32.xlu0 %v5992, 22
    %v6544 = vpop.permute.xlu0 %6543
    %6545 = vrot.lane.b32.xlu0 %v6096, 22
    %v6546 = vpop.permute.xlu0 %6545
    %6547 = vrot.lane.b32.xlu0 %v6200, 22
    %v6548 = vpop.permute.xlu0 %6547
    %6565 = vrot.lane.b32.xlu0 %v5464, 24
    %v6566 = vpop.permute.xlu0 %6565
    %6567 = vrot.lane.b32.xlu0 %v5568, 24
    %v6568 = vpop.permute.xlu0 %6567
    %6569 = vrot.lane.b32.xlu0 %v5672, 24
    %v6570 = vpop.permute.xlu0 %6569
    %6571 = vrot.lane.b32.xlu0 %v5776, 24
    %v6572 = vpop.permute.xlu0 %6571
    %6573 = vrot.lane.b32.xlu0 %v5880, 24
    %v6574 = vpop.permute.xlu0 %6573
    %6575 = vrot.lane.b32.xlu0 %v5984, 24
    %v6576 = vpop.permute.xlu0 %6575
    %6577 = vrot.lane.b32.xlu0 %v6088, 24
    %v6578 = vpop.permute.xlu0 %6577
    %6579 = vrot.lane.b32.xlu0 %v6192, 24
    %v6580 = vpop.permute.xlu0 %6579
    %6597 = vrot.lane.b32.xlu0 %v5474, 26
    %v6598 = vpop.permute.xlu0 %6597
    %6599 = vrot.lane.b32.xlu0 %v5578, 26
    %v6600 = vpop.permute.xlu0 %6599
    %6601 = vrot.lane.b32.xlu0 %v5682, 26
    %v6602 = vpop.permute.xlu0 %6601
    %6603 = vrot.lane.b32.xlu0 %v5786, 26
    %v6604 = vpop.permute.xlu0 %6603
    %6605 = vrot.lane.b32.xlu0 %v5890, 26
    %v6606 = vpop.permute.xlu0 %6605
    %6607 = vrot.lane.b32.xlu0 %v5994, 26
    %v6608 = vpop.permute.xlu0 %6607
    %6609 = vrot.lane.b32.xlu0 %v6098, 26
    %v6610 = vpop.permute.xlu0 %6609
    %6611 = vrot.lane.b32.xlu0 %v6202, 26
    %v6612 = vpop.permute.xlu0 %6611
    %6629 = vrot.lane.b32.xlu0 %v5468, 28
    %v6630 = vpop.permute.xlu0 %6629
    %6631 = vrot.lane.b32.xlu0 %v5572, 28
    %v6632 = vpop.permute.xlu0 %6631
    %6633 = vrot.lane.b32.xlu0 %v5676, 28
    %v6634 = vpop.permute.xlu0 %6633
    %6635 = vrot.lane.b32.xlu0 %v5780, 28
    %v6636 = vpop.permute.xlu0 %6635
    %6637 = vrot.lane.b32.xlu0 %v5884, 28
    %v6638 = vpop.permute.xlu0 %6637
    %6639 = vrot.lane.b32.xlu0 %v5988, 28
    %v6640 = vpop.permute.xlu0 %6639
    %6641 = vrot.lane.b32.xlu0 %v6092, 28
    %v6642 = vpop.permute.xlu0 %6641
    %6643 = vrot.lane.b32.xlu0 %v6196, 28
    %v6644 = vpop.permute.xlu0 %6643
    %6661 = vrot.lane.b32.xlu0 %v5476, 30
    %v6662 = vpop.permute.xlu0 %6661
    %6663 = vrot.lane.b32.xlu0 %v5580, 30
    %v6664 = vpop.permute.xlu0 %6663
    %6665 = vrot.lane.b32.xlu0 %v5684, 30
    %v6666 = vpop.permute.xlu0 %6665
    %6667 = vrot.lane.b32.xlu0 %v5788, 30
    %v6668 = vpop.permute.xlu0 %6667
    %6669 = vrot.lane.b32.xlu0 %v5892, 30
    %v6670 = vpop.permute.xlu0 %6669
    %6671 = vrot.lane.b32.xlu0 %v5996, 30
    %v6672 = vpop.permute.xlu0 %6671
    %6673 = vrot.lane.b32.xlu0 %v6100, 30
    %v6674 = vpop.permute.xlu0 %6673
    %6675 = vrot.lane.b32.xlu0 %v6204, 30
    %v6676 = vpop.permute.xlu0 %6675
    %v6685 = vsel %vm1554, %v5400, %v6214
    %v6686 = vsel %vm1554, %v5504, %v6216
    %v6687 = vsel %vm1554, %v5608, %v6218
    %v6688 = vsel %vm1554, %v5712, %v6220
    %v6689 = vsel %vm1554, %v5816, %v6222
    %v6690 = vsel %vm1554, %v5920, %v6224
    %v6691 = vsel %vm1554, %v6024, %v6226
    %v6692 = vsel %vm1554, %v6128, %v6228
    %v6693 = vsel %vm1563, %v6685, %v6246
    %v6694 = vsel %vm1563, %v6686, %v6248
    %v6695 = vsel %vm1563, %v6687, %v6250
    %v6696 = vsel %vm1563, %v6688, %v6252
    %v6697 = vsel %vm1563, %v6689, %v6254
    %v6698 = vsel %vm1563, %v6690, %v6256
    %v6699 = vsel %vm1563, %v6691, %v6258
    %v6700 = vsel %vm1563, %v6692, %v6260
    %v6701 = vsel %vm1572, %v6693, %v6278
    %v6702 = vsel %vm1572, %v6694, %v6280
    %v6703 = vsel %vm1572, %v6695, %v6282
    %v6704 = vsel %vm1572, %v6696, %v6284
    %v6705 = vsel %vm1572, %v6697, %v6286
    %v6706 = vsel %vm1572, %v6698, %v6288
    %v6707 = vsel %vm1572, %v6699, %v6290
    %v6708 = vsel %vm1572, %v6700, %v6292
    %v6709 = vsel %vm1581, %v6701, %v6310
    %v6710 = vsel %vm1581, %v6702, %v6312
    %v6711 = vsel %vm1581, %v6703, %v6314
    %v6712 = vsel %vm1581, %v6704, %v6316
    %v6713 = vsel %vm1581, %v6705, %v6318
    %v6714 = vsel %vm1581, %v6706, %v6320
    %v6715 = vsel %vm1581, %v6707, %v6322
    %v6716 = vsel %vm1581, %v6708, %v6324
    %v6717 = vsel %vm1590, %v6709, %v6342
    %v6718 = vsel %vm1590, %v6710, %v6344
    %v6719 = vsel %vm1590, %v6711, %v6346
    %v6720 = vsel %vm1590, %v6712, %v6348
    %v6721 = vsel %vm1590, %v6713, %v6350
    %v6722 = vsel %vm1590, %v6714, %v6352
    %v6723 = vsel %vm1590, %v6715, %v6354
    %v6724 = vsel %vm1590, %v6716, %v6356
    %v6725 = vsel %vm1599, %v6717, %v6374
    %v6726 = vsel %vm1599, %v6718, %v6376
    %v6727 = vsel %vm1599, %v6719, %v6378
    %v6728 = vsel %vm1599, %v6720, %v6380
    %v6729 = vsel %vm1599, %v6721, %v6382
    %v6730 = vsel %vm1599, %v6722, %v6384
    %v6731 = vsel %vm1599, %v6723, %v6386
    %v6732 = vsel %vm1599, %v6724, %v6388
    %v6733 = vsel %vm1608, %v6725, %v6406
    %v6734 = vsel %vm1608, %v6726, %v6408
    %v6735 = vsel %vm1608, %v6727, %v6410
    %v6736 = vsel %vm1608, %v6728, %v6412
    %v6737 = vsel %vm1608, %v6729, %v6414
    %v6738 = vsel %vm1608, %v6730, %v6416
    %v6739 = vsel %vm1608, %v6731, %v6418
    %v6740 = vsel %vm1608, %v6732, %v6420
    %v6741 = vsel %vm1617, %v6733, %v6438
    %v6742 = vsel %vm1617, %v6734, %v6440
    %v6743 = vsel %vm1617, %v6735, %v6442
    %v6744 = vsel %vm1617, %v6736, %v6444
    %v6745 = vsel %vm1617, %v6737, %v6446
    %v6746 = vsel %vm1617, %v6738, %v6448
    %v6747 = vsel %vm1617, %v6739, %v6450
    %v6748 = vsel %vm1617, %v6740, %v6452
    %v6749 = vsel %vm1626, %v6741, %v6470
    %v6750 = vsel %vm1626, %v6742, %v6472
    %v6751 = vsel %vm1626, %v6743, %v6474
    %v6752 = vsel %vm1626, %v6744, %v6476
    %v6753 = vsel %vm1626, %v6745, %v6478
    %v6754 = vsel %vm1626, %v6746, %v6480
    %v6755 = vsel %vm1626, %v6747, %v6482
    %v6756 = vsel %vm1626, %v6748, %v6484
    %v6757 = vsel %vm1635, %v6749, %v6502
    %v6758 = vsel %vm1635, %v6750, %v6504
    %v6759 = vsel %vm1635, %v6751, %v6506
    %v6760 = vsel %vm1635, %v6752, %v6508
    %v6761 = vsel %vm1635, %v6753, %v6510
    %v6762 = vsel %vm1635, %v6754, %v6512
    %v6763 = vsel %vm1635, %v6755, %v6514
    %v6764 = vsel %vm1635, %v6756, %v6516
    %v6765 = vsel %vm1644, %v6757, %v6534
    %v6766 = vsel %vm1644, %v6758, %v6536
    %v6767 = vsel %vm1644, %v6759, %v6538
    %v6768 = vsel %vm1644, %v6760, %v6540
    %v6769 = vsel %vm1644, %v6761, %v6542
    %v6770 = vsel %vm1644, %v6762, %v6544
    %v6771 = vsel %vm1644, %v6763, %v6546
    %v6772 = vsel %vm1644, %v6764, %v6548
    %v6773 = vsel %vm1653, %v6765, %v6566
    %v6774 = vsel %vm1653, %v6766, %v6568
    %v6775 = vsel %vm1653, %v6767, %v6570
    %v6776 = vsel %vm1653, %v6768, %v6572
    %v6777 = vsel %vm1653, %v6769, %v6574
    %v6778 = vsel %vm1653, %v6770, %v6576
    %v6779 = vsel %vm1653, %v6771, %v6578
    %v6780 = vsel %vm1653, %v6772, %v6580
    %v6781 = vsel %vm1662, %v6773, %v6598
    %v6782 = vsel %vm1662, %v6774, %v6600
    %v6783 = vsel %vm1662, %v6775, %v6602
    %v6784 = vsel %vm1662, %v6776, %v6604
    %v6785 = vsel %vm1662, %v6777, %v6606
    %v6786 = vsel %vm1662, %v6778, %v6608
    %v6787 = vsel %vm1662, %v6779, %v6610
    %v6788 = vsel %vm1662, %v6780, %v6612
    %v6789 = vsel %vm1671, %v6781, %v6630
    %v6790 = vsel %vm1671, %v6782, %v6632
    %v6791 = vsel %vm1671, %v6783, %v6634
    %v6792 = vsel %vm1671, %v6784, %v6636
    %v6793 = vsel %vm1671, %v6785, %v6638
    %v6794 = vsel %vm1671, %v6786, %v6640
    %v6795 = vsel %vm1671, %v6787, %v6642
    %v6796 = vsel %vm1671, %v6788, %v6644
    %v6797 = vsel %vm1680, %v6789, %v6662
    %v6798 = vsel %vm1680, %v6790, %v6664
    %v6799 = vsel %vm1680, %v6791, %v6666
    %v6800 = vsel %vm1680, %v6792, %v6668
    %v6801 = vsel %vm1680, %v6793, %v6670
    %v6802 = vsel %vm1680, %v6794, %v6672
    %v6803 = vsel %vm1680, %v6795, %v6674
    %v6804 = vsel %vm1680, %v6796, %v6676
    %6813 = vrot.lane.b32.xlu0 %v6797, 64
    %v6814 = vpop.permute.xlu0 %6813
    %6815 = vrot.lane.b32.xlu0 %v6798, 64
    %v6816 = vpop.permute.xlu0 %6815
    %6817 = vrot.lane.b32.xlu0 %v6799, 64
    %v6818 = vpop.permute.xlu0 %6817
    %6819 = vrot.lane.b32.xlu0 %v6800, 64
    %v6820 = vpop.permute.xlu0 %6819
    %6821 = vrot.lane.b32.xlu0 %v6801, 64
    %v6822 = vpop.permute.xlu0 %6821
    %6823 = vrot.lane.b32.xlu0 %v6802, 64
    %v6824 = vpop.permute.xlu0 %6823
    %6825 = vrot.lane.b32.xlu0 %v6803, 64
    %v6826 = vpop.permute.xlu0 %6825
    %6827 = vrot.lane.b32.xlu0 %v6804, 64
    %v6828 = vpop.permute.xlu0 %6827
    %6837 = vst.msk [vmem:[#allocation5 + $0x2] sm:$0x3] %vm3419, %v6814
    %6838 = vst.msk [vmem:[#allocation5 + $0xa] sm:$0x3] %vm3419, %v6816
    %6839 = vst.msk [vmem:[#allocation5 + $0x12] sm:$0x3] %vm3419, %v6818
    %6840 = vst.msk [vmem:[#allocation5 + $0x1a] sm:$0x3] %vm3419, %v6820
    %6841 = vst.msk [vmem:[#allocation5 + $0x22] sm:$0x3] %vm3419, %v6822
    %6842 = vst.msk [vmem:[#allocation5 + $0x2a] sm:$0x3] %vm3419, %v6824
    %6843 = vst.msk [vmem:[#allocation5 + $0x32] sm:$0x3] %vm3419, %v6826
    %6844 = vst.msk [vmem:[#allocation5 + $0x3a] sm:$0x3] %vm3419, %v6828
    %6845 = vrot.lane.b32.xlu0 %v6797, 96
    %v6846 = vpop.permute.xlu0 %6845
    %6847 = vrot.lane.b32.xlu0 %v6798, 96
    %v6848 = vpop.permute.xlu0 %6847
    %6849 = vrot.lane.b32.xlu0 %v6799, 96
    %v6850 = vpop.permute.xlu0 %6849
    %6851 = vrot.lane.b32.xlu0 %v6800, 96
    %v6852 = vpop.permute.xlu0 %6851
    %6853 = vrot.lane.b32.xlu0 %v6801, 96
    %v6854 = vpop.permute.xlu0 %6853
    %6855 = vrot.lane.b32.xlu0 %v6802, 96
    %v6856 = vpop.permute.xlu0 %6855
    %6857 = vrot.lane.b32.xlu0 %v6803, 96
    %v6858 = vpop.permute.xlu0 %6857
    %6859 = vrot.lane.b32.xlu0 %v6804, 96
    %v6860 = vpop.permute.xlu0 %6859
    %6869 = vst.msk [vmem:[#allocation5 + $0x2] sm:$0x3] %vm3452, %v6846
    %6870 = vst.msk [vmem:[#allocation5 + $0xa] sm:$0x3] %vm3452, %v6848
    %6871 = vst.msk [vmem:[#allocation5 + $0x12] sm:$0x3] %vm3452, %v6850
    %6872 = vst.msk [vmem:[#allocation5 + $0x1a] sm:$0x3] %vm3452, %v6852
    %6873 = vst.msk [vmem:[#allocation5 + $0x22] sm:$0x3] %vm3452, %v6854
    %6874 = vst.msk [vmem:[#allocation5 + $0x2a] sm:$0x3] %vm3452, %v6856
    %6875 = vst.msk [vmem:[#allocation5 + $0x32] sm:$0x3] %vm3452, %v6858
    %6876 = vst.msk [vmem:[#allocation5 + $0x3a] sm:$0x3] %vm3452, %v6860
    %v6877 = vld [vmem:[#allocation2] sm:$0x3]
    %v6878 = vld [vmem:[#allocation2 + $0x2] sm:$0x3]
    %v6879 = vld [vmem:[#allocation2 + $0x4] sm:$0x3]
    %v6880 = vld [vmem:[#allocation2 + $0x6] sm:$0x3]
    %v6881 = vld [vmem:[#allocation2 + $0x8] sm:$0x3]
    %v6882 = vld [vmem:[#allocation2 + $0xa] sm:$0x3]
    %v6883 = vld [vmem:[#allocation2 + $0xc] sm:$0x3]
    %v6884 = vld [vmem:[#allocation2 + $0xe] sm:$0x3]
    %v6885 = vperm.slane %v6877, 0
    %v6886 = vlaneseq
    %v6887 = vshrl.u32 %v6886, 7
    %v6888 = vadd.s32 %v6887, 64
    %6889 = vset.pattern.permute.xlu0 %v6888
    %6890 = vperm.xlu0 %6889, %v6885
    %v6891 = vpop.permute.xlu0 %6890
    %v6892 = vlaneseq
    %v6893 = vshrl.u32 %v6892, 7
    %v6894 = vadd.s32 %v6893, 72
    %6895 = vset.pattern.permute.xlu0 %v6894
    %6896 = vperm.xlu0 %6895, %v6885
    %v6897 = vpop.permute.xlu0 %6896
    %v6898 = vperm.slane %v6877, 1
    %v6899 = vlaneseq
    %v6900 = vshrl.u32 %v6899, 7
    %v6901 = vadd.s32 %v6900, 64
    %6902 = vset.pattern.permute.xlu0 %v6901
    %6903 = vperm.xlu0 %6902, %v6898
    %v6904 = vpop.permute.xlu0 %6903
    %v6905 = vlaneseq
    %v6906 = vshrl.u32 %v6905, 7
    %v6907 = vadd.s32 %v6906, 72
    %6908 = vset.pattern.permute.xlu0 %v6907
    %6909 = vperm.xlu0 %6908, %v6898
    %v6910 = vpop.permute.xlu0 %6909
    %v6911 = vperm.slane %v6878, 0
    %v6912 = vlaneseq
    %v6913 = vshrl.u32 %v6912, 7
    %v6914 = vadd.s32 %v6913, 64
    %6915 = vset.pattern.permute.xlu0 %v6914
    %6916 = vperm.xlu0 %6915, %v6911
    %v6917 = vpop.permute.xlu0 %6916
    %v6918 = vlaneseq
    %v6919 = vshrl.u32 %v6918, 7
    %v6920 = vadd.s32 %v6919, 72
    %6921 = vset.pattern.permute.xlu0 %v6920
    %6922 = vperm.xlu0 %6921, %v6911
    %v6923 = vpop.permute.xlu0 %6922
    %v6924 = vperm.slane %v6878, 1
    %v6925 = vlaneseq
    %v6926 = vshrl.u32 %v6925, 7
    %v6927 = vadd.s32 %v6926, 64
    %6928 = vset.pattern.permute.xlu0 %v6927
    %6929 = vperm.xlu0 %6928, %v6924
    %v6930 = vpop.permute.xlu0 %6929
    %v6931 = vlaneseq
    %v6932 = vshrl.u32 %v6931, 7
    %v6933 = vadd.s32 %v6932, 72
    %6934 = vset.pattern.permute.xlu0 %v6933
    %6935 = vperm.xlu0 %6934, %v6924
    %v6936 = vpop.permute.xlu0 %6935
    %v6937 = vperm.slane %v6879, 0
    %v6938 = vlaneseq
    %v6939 = vshrl.u32 %v6938, 7
    %v6940 = vadd.s32 %v6939, 64
    %6941 = vset.pattern.permute.xlu0 %v6940
    %6942 = vperm.xlu0 %6941, %v6937
    %v6943 = vpop.permute.xlu0 %6942
    %v6944 = vlaneseq
    %v6945 = vshrl.u32 %v6944, 7
    %v6946 = vadd.s32 %v6945, 72
    %6947 = vset.pattern.permute.xlu0 %v6946
    %6948 = vperm.xlu0 %6947, %v6937
    %v6949 = vpop.permute.xlu0 %6948
    %v6950 = vperm.slane %v6879, 1
    %v6951 = vlaneseq
    %v6952 = vshrl.u32 %v6951, 7
    %v6953 = vadd.s32 %v6952, 64
    %6954 = vset.pattern.permute.xlu0 %v6953
    %6955 = vperm.xlu0 %6954, %v6950
    %v6956 = vpop.permute.xlu0 %6955
    %v6957 = vlaneseq
    %v6958 = vshrl.u32 %v6957, 7
    %v6959 = vadd.s32 %v6958, 72
    %6960 = vset.pattern.permute.xlu0 %v6959
    %6961 = vperm.xlu0 %6960, %v6950
    %v6962 = vpop.permute.xlu0 %6961
    %v6963 = vperm.slane %v6880, 0
    %v6964 = vlaneseq
    %v6965 = vshrl.u32 %v6964, 7
    %v6966 = vadd.s32 %v6965, 64
    %6967 = vset.pattern.permute.xlu0 %v6966
    %6968 = vperm.xlu0 %6967, %v6963
    %v6969 = vpop.permute.xlu0 %6968
    %v6970 = vlaneseq
    %v6971 = vshrl.u32 %v6970, 7
    %v6972 = vadd.s32 %v6971, 72
    %6973 = vset.pattern.permute.xlu0 %v6972
    %6974 = vperm.xlu0 %6973, %v6963
    %v6975 = vpop.permute.xlu0 %6974
    %v6976 = vperm.slane %v6880, 1
    %v6977 = vlaneseq
    %v6978 = vshrl.u32 %v6977, 7
    %v6979 = vadd.s32 %v6978, 64
    %6980 = vset.pattern.permute.xlu0 %v6979
    %6981 = vperm.xlu0 %6980, %v6976
    %v6982 = vpop.permute.xlu0 %6981
    %v6983 = vlaneseq
    %v6984 = vshrl.u32 %v6983, 7
    %v6985 = vadd.s32 %v6984, 72
    %6986 = vset.pattern.permute.xlu0 %v6985
    %6987 = vperm.xlu0 %6986, %v6976
    %v6988 = vpop.permute.xlu0 %6987
    %v6989 = vperm.slane %v6881, 0
    %v6990 = vlaneseq
    %v6991 = vshrl.u32 %v6990, 7
    %v6992 = vadd.s32 %v6991, 64
    %6993 = vset.pattern.permute.xlu0 %v6992
    %6994 = vperm.xlu0 %6993, %v6989
    %v6995 = vpop.permute.xlu0 %6994
    %v6996 = vlaneseq
    %v6997 = vshrl.u32 %v6996, 7
    %v6998 = vadd.s32 %v6997, 72
    %6999 = vset.pattern.permute.xlu0 %v6998
    %7000 = vperm.xlu0 %6999, %v6989
    %v7001 = vpop.permute.xlu0 %7000
    %v7002 = vperm.slane %v6881, 1
    %v7003 = vlaneseq
    %v7004 = vshrl.u32 %v7003, 7
    %v7005 = vadd.s32 %v7004, 64
    %7006 = vset.pattern.permute.xlu0 %v7005
    %7007 = vperm.xlu0 %7006, %v7002
    %v7008 = vpop.permute.xlu0 %7007
    %v7009 = vlaneseq
    %v7010 = vshrl.u32 %v7009, 7
    %v7011 = vadd.s32 %v7010, 72
    %7012 = vset.pattern.permute.xlu0 %v7011
    %7013 = vperm.xlu0 %7012, %v7002
    %v7014 = vpop.permute.xlu0 %7013
    %v7015 = vperm.slane %v6882, 0
    %v7016 = vlaneseq
    %v7017 = vshrl.u32 %v7016, 7
    %v7018 = vadd.s32 %v7017, 64
    %7019 = vset.pattern.permute.xlu0 %v7018
    %7020 = vperm.xlu0 %7019, %v7015
    %v7021 = vpop.permute.xlu0 %7020
    %v7022 = vlaneseq
    %v7023 = vshrl.u32 %v7022, 7
    %v7024 = vadd.s32 %v7023, 72
    %7025 = vset.pattern.permute.xlu0 %v7024
    %7026 = vperm.xlu0 %7025, %v7015
    %v7027 = vpop.permute.xlu0 %7026
    %v7028 = vperm.slane %v6882, 1
    %v7029 = vlaneseq
    %v7030 = vshrl.u32 %v7029, 7
    %v7031 = vadd.s32 %v7030, 64
    %7032 = vset.pattern.permute.xlu0 %v7031
    %7033 = vperm.xlu0 %7032, %v7028
    %v7034 = vpop.permute.xlu0 %7033
    %v7035 = vlaneseq
    %v7036 = vshrl.u32 %v7035, 7
    %v7037 = vadd.s32 %v7036, 72
    %7038 = vset.pattern.permute.xlu0 %v7037
    %7039 = vperm.xlu0 %7038, %v7028
    %v7040 = vpop.permute.xlu0 %7039
    %v7041 = vperm.slane %v6883, 0
    %v7042 = vlaneseq
    %v7043 = vshrl.u32 %v7042, 7
    %v7044 = vadd.s32 %v7043, 64
    %7045 = vset.pattern.permute.xlu0 %v7044
    %7046 = vperm.xlu0 %7045, %v7041
    %v7047 = vpop.permute.xlu0 %7046
    %v7048 = vlaneseq
    %v7049 = vshrl.u32 %v7048, 7
    %v7050 = vadd.s32 %v7049, 72
    %7051 = vset.pattern.permute.xlu0 %v7050
    %7052 = vperm.xlu0 %7051, %v7041
    %v7053 = vpop.permute.xlu0 %7052
    %v7054 = vperm.slane %v6883, 1
    %v7055 = vlaneseq
    %v7056 = vshrl.u32 %v7055, 7
    %v7057 = vadd.s32 %v7056, 64
    %7058 = vset.pattern.permute.xlu0 %v7057
    %7059 = vperm.xlu0 %7058, %v7054
    %v7060 = vpop.permute.xlu0 %7059
    %v7061 = vlaneseq
    %v7062 = vshrl.u32 %v7061, 7
    %v7063 = vadd.s32 %v7062, 72
    %7064 = vset.pattern.permute.xlu0 %v7063
    %7065 = vperm.xlu0 %7064, %v7054
    %v7066 = vpop.permute.xlu0 %7065
    %v7067 = vperm.slane %v6884, 0
    %v7068 = vlaneseq
    %v7069 = vshrl.u32 %v7068, 7
    %v7070 = vadd.s32 %v7069, 64
    %7071 = vset.pattern.permute.xlu0 %v7070
    %7072 = vperm.xlu0 %7071, %v7067
    %v7073 = vpop.permute.xlu0 %7072
    %v7074 = vlaneseq
    %v7075 = vshrl.u32 %v7074, 7
    %v7076 = vadd.s32 %v7075, 72
    %7077 = vset.pattern.permute.xlu0 %v7076
    %7078 = vperm.xlu0 %7077, %v7067
    %v7079 = vpop.permute.xlu0 %7078
    %v7080 = vperm.slane %v6884, 1
    %v7081 = vlaneseq
    %v7082 = vshrl.u32 %v7081, 7
    %v7083 = vadd.s32 %v7082, 64
    %7084 = vset.pattern.permute.xlu0 %v7083
    %7085 = vperm.xlu0 %7084, %v7080
    %v7086 = vpop.permute.xlu0 %7085
    %v7087 = vlaneseq
    %v7088 = vshrl.u32 %v7087, 7
    %v7089 = vadd.s32 %v7088, 72
    %7090 = vset.pattern.permute.xlu0 %v7089
    %7091 = vperm.xlu0 %7090, %v7080
    %v7092 = vpop.permute.xlu0 %7091
    %v7093 = vrot.slane %v6891, 4
    %v7094 = vsel %vm242, 0.0, %v7093
    %v7096 = vunpack.c.l.s4 1983009808
    %v7097 = vunpack.c.0.s8 %v7096
    %v7098 = vperm.slane %v6891, %v7097
    %v7100 = vunpack.c.l.s4 1983009808
    %v7101 = vunpack.c.0.s8 %v7100
    %v7102 = vperm.slane %v7094, %v7101
    %v7103 = vrot.slane %v6904, 4
    %v7104 = vsel %vm242, 0.0, %v7103
    %v7106 = vunpack.c.l.s4 1983009808
    %v7107 = vunpack.c.0.s8 %v7106
    %v7108 = vperm.slane %v6904, %v7107
    %v7110 = vunpack.c.l.s4 1983009808
    %v7111 = vunpack.c.0.s8 %v7110
    %v7112 = vperm.slane %v7104, %v7111
    %v7113 = vrot.slane %v7108, 4
    %v7114 = vsel %vm242, %v7113, %v7098
    %v7115 = vrot.slane %v7098, 4
    %v7116 = vsel %vm242, %v7108, %v7115
    %v7118 = vunpack.c.l.s4 1934713408
    %v7119 = vunpack.c.0.s8 %v7118
    %v7120 = vperm.slane %v7114, %v7119
    %v7122 = vunpack.c.l.s4 1934713408
    %v7123 = vunpack.c.0.s8 %v7122
    %v7124 = vperm.slane %v7116, %v7123
    %v7125 = vrot.slane %v7112, 4
    %v7126 = vsel %vm242, %v7125, %v7102
    %v7127 = vrot.slane %v7102, 4
    %v7128 = vsel %vm242, %v7112, %v7127
    %v7130 = vunpack.c.l.s4 1934713408
    %v7131 = vunpack.c.0.s8 %v7130
    %v7132 = vperm.slane %v7126, %v7131
    %v7134 = vunpack.c.l.s4 1934713408
    %v7135 = vunpack.c.0.s8 %v7134
    %v7136 = vperm.slane %v7128, %v7135
    %v7137 = vrot.slane %v7120, 4
    %v7138 = vsel %vm242, 0.0, %v7137
    %v7139 = vrot.slane %v7124, 4
    %v7140 = vsel %vm242, 0.0, %v7139
    %v7141 = vrot.slane %v7132, 4
    %v7142 = vsel %vm242, 0.0, %v7141
    %v7143 = vrot.slane %v7136, 4
    %v7144 = vsel %vm242, 0.0, %v7143
    %v7145 = vrot.slane %v6897, 4
    %v7146 = vsel %vm242, 0.0, %v7145
    %v7148 = vunpack.c.l.s4 1983009808
    %v7149 = vunpack.c.0.s8 %v7148
    %v7150 = vperm.slane %v6897, %v7149
    %v7152 = vunpack.c.l.s4 1983009808
    %v7153 = vunpack.c.0.s8 %v7152
    %v7154 = vperm.slane %v7146, %v7153
    %v7155 = vrot.slane %v6910, 4
    %v7156 = vsel %vm242, 0.0, %v7155
    %v7158 = vunpack.c.l.s4 1983009808
    %v7159 = vunpack.c.0.s8 %v7158
    %v7160 = vperm.slane %v6910, %v7159
    %v7162 = vunpack.c.l.s4 1983009808
    %v7163 = vunpack.c.0.s8 %v7162
    %v7164 = vperm.slane %v7156, %v7163
    %v7165 = vrot.slane %v7160, 4
    %v7166 = vsel %vm242, %v7165, %v7150
    %v7167 = vrot.slane %v7150, 4
    %v7168 = vsel %vm242, %v7160, %v7167
    %v7170 = vunpack.c.l.s4 1934713408
    %v7171 = vunpack.c.0.s8 %v7170
    %v7172 = vperm.slane %v7166, %v7171
    %v7174 = vunpack.c.l.s4 1934713408
    %v7175 = vunpack.c.0.s8 %v7174
    %v7176 = vperm.slane %v7168, %v7175
    %v7177 = vrot.slane %v7164, 4
    %v7178 = vsel %vm242, %v7177, %v7154
    %v7179 = vrot.slane %v7154, 4
    %v7180 = vsel %vm242, %v7164, %v7179
    %v7182 = vunpack.c.l.s4 1934713408
    %v7183 = vunpack.c.0.s8 %v7182
    %v7184 = vperm.slane %v7178, %v7183
    %v7186 = vunpack.c.l.s4 1934713408
    %v7187 = vunpack.c.0.s8 %v7186
    %v7188 = vperm.slane %v7180, %v7187
    %v7189 = vrot.slane %v7172, 4
    %v7190 = vsel %vm242, 0.0, %v7189
    %v7191 = vrot.slane %v7176, 4
    %v7192 = vsel %vm242, 0.0, %v7191
    %v7193 = vrot.slane %v7184, 4
    %v7194 = vsel %vm242, 0.0, %v7193
    %v7195 = vrot.slane %v7188, 4
    %v7196 = vsel %vm242, 0.0, %v7195
    %v7197 = vrot.slane %v6917, 4
    %v7198 = vsel %vm242, 0.0, %v7197
    %v7200 = vunpack.c.l.s4 1983009808
    %v7201 = vunpack.c.0.s8 %v7200
    %v7202 = vperm.slane %v6917, %v7201
    %v7204 = vunpack.c.l.s4 1983009808
    %v7205 = vunpack.c.0.s8 %v7204
    %v7206 = vperm.slane %v7198, %v7205
    %v7207 = vrot.slane %v6930, 4
    %v7208 = vsel %vm242, 0.0, %v7207
    %v7210 = vunpack.c.l.s4 1983009808
    %v7211 = vunpack.c.0.s8 %v7210
    %v7212 = vperm.slane %v6930, %v7211
    %v7214 = vunpack.c.l.s4 1983009808
    %v7215 = vunpack.c.0.s8 %v7214
    %v7216 = vperm.slane %v7208, %v7215
    %v7217 = vrot.slane %v7212, 4
    %v7218 = vsel %vm242, %v7217, %v7202
    %v7219 = vrot.slane %v7202, 4
    %v7220 = vsel %vm242, %v7212, %v7219
    %v7222 = vunpack.c.l.s4 1934713408
    %v7223 = vunpack.c.0.s8 %v7222
    %v7224 = vperm.slane %v7218, %v7223
    %v7226 = vunpack.c.l.s4 1934713408
    %v7227 = vunpack.c.0.s8 %v7226
    %v7228 = vperm.slane %v7220, %v7227
    %v7229 = vrot.slane %v7216, 4
    %v7230 = vsel %vm242, %v7229, %v7206
    %v7231 = vrot.slane %v7206, 4
    %v7232 = vsel %vm242, %v7216, %v7231
    %v7234 = vunpack.c.l.s4 1934713408
    %v7235 = vunpack.c.0.s8 %v7234
    %v7236 = vperm.slane %v7230, %v7235
    %v7238 = vunpack.c.l.s4 1934713408
    %v7239 = vunpack.c.0.s8 %v7238
    %v7240 = vperm.slane %v7232, %v7239
    %v7241 = vrot.slane %v7224, 4
    %v7242 = vsel %vm242, 0.0, %v7241
    %v7243 = vrot.slane %v7228, 4
    %v7244 = vsel %vm242, 0.0, %v7243
    %v7245 = vrot.slane %v7236, 4
    %v7246 = vsel %vm242, 0.0, %v7245
    %v7247 = vrot.slane %v7240, 4
    %v7248 = vsel %vm242, 0.0, %v7247
    %v7249 = vrot.slane %v6923, 4
    %v7250 = vsel %vm242, 0.0, %v7249
    %v7252 = vunpack.c.l.s4 1983009808
    %v7253 = vunpack.c.0.s8 %v7252
    %v7254 = vperm.slane %v6923, %v7253
    %v7256 = vunpack.c.l.s4 1983009808
    %v7257 = vunpack.c.0.s8 %v7256
    %v7258 = vperm.slane %v7250, %v7257
    %v7259 = vrot.slane %v6936, 4
    %v7260 = vsel %vm242, 0.0, %v7259
    %v7262 = vunpack.c.l.s4 1983009808
    %v7263 = vunpack.c.0.s8 %v7262
    %v7264 = vperm.slane %v6936, %v7263
    %v7266 = vunpack.c.l.s4 1983009808
    %v7267 = vunpack.c.0.s8 %v7266
    %v7268 = vperm.slane %v7260, %v7267
    %v7269 = vrot.slane %v7264, 4
    %v7270 = vsel %vm242, %v7269, %v7254
    %v7271 = vrot.slane %v7254, 4
    %v7272 = vsel %vm242, %v7264, %v7271
    %v7274 = vunpack.c.l.s4 1934713408
    %v7275 = vunpack.c.0.s8 %v7274
    %v7276 = vperm.slane %v7270, %v7275
    %v7278 = vunpack.c.l.s4 1934713408
    %v7279 = vunpack.c.0.s8 %v7278
    %v7280 = vperm.slane %v7272, %v7279
    %v7281 = vrot.slane %v7268, 4
    %v7282 = vsel %vm242, %v7281, %v7258
    %v7283 = vrot.slane %v7258, 4
    %v7284 = vsel %vm242, %v7268, %v7283
    %v7286 = vunpack.c.l.s4 1934713408
    %v7287 = vunpack.c.0.s8 %v7286
    %v7288 = vperm.slane %v7282, %v7287
    %v7290 = vunpack.c.l.s4 1934713408
    %v7291 = vunpack.c.0.s8 %v7290
    %v7292 = vperm.slane %v7284, %v7291
    %v7293 = vrot.slane %v7276, 4
    %v7294 = vsel %vm242, 0.0, %v7293
    %v7295 = vrot.slane %v7280, 4
    %v7296 = vsel %vm242, 0.0, %v7295
    %v7297 = vrot.slane %v7288, 4
    %v7298 = vsel %vm242, 0.0, %v7297
    %v7299 = vrot.slane %v7292, 4
    %v7300 = vsel %vm242, 0.0, %v7299
    %v7301 = vrot.slane %v6943, 4
    %v7302 = vsel %vm242, 0.0, %v7301
    %v7304 = vunpack.c.l.s4 1983009808
    %v7305 = vunpack.c.0.s8 %v7304
    %v7306 = vperm.slane %v6943, %v7305
    %v7308 = vunpack.c.l.s4 1983009808
    %v7309 = vunpack.c.0.s8 %v7308
    %v7310 = vperm.slane %v7302, %v7309
    %v7311 = vrot.slane %v6956, 4
    %v7312 = vsel %vm242, 0.0, %v7311
    %v7314 = vunpack.c.l.s4 1983009808
    %v7315 = vunpack.c.0.s8 %v7314
    %v7316 = vperm.slane %v6956, %v7315
    %v7318 = vunpack.c.l.s4 1983009808
    %v7319 = vunpack.c.0.s8 %v7318
    %v7320 = vperm.slane %v7312, %v7319
    %v7321 = vrot.slane %v7316, 4
    %v7322 = vsel %vm242, %v7321, %v7306
    %v7323 = vrot.slane %v7306, 4
    %v7324 = vsel %vm242, %v7316, %v7323
    %v7326 = vunpack.c.l.s4 1934713408
    %v7327 = vunpack.c.0.s8 %v7326
    %v7328 = vperm.slane %v7322, %v7327
    %v7330 = vunpack.c.l.s4 1934713408
    %v7331 = vunpack.c.0.s8 %v7330
    %v7332 = vperm.slane %v7324, %v7331
    %v7333 = vrot.slane %v7320, 4
    %v7334 = vsel %vm242, %v7333, %v7310
    %v7335 = vrot.slane %v7310, 4
    %v7336 = vsel %vm242, %v7320, %v7335
    %v7338 = vunpack.c.l.s4 1934713408
    %v7339 = vunpack.c.0.s8 %v7338
    %v7340 = vperm.slane %v7334, %v7339
    %v7342 = vunpack.c.l.s4 1934713408
    %v7343 = vunpack.c.0.s8 %v7342
    %v7344 = vperm.slane %v7336, %v7343
    %v7345 = vrot.slane %v7328, 4
    %v7346 = vsel %vm242, 0.0, %v7345
    %v7347 = vrot.slane %v7332, 4
    %v7348 = vsel %vm242, 0.0, %v7347
    %v7349 = vrot.slane %v7340, 4
    %v7350 = vsel %vm242, 0.0, %v7349
    %v7351 = vrot.slane %v7344, 4
    %v7352 = vsel %vm242, 0.0, %v7351
    %v7353 = vrot.slane %v6949, 4
    %v7354 = vsel %vm242, 0.0, %v7353
    %v7356 = vunpack.c.l.s4 1983009808
    %v7357 = vunpack.c.0.s8 %v7356
    %v7358 = vperm.slane %v6949, %v7357
    %v7360 = vunpack.c.l.s4 1983009808
    %v7361 = vunpack.c.0.s8 %v7360
    %v7362 = vperm.slane %v7354, %v7361
    %v7363 = vrot.slane %v6962, 4
    %v7364 = vsel %vm242, 0.0, %v7363
    %v7366 = vunpack.c.l.s4 1983009808
    %v7367 = vunpack.c.0.s8 %v7366
    %v7368 = vperm.slane %v6962, %v7367
    %v7370 = vunpack.c.l.s4 1983009808
    %v7371 = vunpack.c.0.s8 %v7370
    %v7372 = vperm.slane %v7364, %v7371
    %v7373 = vrot.slane %v7368, 4
    %v7374 = vsel %vm242, %v7373, %v7358
    %v7375 = vrot.slane %v7358, 4
    %v7376 = vsel %vm242, %v7368, %v7375
    %v7378 = vunpack.c.l.s4 1934713408
    %v7379 = vunpack.c.0.s8 %v7378
    %v7380 = vperm.slane %v7374, %v7379
    %v7382 = vunpack.c.l.s4 1934713408
    %v7383 = vunpack.c.0.s8 %v7382
    %v7384 = vperm.slane %v7376, %v7383
    %v7385 = vrot.slane %v7372, 4
    %v7386 = vsel %vm242, %v7385, %v7362
    %v7387 = vrot.slane %v7362, 4
    %v7388 = vsel %vm242, %v7372, %v7387
    %v7390 = vunpack.c.l.s4 1934713408
    %v7391 = vunpack.c.0.s8 %v7390
    %v7392 = vperm.slane %v7386, %v7391
    %v7394 = vunpack.c.l.s4 1934713408
    %v7395 = vunpack.c.0.s8 %v7394
    %v7396 = vperm.slane %v7388, %v7395
    %v7397 = vrot.slane %v7380, 4
    %v7398 = vsel %vm242, 0.0, %v7397
    %v7399 = vrot.slane %v7384, 4
    %v7400 = vsel %vm242, 0.0, %v7399
    %v7401 = vrot.slane %v7392, 4
    %v7402 = vsel %vm242, 0.0, %v7401
    %v7403 = vrot.slane %v7396, 4
    %v7404 = vsel %vm242, 0.0, %v7403
    %v7405 = vrot.slane %v6969, 4
    %v7406 = vsel %vm242, 0.0, %v7405
    %v7408 = vunpack.c.l.s4 1983009808
    %v7409 = vunpack.c.0.s8 %v7408
    %v7410 = vperm.slane %v6969, %v7409
    %v7412 = vunpack.c.l.s4 1983009808
    %v7413 = vunpack.c.0.s8 %v7412
    %v7414 = vperm.slane %v7406, %v7413
    %v7415 = vrot.slane %v6982, 4
    %v7416 = vsel %vm242, 0.0, %v7415
    %v7418 = vunpack.c.l.s4 1983009808
    %v7419 = vunpack.c.0.s8 %v7418
    %v7420 = vperm.slane %v6982, %v7419
    %v7422 = vunpack.c.l.s4 1983009808
    %v7423 = vunpack.c.0.s8 %v7422
    %v7424 = vperm.slane %v7416, %v7423
    %v7425 = vrot.slane %v7420, 4
    %v7426 = vsel %vm242, %v7425, %v7410
    %v7427 = vrot.slane %v7410, 4
    %v7428 = vsel %vm242, %v7420, %v7427
    %v7430 = vunpack.c.l.s4 1934713408
    %v7431 = vunpack.c.0.s8 %v7430
    %v7432 = vperm.slane %v7426, %v7431
    %v7434 = vunpack.c.l.s4 1934713408
    %v7435 = vunpack.c.0.s8 %v7434
    %v7436 = vperm.slane %v7428, %v7435
    %v7437 = vrot.slane %v7424, 4
    %v7438 = vsel %vm242, %v7437, %v7414
    %v7439 = vrot.slane %v7414, 4
    %v7440 = vsel %vm242, %v7424, %v7439
    %v7442 = vunpack.c.l.s4 1934713408
    %v7443 = vunpack.c.0.s8 %v7442
    %v7444 = vperm.slane %v7438, %v7443
    %v7446 = vunpack.c.l.s4 1934713408
    %v7447 = vunpack.c.0.s8 %v7446
    %v7448 = vperm.slane %v7440, %v7447
    %v7449 = vrot.slane %v7432, 4
    %v7450 = vsel %vm242, 0.0, %v7449
    %v7451 = vrot.slane %v7436, 4
    %v7452 = vsel %vm242, 0.0, %v7451
    %v7453 = vrot.slane %v7444, 4
    %v7454 = vsel %vm242, 0.0, %v7453
    %v7455 = vrot.slane %v7448, 4
    %v7456 = vsel %vm242, 0.0, %v7455
    %v7457 = vrot.slane %v6975, 4
    %v7458 = vsel %vm242, 0.0, %v7457
    %v7460 = vunpack.c.l.s4 1983009808
    %v7461 = vunpack.c.0.s8 %v7460
    %v7462 = vperm.slane %v6975, %v7461
    %v7464 = vunpack.c.l.s4 1983009808
    %v7465 = vunpack.c.0.s8 %v7464
    %v7466 = vperm.slane %v7458, %v7465
    %v7467 = vrot.slane %v6988, 4
    %v7468 = vsel %vm242, 0.0, %v7467
    %v7470 = vunpack.c.l.s4 1983009808
    %v7471 = vunpack.c.0.s8 %v7470
    %v7472 = vperm.slane %v6988, %v7471
    %v7474 = vunpack.c.l.s4 1983009808
    %v7475 = vunpack.c.0.s8 %v7474
    %v7476 = vperm.slane %v7468, %v7475
    %v7477 = vrot.slane %v7472, 4
    %v7478 = vsel %vm242, %v7477, %v7462
    %v7479 = vrot.slane %v7462, 4
    %v7480 = vsel %vm242, %v7472, %v7479
    %v7482 = vunpack.c.l.s4 1934713408
    %v7483 = vunpack.c.0.s8 %v7482
    %v7484 = vperm.slane %v7478, %v7483
    %v7486 = vunpack.c.l.s4 1934713408
    %v7487 = vunpack.c.0.s8 %v7486
    %v7488 = vperm.slane %v7480, %v7487
    %v7489 = vrot.slane %v7476, 4
    %v7490 = vsel %vm242, %v7489, %v7466
    %v7491 = vrot.slane %v7466, 4
    %v7492 = vsel %vm242, %v7476, %v7491
    %v7494 = vunpack.c.l.s4 1934713408
    %v7495 = vunpack.c.0.s8 %v7494
    %v7496 = vperm.slane %v7490, %v7495
    %v7498 = vunpack.c.l.s4 1934713408
    %v7499 = vunpack.c.0.s8 %v7498
    %v7500 = vperm.slane %v7492, %v7499
    %v7501 = vrot.slane %v7484, 4
    %v7502 = vsel %vm242, 0.0, %v7501
    %v7503 = vrot.slane %v7488, 4
    %v7504 = vsel %vm242, 0.0, %v7503
    %v7505 = vrot.slane %v7496, 4
    %v7506 = vsel %vm242, 0.0, %v7505
    %v7507 = vrot.slane %v7500, 4
    %v7508 = vsel %vm242, 0.0, %v7507
    %v7509 = vrot.slane %v6995, 4
    %v7510 = vsel %vm242, 0.0, %v7509
    %v7512 = vunpack.c.l.s4 1983009808
    %v7513 = vunpack.c.0.s8 %v7512
    %v7514 = vperm.slane %v6995, %v7513
    %v7516 = vunpack.c.l.s4 1983009808
    %v7517 = vunpack.c.0.s8 %v7516
    %v7518 = vperm.slane %v7510, %v7517
    %v7519 = vrot.slane %v7008, 4
    %v7520 = vsel %vm242, 0.0, %v7519
    %v7522 = vunpack.c.l.s4 1983009808
    %v7523 = vunpack.c.0.s8 %v7522
    %v7524 = vperm.slane %v7008, %v7523
    %v7526 = vunpack.c.l.s4 1983009808
    %v7527 = vunpack.c.0.s8 %v7526
    %v7528 = vperm.slane %v7520, %v7527
    %v7529 = vrot.slane %v7524, 4
    %v7530 = vsel %vm242, %v7529, %v7514
    %v7531 = vrot.slane %v7514, 4
    %v7532 = vsel %vm242, %v7524, %v7531
    %v7534 = vunpack.c.l.s4 1934713408
    %v7535 = vunpack.c.0.s8 %v7534
    %v7536 = vperm.slane %v7530, %v7535
    %v7538 = vunpack.c.l.s4 1934713408
    %v7539 = vunpack.c.0.s8 %v7538
    %v7540 = vperm.slane %v7532, %v7539
    %v7541 = vrot.slane %v7528, 4
    %v7542 = vsel %vm242, %v7541, %v7518
    %v7543 = vrot.slane %v7518, 4
    %v7544 = vsel %vm242, %v7528, %v7543
    %v7546 = vunpack.c.l.s4 1934713408
    %v7547 = vunpack.c.0.s8 %v7546
    %v7548 = vperm.slane %v7542, %v7547
    %v7550 = vunpack.c.l.s4 1934713408
    %v7551 = vunpack.c.0.s8 %v7550
    %v7552 = vperm.slane %v7544, %v7551
    %v7553 = vrot.slane %v7536, 4
    %v7554 = vsel %vm242, 0.0, %v7553
    %v7555 = vrot.slane %v7540, 4
    %v7556 = vsel %vm242, 0.0, %v7555
    %v7557 = vrot.slane %v7548, 4
    %v7558 = vsel %vm242, 0.0, %v7557
    %v7559 = vrot.slane %v7552, 4
    %v7560 = vsel %vm242, 0.0, %v7559
    %v7561 = vrot.slane %v7001, 4
    %v7562 = vsel %vm242, 0.0, %v7561
    %v7564 = vunpack.c.l.s4 1983009808
    %v7565 = vunpack.c.0.s8 %v7564
    %v7566 = vperm.slane %v7001, %v7565
    %v7568 = vunpack.c.l.s4 1983009808
    %v7569 = vunpack.c.0.s8 %v7568
    %v7570 = vperm.slane %v7562, %v7569
    %v7571 = vrot.slane %v7014, 4
    %v7572 = vsel %vm242, 0.0, %v7571
    %v7574 = vunpack.c.l.s4 1983009808
    %v7575 = vunpack.c.0.s8 %v7574
    %v7576 = vperm.slane %v7014, %v7575
    %v7578 = vunpack.c.l.s4 1983009808
    %v7579 = vunpack.c.0.s8 %v7578
    %v7580 = vperm.slane %v7572, %v7579
    %v7581 = vrot.slane %v7576, 4
    %v7582 = vsel %vm242, %v7581, %v7566
    %v7583 = vrot.slane %v7566, 4
    %v7584 = vsel %vm242, %v7576, %v7583
    %v7586 = vunpack.c.l.s4 1934713408
    %v7587 = vunpack.c.0.s8 %v7586
    %v7588 = vperm.slane %v7582, %v7587
    %v7590 = vunpack.c.l.s4 1934713408
    %v7591 = vunpack.c.0.s8 %v7590
    %v7592 = vperm.slane %v7584, %v7591
    %v7593 = vrot.slane %v7580, 4
    %v7594 = vsel %vm242, %v7593, %v7570
    %v7595 = vrot.slane %v7570, 4
    %v7596 = vsel %vm242, %v7580, %v7595
    %v7598 = vunpack.c.l.s4 1934713408
    %v7599 = vunpack.c.0.s8 %v7598
    %v7600 = vperm.slane %v7594, %v7599
    %v7602 = vunpack.c.l.s4 1934713408
    %v7603 = vunpack.c.0.s8 %v7602
    %v7604 = vperm.slane %v7596, %v7603
    %v7605 = vrot.slane %v7588, 4
    %v7606 = vsel %vm242, 0.0, %v7605
    %v7607 = vrot.slane %v7592, 4
    %v7608 = vsel %vm242, 0.0, %v7607
    %v7609 = vrot.slane %v7600, 4
    %v7610 = vsel %vm242, 0.0, %v7609
    %v7611 = vrot.slane %v7604, 4
    %v7612 = vsel %vm242, 0.0, %v7611
    %v7613 = vrot.slane %v7021, 4
    %v7614 = vsel %vm242, 0.0, %v7613
    %v7616 = vunpack.c.l.s4 1983009808
    %v7617 = vunpack.c.0.s8 %v7616
    %v7618 = vperm.slane %v7021, %v7617
    %v7620 = vunpack.c.l.s4 1983009808
    %v7621 = vunpack.c.0.s8 %v7620
    %v7622 = vperm.slane %v7614, %v7621
    %v7623 = vrot.slane %v7034, 4
    %v7624 = vsel %vm242, 0.0, %v7623
    %v7626 = vunpack.c.l.s4 1983009808
    %v7627 = vunpack.c.0.s8 %v7626
    %v7628 = vperm.slane %v7034, %v7627
    %v7630 = vunpack.c.l.s4 1983009808
    %v7631 = vunpack.c.0.s8 %v7630
    %v7632 = vperm.slane %v7624, %v7631
    %v7633 = vrot.slane %v7628, 4
    %v7634 = vsel %vm242, %v7633, %v7618
    %v7635 = vrot.slane %v7618, 4
    %v7636 = vsel %vm242, %v7628, %v7635
    %v7638 = vunpack.c.l.s4 1934713408
    %v7639 = vunpack.c.0.s8 %v7638
    %v7640 = vperm.slane %v7634, %v7639
    %v7642 = vunpack.c.l.s4 1934713408
    %v7643 = vunpack.c.0.s8 %v7642
    %v7644 = vperm.slane %v7636, %v7643
    %v7645 = vrot.slane %v7632, 4
    %v7646 = vsel %vm242, %v7645, %v7622
    %v7647 = vrot.slane %v7622, 4
    %v7648 = vsel %vm242, %v7632, %v7647
    %v7650 = vunpack.c.l.s4 1934713408
    %v7651 = vunpack.c.0.s8 %v7650
    %v7652 = vperm.slane %v7646, %v7651
    %v7654 = vunpack.c.l.s4 1934713408
    %v7655 = vunpack.c.0.s8 %v7654
    %v7656 = vperm.slane %v7648, %v7655
    %v7657 = vrot.slane %v7640, 4
    %v7658 = vsel %vm242, 0.0, %v7657
    %v7659 = vrot.slane %v7644, 4
    %v7660 = vsel %vm242, 0.0, %v7659
    %v7661 = vrot.slane %v7652, 4
    %v7662 = vsel %vm242, 0.0, %v7661
    %v7663 = vrot.slane %v7656, 4
    %v7664 = vsel %vm242, 0.0, %v7663
    %v7665 = vrot.slane %v7027, 4
    %v7666 = vsel %vm242, 0.0, %v7665
    %v7668 = vunpack.c.l.s4 1983009808
    %v7669 = vunpack.c.0.s8 %v7668
    %v7670 = vperm.slane %v7027, %v7669
    %v7672 = vunpack.c.l.s4 1983009808
    %v7673 = vunpack.c.0.s8 %v7672
    %v7674 = vperm.slane %v7666, %v7673
    %v7675 = vrot.slane %v7040, 4
    %v7676 = vsel %vm242, 0.0, %v7675
    %v7678 = vunpack.c.l.s4 1983009808
    %v7679 = vunpack.c.0.s8 %v7678
    %v7680 = vperm.slane %v7040, %v7679
    %v7682 = vunpack.c.l.s4 1983009808
    %v7683 = vunpack.c.0.s8 %v7682
    %v7684 = vperm.slane %v7676, %v7683
    %v7685 = vrot.slane %v7680, 4
    %v7686 = vsel %vm242, %v7685, %v7670
    %v7687 = vrot.slane %v7670, 4
    %v7688 = vsel %vm242, %v7680, %v7687
    %v7690 = vunpack.c.l.s4 1934713408
    %v7691 = vunpack.c.0.s8 %v7690
    %v7692 = vperm.slane %v7686, %v7691
    %v7694 = vunpack.c.l.s4 1934713408
    %v7695 = vunpack.c.0.s8 %v7694
    %v7696 = vperm.slane %v7688, %v7695
    %v7697 = vrot.slane %v7684, 4
    %v7698 = vsel %vm242, %v7697, %v7674
    %v7699 = vrot.slane %v7674, 4
    %v7700 = vsel %vm242, %v7684, %v7699
    %v7702 = vunpack.c.l.s4 1934713408
    %v7703 = vunpack.c.0.s8 %v7702
    %v7704 = vperm.slane %v7698, %v7703
    %v7706 = vunpack.c.l.s4 1934713408
    %v7707 = vunpack.c.0.s8 %v7706
    %v7708 = vperm.slane %v7700, %v7707
    %v7709 = vrot.slane %v7692, 4
    %v7710 = vsel %vm242, 0.0, %v7709
    %v7711 = vrot.slane %v7696, 4
    %v7712 = vsel %vm242, 0.0, %v7711
    %v7713 = vrot.slane %v7704, 4
    %v7714 = vsel %vm242, 0.0, %v7713
    %v7715 = vrot.slane %v7708, 4
    %v7716 = vsel %vm242, 0.0, %v7715
    %v7717 = vrot.slane %v7047, 4
    %v7718 = vsel %vm242, 0.0, %v7717
    %v7720 = vunpack.c.l.s4 1983009808
    %v7721 = vunpack.c.0.s8 %v7720
    %v7722 = vperm.slane %v7047, %v7721
    %v7724 = vunpack.c.l.s4 1983009808
    %v7725 = vunpack.c.0.s8 %v7724
    %v7726 = vperm.slane %v7718, %v7725
    %v7727 = vrot.slane %v7060, 4
    %v7728 = vsel %vm242, 0.0, %v7727
    %v7730 = vunpack.c.l.s4 1983009808
    %v7731 = vunpack.c.0.s8 %v7730
    %v7732 = vperm.slane %v7060, %v7731
    %v7734 = vunpack.c.l.s4 1983009808
    %v7735 = vunpack.c.0.s8 %v7734
    %v7736 = vperm.slane %v7728, %v7735
    %v7737 = vrot.slane %v7732, 4
    %v7738 = vsel %vm242, %v7737, %v7722
    %v7739 = vrot.slane %v7722, 4
    %v7740 = vsel %vm242, %v7732, %v7739
    %v7742 = vunpack.c.l.s4 1934713408
    %v7743 = vunpack.c.0.s8 %v7742
    %v7744 = vperm.slane %v7738, %v7743
    %v7746 = vunpack.c.l.s4 1934713408
    %v7747 = vunpack.c.0.s8 %v7746
    %v7748 = vperm.slane %v7740, %v7747
    %v7749 = vrot.slane %v7736, 4
    %v7750 = vsel %vm242, %v7749, %v7726
    %v7751 = vrot.slane %v7726, 4
    %v7752 = vsel %vm242, %v7736, %v7751
    %v7754 = vunpack.c.l.s4 1934713408
    %v7755 = vunpack.c.0.s8 %v7754
    %v7756 = vperm.slane %v7750, %v7755
    %v7758 = vunpack.c.l.s4 1934713408
    %v7759 = vunpack.c.0.s8 %v7758
    %v7760 = vperm.slane %v7752, %v7759
    %v7761 = vrot.slane %v7744, 4
    %v7762 = vsel %vm242, 0.0, %v7761
    %v7763 = vrot.slane %v7748, 4
    %v7764 = vsel %vm242, 0.0, %v7763
    %v7765 = vrot.slane %v7756, 4
    %v7766 = vsel %vm242, 0.0, %v7765
    %v7767 = vrot.slane %v7760, 4
    %v7768 = vsel %vm242, 0.0, %v7767
    %v7769 = vrot.slane %v7053, 4
    %v7770 = vsel %vm242, 0.0, %v7769
    %v7772 = vunpack.c.l.s4 1983009808
    %v7773 = vunpack.c.0.s8 %v7772
    %v7774 = vperm.slane %v7053, %v7773
    %v7776 = vunpack.c.l.s4 1983009808
    %v7777 = vunpack.c.0.s8 %v7776
    %v7778 = vperm.slane %v7770, %v7777
    %v7779 = vrot.slane %v7066, 4
    %v7780 = vsel %vm242, 0.0, %v7779
    %v7782 = vunpack.c.l.s4 1983009808
    %v7783 = vunpack.c.0.s8 %v7782
    %v7784 = vperm.slane %v7066, %v7783
    %v7786 = vunpack.c.l.s4 1983009808
    %v7787 = vunpack.c.0.s8 %v7786
    %v7788 = vperm.slane %v7780, %v7787
    %v7789 = vrot.slane %v7784, 4
    %v7790 = vsel %vm242, %v7789, %v7774
    %v7791 = vrot.slane %v7774, 4
    %v7792 = vsel %vm242, %v7784, %v7791
    %v7794 = vunpack.c.l.s4 1934713408
    %v7795 = vunpack.c.0.s8 %v7794
    %v7796 = vperm.slane %v7790, %v7795
    %v7798 = vunpack.c.l.s4 1934713408
    %v7799 = vunpack.c.0.s8 %v7798
    %v7800 = vperm.slane %v7792, %v7799
    %v7801 = vrot.slane %v7788, 4
    %v7802 = vsel %vm242, %v7801, %v7778
    %v7803 = vrot.slane %v7778, 4
    %v7804 = vsel %vm242, %v7788, %v7803
    %v7806 = vunpack.c.l.s4 1934713408
    %v7807 = vunpack.c.0.s8 %v7806
    %v7808 = vperm.slane %v7802, %v7807
    %v7810 = vunpack.c.l.s4 1934713408
    %v7811 = vunpack.c.0.s8 %v7810
    %v7812 = vperm.slane %v7804, %v7811
    %v7813 = vrot.slane %v7796, 4
    %v7814 = vsel %vm242, 0.0, %v7813
    %v7815 = vrot.slane %v7800, 4
    %v7816 = vsel %vm242, 0.0, %v7815
    %v7817 = vrot.slane %v7808, 4
    %v7818 = vsel %vm242, 0.0, %v7817
    %v7819 = vrot.slane %v7812, 4
    %v7820 = vsel %vm242, 0.0, %v7819
    %v7821 = vrot.slane %v7073, 4
    %v7822 = vsel %vm242, 0.0, %v7821
    %v7824 = vunpack.c.l.s4 1983009808
    %v7825 = vunpack.c.0.s8 %v7824
    %v7826 = vperm.slane %v7073, %v7825
    %v7828 = vunpack.c.l.s4 1983009808
    %v7829 = vunpack.c.0.s8 %v7828
    %v7830 = vperm.slane %v7822, %v7829
    %v7831 = vrot.slane %v7086, 4
    %v7832 = vsel %vm242, 0.0, %v7831
    %v7834 = vunpack.c.l.s4 1983009808
    %v7835 = vunpack.c.0.s8 %v7834
    %v7836 = vperm.slane %v7086, %v7835
    %v7838 = vunpack.c.l.s4 1983009808
    %v7839 = vunpack.c.0.s8 %v7838
    %v7840 = vperm.slane %v7832, %v7839
    %v7841 = vrot.slane %v7836, 4
    %v7842 = vsel %vm242, %v7841, %v7826
    %v7843 = vrot.slane %v7826, 4
    %v7844 = vsel %vm242, %v7836, %v7843
    %v7846 = vunpack.c.l.s4 1934713408
    %v7847 = vunpack.c.0.s8 %v7846
    %v7848 = vperm.slane %v7842, %v7847
    %v7850 = vunpack.c.l.s4 1934713408
    %v7851 = vunpack.c.0.s8 %v7850
    %v7852 = vperm.slane %v7844, %v7851
    %v7853 = vrot.slane %v7840, 4
    %v7854 = vsel %vm242, %v7853, %v7830
    %v7855 = vrot.slane %v7830, 4
    %v7856 = vsel %vm242, %v7840, %v7855
    %v7858 = vunpack.c.l.s4 1934713408
    %v7859 = vunpack.c.0.s8 %v7858
    %v7860 = vperm.slane %v7854, %v7859
    %v7862 = vunpack.c.l.s4 1934713408
    %v7863 = vunpack.c.0.s8 %v7862
    %v7864 = vperm.slane %v7856, %v7863
    %v7865 = vrot.slane %v7848, 4
    %v7866 = vsel %vm242, 0.0, %v7865
    %v7867 = vrot.slane %v7852, 4
    %v7868 = vsel %vm242, 0.0, %v7867
    %v7869 = vrot.slane %v7860, 4
    %v7870 = vsel %vm242, 0.0, %v7869
    %v7871 = vrot.slane %v7864, 4
    %v7872 = vsel %vm242, 0.0, %v7871
    %v7873 = vrot.slane %v7079, 4
    %v7874 = vsel %vm242, 0.0, %v7873
    %v7876 = vunpack.c.l.s4 1983009808
    %v7877 = vunpack.c.0.s8 %v7876
    %v7878 = vperm.slane %v7079, %v7877
    %v7880 = vunpack.c.l.s4 1983009808
    %v7881 = vunpack.c.0.s8 %v7880
    %v7882 = vperm.slane %v7874, %v7881
    %v7883 = vrot.slane %v7092, 4
    %v7884 = vsel %vm242, 0.0, %v7883
    %v7886 = vunpack.c.l.s4 1983009808
    %v7887 = vunpack.c.0.s8 %v7886
    %v7888 = vperm.slane %v7092, %v7887
    %v7890 = vunpack.c.l.s4 1983009808
    %v7891 = vunpack.c.0.s8 %v7890
    %v7892 = vperm.slane %v7884, %v7891
    %v7893 = vrot.slane %v7888, 4
    %v7894 = vsel %vm242, %v7893, %v7878
    %v7895 = vrot.slane %v7878, 4
    %v7896 = vsel %vm242, %v7888, %v7895
    %v7898 = vunpack.c.l.s4 1934713408
    %v7899 = vunpack.c.0.s8 %v7898
    %v7900 = vperm.slane %v7894, %v7899
    %v7902 = vunpack.c.l.s4 1934713408
    %v7903 = vunpack.c.0.s8 %v7902
    %v7904 = vperm.slane %v7896, %v7903
    %v7905 = vrot.slane %v7892, 4
    %v7906 = vsel %vm242, %v7905, %v7882
    %v7907 = vrot.slane %v7882, 4
    %v7908 = vsel %vm242, %v7892, %v7907
    %v7910 = vunpack.c.l.s4 1934713408
    %v7911 = vunpack.c.0.s8 %v7910
    %v7912 = vperm.slane %v7906, %v7911
    %v7914 = vunpack.c.l.s4 1934713408
    %v7915 = vunpack.c.0.s8 %v7914
    %v7916 = vperm.slane %v7908, %v7915
    %v7917 = vrot.slane %v7900, 4
    %v7918 = vsel %vm242, 0.0, %v7917
    %v7919 = vrot.slane %v7904, 4
    %v7920 = vsel %vm242, 0.0, %v7919
    %v7921 = vrot.slane %v7912, 4
    %v7922 = vsel %vm242, 0.0, %v7921
    %v7923 = vrot.slane %v7916, 4
    %v7924 = vsel %vm242, 0.0, %v7923
    %7933 = vrot.lane.b32.xlu0 %v7138, 2
    %v7934 = vpop.permute.xlu0 %7933
    %7935 = vrot.lane.b32.xlu0 %v7242, 2
    %v7936 = vpop.permute.xlu0 %7935
    %7937 = vrot.lane.b32.xlu0 %v7346, 2
    %v7938 = vpop.permute.xlu0 %7937
    %7939 = vrot.lane.b32.xlu0 %v7450, 2
    %v7940 = vpop.permute.xlu0 %7939
    %7941 = vrot.lane.b32.xlu0 %v7554, 2
    %v7942 = vpop.permute.xlu0 %7941
    %7943 = vrot.lane.b32.xlu0 %v7658, 2
    %v7944 = vpop.permute.xlu0 %7943
    %7945 = vrot.lane.b32.xlu0 %v7762, 2
    %v7946 = vpop.permute.xlu0 %7945
    %7947 = vrot.lane.b32.xlu0 %v7866, 2
    %v7948 = vpop.permute.xlu0 %7947
    %7965 = vrot.lane.b32.xlu0 %v7124, 4
    %v7966 = vpop.permute.xlu0 %7965
    %7967 = vrot.lane.b32.xlu0 %v7228, 4
    %v7968 = vpop.permute.xlu0 %7967
    %7969 = vrot.lane.b32.xlu0 %v7332, 4
    %v7970 = vpop.permute.xlu0 %7969
    %7971 = vrot.lane.b32.xlu0 %v7436, 4
    %v7972 = vpop.permute.xlu0 %7971
    %7973 = vrot.lane.b32.xlu0 %v7540, 4
    %v7974 = vpop.permute.xlu0 %7973
    %7975 = vrot.lane.b32.xlu0 %v7644, 4
    %v7976 = vpop.permute.xlu0 %7975
    %7977 = vrot.lane.b32.xlu0 %v7748, 4
    %v7978 = vpop.permute.xlu0 %7977
    %7979 = vrot.lane.b32.xlu0 %v7852, 4
    %v7980 = vpop.permute.xlu0 %7979
    %7997 = vrot.lane.b32.xlu0 %v7140, 6
    %v7998 = vpop.permute.xlu0 %7997
    %7999 = vrot.lane.b32.xlu0 %v7244, 6
    %v8000 = vpop.permute.xlu0 %7999
    %8001 = vrot.lane.b32.xlu0 %v7348, 6
    %v8002 = vpop.permute.xlu0 %8001
    %8003 = vrot.lane.b32.xlu0 %v7452, 6
    %v8004 = vpop.permute.xlu0 %8003
    %8005 = vrot.lane.b32.xlu0 %v7556, 6
    %v8006 = vpop.permute.xlu0 %8005
    %8007 = vrot.lane.b32.xlu0 %v7660, 6
    %v8008 = vpop.permute.xlu0 %8007
    %8009 = vrot.lane.b32.xlu0 %v7764, 6
    %v8010 = vpop.permute.xlu0 %8009
    %8011 = vrot.lane.b32.xlu0 %v7868, 6
    %v8012 = vpop.permute.xlu0 %8011
    %8029 = vrot.lane.b32.xlu0 %v7132, 8
    %v8030 = vpop.permute.xlu0 %8029
    %8031 = vrot.lane.b32.xlu0 %v7236, 8
    %v8032 = vpop.permute.xlu0 %8031
    %8033 = vrot.lane.b32.xlu0 %v7340, 8
    %v8034 = vpop.permute.xlu0 %8033
    %8035 = vrot.lane.b32.xlu0 %v7444, 8
    %v8036 = vpop.permute.xlu0 %8035
    %8037 = vrot.lane.b32.xlu0 %v7548, 8
    %v8038 = vpop.permute.xlu0 %8037
    %8039 = vrot.lane.b32.xlu0 %v7652, 8
    %v8040 = vpop.permute.xlu0 %8039
    %8041 = vrot.lane.b32.xlu0 %v7756, 8
    %v8042 = vpop.permute.xlu0 %8041
    %8043 = vrot.lane.b32.xlu0 %v7860, 8
    %v8044 = vpop.permute.xlu0 %8043
    %8061 = vrot.lane.b32.xlu0 %v7142, 10
    %v8062 = vpop.permute.xlu0 %8061
    %8063 = vrot.lane.b32.xlu0 %v7246, 10
    %v8064 = vpop.permute.xlu0 %8063
    %8065 = vrot.lane.b32.xlu0 %v7350, 10
    %v8066 = vpop.permute.xlu0 %8065
    %8067 = vrot.lane.b32.xlu0 %v7454, 10
    %v8068 = vpop.permute.xlu0 %8067
    %8069 = vrot.lane.b32.xlu0 %v7558, 10
    %v8070 = vpop.permute.xlu0 %8069
    %8071 = vrot.lane.b32.xlu0 %v7662, 10
    %v8072 = vpop.permute.xlu0 %8071
    %8073 = vrot.lane.b32.xlu0 %v7766, 10
    %v8074 = vpop.permute.xlu0 %8073
    %8075 = vrot.lane.b32.xlu0 %v7870, 10
    %v8076 = vpop.permute.xlu0 %8075
    %8093 = vrot.lane.b32.xlu0 %v7136, 12
    %v8094 = vpop.permute.xlu0 %8093
    %8095 = vrot.lane.b32.xlu0 %v7240, 12
    %v8096 = vpop.permute.xlu0 %8095
    %8097 = vrot.lane.b32.xlu0 %v7344, 12
    %v8098 = vpop.permute.xlu0 %8097
    %8099 = vrot.lane.b32.xlu0 %v7448, 12
    %v8100 = vpop.permute.xlu0 %8099
    %8101 = vrot.lane.b32.xlu0 %v7552, 12
    %v8102 = vpop.permute.xlu0 %8101
    %8103 = vrot.lane.b32.xlu0 %v7656, 12
    %v8104 = vpop.permute.xlu0 %8103
    %8105 = vrot.lane.b32.xlu0 %v7760, 12
    %v8106 = vpop.permute.xlu0 %8105
    %8107 = vrot.lane.b32.xlu0 %v7864, 12
    %v8108 = vpop.permute.xlu0 %8107
    %8125 = vrot.lane.b32.xlu0 %v7144, 14
    %v8126 = vpop.permute.xlu0 %8125
    %8127 = vrot.lane.b32.xlu0 %v7248, 14
    %v8128 = vpop.permute.xlu0 %8127
    %8129 = vrot.lane.b32.xlu0 %v7352, 14
    %v8130 = vpop.permute.xlu0 %8129
    %8131 = vrot.lane.b32.xlu0 %v7456, 14
    %v8132 = vpop.permute.xlu0 %8131
    %8133 = vrot.lane.b32.xlu0 %v7560, 14
    %v8134 = vpop.permute.xlu0 %8133
    %8135 = vrot.lane.b32.xlu0 %v7664, 14
    %v8136 = vpop.permute.xlu0 %8135
    %8137 = vrot.lane.b32.xlu0 %v7768, 14
    %v8138 = vpop.permute.xlu0 %8137
    %8139 = vrot.lane.b32.xlu0 %v7872, 14
    %v8140 = vpop.permute.xlu0 %8139
    %8157 = vrot.lane.b32.xlu0 %v7172, 16
    %v8158 = vpop.permute.xlu0 %8157
    %8159 = vrot.lane.b32.xlu0 %v7276, 16
    %v8160 = vpop.permute.xlu0 %8159
    %8161 = vrot.lane.b32.xlu0 %v7380, 16
    %v8162 = vpop.permute.xlu0 %8161
    %8163 = vrot.lane.b32.xlu0 %v7484, 16
    %v8164 = vpop.permute.xlu0 %8163
    %8165 = vrot.lane.b32.xlu0 %v7588, 16
    %v8166 = vpop.permute.xlu0 %8165
    %8167 = vrot.lane.b32.xlu0 %v7692, 16
    %v8168 = vpop.permute.xlu0 %8167
    %8169 = vrot.lane.b32.xlu0 %v7796, 16
    %v8170 = vpop.permute.xlu0 %8169
    %8171 = vrot.lane.b32.xlu0 %v7900, 16
    %v8172 = vpop.permute.xlu0 %8171
    %8189 = vrot.lane.b32.xlu0 %v7190, 18
    %v8190 = vpop.permute.xlu0 %8189
    %8191 = vrot.lane.b32.xlu0 %v7294, 18
    %v8192 = vpop.permute.xlu0 %8191
    %8193 = vrot.lane.b32.xlu0 %v7398, 18
    %v8194 = vpop.permute.xlu0 %8193
    %8195 = vrot.lane.b32.xlu0 %v7502, 18
    %v8196 = vpop.permute.xlu0 %8195
    %8197 = vrot.lane.b32.xlu0 %v7606, 18
    %v8198 = vpop.permute.xlu0 %8197
    %8199 = vrot.lane.b32.xlu0 %v7710, 18
    %v8200 = vpop.permute.xlu0 %8199
    %8201 = vrot.lane.b32.xlu0 %v7814, 18
    %v8202 = vpop.permute.xlu0 %8201
    %8203 = vrot.lane.b32.xlu0 %v7918, 18
    %v8204 = vpop.permute.xlu0 %8203
    %8221 = vrot.lane.b32.xlu0 %v7176, 20
    %v8222 = vpop.permute.xlu0 %8221
    %8223 = vrot.lane.b32.xlu0 %v7280, 20
    %v8224 = vpop.permute.xlu0 %8223
    %8225 = vrot.lane.b32.xlu0 %v7384, 20
    %v8226 = vpop.permute.xlu0 %8225
    %8227 = vrot.lane.b32.xlu0 %v7488, 20
    %v8228 = vpop.permute.xlu0 %8227
    %8229 = vrot.lane.b32.xlu0 %v7592, 20
    %v8230 = vpop.permute.xlu0 %8229
    %8231 = vrot.lane.b32.xlu0 %v7696, 20
    %v8232 = vpop.permute.xlu0 %8231
    %8233 = vrot.lane.b32.xlu0 %v7800, 20
    %v8234 = vpop.permute.xlu0 %8233
    %8235 = vrot.lane.b32.xlu0 %v7904, 20
    %v8236 = vpop.permute.xlu0 %8235
    %8253 = vrot.lane.b32.xlu0 %v7192, 22
    %v8254 = vpop.permute.xlu0 %8253
    %8255 = vrot.lane.b32.xlu0 %v7296, 22
    %v8256 = vpop.permute.xlu0 %8255
    %8257 = vrot.lane.b32.xlu0 %v7400, 22
    %v8258 = vpop.permute.xlu0 %8257
    %8259 = vrot.lane.b32.xlu0 %v7504, 22
    %v8260 = vpop.permute.xlu0 %8259
    %8261 = vrot.lane.b32.xlu0 %v7608, 22
    %v8262 = vpop.permute.xlu0 %8261
    %8263 = vrot.lane.b32.xlu0 %v7712, 22
    %v8264 = vpop.permute.xlu0 %8263
    %8265 = vrot.lane.b32.xlu0 %v7816, 22
    %v8266 = vpop.permute.xlu0 %8265
    %8267 = vrot.lane.b32.xlu0 %v7920, 22
    %v8268 = vpop.permute.xlu0 %8267
    %8285 = vrot.lane.b32.xlu0 %v7184, 24
    %v8286 = vpop.permute.xlu0 %8285
    %8287 = vrot.lane.b32.xlu0 %v7288, 24
    %v8288 = vpop.permute.xlu0 %8287
    %8289 = vrot.lane.b32.xlu0 %v7392, 24
    %v8290 = vpop.permute.xlu0 %8289
    %8291 = vrot.lane.b32.xlu0 %v7496, 24
    %v8292 = vpop.permute.xlu0 %8291
    %8293 = vrot.lane.b32.xlu0 %v7600, 24
    %v8294 = vpop.permute.xlu0 %8293
    %8295 = vrot.lane.b32.xlu0 %v7704, 24
    %v8296 = vpop.permute.xlu0 %8295
    %8297 = vrot.lane.b32.xlu0 %v7808, 24
    %v8298 = vpop.permute.xlu0 %8297
    %8299 = vrot.lane.b32.xlu0 %v7912, 24
    %v8300 = vpop.permute.xlu0 %8299
    %8317 = vrot.lane.b32.xlu0 %v7194, 26
    %v8318 = vpop.permute.xlu0 %8317
    %8319 = vrot.lane.b32.xlu0 %v7298, 26
    %v8320 = vpop.permute.xlu0 %8319
    %8321 = vrot.lane.b32.xlu0 %v7402, 26
    %v8322 = vpop.permute.xlu0 %8321
    %8323 = vrot.lane.b32.xlu0 %v7506, 26
    %v8324 = vpop.permute.xlu0 %8323
    %8325 = vrot.lane.b32.xlu0 %v7610, 26
    %v8326 = vpop.permute.xlu0 %8325
    %8327 = vrot.lane.b32.xlu0 %v7714, 26
    %v8328 = vpop.permute.xlu0 %8327
    %8329 = vrot.lane.b32.xlu0 %v7818, 26
    %v8330 = vpop.permute.xlu0 %8329
    %8331 = vrot.lane.b32.xlu0 %v7922, 26
    %v8332 = vpop.permute.xlu0 %8331
    %8349 = vrot.lane.b32.xlu0 %v7188, 28
    %v8350 = vpop.permute.xlu0 %8349
    %8351 = vrot.lane.b32.xlu0 %v7292, 28
    %v8352 = vpop.permute.xlu0 %8351
    %8353 = vrot.lane.b32.xlu0 %v7396, 28
    %v8354 = vpop.permute.xlu0 %8353
    %8355 = vrot.lane.b32.xlu0 %v7500, 28
    %v8356 = vpop.permute.xlu0 %8355
    %8357 = vrot.lane.b32.xlu0 %v7604, 28
    %v8358 = vpop.permute.xlu0 %8357
    %8359 = vrot.lane.b32.xlu0 %v7708, 28
    %v8360 = vpop.permute.xlu0 %8359
    %8361 = vrot.lane.b32.xlu0 %v7812, 28
    %v8362 = vpop.permute.xlu0 %8361
    %8363 = vrot.lane.b32.xlu0 %v7916, 28
    %v8364 = vpop.permute.xlu0 %8363
    %8381 = vrot.lane.b32.xlu0 %v7196, 30
    %v8382 = vpop.permute.xlu0 %8381
    %8383 = vrot.lane.b32.xlu0 %v7300, 30
    %v8384 = vpop.permute.xlu0 %8383
    %8385 = vrot.lane.b32.xlu0 %v7404, 30
    %v8386 = vpop.permute.xlu0 %8385
    %8387 = vrot.lane.b32.xlu0 %v7508, 30
    %v8388 = vpop.permute.xlu0 %8387
    %8389 = vrot.lane.b32.xlu0 %v7612, 30
    %v8390 = vpop.permute.xlu0 %8389
    %8391 = vrot.lane.b32.xlu0 %v7716, 30
    %v8392 = vpop.permute.xlu0 %8391
    %8393 = vrot.lane.b32.xlu0 %v7820, 30
    %v8394 = vpop.permute.xlu0 %8393
    %8395 = vrot.lane.b32.xlu0 %v7924, 30
    %v8396 = vpop.permute.xlu0 %8395
    %v8405 = vsel %vm1554, %v7120, %v7934
    %v8406 = vsel %vm1554, %v7224, %v7936
    %v8407 = vsel %vm1554, %v7328, %v7938
    %v8408 = vsel %vm1554, %v7432, %v7940
    %v8409 = vsel %vm1554, %v7536, %v7942
    %v8410 = vsel %vm1554, %v7640, %v7944
    %v8411 = vsel %vm1554, %v7744, %v7946
    %v8412 = vsel %vm1554, %v7848, %v7948
    %v8413 = vsel %vm1563, %v8405, %v7966
    %v8414 = vsel %vm1563, %v8406, %v7968
    %v8415 = vsel %vm1563, %v8407, %v7970
    %v8416 = vsel %vm1563, %v8408, %v7972
    %v8417 = vsel %vm1563, %v8409, %v7974
    %v8418 = vsel %vm1563, %v8410, %v7976
    %v8419 = vsel %vm1563, %v8411, %v7978
    %v8420 = vsel %vm1563, %v8412, %v7980
    %v8421 = vsel %vm1572, %v8413, %v7998
    %v8422 = vsel %vm1572, %v8414, %v8000
    %v8423 = vsel %vm1572, %v8415, %v8002
    %v8424 = vsel %vm1572, %v8416, %v8004
    %v8425 = vsel %vm1572, %v8417, %v8006
    %v8426 = vsel %vm1572, %v8418, %v8008
    %v8427 = vsel %vm1572, %v8419, %v8010
    %v8428 = vsel %vm1572, %v8420, %v8012
    %v8429 = vsel %vm1581, %v8421, %v8030
    %v8430 = vsel %vm1581, %v8422, %v8032
    %v8431 = vsel %vm1581, %v8423, %v8034
    %v8432 = vsel %vm1581, %v8424, %v8036
    %v8433 = vsel %vm1581, %v8425, %v8038
    %v8434 = vsel %vm1581, %v8426, %v8040
    %v8435 = vsel %vm1581, %v8427, %v8042
    %v8436 = vsel %vm1581, %v8428, %v8044
    %v8437 = vsel %vm1590, %v8429, %v8062
    %v8438 = vsel %vm1590, %v8430, %v8064
    %v8439 = vsel %vm1590, %v8431, %v8066
    %v8440 = vsel %vm1590, %v8432, %v8068
    %v8441 = vsel %vm1590, %v8433, %v8070
    %v8442 = vsel %vm1590, %v8434, %v8072
    %v8443 = vsel %vm1590, %v8435, %v8074
    %v8444 = vsel %vm1590, %v8436, %v8076
    %v8445 = vsel %vm1599, %v8437, %v8094
    %v8446 = vsel %vm1599, %v8438, %v8096
    %v8447 = vsel %vm1599, %v8439, %v8098
    %v8448 = vsel %vm1599, %v8440, %v8100
    %v8449 = vsel %vm1599, %v8441, %v8102
    %v8450 = vsel %vm1599, %v8442, %v8104
    %v8451 = vsel %vm1599, %v8443, %v8106
    %v8452 = vsel %vm1599, %v8444, %v8108
    %v8453 = vsel %vm1608, %v8445, %v8126
    %v8454 = vsel %vm1608, %v8446, %v8128
    %v8455 = vsel %vm1608, %v8447, %v8130
    %v8456 = vsel %vm1608, %v8448, %v8132
    %v8457 = vsel %vm1608, %v8449, %v8134
    %v8458 = vsel %vm1608, %v8450, %v8136
    %v8459 = vsel %vm1608, %v8451, %v8138
    %v8460 = vsel %vm1608, %v8452, %v8140
    %v8461 = vsel %vm1617, %v8453, %v8158
    %v8462 = vsel %vm1617, %v8454, %v8160
    %v8463 = vsel %vm1617, %v8455, %v8162
    %v8464 = vsel %vm1617, %v8456, %v8164
    %v8465 = vsel %vm1617, %v8457, %v8166
    %v8466 = vsel %vm1617, %v8458, %v8168
    %v8467 = vsel %vm1617, %v8459, %v8170
    %v8468 = vsel %vm1617, %v8460, %v8172
    %v8469 = vsel %vm1626, %v8461, %v8190
    %v8470 = vsel %vm1626, %v8462, %v8192
    %v8471 = vsel %vm1626, %v8463, %v8194
    %v8472 = vsel %vm1626, %v8464, %v8196
    %v8473 = vsel %vm1626, %v8465, %v8198
    %v8474 = vsel %vm1626, %v8466, %v8200
    %v8475 = vsel %vm1626, %v8467, %v8202
    %v8476 = vsel %vm1626, %v8468, %v8204
    %v8477 = vsel %vm1635, %v8469, %v8222
    %v8478 = vsel %vm1635, %v8470, %v8224
    %v8479 = vsel %vm1635, %v8471, %v8226
    %v8480 = vsel %vm1635, %v8472, %v8228
    %v8481 = vsel %vm1635, %v8473, %v8230
    %v8482 = vsel %vm1635, %v8474, %v8232
    %v8483 = vsel %vm1635, %v8475, %v8234
    %v8484 = vsel %vm1635, %v8476, %v8236
    %v8485 = vsel %vm1644, %v8477, %v8254
    %v8486 = vsel %vm1644, %v8478, %v8256
    %v8487 = vsel %vm1644, %v8479, %v8258
    %v8488 = vsel %vm1644, %v8480, %v8260
    %v8489 = vsel %vm1644, %v8481, %v8262
    %v8490 = vsel %vm1644, %v8482, %v8264
    %v8491 = vsel %vm1644, %v8483, %v8266
    %v8492 = vsel %vm1644, %v8484, %v8268
    %v8493 = vsel %vm1653, %v8485, %v8286
    %v8494 = vsel %vm1653, %v8486, %v8288
    %v8495 = vsel %vm1653, %v8487, %v8290
    %v8496 = vsel %vm1653, %v8488, %v8292
    %v8497 = vsel %vm1653, %v8489, %v8294
    %v8498 = vsel %vm1653, %v8490, %v8296
    %v8499 = vsel %vm1653, %v8491, %v8298
    %v8500 = vsel %vm1653, %v8492, %v8300
    %v8501 = vsel %vm1662, %v8493, %v8318
    %v8502 = vsel %vm1662, %v8494, %v8320
    %v8503 = vsel %vm1662, %v8495, %v8322
    %v8504 = vsel %vm1662, %v8496, %v8324
    %v8505 = vsel %vm1662, %v8497, %v8326
    %v8506 = vsel %vm1662, %v8498, %v8328
    %v8507 = vsel %vm1662, %v8499, %v8330
    %v8508 = vsel %vm1662, %v8500, %v8332
    %v8509 = vsel %vm1671, %v8501, %v8350
    %v8510 = vsel %vm1671, %v8502, %v8352
    %v8511 = vsel %vm1671, %v8503, %v8354
    %v8512 = vsel %vm1671, %v8504, %v8356
    %v8513 = vsel %vm1671, %v8505, %v8358
    %v8514 = vsel %vm1671, %v8506, %v8360
    %v8515 = vsel %vm1671, %v8507, %v8362
    %v8516 = vsel %vm1671, %v8508, %v8364
    %v8517 = vsel %vm1680, %v8509, %v8382
    %v8518 = vsel %vm1680, %v8510, %v8384
    %v8519 = vsel %vm1680, %v8511, %v8386
    %v8520 = vsel %vm1680, %v8512, %v8388
    %v8521 = vsel %vm1680, %v8513, %v8390
    %v8522 = vsel %vm1680, %v8514, %v8392
    %v8523 = vsel %vm1680, %v8515, %v8394
    %v8524 = vsel %vm1680, %v8516, %v8396
    %8525 = vst.msk [vmem:[#allocation5 + $0x4] sm:$0x3] %vm1689, %v8517
    %8526 = vst.msk [vmem:[#allocation5 + $0xc] sm:$0x3] %vm1689, %v8518
    %8527 = vst.msk [vmem:[#allocation5 + $0x14] sm:$0x3] %vm1689, %v8519
    %8528 = vst.msk [vmem:[#allocation5 + $0x1c] sm:$0x3] %vm1689, %v8520
    %8529 = vst.msk [vmem:[#allocation5 + $0x24] sm:$0x3] %vm1689, %v8521
    %8530 = vst.msk [vmem:[#allocation5 + $0x2c] sm:$0x3] %vm1689, %v8522
    %8531 = vst.msk [vmem:[#allocation5 + $0x34] sm:$0x3] %vm1689, %v8523
    %8532 = vst.msk [vmem:[#allocation5 + $0x3c] sm:$0x3] %vm1689, %v8524
    %8541 = vrot.lane.b32.xlu0 %v8517, 32
    %v8542 = vpop.permute.xlu0 %8541
    %8543 = vrot.lane.b32.xlu0 %v8518, 32
    %v8544 = vpop.permute.xlu0 %8543
    %8545 = vrot.lane.b32.xlu0 %v8519, 32
    %v8546 = vpop.permute.xlu0 %8545
    %8547 = vrot.lane.b32.xlu0 %v8520, 32
    %v8548 = vpop.permute.xlu0 %8547
    %8549 = vrot.lane.b32.xlu0 %v8521, 32
    %v8550 = vpop.permute.xlu0 %8549
    %8551 = vrot.lane.b32.xlu0 %v8522, 32
    %v8552 = vpop.permute.xlu0 %8551
    %8553 = vrot.lane.b32.xlu0 %v8523, 32
    %v8554 = vpop.permute.xlu0 %8553
    %8555 = vrot.lane.b32.xlu0 %v8524, 32
    %v8556 = vpop.permute.xlu0 %8555
    %8565 = vst.msk [vmem:[#allocation5 + $0x4] sm:$0x3] %vm1730, %v8542
    %8566 = vst.msk [vmem:[#allocation5 + $0xc] sm:$0x3] %vm1730, %v8544
    %8567 = vst.msk [vmem:[#allocation5 + $0x14] sm:$0x3] %vm1730, %v8546
    %8568 = vst.msk [vmem:[#allocation5 + $0x1c] sm:$0x3] %vm1730, %v8548
    %8569 = vst.msk [vmem:[#allocation5 + $0x24] sm:$0x3] %vm1730, %v8550
    %8570 = vst.msk [vmem:[#allocation5 + $0x2c] sm:$0x3] %vm1730, %v8552
    %8571 = vst.msk [vmem:[#allocation5 + $0x34] sm:$0x3] %vm1730, %v8554
    %8572 = vst.msk [vmem:[#allocation5 + $0x3c] sm:$0x3] %vm1730, %v8556
    %v8573 = vld [vmem:[#allocation2] sm:$0x3]
    %v8574 = vld [vmem:[#allocation2 + $0x2] sm:$0x3]
    %v8575 = vld [vmem:[#allocation2 + $0x4] sm:$0x3]
    %v8576 = vld [vmem:[#allocation2 + $0x6] sm:$0x3]
    %v8577 = vld [vmem:[#allocation2 + $0x8] sm:$0x3]
    %v8578 = vld [vmem:[#allocation2 + $0xa] sm:$0x3]
    %v8579 = vld [vmem:[#allocation2 + $0xc] sm:$0x3]
    %v8580 = vld [vmem:[#allocation2 + $0xe] sm:$0x3]
    %v8581 = vperm.slane %v8573, 0
    %v8582 = vlaneseq
    %v8583 = vshrl.u32 %v8582, 7
    %v8584 = vadd.s32 %v8583, 80
    %8585 = vset.pattern.permute.xlu0 %v8584
    %8586 = vperm.xlu0 %8585, %v8581
    %v8587 = vpop.permute.xlu0 %8586
    %v8588 = vlaneseq
    %v8589 = vshrl.u32 %v8588, 7
    %v8590 = vadd.s32 %v8589, 88
    %8591 = vset.pattern.permute.xlu0 %v8590
    %8592 = vperm.xlu0 %8591, %v8581
    %v8593 = vpop.permute.xlu0 %8592
    %v8594 = vperm.slane %v8573, 1
    %v8595 = vlaneseq
    %v8596 = vshrl.u32 %v8595, 7
    %v8597 = vadd.s32 %v8596, 80
    %8598 = vset.pattern.permute.xlu0 %v8597
    %8599 = vperm.xlu0 %8598, %v8594
    %v8600 = vpop.permute.xlu0 %8599
    %v8601 = vlaneseq
    %v8602 = vshrl.u32 %v8601, 7
    %v8603 = vadd.s32 %v8602, 88
    %8604 = vset.pattern.permute.xlu0 %v8603
    %8605 = vperm.xlu0 %8604, %v8594
    %v8606 = vpop.permute.xlu0 %8605
    %v8607 = vperm.slane %v8574, 0
    %v8608 = vlaneseq
    %v8609 = vshrl.u32 %v8608, 7
    %v8610 = vadd.s32 %v8609, 80
    %8611 = vset.pattern.permute.xlu0 %v8610
    %8612 = vperm.xlu0 %8611, %v8607
    %v8613 = vpop.permute.xlu0 %8612
    %v8614 = vlaneseq
    %v8615 = vshrl.u32 %v8614, 7
    %v8616 = vadd.s32 %v8615, 88
    %8617 = vset.pattern.permute.xlu0 %v8616
    %8618 = vperm.xlu0 %8617, %v8607
    %v8619 = vpop.permute.xlu0 %8618
    %v8620 = vperm.slane %v8574, 1
    %v8621 = vlaneseq
    %v8622 = vshrl.u32 %v8621, 7
    %v8623 = vadd.s32 %v8622, 80
    %8624 = vset.pattern.permute.xlu0 %v8623
    %8625 = vperm.xlu0 %8624, %v8620
    %v8626 = vpop.permute.xlu0 %8625
    %v8627 = vlaneseq
    %v8628 = vshrl.u32 %v8627, 7
    %v8629 = vadd.s32 %v8628, 88
    %8630 = vset.pattern.permute.xlu0 %v8629
    %8631 = vperm.xlu0 %8630, %v8620
    %v8632 = vpop.permute.xlu0 %8631
    %v8633 = vperm.slane %v8575, 0
    %v8634 = vlaneseq
    %v8635 = vshrl.u32 %v8634, 7
    %v8636 = vadd.s32 %v8635, 80
    %8637 = vset.pattern.permute.xlu0 %v8636
    %8638 = vperm.xlu0 %8637, %v8633
    %v8639 = vpop.permute.xlu0 %8638
    %v8640 = vlaneseq
    %v8641 = vshrl.u32 %v8640, 7
    %v8642 = vadd.s32 %v8641, 88
    %8643 = vset.pattern.permute.xlu0 %v8642
    %8644 = vperm.xlu0 %8643, %v8633
    %v8645 = vpop.permute.xlu0 %8644
    %v8646 = vperm.slane %v8575, 1
    %v8647 = vlaneseq
    %v8648 = vshrl.u32 %v8647, 7
    %v8649 = vadd.s32 %v8648, 80
    %8650 = vset.pattern.permute.xlu0 %v8649
    %8651 = vperm.xlu0 %8650, %v8646
    %v8652 = vpop.permute.xlu0 %8651
    %v8653 = vlaneseq
    %v8654 = vshrl.u32 %v8653, 7
    %v8655 = vadd.s32 %v8654, 88
    %8656 = vset.pattern.permute.xlu0 %v8655
    %8657 = vperm.xlu0 %8656, %v8646
    %v8658 = vpop.permute.xlu0 %8657
    %v8659 = vperm.slane %v8576, 0
    %v8660 = vlaneseq
    %v8661 = vshrl.u32 %v8660, 7
    %v8662 = vadd.s32 %v8661, 80
    %8663 = vset.pattern.permute.xlu0 %v8662
    %8664 = vperm.xlu0 %8663, %v8659
    %v8665 = vpop.permute.xlu0 %8664
    %v8666 = vlaneseq
    %v8667 = vshrl.u32 %v8666, 7
    %v8668 = vadd.s32 %v8667, 88
    %8669 = vset.pattern.permute.xlu0 %v8668
    %8670 = vperm.xlu0 %8669, %v8659
    %v8671 = vpop.permute.xlu0 %8670
    %v8672 = vperm.slane %v8576, 1
    %v8673 = vlaneseq
    %v8674 = vshrl.u32 %v8673, 7
    %v8675 = vadd.s32 %v8674, 80
    %8676 = vset.pattern.permute.xlu0 %v8675
    %8677 = vperm.xlu0 %8676, %v8672
    %v8678 = vpop.permute.xlu0 %8677
    %v8679 = vlaneseq
    %v8680 = vshrl.u32 %v8679, 7
    %v8681 = vadd.s32 %v8680, 88
    %8682 = vset.pattern.permute.xlu0 %v8681
    %8683 = vperm.xlu0 %8682, %v8672
    %v8684 = vpop.permute.xlu0 %8683
    %v8685 = vperm.slane %v8577, 0
    %v8686 = vlaneseq
    %v8687 = vshrl.u32 %v8686, 7
    %v8688 = vadd.s32 %v8687, 80
    %8689 = vset.pattern.permute.xlu0 %v8688
    %8690 = vperm.xlu0 %8689, %v8685
    %v8691 = vpop.permute.xlu0 %8690
    %v8692 = vlaneseq
    %v8693 = vshrl.u32 %v8692, 7
    %v8694 = vadd.s32 %v8693, 88
    %8695 = vset.pattern.permute.xlu0 %v8694
    %8696 = vperm.xlu0 %8695, %v8685
    %v8697 = vpop.permute.xlu0 %8696
    %v8698 = vperm.slane %v8577, 1
    %v8699 = vlaneseq
    %v8700 = vshrl.u32 %v8699, 7
    %v8701 = vadd.s32 %v8700, 80
    %8702 = vset.pattern.permute.xlu0 %v8701
    %8703 = vperm.xlu0 %8702, %v8698
    %v8704 = vpop.permute.xlu0 %8703
    %v8705 = vlaneseq
    %v8706 = vshrl.u32 %v8705, 7
    %v8707 = vadd.s32 %v8706, 88
    %8708 = vset.pattern.permute.xlu0 %v8707
    %8709 = vperm.xlu0 %8708, %v8698
    %v8710 = vpop.permute.xlu0 %8709
    %v8711 = vperm.slane %v8578, 0
    %v8712 = vlaneseq
    %v8713 = vshrl.u32 %v8712, 7
    %v8714 = vadd.s32 %v8713, 80
    %8715 = vset.pattern.permute.xlu0 %v8714
    %8716 = vperm.xlu0 %8715, %v8711
    %v8717 = vpop.permute.xlu0 %8716
    %v8718 = vlaneseq
    %v8719 = vshrl.u32 %v8718, 7
    %v8720 = vadd.s32 %v8719, 88
    %8721 = vset.pattern.permute.xlu0 %v8720
    %8722 = vperm.xlu0 %8721, %v8711
    %v8723 = vpop.permute.xlu0 %8722
    %v8724 = vperm.slane %v8578, 1
    %v8725 = vlaneseq
    %v8726 = vshrl.u32 %v8725, 7
    %v8727 = vadd.s32 %v8726, 80
    %8728 = vset.pattern.permute.xlu0 %v8727
    %8729 = vperm.xlu0 %8728, %v8724
    %v8730 = vpop.permute.xlu0 %8729
    %v8731 = vlaneseq
    %v8732 = vshrl.u32 %v8731, 7
    %v8733 = vadd.s32 %v8732, 88
    %8734 = vset.pattern.permute.xlu0 %v8733
    %8735 = vperm.xlu0 %8734, %v8724
    %v8736 = vpop.permute.xlu0 %8735
    %v8737 = vperm.slane %v8579, 0
    %v8738 = vlaneseq
    %v8739 = vshrl.u32 %v8738, 7
    %v8740 = vadd.s32 %v8739, 80
    %8741 = vset.pattern.permute.xlu0 %v8740
    %8742 = vperm.xlu0 %8741, %v8737
    %v8743 = vpop.permute.xlu0 %8742
    %v8744 = vlaneseq
    %v8745 = vshrl.u32 %v8744, 7
    %v8746 = vadd.s32 %v8745, 88
    %8747 = vset.pattern.permute.xlu0 %v8746
    %8748 = vperm.xlu0 %8747, %v8737
    %v8749 = vpop.permute.xlu0 %8748
    %v8750 = vperm.slane %v8579, 1
    %v8751 = vlaneseq
    %v8752 = vshrl.u32 %v8751, 7
    %v8753 = vadd.s32 %v8752, 80
    %8754 = vset.pattern.permute.xlu0 %v8753
    %8755 = vperm.xlu0 %8754, %v8750
    %v8756 = vpop.permute.xlu0 %8755
    %v8757 = vlaneseq
    %v8758 = vshrl.u32 %v8757, 7
    %v8759 = vadd.s32 %v8758, 88
    %8760 = vset.pattern.permute.xlu0 %v8759
    %8761 = vperm.xlu0 %8760, %v8750
    %v8762 = vpop.permute.xlu0 %8761
    %v8763 = vperm.slane %v8580, 0
    %v8764 = vlaneseq
    %v8765 = vshrl.u32 %v8764, 7
    %v8766 = vadd.s32 %v8765, 80
    %8767 = vset.pattern.permute.xlu0 %v8766
    %8768 = vperm.xlu0 %8767, %v8763
    %v8769 = vpop.permute.xlu0 %8768
    %v8770 = vlaneseq
    %v8771 = vshrl.u32 %v8770, 7
    %v8772 = vadd.s32 %v8771, 88
    %8773 = vset.pattern.permute.xlu0 %v8772
    %8774 = vperm.xlu0 %8773, %v8763
    %v8775 = vpop.permute.xlu0 %8774
    %v8776 = vperm.slane %v8580, 1
    %v8777 = vlaneseq
    %v8778 = vshrl.u32 %v8777, 7
    %v8779 = vadd.s32 %v8778, 80
    %8780 = vset.pattern.permute.xlu0 %v8779
    %8781 = vperm.xlu0 %8780, %v8776
    %v8782 = vpop.permute.xlu0 %8781
    %v8783 = vlaneseq
    %v8784 = vshrl.u32 %v8783, 7
    %v8785 = vadd.s32 %v8784, 88
    %8786 = vset.pattern.permute.xlu0 %v8785
    %8787 = vperm.xlu0 %8786, %v8776
    %v8788 = vpop.permute.xlu0 %8787
    %v8789 = vrot.slane %v8587, 4
    %v8790 = vsel %vm242, 0.0, %v8789
    %v8792 = vunpack.c.l.s4 1983009808
    %v8793 = vunpack.c.0.s8 %v8792
    %v8794 = vperm.slane %v8587, %v8793
    %v8796 = vunpack.c.l.s4 1983009808
    %v8797 = vunpack.c.0.s8 %v8796
    %v8798 = vperm.slane %v8790, %v8797
    %v8799 = vrot.slane %v8600, 4
    %v8800 = vsel %vm242, 0.0, %v8799
    %v8802 = vunpack.c.l.s4 1983009808
    %v8803 = vunpack.c.0.s8 %v8802
    %v8804 = vperm.slane %v8600, %v8803
    %v8806 = vunpack.c.l.s4 1983009808
    %v8807 = vunpack.c.0.s8 %v8806
    %v8808 = vperm.slane %v8800, %v8807
    %v8809 = vrot.slane %v8804, 4
    %v8810 = vsel %vm242, %v8809, %v8794
    %v8811 = vrot.slane %v8794, 4
    %v8812 = vsel %vm242, %v8804, %v8811
    %v8814 = vunpack.c.l.s4 1934713408
    %v8815 = vunpack.c.0.s8 %v8814
    %v8816 = vperm.slane %v8810, %v8815
    %v8818 = vunpack.c.l.s4 1934713408
    %v8819 = vunpack.c.0.s8 %v8818
    %v8820 = vperm.slane %v8812, %v8819
    %v8821 = vrot.slane %v8808, 4
    %v8822 = vsel %vm242, %v8821, %v8798
    %v8823 = vrot.slane %v8798, 4
    %v8824 = vsel %vm242, %v8808, %v8823
    %v8826 = vunpack.c.l.s4 1934713408
    %v8827 = vunpack.c.0.s8 %v8826
    %v8828 = vperm.slane %v8822, %v8827
    %v8830 = vunpack.c.l.s4 1934713408
    %v8831 = vunpack.c.0.s8 %v8830
    %v8832 = vperm.slane %v8824, %v8831
    %v8833 = vrot.slane %v8816, 4
    %v8834 = vsel %vm242, 0.0, %v8833
    %v8835 = vrot.slane %v8820, 4
    %v8836 = vsel %vm242, 0.0, %v8835
    %v8837 = vrot.slane %v8828, 4
    %v8838 = vsel %vm242, 0.0, %v8837
    %v8839 = vrot.slane %v8832, 4
    %v8840 = vsel %vm242, 0.0, %v8839
    %v8841 = vrot.slane %v8593, 4
    %v8842 = vsel %vm242, 0.0, %v8841
    %v8844 = vunpack.c.l.s4 1983009808
    %v8845 = vunpack.c.0.s8 %v8844
    %v8846 = vperm.slane %v8593, %v8845
    %v8848 = vunpack.c.l.s4 1983009808
    %v8849 = vunpack.c.0.s8 %v8848
    %v8850 = vperm.slane %v8842, %v8849
    %v8851 = vrot.slane %v8606, 4
    %v8852 = vsel %vm242, 0.0, %v8851
    %v8854 = vunpack.c.l.s4 1983009808
    %v8855 = vunpack.c.0.s8 %v8854
    %v8856 = vperm.slane %v8606, %v8855
    %v8858 = vunpack.c.l.s4 1983009808
    %v8859 = vunpack.c.0.s8 %v8858
    %v8860 = vperm.slane %v8852, %v8859
    %v8861 = vrot.slane %v8856, 4
    %v8862 = vsel %vm242, %v8861, %v8846
    %v8863 = vrot.slane %v8846, 4
    %v8864 = vsel %vm242, %v8856, %v8863
    %v8866 = vunpack.c.l.s4 1934713408
    %v8867 = vunpack.c.0.s8 %v8866
    %v8868 = vperm.slane %v8862, %v8867
    %v8870 = vunpack.c.l.s4 1934713408
    %v8871 = vunpack.c.0.s8 %v8870
    %v8872 = vperm.slane %v8864, %v8871
    %v8873 = vrot.slane %v8860, 4
    %v8874 = vsel %vm242, %v8873, %v8850
    %v8875 = vrot.slane %v8850, 4
    %v8876 = vsel %vm242, %v8860, %v8875
    %v8878 = vunpack.c.l.s4 1934713408
    %v8879 = vunpack.c.0.s8 %v8878
    %v8880 = vperm.slane %v8874, %v8879
    %v8882 = vunpack.c.l.s4 1934713408
    %v8883 = vunpack.c.0.s8 %v8882
    %v8884 = vperm.slane %v8876, %v8883
    %v8885 = vrot.slane %v8868, 4
    %v8886 = vsel %vm242, 0.0, %v8885
    %v8887 = vrot.slane %v8872, 4
    %v8888 = vsel %vm242, 0.0, %v8887
    %v8889 = vrot.slane %v8880, 4
    %v8890 = vsel %vm242, 0.0, %v8889
    %v8891 = vrot.slane %v8884, 4
    %v8892 = vsel %vm242, 0.0, %v8891
    %v8893 = vrot.slane %v8613, 4
    %v8894 = vsel %vm242, 0.0, %v8893
    %v8896 = vunpack.c.l.s4 1983009808
    %v8897 = vunpack.c.0.s8 %v8896
    %v8898 = vperm.slane %v8613, %v8897
    %v8900 = vunpack.c.l.s4 1983009808
    %v8901 = vunpack.c.0.s8 %v8900
    %v8902 = vperm.slane %v8894, %v8901
    %v8903 = vrot.slane %v8626, 4
    %v8904 = vsel %vm242, 0.0, %v8903
    %v8906 = vunpack.c.l.s4 1983009808
    %v8907 = vunpack.c.0.s8 %v8906
    %v8908 = vperm.slane %v8626, %v8907
    %v8910 = vunpack.c.l.s4 1983009808
    %v8911 = vunpack.c.0.s8 %v8910
    %v8912 = vperm.slane %v8904, %v8911
    %v8913 = vrot.slane %v8908, 4
    %v8914 = vsel %vm242, %v8913, %v8898
    %v8915 = vrot.slane %v8898, 4
    %v8916 = vsel %vm242, %v8908, %v8915
    %v8918 = vunpack.c.l.s4 1934713408
    %v8919 = vunpack.c.0.s8 %v8918
    %v8920 = vperm.slane %v8914, %v8919
    %v8922 = vunpack.c.l.s4 1934713408
    %v8923 = vunpack.c.0.s8 %v8922
    %v8924 = vperm.slane %v8916, %v8923
    %v8925 = vrot.slane %v8912, 4
    %v8926 = vsel %vm242, %v8925, %v8902
    %v8927 = vrot.slane %v8902, 4
    %v8928 = vsel %vm242, %v8912, %v8927
    %v8930 = vunpack.c.l.s4 1934713408
    %v8931 = vunpack.c.0.s8 %v8930
    %v8932 = vperm.slane %v8926, %v8931
    %v8934 = vunpack.c.l.s4 1934713408
    %v8935 = vunpack.c.0.s8 %v8934
    %v8936 = vperm.slane %v8928, %v8935
    %v8937 = vrot.slane %v8920, 4
    %v8938 = vsel %vm242, 0.0, %v8937
    %v8939 = vrot.slane %v8924, 4
    %v8940 = vsel %vm242, 0.0, %v8939
    %v8941 = vrot.slane %v8932, 4
    %v8942 = vsel %vm242, 0.0, %v8941
    %v8943 = vrot.slane %v8936, 4
    %v8944 = vsel %vm242, 0.0, %v8943
    %v8945 = vrot.slane %v8619, 4
    %v8946 = vsel %vm242, 0.0, %v8945
    %v8948 = vunpack.c.l.s4 1983009808
    %v8949 = vunpack.c.0.s8 %v8948
    %v8950 = vperm.slane %v8619, %v8949
    %v8952 = vunpack.c.l.s4 1983009808
    %v8953 = vunpack.c.0.s8 %v8952
    %v8954 = vperm.slane %v8946, %v8953
    %v8955 = vrot.slane %v8632, 4
    %v8956 = vsel %vm242, 0.0, %v8955
    %v8958 = vunpack.c.l.s4 1983009808
    %v8959 = vunpack.c.0.s8 %v8958
    %v8960 = vperm.slane %v8632, %v8959
    %v8962 = vunpack.c.l.s4 1983009808
    %v8963 = vunpack.c.0.s8 %v8962
    %v8964 = vperm.slane %v8956, %v8963
    %v8965 = vrot.slane %v8960, 4
    %v8966 = vsel %vm242, %v8965, %v8950
    %v8967 = vrot.slane %v8950, 4
    %v8968 = vsel %vm242, %v8960, %v8967
    %v8970 = vunpack.c.l.s4 1934713408
    %v8971 = vunpack.c.0.s8 %v8970
    %v8972 = vperm.slane %v8966, %v8971
    %v8974 = vunpack.c.l.s4 1934713408
    %v8975 = vunpack.c.0.s8 %v8974
    %v8976 = vperm.slane %v8968, %v8975
    %v8977 = vrot.slane %v8964, 4
    %v8978 = vsel %vm242, %v8977, %v8954
    %v8979 = vrot.slane %v8954, 4
    %v8980 = vsel %vm242, %v8964, %v8979
    %v8982 = vunpack.c.l.s4 1934713408
    %v8983 = vunpack.c.0.s8 %v8982
    %v8984 = vperm.slane %v8978, %v8983
    %v8986 = vunpack.c.l.s4 1934713408
    %v8987 = vunpack.c.0.s8 %v8986
    %v8988 = vperm.slane %v8980, %v8987
    %v8989 = vrot.slane %v8972, 4
    %v8990 = vsel %vm242, 0.0, %v8989
    %v8991 = vrot.slane %v8976, 4
    %v8992 = vsel %vm242, 0.0, %v8991
    %v8993 = vrot.slane %v8984, 4
    %v8994 = vsel %vm242, 0.0, %v8993
    %v8995 = vrot.slane %v8988, 4
    %v8996 = vsel %vm242, 0.0, %v8995
    %v8997 = vrot.slane %v8639, 4
    %v8998 = vsel %vm242, 0.0, %v8997
    %v9000 = vunpack.c.l.s4 1983009808
    %v9001 = vunpack.c.0.s8 %v9000
    %v9002 = vperm.slane %v8639, %v9001
    %v9004 = vunpack.c.l.s4 1983009808
    %v9005 = vunpack.c.0.s8 %v9004
    %v9006 = vperm.slane %v8998, %v9005
    %v9007 = vrot.slane %v8652, 4
    %v9008 = vsel %vm242, 0.0, %v9007
    %v9010 = vunpack.c.l.s4 1983009808
    %v9011 = vunpack.c.0.s8 %v9010
    %v9012 = vperm.slane %v8652, %v9011
    %v9014 = vunpack.c.l.s4 1983009808
    %v9015 = vunpack.c.0.s8 %v9014
    %v9016 = vperm.slane %v9008, %v9015
    %v9017 = vrot.slane %v9012, 4
    %v9018 = vsel %vm242, %v9017, %v9002
    %v9019 = vrot.slane %v9002, 4
    %v9020 = vsel %vm242, %v9012, %v9019
    %v9022 = vunpack.c.l.s4 1934713408
    %v9023 = vunpack.c.0.s8 %v9022
    %v9024 = vperm.slane %v9018, %v9023
    %v9026 = vunpack.c.l.s4 1934713408
    %v9027 = vunpack.c.0.s8 %v9026
    %v9028 = vperm.slane %v9020, %v9027
    %v9029 = vrot.slane %v9016, 4
    %v9030 = vsel %vm242, %v9029, %v9006
    %v9031 = vrot.slane %v9006, 4
    %v9032 = vsel %vm242, %v9016, %v9031
    %v9034 = vunpack.c.l.s4 1934713408
    %v9035 = vunpack.c.0.s8 %v9034
    %v9036 = vperm.slane %v9030, %v9035
    %v9038 = vunpack.c.l.s4 1934713408
    %v9039 = vunpack.c.0.s8 %v9038
    %v9040 = vperm.slane %v9032, %v9039
    %v9041 = vrot.slane %v9024, 4
    %v9042 = vsel %vm242, 0.0, %v9041
    %v9043 = vrot.slane %v9028, 4
    %v9044 = vsel %vm242, 0.0, %v9043
    %v9045 = vrot.slane %v9036, 4
    %v9046 = vsel %vm242, 0.0, %v9045
    %v9047 = vrot.slane %v9040, 4
    %v9048 = vsel %vm242, 0.0, %v9047
    %v9049 = vrot.slane %v8645, 4
    %v9050 = vsel %vm242, 0.0, %v9049
    %v9052 = vunpack.c.l.s4 1983009808
    %v9053 = vunpack.c.0.s8 %v9052
    %v9054 = vperm.slane %v8645, %v9053
    %v9056 = vunpack.c.l.s4 1983009808
    %v9057 = vunpack.c.0.s8 %v9056
    %v9058 = vperm.slane %v9050, %v9057
    %v9059 = vrot.slane %v8658, 4
    %v9060 = vsel %vm242, 0.0, %v9059
    %v9062 = vunpack.c.l.s4 1983009808
    %v9063 = vunpack.c.0.s8 %v9062
    %v9064 = vperm.slane %v8658, %v9063
    %v9066 = vunpack.c.l.s4 1983009808
    %v9067 = vunpack.c.0.s8 %v9066
    %v9068 = vperm.slane %v9060, %v9067
    %v9069 = vrot.slane %v9064, 4
    %v9070 = vsel %vm242, %v9069, %v9054
    %v9071 = vrot.slane %v9054, 4
    %v9072 = vsel %vm242, %v9064, %v9071
    %v9074 = vunpack.c.l.s4 1934713408
    %v9075 = vunpack.c.0.s8 %v9074
    %v9076 = vperm.slane %v9070, %v9075
    %v9078 = vunpack.c.l.s4 1934713408
    %v9079 = vunpack.c.0.s8 %v9078
    %v9080 = vperm.slane %v9072, %v9079
    %v9081 = vrot.slane %v9068, 4
    %v9082 = vsel %vm242, %v9081, %v9058
    %v9083 = vrot.slane %v9058, 4
    %v9084 = vsel %vm242, %v9068, %v9083
    %v9086 = vunpack.c.l.s4 1934713408
    %v9087 = vunpack.c.0.s8 %v9086
    %v9088 = vperm.slane %v9082, %v9087
    %v9090 = vunpack.c.l.s4 1934713408
    %v9091 = vunpack.c.0.s8 %v9090
    %v9092 = vperm.slane %v9084, %v9091
    %v9093 = vrot.slane %v9076, 4
    %v9094 = vsel %vm242, 0.0, %v9093
    %v9095 = vrot.slane %v9080, 4
    %v9096 = vsel %vm242, 0.0, %v9095
    %v9097 = vrot.slane %v9088, 4
    %v9098 = vsel %vm242, 0.0, %v9097
    %v9099 = vrot.slane %v9092, 4
    %v9100 = vsel %vm242, 0.0, %v9099
    %v9101 = vrot.slane %v8665, 4
    %v9102 = vsel %vm242, 0.0, %v9101
    %v9104 = vunpack.c.l.s4 1983009808
    %v9105 = vunpack.c.0.s8 %v9104
    %v9106 = vperm.slane %v8665, %v9105
    %v9108 = vunpack.c.l.s4 1983009808
    %v9109 = vunpack.c.0.s8 %v9108
    %v9110 = vperm.slane %v9102, %v9109
    %v9111 = vrot.slane %v8678, 4
    %v9112 = vsel %vm242, 0.0, %v9111
    %v9114 = vunpack.c.l.s4 1983009808
    %v9115 = vunpack.c.0.s8 %v9114
    %v9116 = vperm.slane %v8678, %v9115
    %v9118 = vunpack.c.l.s4 1983009808
    %v9119 = vunpack.c.0.s8 %v9118
    %v9120 = vperm.slane %v9112, %v9119
    %v9121 = vrot.slane %v9116, 4
    %v9122 = vsel %vm242, %v9121, %v9106
    %v9123 = vrot.slane %v9106, 4
    %v9124 = vsel %vm242, %v9116, %v9123
    %v9126 = vunpack.c.l.s4 1934713408
    %v9127 = vunpack.c.0.s8 %v9126
    %v9128 = vperm.slane %v9122, %v9127
    %v9130 = vunpack.c.l.s4 1934713408
    %v9131 = vunpack.c.0.s8 %v9130
    %v9132 = vperm.slane %v9124, %v9131
    %v9133 = vrot.slane %v9120, 4
    %v9134 = vsel %vm242, %v9133, %v9110
    %v9135 = vrot.slane %v9110, 4
    %v9136 = vsel %vm242, %v9120, %v9135
    %v9138 = vunpack.c.l.s4 1934713408
    %v9139 = vunpack.c.0.s8 %v9138
    %v9140 = vperm.slane %v9134, %v9139
    %v9142 = vunpack.c.l.s4 1934713408
    %v9143 = vunpack.c.0.s8 %v9142
    %v9144 = vperm.slane %v9136, %v9143
    %v9145 = vrot.slane %v9128, 4
    %v9146 = vsel %vm242, 0.0, %v9145
    %v9147 = vrot.slane %v9132, 4
    %v9148 = vsel %vm242, 0.0, %v9147
    %v9149 = vrot.slane %v9140, 4
    %v9150 = vsel %vm242, 0.0, %v9149
    %v9151 = vrot.slane %v9144, 4
    %v9152 = vsel %vm242, 0.0, %v9151
    %v9153 = vrot.slane %v8671, 4
    %v9154 = vsel %vm242, 0.0, %v9153
    %v9156 = vunpack.c.l.s4 1983009808
    %v9157 = vunpack.c.0.s8 %v9156
    %v9158 = vperm.slane %v8671, %v9157
    %v9160 = vunpack.c.l.s4 1983009808
    %v9161 = vunpack.c.0.s8 %v9160
    %v9162 = vperm.slane %v9154, %v9161
    %v9163 = vrot.slane %v8684, 4
    %v9164 = vsel %vm242, 0.0, %v9163
    %v9166 = vunpack.c.l.s4 1983009808
    %v9167 = vunpack.c.0.s8 %v9166
    %v9168 = vperm.slane %v8684, %v9167
    %v9170 = vunpack.c.l.s4 1983009808
    %v9171 = vunpack.c.0.s8 %v9170
    %v9172 = vperm.slane %v9164, %v9171
    %v9173 = vrot.slane %v9168, 4
    %v9174 = vsel %vm242, %v9173, %v9158
    %v9175 = vrot.slane %v9158, 4
    %v9176 = vsel %vm242, %v9168, %v9175
    %v9178 = vunpack.c.l.s4 1934713408
    %v9179 = vunpack.c.0.s8 %v9178
    %v9180 = vperm.slane %v9174, %v9179
    %v9182 = vunpack.c.l.s4 1934713408
    %v9183 = vunpack.c.0.s8 %v9182
    %v9184 = vperm.slane %v9176, %v9183
    %v9185 = vrot.slane %v9172, 4
    %v9186 = vsel %vm242, %v9185, %v9162
    %v9187 = vrot.slane %v9162, 4
    %v9188 = vsel %vm242, %v9172, %v9187
    %v9190 = vunpack.c.l.s4 1934713408
    %v9191 = vunpack.c.0.s8 %v9190
    %v9192 = vperm.slane %v9186, %v9191
    %v9194 = vunpack.c.l.s4 1934713408
    %v9195 = vunpack.c.0.s8 %v9194
    %v9196 = vperm.slane %v9188, %v9195
    %v9197 = vrot.slane %v9180, 4
    %v9198 = vsel %vm242, 0.0, %v9197
    %v9199 = vrot.slane %v9184, 4
    %v9200 = vsel %vm242, 0.0, %v9199
    %v9201 = vrot.slane %v9192, 4
    %v9202 = vsel %vm242, 0.0, %v9201
    %v9203 = vrot.slane %v9196, 4
    %v9204 = vsel %vm242, 0.0, %v9203
    %v9205 = vrot.slane %v8691, 4
    %v9206 = vsel %vm242, 0.0, %v9205
    %v9208 = vunpack.c.l.s4 1983009808
    %v9209 = vunpack.c.0.s8 %v9208
    %v9210 = vperm.slane %v8691, %v9209
    %v9212 = vunpack.c.l.s4 1983009808
    %v9213 = vunpack.c.0.s8 %v9212
    %v9214 = vperm.slane %v9206, %v9213
    %v9215 = vrot.slane %v8704, 4
    %v9216 = vsel %vm242, 0.0, %v9215
    %v9218 = vunpack.c.l.s4 1983009808
    %v9219 = vunpack.c.0.s8 %v9218
    %v9220 = vperm.slane %v8704, %v9219
    %v9222 = vunpack.c.l.s4 1983009808
    %v9223 = vunpack.c.0.s8 %v9222
    %v9224 = vperm.slane %v9216, %v9223
    %v9225 = vrot.slane %v9220, 4
    %v9226 = vsel %vm242, %v9225, %v9210
    %v9227 = vrot.slane %v9210, 4
    %v9228 = vsel %vm242, %v9220, %v9227
    %v9230 = vunpack.c.l.s4 1934713408
    %v9231 = vunpack.c.0.s8 %v9230
    %v9232 = vperm.slane %v9226, %v9231
    %v9234 = vunpack.c.l.s4 1934713408
    %v9235 = vunpack.c.0.s8 %v9234
    %v9236 = vperm.slane %v9228, %v9235
    %v9237 = vrot.slane %v9224, 4
    %v9238 = vsel %vm242, %v9237, %v9214
    %v9239 = vrot.slane %v9214, 4
    %v9240 = vsel %vm242, %v9224, %v9239
    %v9242 = vunpack.c.l.s4 1934713408
    %v9243 = vunpack.c.0.s8 %v9242
    %v9244 = vperm.slane %v9238, %v9243
    %v9246 = vunpack.c.l.s4 1934713408
    %v9247 = vunpack.c.0.s8 %v9246
    %v9248 = vperm.slane %v9240, %v9247
    %v9249 = vrot.slane %v9232, 4
    %v9250 = vsel %vm242, 0.0, %v9249
    %v9251 = vrot.slane %v9236, 4
    %v9252 = vsel %vm242, 0.0, %v9251
    %v9253 = vrot.slane %v9244, 4
    %v9254 = vsel %vm242, 0.0, %v9253
    %v9255 = vrot.slane %v9248, 4
    %v9256 = vsel %vm242, 0.0, %v9255
    %v9257 = vrot.slane %v8697, 4
    %v9258 = vsel %vm242, 0.0, %v9257
    %v9260 = vunpack.c.l.s4 1983009808
    %v9261 = vunpack.c.0.s8 %v9260
    %v9262 = vperm.slane %v8697, %v9261
    %v9264 = vunpack.c.l.s4 1983009808
    %v9265 = vunpack.c.0.s8 %v9264
    %v9266 = vperm.slane %v9258, %v9265
    %v9267 = vrot.slane %v8710, 4
    %v9268 = vsel %vm242, 0.0, %v9267
    %v9270 = vunpack.c.l.s4 1983009808
    %v9271 = vunpack.c.0.s8 %v9270
    %v9272 = vperm.slane %v8710, %v9271
    %v9274 = vunpack.c.l.s4 1983009808
    %v9275 = vunpack.c.0.s8 %v9274
    %v9276 = vperm.slane %v9268, %v9275
    %v9277 = vrot.slane %v9272, 4
    %v9278 = vsel %vm242, %v9277, %v9262
    %v9279 = vrot.slane %v9262, 4
    %v9280 = vsel %vm242, %v9272, %v9279
    %v9282 = vunpack.c.l.s4 1934713408
    %v9283 = vunpack.c.0.s8 %v9282
    %v9284 = vperm.slane %v9278, %v9283
    %v9286 = vunpack.c.l.s4 1934713408
    %v9287 = vunpack.c.0.s8 %v9286
    %v9288 = vperm.slane %v9280, %v9287
    %v9289 = vrot.slane %v9276, 4
    %v9290 = vsel %vm242, %v9289, %v9266
    %v9291 = vrot.slane %v9266, 4
    %v9292 = vsel %vm242, %v9276, %v9291
    %v9294 = vunpack.c.l.s4 1934713408
    %v9295 = vunpack.c.0.s8 %v9294
    %v9296 = vperm.slane %v9290, %v9295
    %v9298 = vunpack.c.l.s4 1934713408
    %v9299 = vunpack.c.0.s8 %v9298
    %v9300 = vperm.slane %v9292, %v9299
    %v9301 = vrot.slane %v9284, 4
    %v9302 = vsel %vm242, 0.0, %v9301
    %v9303 = vrot.slane %v9288, 4
    %v9304 = vsel %vm242, 0.0, %v9303
    %v9305 = vrot.slane %v9296, 4
    %v9306 = vsel %vm242, 0.0, %v9305
    %v9307 = vrot.slane %v9300, 4
    %v9308 = vsel %vm242, 0.0, %v9307
    %v9309 = vrot.slane %v8717, 4
    %v9310 = vsel %vm242, 0.0, %v9309
    %v9312 = vunpack.c.l.s4 1983009808
    %v9313 = vunpack.c.0.s8 %v9312
    %v9314 = vperm.slane %v8717, %v9313
    %v9316 = vunpack.c.l.s4 1983009808
    %v9317 = vunpack.c.0.s8 %v9316
    %v9318 = vperm.slane %v9310, %v9317
    %v9319 = vrot.slane %v8730, 4
    %v9320 = vsel %vm242, 0.0, %v9319
    %v9322 = vunpack.c.l.s4 1983009808
    %v9323 = vunpack.c.0.s8 %v9322
    %v9324 = vperm.slane %v8730, %v9323
    %v9326 = vunpack.c.l.s4 1983009808
    %v9327 = vunpack.c.0.s8 %v9326
    %v9328 = vperm.slane %v9320, %v9327
    %v9329 = vrot.slane %v9324, 4
    %v9330 = vsel %vm242, %v9329, %v9314
    %v9331 = vrot.slane %v9314, 4
    %v9332 = vsel %vm242, %v9324, %v9331
    %v9334 = vunpack.c.l.s4 1934713408
    %v9335 = vunpack.c.0.s8 %v9334
    %v9336 = vperm.slane %v9330, %v9335
    %v9338 = vunpack.c.l.s4 1934713408
    %v9339 = vunpack.c.0.s8 %v9338
    %v9340 = vperm.slane %v9332, %v9339
    %v9341 = vrot.slane %v9328, 4
    %v9342 = vsel %vm242, %v9341, %v9318
    %v9343 = vrot.slane %v9318, 4
    %v9344 = vsel %vm242, %v9328, %v9343
    %v9346 = vunpack.c.l.s4 1934713408
    %v9347 = vunpack.c.0.s8 %v9346
    %v9348 = vperm.slane %v9342, %v9347
    %v9350 = vunpack.c.l.s4 1934713408
    %v9351 = vunpack.c.0.s8 %v9350
    %v9352 = vperm.slane %v9344, %v9351
    %v9353 = vrot.slane %v9336, 4
    %v9354 = vsel %vm242, 0.0, %v9353
    %v9355 = vrot.slane %v9340, 4
    %v9356 = vsel %vm242, 0.0, %v9355
    %v9357 = vrot.slane %v9348, 4
    %v9358 = vsel %vm242, 0.0, %v9357
    %v9359 = vrot.slane %v9352, 4
    %v9360 = vsel %vm242, 0.0, %v9359
    %v9361 = vrot.slane %v8723, 4
    %v9362 = vsel %vm242, 0.0, %v9361
    %v9364 = vunpack.c.l.s4 1983009808
    %v9365 = vunpack.c.0.s8 %v9364
    %v9366 = vperm.slane %v8723, %v9365
    %v9368 = vunpack.c.l.s4 1983009808
    %v9369 = vunpack.c.0.s8 %v9368
    %v9370 = vperm.slane %v9362, %v9369
    %v9371 = vrot.slane %v8736, 4
    %v9372 = vsel %vm242, 0.0, %v9371
    %v9374 = vunpack.c.l.s4 1983009808
    %v9375 = vunpack.c.0.s8 %v9374
    %v9376 = vperm.slane %v8736, %v9375
    %v9378 = vunpack.c.l.s4 1983009808
    %v9379 = vunpack.c.0.s8 %v9378
    %v9380 = vperm.slane %v9372, %v9379
    %v9381 = vrot.slane %v9376, 4
    %v9382 = vsel %vm242, %v9381, %v9366
    %v9383 = vrot.slane %v9366, 4
    %v9384 = vsel %vm242, %v9376, %v9383
    %v9386 = vunpack.c.l.s4 1934713408
    %v9387 = vunpack.c.0.s8 %v9386
    %v9388 = vperm.slane %v9382, %v9387
    %v9390 = vunpack.c.l.s4 1934713408
    %v9391 = vunpack.c.0.s8 %v9390
    %v9392 = vperm.slane %v9384, %v9391
    %v9393 = vrot.slane %v9380, 4
    %v9394 = vsel %vm242, %v9393, %v9370
    %v9395 = vrot.slane %v9370, 4
    %v9396 = vsel %vm242, %v9380, %v9395
    %v9398 = vunpack.c.l.s4 1934713408
    %v9399 = vunpack.c.0.s8 %v9398
    %v9400 = vperm.slane %v9394, %v9399
    %v9402 = vunpack.c.l.s4 1934713408
    %v9403 = vunpack.c.0.s8 %v9402
    %v9404 = vperm.slane %v9396, %v9403
    %v9405 = vrot.slane %v9388, 4
    %v9406 = vsel %vm242, 0.0, %v9405
    %v9407 = vrot.slane %v9392, 4
    %v9408 = vsel %vm242, 0.0, %v9407
    %v9409 = vrot.slane %v9400, 4
    %v9410 = vsel %vm242, 0.0, %v9409
    %v9411 = vrot.slane %v9404, 4
    %v9412 = vsel %vm242, 0.0, %v9411
    %v9413 = vrot.slane %v8743, 4
    %v9414 = vsel %vm242, 0.0, %v9413
    %v9416 = vunpack.c.l.s4 1983009808
    %v9417 = vunpack.c.0.s8 %v9416
    %v9418 = vperm.slane %v8743, %v9417
    %v9420 = vunpack.c.l.s4 1983009808
    %v9421 = vunpack.c.0.s8 %v9420
    %v9422 = vperm.slane %v9414, %v9421
    %v9423 = vrot.slane %v8756, 4
    %v9424 = vsel %vm242, 0.0, %v9423
    %v9426 = vunpack.c.l.s4 1983009808
    %v9427 = vunpack.c.0.s8 %v9426
    %v9428 = vperm.slane %v8756, %v9427
    %v9430 = vunpack.c.l.s4 1983009808
    %v9431 = vunpack.c.0.s8 %v9430
    %v9432 = vperm.slane %v9424, %v9431
    %v9433 = vrot.slane %v9428, 4
    %v9434 = vsel %vm242, %v9433, %v9418
    %v9435 = vrot.slane %v9418, 4
    %v9436 = vsel %vm242, %v9428, %v9435
    %v9438 = vunpack.c.l.s4 1934713408
    %v9439 = vunpack.c.0.s8 %v9438
    %v9440 = vperm.slane %v9434, %v9439
    %v9442 = vunpack.c.l.s4 1934713408
    %v9443 = vunpack.c.0.s8 %v9442
    %v9444 = vperm.slane %v9436, %v9443
    %v9445 = vrot.slane %v9432, 4
    %v9446 = vsel %vm242, %v9445, %v9422
    %v9447 = vrot.slane %v9422, 4
    %v9448 = vsel %vm242, %v9432, %v9447
    %v9450 = vunpack.c.l.s4 1934713408
    %v9451 = vunpack.c.0.s8 %v9450
    %v9452 = vperm.slane %v9446, %v9451
    %v9454 = vunpack.c.l.s4 1934713408
    %v9455 = vunpack.c.0.s8 %v9454
    %v9456 = vperm.slane %v9448, %v9455
    %v9457 = vrot.slane %v9440, 4
    %v9458 = vsel %vm242, 0.0, %v9457
    %v9459 = vrot.slane %v9444, 4
    %v9460 = vsel %vm242, 0.0, %v9459
    %v9461 = vrot.slane %v9452, 4
    %v9462 = vsel %vm242, 0.0, %v9461
    %v9463 = vrot.slane %v9456, 4
    %v9464 = vsel %vm242, 0.0, %v9463
    %v9465 = vrot.slane %v8749, 4
    %v9466 = vsel %vm242, 0.0, %v9465
    %v9468 = vunpack.c.l.s4 1983009808
    %v9469 = vunpack.c.0.s8 %v9468
    %v9470 = vperm.slane %v8749, %v9469
    %v9472 = vunpack.c.l.s4 1983009808
    %v9473 = vunpack.c.0.s8 %v9472
    %v9474 = vperm.slane %v9466, %v9473
    %v9475 = vrot.slane %v8762, 4
    %v9476 = vsel %vm242, 0.0, %v9475
    %v9478 = vunpack.c.l.s4 1983009808
    %v9479 = vunpack.c.0.s8 %v9478
    %v9480 = vperm.slane %v8762, %v9479
    %v9482 = vunpack.c.l.s4 1983009808
    %v9483 = vunpack.c.0.s8 %v9482
    %v9484 = vperm.slane %v9476, %v9483
    %v9485 = vrot.slane %v9480, 4
    %v9486 = vsel %vm242, %v9485, %v9470
    %v9487 = vrot.slane %v9470, 4
    %v9488 = vsel %vm242, %v9480, %v9487
    %v9490 = vunpack.c.l.s4 1934713408
    %v9491 = vunpack.c.0.s8 %v9490
    %v9492 = vperm.slane %v9486, %v9491
    %v9494 = vunpack.c.l.s4 1934713408
    %v9495 = vunpack.c.0.s8 %v9494
    %v9496 = vperm.slane %v9488, %v9495
    %v9497 = vrot.slane %v9484, 4
    %v9498 = vsel %vm242, %v9497, %v9474
    %v9499 = vrot.slane %v9474, 4
    %v9500 = vsel %vm242, %v9484, %v9499
    %v9502 = vunpack.c.l.s4 1934713408
    %v9503 = vunpack.c.0.s8 %v9502
    %v9504 = vperm.slane %v9498, %v9503
    %v9506 = vunpack.c.l.s4 1934713408
    %v9507 = vunpack.c.0.s8 %v9506
    %v9508 = vperm.slane %v9500, %v9507
    %v9509 = vrot.slane %v9492, 4
    %v9510 = vsel %vm242, 0.0, %v9509
    %v9511 = vrot.slane %v9496, 4
    %v9512 = vsel %vm242, 0.0, %v9511
    %v9513 = vrot.slane %v9504, 4
    %v9514 = vsel %vm242, 0.0, %v9513
    %v9515 = vrot.slane %v9508, 4
    %v9516 = vsel %vm242, 0.0, %v9515
    %v9517 = vrot.slane %v8769, 4
    %v9518 = vsel %vm242, 0.0, %v9517
    %v9520 = vunpack.c.l.s4 1983009808
    %v9521 = vunpack.c.0.s8 %v9520
    %v9522 = vperm.slane %v8769, %v9521
    %v9524 = vunpack.c.l.s4 1983009808
    %v9525 = vunpack.c.0.s8 %v9524
    %v9526 = vperm.slane %v9518, %v9525
    %v9527 = vrot.slane %v8782, 4
    %v9528 = vsel %vm242, 0.0, %v9527
    %v9530 = vunpack.c.l.s4 1983009808
    %v9531 = vunpack.c.0.s8 %v9530
    %v9532 = vperm.slane %v8782, %v9531
    %v9534 = vunpack.c.l.s4 1983009808
    %v9535 = vunpack.c.0.s8 %v9534
    %v9536 = vperm.slane %v9528, %v9535
    %v9537 = vrot.slane %v9532, 4
    %v9538 = vsel %vm242, %v9537, %v9522
    %v9539 = vrot.slane %v9522, 4
    %v9540 = vsel %vm242, %v9532, %v9539
    %v9542 = vunpack.c.l.s4 1934713408
    %v9543 = vunpack.c.0.s8 %v9542
    %v9544 = vperm.slane %v9538, %v9543
    %v9546 = vunpack.c.l.s4 1934713408
    %v9547 = vunpack.c.0.s8 %v9546
    %v9548 = vperm.slane %v9540, %v9547
    %v9549 = vrot.slane %v9536, 4
    %v9550 = vsel %vm242, %v9549, %v9526
    %v9551 = vrot.slane %v9526, 4
    %v9552 = vsel %vm242, %v9536, %v9551
    %v9554 = vunpack.c.l.s4 1934713408
    %v9555 = vunpack.c.0.s8 %v9554
    %v9556 = vperm.slane %v9550, %v9555
    %v9558 = vunpack.c.l.s4 1934713408
    %v9559 = vunpack.c.0.s8 %v9558
    %v9560 = vperm.slane %v9552, %v9559
    %v9561 = vrot.slane %v9544, 4
    %v9562 = vsel %vm242, 0.0, %v9561
    %v9563 = vrot.slane %v9548, 4
    %v9564 = vsel %vm242, 0.0, %v9563
    %v9565 = vrot.slane %v9556, 4
    %v9566 = vsel %vm242, 0.0, %v9565
    %v9567 = vrot.slane %v9560, 4
    %v9568 = vsel %vm242, 0.0, %v9567
    %v9569 = vrot.slane %v8775, 4
    %v9570 = vsel %vm242, 0.0, %v9569
    %v9572 = vunpack.c.l.s4 1983009808
    %v9573 = vunpack.c.0.s8 %v9572
    %v9574 = vperm.slane %v8775, %v9573
    %v9576 = vunpack.c.l.s4 1983009808
    %v9577 = vunpack.c.0.s8 %v9576
    %v9578 = vperm.slane %v9570, %v9577
    %v9579 = vrot.slane %v8788, 4
    %v9580 = vsel %vm242, 0.0, %v9579
    %v9582 = vunpack.c.l.s4 1983009808
    %v9583 = vunpack.c.0.s8 %v9582
    %v9584 = vperm.slane %v8788, %v9583
    %v9586 = vunpack.c.l.s4 1983009808
    %v9587 = vunpack.c.0.s8 %v9586
    %v9588 = vperm.slane %v9580, %v9587
    %v9589 = vrot.slane %v9584, 4
    %v9590 = vsel %vm242, %v9589, %v9574
    %v9591 = vrot.slane %v9574, 4
    %v9592 = vsel %vm242, %v9584, %v9591
    %v9594 = vunpack.c.l.s4 1934713408
    %v9595 = vunpack.c.0.s8 %v9594
    %v9596 = vperm.slane %v9590, %v9595
    %v9598 = vunpack.c.l.s4 1934713408
    %v9599 = vunpack.c.0.s8 %v9598
    %v9600 = vperm.slane %v9592, %v9599
    %v9601 = vrot.slane %v9588, 4
    %v9602 = vsel %vm242, %v9601, %v9578
    %v9603 = vrot.slane %v9578, 4
    %v9604 = vsel %vm242, %v9588, %v9603
    %v9606 = vunpack.c.l.s4 1934713408
    %v9607 = vunpack.c.0.s8 %v9606
    %v9608 = vperm.slane %v9602, %v9607
    %v9610 = vunpack.c.l.s4 1934713408
    %v9611 = vunpack.c.0.s8 %v9610
    %v9612 = vperm.slane %v9604, %v9611
    %v9613 = vrot.slane %v9596, 4
    %v9614 = vsel %vm242, 0.0, %v9613
    %v9615 = vrot.slane %v9600, 4
    %v9616 = vsel %vm242, 0.0, %v9615
    %v9617 = vrot.slane %v9608, 4
    %v9618 = vsel %vm242, 0.0, %v9617
    %v9619 = vrot.slane %v9612, 4
    %v9620 = vsel %vm242, 0.0, %v9619
    %9629 = vrot.lane.b32.xlu0 %v8834, 2
    %v9630 = vpop.permute.xlu0 %9629
    %9631 = vrot.lane.b32.xlu0 %v8938, 2
    %v9632 = vpop.permute.xlu0 %9631
    %9633 = vrot.lane.b32.xlu0 %v9042, 2
    %v9634 = vpop.permute.xlu0 %9633
    %9635 = vrot.lane.b32.xlu0 %v9146, 2
    %v9636 = vpop.permute.xlu0 %9635
    %9637 = vrot.lane.b32.xlu0 %v9250, 2
    %v9638 = vpop.permute.xlu0 %9637
    %9639 = vrot.lane.b32.xlu0 %v9354, 2
    %v9640 = vpop.permute.xlu0 %9639
    %9641 = vrot.lane.b32.xlu0 %v9458, 2
    %v9642 = vpop.permute.xlu0 %9641
    %9643 = vrot.lane.b32.xlu0 %v9562, 2
    %v9644 = vpop.permute.xlu0 %9643
    %9661 = vrot.lane.b32.xlu0 %v8820, 4
    %v9662 = vpop.permute.xlu0 %9661
    %9663 = vrot.lane.b32.xlu0 %v8924, 4
    %v9664 = vpop.permute.xlu0 %9663
    %9665 = vrot.lane.b32.xlu0 %v9028, 4
    %v9666 = vpop.permute.xlu0 %9665
    %9667 = vrot.lane.b32.xlu0 %v9132, 4
    %v9668 = vpop.permute.xlu0 %9667
    %9669 = vrot.lane.b32.xlu0 %v9236, 4
    %v9670 = vpop.permute.xlu0 %9669
    %9671 = vrot.lane.b32.xlu0 %v9340, 4
    %v9672 = vpop.permute.xlu0 %9671
    %9673 = vrot.lane.b32.xlu0 %v9444, 4
    %v9674 = vpop.permute.xlu0 %9673
    %9675 = vrot.lane.b32.xlu0 %v9548, 4
    %v9676 = vpop.permute.xlu0 %9675
    %9693 = vrot.lane.b32.xlu0 %v8836, 6
    %v9694 = vpop.permute.xlu0 %9693
    %9695 = vrot.lane.b32.xlu0 %v8940, 6
    %v9696 = vpop.permute.xlu0 %9695
    %9697 = vrot.lane.b32.xlu0 %v9044, 6
    %v9698 = vpop.permute.xlu0 %9697
    %9699 = vrot.lane.b32.xlu0 %v9148, 6
    %v9700 = vpop.permute.xlu0 %9699
    %9701 = vrot.lane.b32.xlu0 %v9252, 6
    %v9702 = vpop.permute.xlu0 %9701
    %9703 = vrot.lane.b32.xlu0 %v9356, 6
    %v9704 = vpop.permute.xlu0 %9703
    %9705 = vrot.lane.b32.xlu0 %v9460, 6
    %v9706 = vpop.permute.xlu0 %9705
    %9707 = vrot.lane.b32.xlu0 %v9564, 6
    %v9708 = vpop.permute.xlu0 %9707
    %9725 = vrot.lane.b32.xlu0 %v8828, 8
    %v9726 = vpop.permute.xlu0 %9725
    %9727 = vrot.lane.b32.xlu0 %v8932, 8
    %v9728 = vpop.permute.xlu0 %9727
    %9729 = vrot.lane.b32.xlu0 %v9036, 8
    %v9730 = vpop.permute.xlu0 %9729
    %9731 = vrot.lane.b32.xlu0 %v9140, 8
    %v9732 = vpop.permute.xlu0 %9731
    %9733 = vrot.lane.b32.xlu0 %v9244, 8
    %v9734 = vpop.permute.xlu0 %9733
    %9735 = vrot.lane.b32.xlu0 %v9348, 8
    %v9736 = vpop.permute.xlu0 %9735
    %9737 = vrot.lane.b32.xlu0 %v9452, 8
    %v9738 = vpop.permute.xlu0 %9737
    %9739 = vrot.lane.b32.xlu0 %v9556, 8
    %v9740 = vpop.permute.xlu0 %9739
    %9757 = vrot.lane.b32.xlu0 %v8838, 10
    %v9758 = vpop.permute.xlu0 %9757
    %9759 = vrot.lane.b32.xlu0 %v8942, 10
    %v9760 = vpop.permute.xlu0 %9759
    %9761 = vrot.lane.b32.xlu0 %v9046, 10
    %v9762 = vpop.permute.xlu0 %9761
    %9763 = vrot.lane.b32.xlu0 %v9150, 10
    %v9764 = vpop.permute.xlu0 %9763
    %9765 = vrot.lane.b32.xlu0 %v9254, 10
    %v9766 = vpop.permute.xlu0 %9765
    %9767 = vrot.lane.b32.xlu0 %v9358, 10
    %v9768 = vpop.permute.xlu0 %9767
    %9769 = vrot.lane.b32.xlu0 %v9462, 10
    %v9770 = vpop.permute.xlu0 %9769
    %9771 = vrot.lane.b32.xlu0 %v9566, 10
    %v9772 = vpop.permute.xlu0 %9771
    %9789 = vrot.lane.b32.xlu0 %v8832, 12
    %v9790 = vpop.permute.xlu0 %9789
    %9791 = vrot.lane.b32.xlu0 %v8936, 12
    %v9792 = vpop.permute.xlu0 %9791
    %9793 = vrot.lane.b32.xlu0 %v9040, 12
    %v9794 = vpop.permute.xlu0 %9793
    %9795 = vrot.lane.b32.xlu0 %v9144, 12
    %v9796 = vpop.permute.xlu0 %9795
    %9797 = vrot.lane.b32.xlu0 %v9248, 12
    %v9798 = vpop.permute.xlu0 %9797
    %9799 = vrot.lane.b32.xlu0 %v9352, 12
    %v9800 = vpop.permute.xlu0 %9799
    %9801 = vrot.lane.b32.xlu0 %v9456, 12
    %v9802 = vpop.permute.xlu0 %9801
    %9803 = vrot.lane.b32.xlu0 %v9560, 12
    %v9804 = vpop.permute.xlu0 %9803
    %9821 = vrot.lane.b32.xlu0 %v8840, 14
    %v9822 = vpop.permute.xlu0 %9821
    %9823 = vrot.lane.b32.xlu0 %v8944, 14
    %v9824 = vpop.permute.xlu0 %9823
    %9825 = vrot.lane.b32.xlu0 %v9048, 14
    %v9826 = vpop.permute.xlu0 %9825
    %9827 = vrot.lane.b32.xlu0 %v9152, 14
    %v9828 = vpop.permute.xlu0 %9827
    %9829 = vrot.lane.b32.xlu0 %v9256, 14
    %v9830 = vpop.permute.xlu0 %9829
    %9831 = vrot.lane.b32.xlu0 %v9360, 14
    %v9832 = vpop.permute.xlu0 %9831
    %9833 = vrot.lane.b32.xlu0 %v9464, 14
    %v9834 = vpop.permute.xlu0 %9833
    %9835 = vrot.lane.b32.xlu0 %v9568, 14
    %v9836 = vpop.permute.xlu0 %9835
    %9853 = vrot.lane.b32.xlu0 %v8868, 16
    %v9854 = vpop.permute.xlu0 %9853
    %9855 = vrot.lane.b32.xlu0 %v8972, 16
    %v9856 = vpop.permute.xlu0 %9855
    %9857 = vrot.lane.b32.xlu0 %v9076, 16
    %v9858 = vpop.permute.xlu0 %9857
    %9859 = vrot.lane.b32.xlu0 %v9180, 16
    %v9860 = vpop.permute.xlu0 %9859
    %9861 = vrot.lane.b32.xlu0 %v9284, 16
    %v9862 = vpop.permute.xlu0 %9861
    %9863 = vrot.lane.b32.xlu0 %v9388, 16
    %v9864 = vpop.permute.xlu0 %9863
    %9865 = vrot.lane.b32.xlu0 %v9492, 16
    %v9866 = vpop.permute.xlu0 %9865
    %9867 = vrot.lane.b32.xlu0 %v9596, 16
    %v9868 = vpop.permute.xlu0 %9867
    %9885 = vrot.lane.b32.xlu0 %v8886, 18
    %v9886 = vpop.permute.xlu0 %9885
    %9887 = vrot.lane.b32.xlu0 %v8990, 18
    %v9888 = vpop.permute.xlu0 %9887
    %9889 = vrot.lane.b32.xlu0 %v9094, 18
    %v9890 = vpop.permute.xlu0 %9889
    %9891 = vrot.lane.b32.xlu0 %v9198, 18
    %v9892 = vpop.permute.xlu0 %9891
    %9893 = vrot.lane.b32.xlu0 %v9302, 18
    %v9894 = vpop.permute.xlu0 %9893
    %9895 = vrot.lane.b32.xlu0 %v9406, 18
    %v9896 = vpop.permute.xlu0 %9895
    %9897 = vrot.lane.b32.xlu0 %v9510, 18
    %v9898 = vpop.permute.xlu0 %9897
    %9899 = vrot.lane.b32.xlu0 %v9614, 18
    %v9900 = vpop.permute.xlu0 %9899
    %9917 = vrot.lane.b32.xlu0 %v8872, 20
    %v9918 = vpop.permute.xlu0 %9917
    %9919 = vrot.lane.b32.xlu0 %v8976, 20
    %v9920 = vpop.permute.xlu0 %9919
    %9921 = vrot.lane.b32.xlu0 %v9080, 20
    %v9922 = vpop.permute.xlu0 %9921
    %9923 = vrot.lane.b32.xlu0 %v9184, 20
    %v9924 = vpop.permute.xlu0 %9923
    %9925 = vrot.lane.b32.xlu0 %v9288, 20
    %v9926 = vpop.permute.xlu0 %9925
    %9927 = vrot.lane.b32.xlu0 %v9392, 20
    %v9928 = vpop.permute.xlu0 %9927
    %9929 = vrot.lane.b32.xlu0 %v9496, 20
    %v9930 = vpop.permute.xlu0 %9929
    %9931 = vrot.lane.b32.xlu0 %v9600, 20
    %v9932 = vpop.permute.xlu0 %9931
    %9949 = vrot.lane.b32.xlu0 %v8888, 22
    %v9950 = vpop.permute.xlu0 %9949
    %9951 = vrot.lane.b32.xlu0 %v8992, 22
    %v9952 = vpop.permute.xlu0 %9951
    %9953 = vrot.lane.b32.xlu0 %v9096, 22
    %v9954 = vpop.permute.xlu0 %9953
    %9955 = vrot.lane.b32.xlu0 %v9200, 22
    %v9956 = vpop.permute.xlu0 %9955
    %9957 = vrot.lane.b32.xlu0 %v9304, 22
    %v9958 = vpop.permute.xlu0 %9957
    %9959 = vrot.lane.b32.xlu0 %v9408, 22
    %v9960 = vpop.permute.xlu0 %9959
    %9961 = vrot.lane.b32.xlu0 %v9512, 22
    %v9962 = vpop.permute.xlu0 %9961
    %9963 = vrot.lane.b32.xlu0 %v9616, 22
    %v9964 = vpop.permute.xlu0 %9963
    %9981 = vrot.lane.b32.xlu0 %v8880, 24
    %v9982 = vpop.permute.xlu0 %9981
    %9983 = vrot.lane.b32.xlu0 %v8984, 24
    %v9984 = vpop.permute.xlu0 %9983
    %9985 = vrot.lane.b32.xlu0 %v9088, 24
    %v9986 = vpop.permute.xlu0 %9985
    %9987 = vrot.lane.b32.xlu0 %v9192, 24
    %v9988 = vpop.permute.xlu0 %9987
    %9989 = vrot.lane.b32.xlu0 %v9296, 24
    %v9990 = vpop.permute.xlu0 %9989
    %9991 = vrot.lane.b32.xlu0 %v9400, 24
    %v9992 = vpop.permute.xlu0 %9991
    %9993 = vrot.lane.b32.xlu0 %v9504, 24
    %v9994 = vpop.permute.xlu0 %9993
    %9995 = vrot.lane.b32.xlu0 %v9608, 24
    %v9996 = vpop.permute.xlu0 %9995
    %10013 = vrot.lane.b32.xlu0 %v8890, 26
    %v10014 = vpop.permute.xlu0 %10013
    %10015 = vrot.lane.b32.xlu0 %v8994, 26
    %v10016 = vpop.permute.xlu0 %10015
    %10017 = vrot.lane.b32.xlu0 %v9098, 26
    %v10018 = vpop.permute.xlu0 %10017
    %10019 = vrot.lane.b32.xlu0 %v9202, 26
    %v10020 = vpop.permute.xlu0 %10019
    %10021 = vrot.lane.b32.xlu0 %v9306, 26
    %v10022 = vpop.permute.xlu0 %10021
    %10023 = vrot.lane.b32.xlu0 %v9410, 26
    %v10024 = vpop.permute.xlu0 %10023
    %10025 = vrot.lane.b32.xlu0 %v9514, 26
    %v10026 = vpop.permute.xlu0 %10025
    %10027 = vrot.lane.b32.xlu0 %v9618, 26
    %v10028 = vpop.permute.xlu0 %10027
    %10045 = vrot.lane.b32.xlu0 %v8884, 28
    %v10046 = vpop.permute.xlu0 %10045
    %10047 = vrot.lane.b32.xlu0 %v8988, 28
    %v10048 = vpop.permute.xlu0 %10047
    %10049 = vrot.lane.b32.xlu0 %v9092, 28
    %v10050 = vpop.permute.xlu0 %10049
    %10051 = vrot.lane.b32.xlu0 %v9196, 28
    %v10052 = vpop.permute.xlu0 %10051
    %10053 = vrot.lane.b32.xlu0 %v9300, 28
    %v10054 = vpop.permute.xlu0 %10053
    %10055 = vrot.lane.b32.xlu0 %v9404, 28
    %v10056 = vpop.permute.xlu0 %10055
    %10057 = vrot.lane.b32.xlu0 %v9508, 28
    %v10058 = vpop.permute.xlu0 %10057
    %10059 = vrot.lane.b32.xlu0 %v9612, 28
    %v10060 = vpop.permute.xlu0 %10059
    %10077 = vrot.lane.b32.xlu0 %v8892, 30
    %v10078 = vpop.permute.xlu0 %10077
    %10079 = vrot.lane.b32.xlu0 %v8996, 30
    %v10080 = vpop.permute.xlu0 %10079
    %10081 = vrot.lane.b32.xlu0 %v9100, 30
    %v10082 = vpop.permute.xlu0 %10081
    %10083 = vrot.lane.b32.xlu0 %v9204, 30
    %v10084 = vpop.permute.xlu0 %10083
    %10085 = vrot.lane.b32.xlu0 %v9308, 30
    %v10086 = vpop.permute.xlu0 %10085
    %10087 = vrot.lane.b32.xlu0 %v9412, 30
    %v10088 = vpop.permute.xlu0 %10087
    %10089 = vrot.lane.b32.xlu0 %v9516, 30
    %v10090 = vpop.permute.xlu0 %10089
    %10091 = vrot.lane.b32.xlu0 %v9620, 30
    %v10092 = vpop.permute.xlu0 %10091
    %v10101 = vsel %vm1554, %v8816, %v9630
    %v10102 = vsel %vm1554, %v8920, %v9632
    %v10103 = vsel %vm1554, %v9024, %v9634
    %v10104 = vsel %vm1554, %v9128, %v9636
    %v10105 = vsel %vm1554, %v9232, %v9638
    %v10106 = vsel %vm1554, %v9336, %v9640
    %v10107 = vsel %vm1554, %v9440, %v9642
    %v10108 = vsel %vm1554, %v9544, %v9644
    %v10109 = vsel %vm1563, %v10101, %v9662
    %v10110 = vsel %vm1563, %v10102, %v9664
    %v10111 = vsel %vm1563, %v10103, %v9666
    %v10112 = vsel %vm1563, %v10104, %v9668
    %v10113 = vsel %vm1563, %v10105, %v9670
    %v10114 = vsel %vm1563, %v10106, %v9672
    %v10115 = vsel %vm1563, %v10107, %v9674
    %v10116 = vsel %vm1563, %v10108, %v9676
    %v10117 = vsel %vm1572, %v10109, %v9694
    %v10118 = vsel %vm1572, %v10110, %v9696
    %v10119 = vsel %vm1572, %v10111, %v9698
    %v10120 = vsel %vm1572, %v10112, %v9700
    %v10121 = vsel %vm1572, %v10113, %v9702
    %v10122 = vsel %vm1572, %v10114, %v9704
    %v10123 = vsel %vm1572, %v10115, %v9706
    %v10124 = vsel %vm1572, %v10116, %v9708
    %v10125 = vsel %vm1581, %v10117, %v9726
    %v10126 = vsel %vm1581, %v10118, %v9728
    %v10127 = vsel %vm1581, %v10119, %v9730
    %v10128 = vsel %vm1581, %v10120, %v9732
    %v10129 = vsel %vm1581, %v10121, %v9734
    %v10130 = vsel %vm1581, %v10122, %v9736
    %v10131 = vsel %vm1581, %v10123, %v9738
    %v10132 = vsel %vm1581, %v10124, %v9740
    %v10133 = vsel %vm1590, %v10125, %v9758
    %v10134 = vsel %vm1590, %v10126, %v9760
    %v10135 = vsel %vm1590, %v10127, %v9762
    %v10136 = vsel %vm1590, %v10128, %v9764
    %v10137 = vsel %vm1590, %v10129, %v9766
    %v10138 = vsel %vm1590, %v10130, %v9768
    %v10139 = vsel %vm1590, %v10131, %v9770
    %v10140 = vsel %vm1590, %v10132, %v9772
    %v10141 = vsel %vm1599, %v10133, %v9790
    %v10142 = vsel %vm1599, %v10134, %v9792
    %v10143 = vsel %vm1599, %v10135, %v9794
    %v10144 = vsel %vm1599, %v10136, %v9796
    %v10145 = vsel %vm1599, %v10137, %v9798
    %v10146 = vsel %vm1599, %v10138, %v9800
    %v10147 = vsel %vm1599, %v10139, %v9802
    %v10148 = vsel %vm1599, %v10140, %v9804
    %v10149 = vsel %vm1608, %v10141, %v9822
    %v10150 = vsel %vm1608, %v10142, %v9824
    %v10151 = vsel %vm1608, %v10143, %v9826
    %v10152 = vsel %vm1608, %v10144, %v9828
    %v10153 = vsel %vm1608, %v10145, %v9830
    %v10154 = vsel %vm1608, %v10146, %v9832
    %v10155 = vsel %vm1608, %v10147, %v9834
    %v10156 = vsel %vm1608, %v10148, %v9836
    %v10157 = vsel %vm1617, %v10149, %v9854
    %v10158 = vsel %vm1617, %v10150, %v9856
    %v10159 = vsel %vm1617, %v10151, %v9858
    %v10160 = vsel %vm1617, %v10152, %v9860
    %v10161 = vsel %vm1617, %v10153, %v9862
    %v10162 = vsel %vm1617, %v10154, %v9864
    %v10163 = vsel %vm1617, %v10155, %v9866
    %v10164 = vsel %vm1617, %v10156, %v9868
    %v10165 = vsel %vm1626, %v10157, %v9886
    %v10166 = vsel %vm1626, %v10158, %v9888
    %v10167 = vsel %vm1626, %v10159, %v9890
    %v10168 = vsel %vm1626, %v10160, %v9892
    %v10169 = vsel %vm1626, %v10161, %v9894
    %v10170 = vsel %vm1626, %v10162, %v9896
    %v10171 = vsel %vm1626, %v10163, %v9898
    %v10172 = vsel %vm1626, %v10164, %v9900
    %v10173 = vsel %vm1635, %v10165, %v9918
    %v10174 = vsel %vm1635, %v10166, %v9920
    %v10175 = vsel %vm1635, %v10167, %v9922
    %v10176 = vsel %vm1635, %v10168, %v9924
    %v10177 = vsel %vm1635, %v10169, %v9926
    %v10178 = vsel %vm1635, %v10170, %v9928
    %v10179 = vsel %vm1635, %v10171, %v9930
    %v10180 = vsel %vm1635, %v10172, %v9932
    %v10181 = vsel %vm1644, %v10173, %v9950
    %v10182 = vsel %vm1644, %v10174, %v9952
    %v10183 = vsel %vm1644, %v10175, %v9954
    %v10184 = vsel %vm1644, %v10176, %v9956
    %v10185 = vsel %vm1644, %v10177, %v9958
    %v10186 = vsel %vm1644, %v10178, %v9960
    %v10187 = vsel %vm1644, %v10179, %v9962
    %v10188 = vsel %vm1644, %v10180, %v9964
    %v10189 = vsel %vm1653, %v10181, %v9982
    %v10190 = vsel %vm1653, %v10182, %v9984
    %v10191 = vsel %vm1653, %v10183, %v9986
    %v10192 = vsel %vm1653, %v10184, %v9988
    %v10193 = vsel %vm1653, %v10185, %v9990
    %v10194 = vsel %vm1653, %v10186, %v9992
    %v10195 = vsel %vm1653, %v10187, %v9994
    %v10196 = vsel %vm1653, %v10188, %v9996
    %v10197 = vsel %vm1662, %v10189, %v10014
    %v10198 = vsel %vm1662, %v10190, %v10016
    %v10199 = vsel %vm1662, %v10191, %v10018
    %v10200 = vsel %vm1662, %v10192, %v10020
    %v10201 = vsel %vm1662, %v10193, %v10022
    %v10202 = vsel %vm1662, %v10194, %v10024
    %v10203 = vsel %vm1662, %v10195, %v10026
    %v10204 = vsel %vm1662, %v10196, %v10028
    %v10205 = vsel %vm1671, %v10197, %v10046
    %v10206 = vsel %vm1671, %v10198, %v10048
    %v10207 = vsel %vm1671, %v10199, %v10050
    %v10208 = vsel %vm1671, %v10200, %v10052
    %v10209 = vsel %vm1671, %v10201, %v10054
    %v10210 = vsel %vm1671, %v10202, %v10056
    %v10211 = vsel %vm1671, %v10203, %v10058
    %v10212 = vsel %vm1671, %v10204, %v10060
    %v10213 = vsel %vm1680, %v10205, %v10078
    %v10214 = vsel %vm1680, %v10206, %v10080
    %v10215 = vsel %vm1680, %v10207, %v10082
    %v10216 = vsel %vm1680, %v10208, %v10084
    %v10217 = vsel %vm1680, %v10209, %v10086
    %v10218 = vsel %vm1680, %v10210, %v10088
    %v10219 = vsel %vm1680, %v10211, %v10090
    %v10220 = vsel %vm1680, %v10212, %v10092
    %10229 = vrot.lane.b32.xlu0 %v10213, 64
    %v10230 = vpop.permute.xlu0 %10229
    %10231 = vrot.lane.b32.xlu0 %v10214, 64
    %v10232 = vpop.permute.xlu0 %10231
    %10233 = vrot.lane.b32.xlu0 %v10215, 64
    %v10234 = vpop.permute.xlu0 %10233
    %10235 = vrot.lane.b32.xlu0 %v10216, 64
    %v10236 = vpop.permute.xlu0 %10235
    %10237 = vrot.lane.b32.xlu0 %v10217, 64
    %v10238 = vpop.permute.xlu0 %10237
    %10239 = vrot.lane.b32.xlu0 %v10218, 64
    %v10240 = vpop.permute.xlu0 %10239
    %10241 = vrot.lane.b32.xlu0 %v10219, 64
    %v10242 = vpop.permute.xlu0 %10241
    %10243 = vrot.lane.b32.xlu0 %v10220, 64
    %v10244 = vpop.permute.xlu0 %10243
    %10253 = vst.msk [vmem:[#allocation5 + $0x4] sm:$0x3] %vm3419, %v10230
    %10254 = vst.msk [vmem:[#allocation5 + $0xc] sm:$0x3] %vm3419, %v10232
    %10255 = vst.msk [vmem:[#allocation5 + $0x14] sm:$0x3] %vm3419, %v10234
    %10256 = vst.msk [vmem:[#allocation5 + $0x1c] sm:$0x3] %vm3419, %v10236
    %10257 = vst.msk [vmem:[#allocation5 + $0x24] sm:$0x3] %vm3419, %v10238
    %10258 = vst.msk [vmem:[#allocation5 + $0x2c] sm:$0x3] %vm3419, %v10240
    %10259 = vst.msk [vmem:[#allocation5 + $0x34] sm:$0x3] %vm3419, %v10242
    %10260 = vst.msk [vmem:[#allocation5 + $0x3c] sm:$0x3] %vm3419, %v10244
    %10261 = vrot.lane.b32.xlu0 %v10213, 96
    %v10262 = vpop.permute.xlu0 %10261
    %10263 = vrot.lane.b32.xlu0 %v10214, 96
    %v10264 = vpop.permute.xlu0 %10263
    %10265 = vrot.lane.b32.xlu0 %v10215, 96
    %v10266 = vpop.permute.xlu0 %10265
    %10267 = vrot.lane.b32.xlu0 %v10216, 96
    %v10268 = vpop.permute.xlu0 %10267
    %10269 = vrot.lane.b32.xlu0 %v10217, 96
    %v10270 = vpop.permute.xlu0 %10269
    %10271 = vrot.lane.b32.xlu0 %v10218, 96
    %v10272 = vpop.permute.xlu0 %10271
    %10273 = vrot.lane.b32.xlu0 %v10219, 96
    %v10274 = vpop.permute.xlu0 %10273
    %10275 = vrot.lane.b32.xlu0 %v10220, 96
    %v10276 = vpop.permute.xlu0 %10275
    %10285 = vst.msk [vmem:[#allocation5 + $0x4] sm:$0x3] %vm3452, %v10262
    %10286 = vst.msk [vmem:[#allocation5 + $0xc] sm:$0x3] %vm3452, %v10264
    %10287 = vst.msk [vmem:[#allocation5 + $0x14] sm:$0x3] %vm3452, %v10266
    %10288 = vst.msk [vmem:[#allocation5 + $0x1c] sm:$0x3] %vm3452, %v10268
    %10289 = vst.msk [vmem:[#allocation5 + $0x24] sm:$0x3] %vm3452, %v10270
    %10290 = vst.msk [vmem:[#allocation5 + $0x2c] sm:$0x3] %vm3452, %v10272
    %10291 = vst.msk [vmem:[#allocation5 + $0x34] sm:$0x3] %vm3452, %v10274
    %10292 = vst.msk [vmem:[#allocation5 + $0x3c] sm:$0x3] %vm3452, %v10276
    %v10293 = vld [vmem:[#allocation2] sm:$0x3]
    %v10294 = vld [vmem:[#allocation2 + $0x2] sm:$0x3]
    %v10295 = vld [vmem:[#allocation2 + $0x4] sm:$0x3]
    %v10296 = vld [vmem:[#allocation2 + $0x6] sm:$0x3]
    %v10297 = vld [vmem:[#allocation2 + $0x8] sm:$0x3]
    %v10298 = vld [vmem:[#allocation2 + $0xa] sm:$0x3]
    %v10299 = vld [vmem:[#allocation2 + $0xc] sm:$0x3]
    %v10300 = vld [vmem:[#allocation2 + $0xe] sm:$0x3]
    %v10301 = vperm.slane %v10293, 0
    %v10302 = vlaneseq
    %v10303 = vshrl.u32 %v10302, 7
    %v10304 = vadd.s32 %v10303, 96
    %10305 = vset.pattern.permute.xlu0 %v10304
    %10306 = vperm.xlu0 %10305, %v10301
    %v10307 = vpop.permute.xlu0 %10306
    %v10308 = vlaneseq
    %v10309 = vshrl.u32 %v10308, 7
    %v10310 = vadd.s32 %v10309, 104
    %10311 = vset.pattern.permute.xlu0 %v10310
    %10312 = vperm.xlu0 %10311, %v10301
    %v10313 = vpop.permute.xlu0 %10312
    %v10314 = vperm.slane %v10293, 1
    %v10315 = vlaneseq
    %v10316 = vshrl.u32 %v10315, 7
    %v10317 = vadd.s32 %v10316, 96
    %10318 = vset.pattern.permute.xlu0 %v10317
    %10319 = vperm.xlu0 %10318, %v10314
    %v10320 = vpop.permute.xlu0 %10319
    %v10321 = vlaneseq
    %v10322 = vshrl.u32 %v10321, 7
    %v10323 = vadd.s32 %v10322, 104
    %10324 = vset.pattern.permute.xlu0 %v10323
    %10325 = vperm.xlu0 %10324, %v10314
    %v10326 = vpop.permute.xlu0 %10325
    %v10327 = vperm.slane %v10294, 0
    %v10328 = vlaneseq
    %v10329 = vshrl.u32 %v10328, 7
    %v10330 = vadd.s32 %v10329, 96
    %10331 = vset.pattern.permute.xlu0 %v10330
    %10332 = vperm.xlu0 %10331, %v10327
    %v10333 = vpop.permute.xlu0 %10332
    %v10334 = vlaneseq
    %v10335 = vshrl.u32 %v10334, 7
    %v10336 = vadd.s32 %v10335, 104
    %10337 = vset.pattern.permute.xlu0 %v10336
    %10338 = vperm.xlu0 %10337, %v10327
    %v10339 = vpop.permute.xlu0 %10338
    %v10340 = vperm.slane %v10294, 1
    %v10341 = vlaneseq
    %v10342 = vshrl.u32 %v10341, 7
    %v10343 = vadd.s32 %v10342, 96
    %10344 = vset.pattern.permute.xlu0 %v10343
    %10345 = vperm.xlu0 %10344, %v10340
    %v10346 = vpop.permute.xlu0 %10345
    %v10347 = vlaneseq
    %v10348 = vshrl.u32 %v10347, 7
    %v10349 = vadd.s32 %v10348, 104
    %10350 = vset.pattern.permute.xlu0 %v10349
    %10351 = vperm.xlu0 %10350, %v10340
    %v10352 = vpop.permute.xlu0 %10351
    %v10353 = vperm.slane %v10295, 0
    %v10354 = vlaneseq
    %v10355 = vshrl.u32 %v10354, 7
    %v10356 = vadd.s32 %v10355, 96
    %10357 = vset.pattern.permute.xlu0 %v10356
    %10358 = vperm.xlu0 %10357, %v10353
    %v10359 = vpop.permute.xlu0 %10358
    %v10360 = vlaneseq
    %v10361 = vshrl.u32 %v10360, 7
    %v10362 = vadd.s32 %v10361, 104
    %10363 = vset.pattern.permute.xlu0 %v10362
    %10364 = vperm.xlu0 %10363, %v10353
    %v10365 = vpop.permute.xlu0 %10364
    %v10366 = vperm.slane %v10295, 1
    %v10367 = vlaneseq
    %v10368 = vshrl.u32 %v10367, 7
    %v10369 = vadd.s32 %v10368, 96
    %10370 = vset.pattern.permute.xlu0 %v10369
    %10371 = vperm.xlu0 %10370, %v10366
    %v10372 = vpop.permute.xlu0 %10371
    %v10373 = vlaneseq
    %v10374 = vshrl.u32 %v10373, 7
    %v10375 = vadd.s32 %v10374, 104
    %10376 = vset.pattern.permute.xlu0 %v10375
    %10377 = vperm.xlu0 %10376, %v10366
    %v10378 = vpop.permute.xlu0 %10377
    %v10379 = vperm.slane %v10296, 0
    %v10380 = vlaneseq
    %v10381 = vshrl.u32 %v10380, 7
    %v10382 = vadd.s32 %v10381, 96
    %10383 = vset.pattern.permute.xlu0 %v10382
    %10384 = vperm.xlu0 %10383, %v10379
    %v10385 = vpop.permute.xlu0 %10384
    %v10386 = vlaneseq
    %v10387 = vshrl.u32 %v10386, 7
    %v10388 = vadd.s32 %v10387, 104
    %10389 = vset.pattern.permute.xlu0 %v10388
    %10390 = vperm.xlu0 %10389, %v10379
    %v10391 = vpop.permute.xlu0 %10390
    %v10392 = vperm.slane %v10296, 1
    %v10393 = vlaneseq
    %v10394 = vshrl.u32 %v10393, 7
    %v10395 = vadd.s32 %v10394, 96
    %10396 = vset.pattern.permute.xlu0 %v10395
    %10397 = vperm.xlu0 %10396, %v10392
    %v10398 = vpop.permute.xlu0 %10397
    %v10399 = vlaneseq
    %v10400 = vshrl.u32 %v10399, 7
    %v10401 = vadd.s32 %v10400, 104
    %10402 = vset.pattern.permute.xlu0 %v10401
    %10403 = vperm.xlu0 %10402, %v10392
    %v10404 = vpop.permute.xlu0 %10403
    %v10405 = vperm.slane %v10297, 0
    %v10406 = vlaneseq
    %v10407 = vshrl.u32 %v10406, 7
    %v10408 = vadd.s32 %v10407, 96
    %10409 = vset.pattern.permute.xlu0 %v10408
    %10410 = vperm.xlu0 %10409, %v10405
    %v10411 = vpop.permute.xlu0 %10410
    %v10412 = vlaneseq
    %v10413 = vshrl.u32 %v10412, 7
    %v10414 = vadd.s32 %v10413, 104
    %10415 = vset.pattern.permute.xlu0 %v10414
    %10416 = vperm.xlu0 %10415, %v10405
    %v10417 = vpop.permute.xlu0 %10416
    %v10418 = vperm.slane %v10297, 1
    %v10419 = vlaneseq
    %v10420 = vshrl.u32 %v10419, 7
    %v10421 = vadd.s32 %v10420, 96
    %10422 = vset.pattern.permute.xlu0 %v10421
    %10423 = vperm.xlu0 %10422, %v10418
    %v10424 = vpop.permute.xlu0 %10423
    %v10425 = vlaneseq
    %v10426 = vshrl.u32 %v10425, 7
    %v10427 = vadd.s32 %v10426, 104
    %10428 = vset.pattern.permute.xlu0 %v10427
    %10429 = vperm.xlu0 %10428, %v10418
    %v10430 = vpop.permute.xlu0 %10429
    %v10431 = vperm.slane %v10298, 0
    %v10432 = vlaneseq
    %v10433 = vshrl.u32 %v10432, 7
    %v10434 = vadd.s32 %v10433, 96
    %10435 = vset.pattern.permute.xlu0 %v10434
    %10436 = vperm.xlu0 %10435, %v10431
    %v10437 = vpop.permute.xlu0 %10436
    %v10438 = vlaneseq
    %v10439 = vshrl.u32 %v10438, 7
    %v10440 = vadd.s32 %v10439, 104
    %10441 = vset.pattern.permute.xlu0 %v10440
    %10442 = vperm.xlu0 %10441, %v10431
    %v10443 = vpop.permute.xlu0 %10442
    %v10444 = vperm.slane %v10298, 1
    %v10445 = vlaneseq
    %v10446 = vshrl.u32 %v10445, 7
    %v10447 = vadd.s32 %v10446, 96
    %10448 = vset.pattern.permute.xlu0 %v10447
    %10449 = vperm.xlu0 %10448, %v10444
    %v10450 = vpop.permute.xlu0 %10449
    %v10451 = vlaneseq
    %v10452 = vshrl.u32 %v10451, 7
    %v10453 = vadd.s32 %v10452, 104
    %10454 = vset.pattern.permute.xlu0 %v10453
    %10455 = vperm.xlu0 %10454, %v10444
    %v10456 = vpop.permute.xlu0 %10455
    %v10457 = vperm.slane %v10299, 0
    %v10458 = vlaneseq
    %v10459 = vshrl.u32 %v10458, 7
    %v10460 = vadd.s32 %v10459, 96
    %10461 = vset.pattern.permute.xlu0 %v10460
    %10462 = vperm.xlu0 %10461, %v10457
    %v10463 = vpop.permute.xlu0 %10462
    %v10464 = vlaneseq
    %v10465 = vshrl.u32 %v10464, 7
    %v10466 = vadd.s32 %v10465, 104
    %10467 = vset.pattern.permute.xlu0 %v10466
    %10468 = vperm.xlu0 %10467, %v10457
    %v10469 = vpop.permute.xlu0 %10468
    %v10470 = vperm.slane %v10299, 1
    %v10471 = vlaneseq
    %v10472 = vshrl.u32 %v10471, 7
    %v10473 = vadd.s32 %v10472, 96
    %10474 = vset.pattern.permute.xlu0 %v10473
    %10475 = vperm.xlu0 %10474, %v10470
    %v10476 = vpop.permute.xlu0 %10475
    %v10477 = vlaneseq
    %v10478 = vshrl.u32 %v10477, 7
    %v10479 = vadd.s32 %v10478, 104
    %10480 = vset.pattern.permute.xlu0 %v10479
    %10481 = vperm.xlu0 %10480, %v10470
    %v10482 = vpop.permute.xlu0 %10481
    %v10483 = vperm.slane %v10300, 0
    %v10484 = vlaneseq
    %v10485 = vshrl.u32 %v10484, 7
    %v10486 = vadd.s32 %v10485, 96
    %10487 = vset.pattern.permute.xlu0 %v10486
    %10488 = vperm.xlu0 %10487, %v10483
    %v10489 = vpop.permute.xlu0 %10488
    %v10490 = vlaneseq
    %v10491 = vshrl.u32 %v10490, 7
    %v10492 = vadd.s32 %v10491, 104
    %10493 = vset.pattern.permute.xlu0 %v10492
    %10494 = vperm.xlu0 %10493, %v10483
    %v10495 = vpop.permute.xlu0 %10494
    %v10496 = vperm.slane %v10300, 1
    %v10497 = vlaneseq
    %v10498 = vshrl.u32 %v10497, 7
    %v10499 = vadd.s32 %v10498, 96
    %10500 = vset.pattern.permute.xlu0 %v10499
    %10501 = vperm.xlu0 %10500, %v10496
    %v10502 = vpop.permute.xlu0 %10501
    %v10503 = vlaneseq
    %v10504 = vshrl.u32 %v10503, 7
    %v10505 = vadd.s32 %v10504, 104
    %10506 = vset.pattern.permute.xlu0 %v10505
    %10507 = vperm.xlu0 %10506, %v10496
    %v10508 = vpop.permute.xlu0 %10507
    %v10509 = vrot.slane %v10307, 4
    %v10510 = vsel %vm242, 0.0, %v10509
    %v10512 = vunpack.c.l.s4 1983009808
    %v10513 = vunpack.c.0.s8 %v10512
    %v10514 = vperm.slane %v10307, %v10513
    %v10516 = vunpack.c.l.s4 1983009808
    %v10517 = vunpack.c.0.s8 %v10516
    %v10518 = vperm.slane %v10510, %v10517
    %v10519 = vrot.slane %v10320, 4
    %v10520 = vsel %vm242, 0.0, %v10519
    %v10522 = vunpack.c.l.s4 1983009808
    %v10523 = vunpack.c.0.s8 %v10522
    %v10524 = vperm.slane %v10320, %v10523
    %v10526 = vunpack.c.l.s4 1983009808
    %v10527 = vunpack.c.0.s8 %v10526
    %v10528 = vperm.slane %v10520, %v10527
    %v10529 = vrot.slane %v10524, 4
    %v10530 = vsel %vm242, %v10529, %v10514
    %v10531 = vrot.slane %v10514, 4
    %v10532 = vsel %vm242, %v10524, %v10531
    %v10534 = vunpack.c.l.s4 1934713408
    %v10535 = vunpack.c.0.s8 %v10534
    %v10536 = vperm.slane %v10530, %v10535
    %v10538 = vunpack.c.l.s4 1934713408
    %v10539 = vunpack.c.0.s8 %v10538
    %v10540 = vperm.slane %v10532, %v10539
    %v10541 = vrot.slane %v10528, 4
    %v10542 = vsel %vm242, %v10541, %v10518
    %v10543 = vrot.slane %v10518, 4
    %v10544 = vsel %vm242, %v10528, %v10543
    %v10546 = vunpack.c.l.s4 1934713408
    %v10547 = vunpack.c.0.s8 %v10546
    %v10548 = vperm.slane %v10542, %v10547
    %v10550 = vunpack.c.l.s4 1934713408
    %v10551 = vunpack.c.0.s8 %v10550
    %v10552 = vperm.slane %v10544, %v10551
    %v10553 = vrot.slane %v10536, 4
    %v10554 = vsel %vm242, 0.0, %v10553
    %v10555 = vrot.slane %v10540, 4
    %v10556 = vsel %vm242, 0.0, %v10555
    %v10557 = vrot.slane %v10548, 4
    %v10558 = vsel %vm242, 0.0, %v10557
    %v10559 = vrot.slane %v10552, 4
    %v10560 = vsel %vm242, 0.0, %v10559
    %v10561 = vrot.slane %v10313, 4
    %v10562 = vsel %vm242, 0.0, %v10561
    %v10564 = vunpack.c.l.s4 1983009808
    %v10565 = vunpack.c.0.s8 %v10564
    %v10566 = vperm.slane %v10313, %v10565
    %v10568 = vunpack.c.l.s4 1983009808
    %v10569 = vunpack.c.0.s8 %v10568
    %v10570 = vperm.slane %v10562, %v10569
    %v10571 = vrot.slane %v10326, 4
    %v10572 = vsel %vm242, 0.0, %v10571
    %v10574 = vunpack.c.l.s4 1983009808
    %v10575 = vunpack.c.0.s8 %v10574
    %v10576 = vperm.slane %v10326, %v10575
    %v10578 = vunpack.c.l.s4 1983009808
    %v10579 = vunpack.c.0.s8 %v10578
    %v10580 = vperm.slane %v10572, %v10579
    %v10581 = vrot.slane %v10576, 4
    %v10582 = vsel %vm242, %v10581, %v10566
    %v10583 = vrot.slane %v10566, 4
    %v10584 = vsel %vm242, %v10576, %v10583
    %v10586 = vunpack.c.l.s4 1934713408
    %v10587 = vunpack.c.0.s8 %v10586
    %v10588 = vperm.slane %v10582, %v10587
    %v10590 = vunpack.c.l.s4 1934713408
    %v10591 = vunpack.c.0.s8 %v10590
    %v10592 = vperm.slane %v10584, %v10591
    %v10593 = vrot.slane %v10580, 4
    %v10594 = vsel %vm242, %v10593, %v10570
    %v10595 = vrot.slane %v10570, 4
    %v10596 = vsel %vm242, %v10580, %v10595
    %v10598 = vunpack.c.l.s4 1934713408
    %v10599 = vunpack.c.0.s8 %v10598
    %v10600 = vperm.slane %v10594, %v10599
    %v10602 = vunpack.c.l.s4 1934713408
    %v10603 = vunpack.c.0.s8 %v10602
    %v10604 = vperm.slane %v10596, %v10603
    %v10605 = vrot.slane %v10588, 4
    %v10606 = vsel %vm242, 0.0, %v10605
    %v10607 = vrot.slane %v10592, 4
    %v10608 = vsel %vm242, 0.0, %v10607
    %v10609 = vrot.slane %v10600, 4
    %v10610 = vsel %vm242, 0.0, %v10609
    %v10611 = vrot.slane %v10604, 4
    %v10612 = vsel %vm242, 0.0, %v10611
    %v10613 = vrot.slane %v10333, 4
    %v10614 = vsel %vm242, 0.0, %v10613
    %v10616 = vunpack.c.l.s4 1983009808
    %v10617 = vunpack.c.0.s8 %v10616
    %v10618 = vperm.slane %v10333, %v10617
    %v10620 = vunpack.c.l.s4 1983009808
    %v10621 = vunpack.c.0.s8 %v10620
    %v10622 = vperm.slane %v10614, %v10621
    %v10623 = vrot.slane %v10346, 4
    %v10624 = vsel %vm242, 0.0, %v10623
    %v10626 = vunpack.c.l.s4 1983009808
    %v10627 = vunpack.c.0.s8 %v10626
    %v10628 = vperm.slane %v10346, %v10627
    %v10630 = vunpack.c.l.s4 1983009808
    %v10631 = vunpack.c.0.s8 %v10630
    %v10632 = vperm.slane %v10624, %v10631
    %v10633 = vrot.slane %v10628, 4
    %v10634 = vsel %vm242, %v10633, %v10618
    %v10635 = vrot.slane %v10618, 4
    %v10636 = vsel %vm242, %v10628, %v10635
    %v10638 = vunpack.c.l.s4 1934713408
    %v10639 = vunpack.c.0.s8 %v10638
    %v10640 = vperm.slane %v10634, %v10639
    %v10642 = vunpack.c.l.s4 1934713408
    %v10643 = vunpack.c.0.s8 %v10642
    %v10644 = vperm.slane %v10636, %v10643
    %v10645 = vrot.slane %v10632, 4
    %v10646 = vsel %vm242, %v10645, %v10622
    %v10647 = vrot.slane %v10622, 4
    %v10648 = vsel %vm242, %v10632, %v10647
    %v10650 = vunpack.c.l.s4 1934713408
    %v10651 = vunpack.c.0.s8 %v10650
    %v10652 = vperm.slane %v10646, %v10651
    %v10654 = vunpack.c.l.s4 1934713408
    %v10655 = vunpack.c.0.s8 %v10654
    %v10656 = vperm.slane %v10648, %v10655
    %v10657 = vrot.slane %v10640, 4
    %v10658 = vsel %vm242, 0.0, %v10657
    %v10659 = vrot.slane %v10644, 4
    %v10660 = vsel %vm242, 0.0, %v10659
    %v10661 = vrot.slane %v10652, 4
    %v10662 = vsel %vm242, 0.0, %v10661
    %v10663 = vrot.slane %v10656, 4
    %v10664 = vsel %vm242, 0.0, %v10663
    %v10665 = vrot.slane %v10339, 4
    %v10666 = vsel %vm242, 0.0, %v10665
    %v10668 = vunpack.c.l.s4 1983009808
    %v10669 = vunpack.c.0.s8 %v10668
    %v10670 = vperm.slane %v10339, %v10669
    %v10672 = vunpack.c.l.s4 1983009808
    %v10673 = vunpack.c.0.s8 %v10672
    %v10674 = vperm.slane %v10666, %v10673
    %v10675 = vrot.slane %v10352, 4
    %v10676 = vsel %vm242, 0.0, %v10675
    %v10678 = vunpack.c.l.s4 1983009808
    %v10679 = vunpack.c.0.s8 %v10678
    %v10680 = vperm.slane %v10352, %v10679
    %v10682 = vunpack.c.l.s4 1983009808
    %v10683 = vunpack.c.0.s8 %v10682
    %v10684 = vperm.slane %v10676, %v10683
    %v10685 = vrot.slane %v10680, 4
    %v10686 = vsel %vm242, %v10685, %v10670
    %v10687 = vrot.slane %v10670, 4
    %v10688 = vsel %vm242, %v10680, %v10687
    %v10690 = vunpack.c.l.s4 1934713408
    %v10691 = vunpack.c.0.s8 %v10690
    %v10692 = vperm.slane %v10686, %v10691
    %v10694 = vunpack.c.l.s4 1934713408
    %v10695 = vunpack.c.0.s8 %v10694
    %v10696 = vperm.slane %v10688, %v10695
    %v10697 = vrot.slane %v10684, 4
    %v10698 = vsel %vm242, %v10697, %v10674
    %v10699 = vrot.slane %v10674, 4
    %v10700 = vsel %vm242, %v10684, %v10699
    %v10702 = vunpack.c.l.s4 1934713408
    %v10703 = vunpack.c.0.s8 %v10702
    %v10704 = vperm.slane %v10698, %v10703
    %v10706 = vunpack.c.l.s4 1934713408
    %v10707 = vunpack.c.0.s8 %v10706
    %v10708 = vperm.slane %v10700, %v10707
    %v10709 = vrot.slane %v10692, 4
    %v10710 = vsel %vm242, 0.0, %v10709
    %v10711 = vrot.slane %v10696, 4
    %v10712 = vsel %vm242, 0.0, %v10711
    %v10713 = vrot.slane %v10704, 4
    %v10714 = vsel %vm242, 0.0, %v10713
    %v10715 = vrot.slane %v10708, 4
    %v10716 = vsel %vm242, 0.0, %v10715
    %v10717 = vrot.slane %v10359, 4
    %v10718 = vsel %vm242, 0.0, %v10717
    %v10720 = vunpack.c.l.s4 1983009808
    %v10721 = vunpack.c.0.s8 %v10720
    %v10722 = vperm.slane %v10359, %v10721
    %v10724 = vunpack.c.l.s4 1983009808
    %v10725 = vunpack.c.0.s8 %v10724
    %v10726 = vperm.slane %v10718, %v10725
    %v10727 = vrot.slane %v10372, 4
    %v10728 = vsel %vm242, 0.0, %v10727
    %v10730 = vunpack.c.l.s4 1983009808
    %v10731 = vunpack.c.0.s8 %v10730
    %v10732 = vperm.slane %v10372, %v10731
    %v10734 = vunpack.c.l.s4 1983009808
    %v10735 = vunpack.c.0.s8 %v10734
    %v10736 = vperm.slane %v10728, %v10735
    %v10737 = vrot.slane %v10732, 4
    %v10738 = vsel %vm242, %v10737, %v10722
    %v10739 = vrot.slane %v10722, 4
    %v10740 = vsel %vm242, %v10732, %v10739
    %v10742 = vunpack.c.l.s4 1934713408
    %v10743 = vunpack.c.0.s8 %v10742
    %v10744 = vperm.slane %v10738, %v10743
    %v10746 = vunpack.c.l.s4 1934713408
    %v10747 = vunpack.c.0.s8 %v10746
    %v10748 = vperm.slane %v10740, %v10747
    %v10749 = vrot.slane %v10736, 4
    %v10750 = vsel %vm242, %v10749, %v10726
    %v10751 = vrot.slane %v10726, 4
    %v10752 = vsel %vm242, %v10736, %v10751
    %v10754 = vunpack.c.l.s4 1934713408
    %v10755 = vunpack.c.0.s8 %v10754
    %v10756 = vperm.slane %v10750, %v10755
    %v10758 = vunpack.c.l.s4 1934713408
    %v10759 = vunpack.c.0.s8 %v10758
    %v10760 = vperm.slane %v10752, %v10759
    %v10761 = vrot.slane %v10744, 4
    %v10762 = vsel %vm242, 0.0, %v10761
    %v10763 = vrot.slane %v10748, 4
    %v10764 = vsel %vm242, 0.0, %v10763
    %v10765 = vrot.slane %v10756, 4
    %v10766 = vsel %vm242, 0.0, %v10765
    %v10767 = vrot.slane %v10760, 4
    %v10768 = vsel %vm242, 0.0, %v10767
    %v10769 = vrot.slane %v10365, 4
    %v10770 = vsel %vm242, 0.0, %v10769
    %v10772 = vunpack.c.l.s4 1983009808
    %v10773 = vunpack.c.0.s8 %v10772
    %v10774 = vperm.slane %v10365, %v10773
    %v10776 = vunpack.c.l.s4 1983009808
    %v10777 = vunpack.c.0.s8 %v10776
    %v10778 = vperm.slane %v10770, %v10777
    %v10779 = vrot.slane %v10378, 4
    %v10780 = vsel %vm242, 0.0, %v10779
    %v10782 = vunpack.c.l.s4 1983009808
    %v10783 = vunpack.c.0.s8 %v10782
    %v10784 = vperm.slane %v10378, %v10783
    %v10786 = vunpack.c.l.s4 1983009808
    %v10787 = vunpack.c.0.s8 %v10786
    %v10788 = vperm.slane %v10780, %v10787
    %v10789 = vrot.slane %v10784, 4
    %v10790 = vsel %vm242, %v10789, %v10774
    %v10791 = vrot.slane %v10774, 4
    %v10792 = vsel %vm242, %v10784, %v10791
    %v10794 = vunpack.c.l.s4 1934713408
    %v10795 = vunpack.c.0.s8 %v10794
    %v10796 = vperm.slane %v10790, %v10795
    %v10798 = vunpack.c.l.s4 1934713408
    %v10799 = vunpack.c.0.s8 %v10798
    %v10800 = vperm.slane %v10792, %v10799
    %v10801 = vrot.slane %v10788, 4
    %v10802 = vsel %vm242, %v10801, %v10778
    %v10803 = vrot.slane %v10778, 4
    %v10804 = vsel %vm242, %v10788, %v10803
    %v10806 = vunpack.c.l.s4 1934713408
    %v10807 = vunpack.c.0.s8 %v10806
    %v10808 = vperm.slane %v10802, %v10807
    %v10810 = vunpack.c.l.s4 1934713408
    %v10811 = vunpack.c.0.s8 %v10810
    %v10812 = vperm.slane %v10804, %v10811
    %v10813 = vrot.slane %v10796, 4
    %v10814 = vsel %vm242, 0.0, %v10813
    %v10815 = vrot.slane %v10800, 4
    %v10816 = vsel %vm242, 0.0, %v10815
    %v10817 = vrot.slane %v10808, 4
    %v10818 = vsel %vm242, 0.0, %v10817
    %v10819 = vrot.slane %v10812, 4
    %v10820 = vsel %vm242, 0.0, %v10819
    %v10821 = vrot.slane %v10385, 4
    %v10822 = vsel %vm242, 0.0, %v10821
    %v10824 = vunpack.c.l.s4 1983009808
    %v10825 = vunpack.c.0.s8 %v10824
    %v10826 = vperm.slane %v10385, %v10825
    %v10828 = vunpack.c.l.s4 1983009808
    %v10829 = vunpack.c.0.s8 %v10828
    %v10830 = vperm.slane %v10822, %v10829
    %v10831 = vrot.slane %v10398, 4
    %v10832 = vsel %vm242, 0.0, %v10831
    %v10834 = vunpack.c.l.s4 1983009808
    %v10835 = vunpack.c.0.s8 %v10834
    %v10836 = vperm.slane %v10398, %v10835
    %v10838 = vunpack.c.l.s4 1983009808
    %v10839 = vunpack.c.0.s8 %v10838
    %v10840 = vperm.slane %v10832, %v10839
    %v10841 = vrot.slane %v10836, 4
    %v10842 = vsel %vm242, %v10841, %v10826
    %v10843 = vrot.slane %v10826, 4
    %v10844 = vsel %vm242, %v10836, %v10843
    %v10846 = vunpack.c.l.s4 1934713408
    %v10847 = vunpack.c.0.s8 %v10846
    %v10848 = vperm.slane %v10842, %v10847
    %v10850 = vunpack.c.l.s4 1934713408
    %v10851 = vunpack.c.0.s8 %v10850
    %v10852 = vperm.slane %v10844, %v10851
    %v10853 = vrot.slane %v10840, 4
    %v10854 = vsel %vm242, %v10853, %v10830
    %v10855 = vrot.slane %v10830, 4
    %v10856 = vsel %vm242, %v10840, %v10855
    %v10858 = vunpack.c.l.s4 1934713408
    %v10859 = vunpack.c.0.s8 %v10858
    %v10860 = vperm.slane %v10854, %v10859
    %v10862 = vunpack.c.l.s4 1934713408
    %v10863 = vunpack.c.0.s8 %v10862
    %v10864 = vperm.slane %v10856, %v10863
    %v10865 = vrot.slane %v10848, 4
    %v10866 = vsel %vm242, 0.0, %v10865
    %v10867 = vrot.slane %v10852, 4
    %v10868 = vsel %vm242, 0.0, %v10867
    %v10869 = vrot.slane %v10860, 4
    %v10870 = vsel %vm242, 0.0, %v10869
    %v10871 = vrot.slane %v10864, 4
    %v10872 = vsel %vm242, 0.0, %v10871
    %v10873 = vrot.slane %v10391, 4
    %v10874 = vsel %vm242, 0.0, %v10873
    %v10876 = vunpack.c.l.s4 1983009808
    %v10877 = vunpack.c.0.s8 %v10876
    %v10878 = vperm.slane %v10391, %v10877
    %v10880 = vunpack.c.l.s4 1983009808
    %v10881 = vunpack.c.0.s8 %v10880
    %v10882 = vperm.slane %v10874, %v10881
    %v10883 = vrot.slane %v10404, 4
    %v10884 = vsel %vm242, 0.0, %v10883
    %v10886 = vunpack.c.l.s4 1983009808
    %v10887 = vunpack.c.0.s8 %v10886
    %v10888 = vperm.slane %v10404, %v10887
    %v10890 = vunpack.c.l.s4 1983009808
    %v10891 = vunpack.c.0.s8 %v10890
    %v10892 = vperm.slane %v10884, %v10891
    %v10893 = vrot.slane %v10888, 4
    %v10894 = vsel %vm242, %v10893, %v10878
    %v10895 = vrot.slane %v10878, 4
    %v10896 = vsel %vm242, %v10888, %v10895
    %v10898 = vunpack.c.l.s4 1934713408
    %v10899 = vunpack.c.0.s8 %v10898
    %v10900 = vperm.slane %v10894, %v10899
    %v10902 = vunpack.c.l.s4 1934713408
    %v10903 = vunpack.c.0.s8 %v10902
    %v10904 = vperm.slane %v10896, %v10903
    %v10905 = vrot.slane %v10892, 4
    %v10906 = vsel %vm242, %v10905, %v10882
    %v10907 = vrot.slane %v10882, 4
    %v10908 = vsel %vm242, %v10892, %v10907
    %v10910 = vunpack.c.l.s4 1934713408
    %v10911 = vunpack.c.0.s8 %v10910
    %v10912 = vperm.slane %v10906, %v10911
    %v10914 = vunpack.c.l.s4 1934713408
    %v10915 = vunpack.c.0.s8 %v10914
    %v10916 = vperm.slane %v10908, %v10915
    %v10917 = vrot.slane %v10900, 4
    %v10918 = vsel %vm242, 0.0, %v10917
    %v10919 = vrot.slane %v10904, 4
    %v10920 = vsel %vm242, 0.0, %v10919
    %v10921 = vrot.slane %v10912, 4
    %v10922 = vsel %vm242, 0.0, %v10921
    %v10923 = vrot.slane %v10916, 4
    %v10924 = vsel %vm242, 0.0, %v10923
    %v10925 = vrot.slane %v10411, 4
    %v10926 = vsel %vm242, 0.0, %v10925
    %v10928 = vunpack.c.l.s4 1983009808
    %v10929 = vunpack.c.0.s8 %v10928
    %v10930 = vperm.slane %v10411, %v10929
    %v10932 = vunpack.c.l.s4 1983009808
    %v10933 = vunpack.c.0.s8 %v10932
    %v10934 = vperm.slane %v10926, %v10933
    %v10935 = vrot.slane %v10424, 4
    %v10936 = vsel %vm242, 0.0, %v10935
    %v10938 = vunpack.c.l.s4 1983009808
    %v10939 = vunpack.c.0.s8 %v10938
    %v10940 = vperm.slane %v10424, %v10939
    %v10942 = vunpack.c.l.s4 1983009808
    %v10943 = vunpack.c.0.s8 %v10942
    %v10944 = vperm.slane %v10936, %v10943
    %v10945 = vrot.slane %v10940, 4
    %v10946 = vsel %vm242, %v10945, %v10930
    %v10947 = vrot.slane %v10930, 4
    %v10948 = vsel %vm242, %v10940, %v10947
    %v10950 = vunpack.c.l.s4 1934713408
    %v10951 = vunpack.c.0.s8 %v10950
    %v10952 = vperm.slane %v10946, %v10951
    %v10954 = vunpack.c.l.s4 1934713408
    %v10955 = vunpack.c.0.s8 %v10954
    %v10956 = vperm.slane %v10948, %v10955
    %v10957 = vrot.slane %v10944, 4
    %v10958 = vsel %vm242, %v10957, %v10934
    %v10959 = vrot.slane %v10934, 4
    %v10960 = vsel %vm242, %v10944, %v10959
    %v10962 = vunpack.c.l.s4 1934713408
    %v10963 = vunpack.c.0.s8 %v10962
    %v10964 = vperm.slane %v10958, %v10963
    %v10966 = vunpack.c.l.s4 1934713408
    %v10967 = vunpack.c.0.s8 %v10966
    %v10968 = vperm.slane %v10960, %v10967
    %v10969 = vrot.slane %v10952, 4
    %v10970 = vsel %vm242, 0.0, %v10969
    %v10971 = vrot.slane %v10956, 4
    %v10972 = vsel %vm242, 0.0, %v10971
    %v10973 = vrot.slane %v10964, 4
    %v10974 = vsel %vm242, 0.0, %v10973
    %v10975 = vrot.slane %v10968, 4
    %v10976 = vsel %vm242, 0.0, %v10975
    %v10977 = vrot.slane %v10417, 4
    %v10978 = vsel %vm242, 0.0, %v10977
    %v10980 = vunpack.c.l.s4 1983009808
    %v10981 = vunpack.c.0.s8 %v10980
    %v10982 = vperm.slane %v10417, %v10981
    %v10984 = vunpack.c.l.s4 1983009808
    %v10985 = vunpack.c.0.s8 %v10984
    %v10986 = vperm.slane %v10978, %v10985
    %v10987 = vrot.slane %v10430, 4
    %v10988 = vsel %vm242, 0.0, %v10987
    %v10990 = vunpack.c.l.s4 1983009808
    %v10991 = vunpack.c.0.s8 %v10990
    %v10992 = vperm.slane %v10430, %v10991
    %v10994 = vunpack.c.l.s4 1983009808
    %v10995 = vunpack.c.0.s8 %v10994
    %v10996 = vperm.slane %v10988, %v10995
    %v10997 = vrot.slane %v10992, 4
    %v10998 = vsel %vm242, %v10997, %v10982
    %v10999 = vrot.slane %v10982, 4
    %v11000 = vsel %vm242, %v10992, %v10999
    %v11002 = vunpack.c.l.s4 1934713408
    %v11003 = vunpack.c.0.s8 %v11002
    %v11004 = vperm.slane %v10998, %v11003
    %v11006 = vunpack.c.l.s4 1934713408
    %v11007 = vunpack.c.0.s8 %v11006
    %v11008 = vperm.slane %v11000, %v11007
    %v11009 = vrot.slane %v10996, 4
    %v11010 = vsel %vm242, %v11009, %v10986
    %v11011 = vrot.slane %v10986, 4
    %v11012 = vsel %vm242, %v10996, %v11011
    %v11014 = vunpack.c.l.s4 1934713408
    %v11015 = vunpack.c.0.s8 %v11014
    %v11016 = vperm.slane %v11010, %v11015
    %v11018 = vunpack.c.l.s4 1934713408
    %v11019 = vunpack.c.0.s8 %v11018
    %v11020 = vperm.slane %v11012, %v11019
    %v11021 = vrot.slane %v11004, 4
    %v11022 = vsel %vm242, 0.0, %v11021
    %v11023 = vrot.slane %v11008, 4
    %v11024 = vsel %vm242, 0.0, %v11023
    %v11025 = vrot.slane %v11016, 4
    %v11026 = vsel %vm242, 0.0, %v11025
    %v11027 = vrot.slane %v11020, 4
    %v11028 = vsel %vm242, 0.0, %v11027
    %v11029 = vrot.slane %v10437, 4
    %v11030 = vsel %vm242, 0.0, %v11029
    %v11032 = vunpack.c.l.s4 1983009808
    %v11033 = vunpack.c.0.s8 %v11032
    %v11034 = vperm.slane %v10437, %v11033
    %v11036 = vunpack.c.l.s4 1983009808
    %v11037 = vunpack.c.0.s8 %v11036
    %v11038 = vperm.slane %v11030, %v11037
    %v11039 = vrot.slane %v10450, 4
    %v11040 = vsel %vm242, 0.0, %v11039
    %v11042 = vunpack.c.l.s4 1983009808
    %v11043 = vunpack.c.0.s8 %v11042
    %v11044 = vperm.slane %v10450, %v11043
    %v11046 = vunpack.c.l.s4 1983009808
    %v11047 = vunpack.c.0.s8 %v11046
    %v11048 = vperm.slane %v11040, %v11047
    %v11049 = vrot.slane %v11044, 4
    %v11050 = vsel %vm242, %v11049, %v11034
    %v11051 = vrot.slane %v11034, 4
    %v11052 = vsel %vm242, %v11044, %v11051
    %v11054 = vunpack.c.l.s4 1934713408
    %v11055 = vunpack.c.0.s8 %v11054
    %v11056 = vperm.slane %v11050, %v11055
    %v11058 = vunpack.c.l.s4 1934713408
    %v11059 = vunpack.c.0.s8 %v11058
    %v11060 = vperm.slane %v11052, %v11059
    %v11061 = vrot.slane %v11048, 4
    %v11062 = vsel %vm242, %v11061, %v11038
    %v11063 = vrot.slane %v11038, 4
    %v11064 = vsel %vm242, %v11048, %v11063
    %v11066 = vunpack.c.l.s4 1934713408
    %v11067 = vunpack.c.0.s8 %v11066
    %v11068 = vperm.slane %v11062, %v11067
    %v11070 = vunpack.c.l.s4 1934713408
    %v11071 = vunpack.c.0.s8 %v11070
    %v11072 = vperm.slane %v11064, %v11071
    %v11073 = vrot.slane %v11056, 4
    %v11074 = vsel %vm242, 0.0, %v11073
    %v11075 = vrot.slane %v11060, 4
    %v11076 = vsel %vm242, 0.0, %v11075
    %v11077 = vrot.slane %v11068, 4
    %v11078 = vsel %vm242, 0.0, %v11077
    %v11079 = vrot.slane %v11072, 4
    %v11080 = vsel %vm242, 0.0, %v11079
    %v11081 = vrot.slane %v10443, 4
    %v11082 = vsel %vm242, 0.0, %v11081
    %v11084 = vunpack.c.l.s4 1983009808
    %v11085 = vunpack.c.0.s8 %v11084
    %v11086 = vperm.slane %v10443, %v11085
    %v11088 = vunpack.c.l.s4 1983009808
    %v11089 = vunpack.c.0.s8 %v11088
    %v11090 = vperm.slane %v11082, %v11089
    %v11091 = vrot.slane %v10456, 4
    %v11092 = vsel %vm242, 0.0, %v11091
    %v11094 = vunpack.c.l.s4 1983009808
    %v11095 = vunpack.c.0.s8 %v11094
    %v11096 = vperm.slane %v10456, %v11095
    %v11098 = vunpack.c.l.s4 1983009808
    %v11099 = vunpack.c.0.s8 %v11098
    %v11100 = vperm.slane %v11092, %v11099
    %v11101 = vrot.slane %v11096, 4
    %v11102 = vsel %vm242, %v11101, %v11086
    %v11103 = vrot.slane %v11086, 4
    %v11104 = vsel %vm242, %v11096, %v11103
    %v11106 = vunpack.c.l.s4 1934713408
    %v11107 = vunpack.c.0.s8 %v11106
    %v11108 = vperm.slane %v11102, %v11107
    %v11110 = vunpack.c.l.s4 1934713408
    %v11111 = vunpack.c.0.s8 %v11110
    %v11112 = vperm.slane %v11104, %v11111
    %v11113 = vrot.slane %v11100, 4
    %v11114 = vsel %vm242, %v11113, %v11090
    %v11115 = vrot.slane %v11090, 4
    %v11116 = vsel %vm242, %v11100, %v11115
    %v11118 = vunpack.c.l.s4 1934713408
    %v11119 = vunpack.c.0.s8 %v11118
    %v11120 = vperm.slane %v11114, %v11119
    %v11122 = vunpack.c.l.s4 1934713408
    %v11123 = vunpack.c.0.s8 %v11122
    %v11124 = vperm.slane %v11116, %v11123
    %v11125 = vrot.slane %v11108, 4
    %v11126 = vsel %vm242, 0.0, %v11125
    %v11127 = vrot.slane %v11112, 4
    %v11128 = vsel %vm242, 0.0, %v11127
    %v11129 = vrot.slane %v11120, 4
    %v11130 = vsel %vm242, 0.0, %v11129
    %v11131 = vrot.slane %v11124, 4
    %v11132 = vsel %vm242, 0.0, %v11131
    %v11133 = vrot.slane %v10463, 4
    %v11134 = vsel %vm242, 0.0, %v11133
    %v11136 = vunpack.c.l.s4 1983009808
    %v11137 = vunpack.c.0.s8 %v11136
    %v11138 = vperm.slane %v10463, %v11137
    %v11140 = vunpack.c.l.s4 1983009808
    %v11141 = vunpack.c.0.s8 %v11140
    %v11142 = vperm.slane %v11134, %v11141
    %v11143 = vrot.slane %v10476, 4
    %v11144 = vsel %vm242, 0.0, %v11143
    %v11146 = vunpack.c.l.s4 1983009808
    %v11147 = vunpack.c.0.s8 %v11146
    %v11148 = vperm.slane %v10476, %v11147
    %v11150 = vunpack.c.l.s4 1983009808
    %v11151 = vunpack.c.0.s8 %v11150
    %v11152 = vperm.slane %v11144, %v11151
    %v11153 = vrot.slane %v11148, 4
    %v11154 = vsel %vm242, %v11153, %v11138
    %v11155 = vrot.slane %v11138, 4
    %v11156 = vsel %vm242, %v11148, %v11155
    %v11158 = vunpack.c.l.s4 1934713408
    %v11159 = vunpack.c.0.s8 %v11158
    %v11160 = vperm.slane %v11154, %v11159
    %v11162 = vunpack.c.l.s4 1934713408
    %v11163 = vunpack.c.0.s8 %v11162
    %v11164 = vperm.slane %v11156, %v11163
    %v11165 = vrot.slane %v11152, 4
    %v11166 = vsel %vm242, %v11165, %v11142
    %v11167 = vrot.slane %v11142, 4
    %v11168 = vsel %vm242, %v11152, %v11167
    %v11170 = vunpack.c.l.s4 1934713408
    %v11171 = vunpack.c.0.s8 %v11170
    %v11172 = vperm.slane %v11166, %v11171
    %v11174 = vunpack.c.l.s4 1934713408
    %v11175 = vunpack.c.0.s8 %v11174
    %v11176 = vperm.slane %v11168, %v11175
    %v11177 = vrot.slane %v11160, 4
    %v11178 = vsel %vm242, 0.0, %v11177
    %v11179 = vrot.slane %v11164, 4
    %v11180 = vsel %vm242, 0.0, %v11179
    %v11181 = vrot.slane %v11172, 4
    %v11182 = vsel %vm242, 0.0, %v11181
    %v11183 = vrot.slane %v11176, 4
    %v11184 = vsel %vm242, 0.0, %v11183
    %v11185 = vrot.slane %v10469, 4
    %v11186 = vsel %vm242, 0.0, %v11185
    %v11188 = vunpack.c.l.s4 1983009808
    %v11189 = vunpack.c.0.s8 %v11188
    %v11190 = vperm.slane %v10469, %v11189
    %v11192 = vunpack.c.l.s4 1983009808
    %v11193 = vunpack.c.0.s8 %v11192
    %v11194 = vperm.slane %v11186, %v11193
    %v11195 = vrot.slane %v10482, 4
    %v11196 = vsel %vm242, 0.0, %v11195
    %v11198 = vunpack.c.l.s4 1983009808
    %v11199 = vunpack.c.0.s8 %v11198
    %v11200 = vperm.slane %v10482, %v11199
    %v11202 = vunpack.c.l.s4 1983009808
    %v11203 = vunpack.c.0.s8 %v11202
    %v11204 = vperm.slane %v11196, %v11203
    %v11205 = vrot.slane %v11200, 4
    %v11206 = vsel %vm242, %v11205, %v11190
    %v11207 = vrot.slane %v11190, 4
    %v11208 = vsel %vm242, %v11200, %v11207
    %v11210 = vunpack.c.l.s4 1934713408
    %v11211 = vunpack.c.0.s8 %v11210
    %v11212 = vperm.slane %v11206, %v11211
    %v11214 = vunpack.c.l.s4 1934713408
    %v11215 = vunpack.c.0.s8 %v11214
    %v11216 = vperm.slane %v11208, %v11215
    %v11217 = vrot.slane %v11204, 4
    %v11218 = vsel %vm242, %v11217, %v11194
    %v11219 = vrot.slane %v11194, 4
    %v11220 = vsel %vm242, %v11204, %v11219
    %v11222 = vunpack.c.l.s4 1934713408
    %v11223 = vunpack.c.0.s8 %v11222
    %v11224 = vperm.slane %v11218, %v11223
    %v11226 = vunpack.c.l.s4 1934713408
    %v11227 = vunpack.c.0.s8 %v11226
    %v11228 = vperm.slane %v11220, %v11227
    %v11229 = vrot.slane %v11212, 4
    %v11230 = vsel %vm242, 0.0, %v11229
    %v11231 = vrot.slane %v11216, 4
    %v11232 = vsel %vm242, 0.0, %v11231
    %v11233 = vrot.slane %v11224, 4
    %v11234 = vsel %vm242, 0.0, %v11233
    %v11235 = vrot.slane %v11228, 4
    %v11236 = vsel %vm242, 0.0, %v11235
    %v11237 = vrot.slane %v10489, 4
    %v11238 = vsel %vm242, 0.0, %v11237
    %v11240 = vunpack.c.l.s4 1983009808
    %v11241 = vunpack.c.0.s8 %v11240
    %v11242 = vperm.slane %v10489, %v11241
    %v11244 = vunpack.c.l.s4 1983009808
    %v11245 = vunpack.c.0.s8 %v11244
    %v11246 = vperm.slane %v11238, %v11245
    %v11247 = vrot.slane %v10502, 4
    %v11248 = vsel %vm242, 0.0, %v11247
    %v11250 = vunpack.c.l.s4 1983009808
    %v11251 = vunpack.c.0.s8 %v11250
    %v11252 = vperm.slane %v10502, %v11251
    %v11254 = vunpack.c.l.s4 1983009808
    %v11255 = vunpack.c.0.s8 %v11254
    %v11256 = vperm.slane %v11248, %v11255
    %v11257 = vrot.slane %v11252, 4
    %v11258 = vsel %vm242, %v11257, %v11242
    %v11259 = vrot.slane %v11242, 4
    %v11260 = vsel %vm242, %v11252, %v11259
    %v11262 = vunpack.c.l.s4 1934713408
    %v11263 = vunpack.c.0.s8 %v11262
    %v11264 = vperm.slane %v11258, %v11263
    %v11266 = vunpack.c.l.s4 1934713408
    %v11267 = vunpack.c.0.s8 %v11266
    %v11268 = vperm.slane %v11260, %v11267
    %v11269 = vrot.slane %v11256, 4
    %v11270 = vsel %vm242, %v11269, %v11246
    %v11271 = vrot.slane %v11246, 4
    %v11272 = vsel %vm242, %v11256, %v11271
    %v11274 = vunpack.c.l.s4 1934713408
    %v11275 = vunpack.c.0.s8 %v11274
    %v11276 = vperm.slane %v11270, %v11275
    %v11278 = vunpack.c.l.s4 1934713408
    %v11279 = vunpack.c.0.s8 %v11278
    %v11280 = vperm.slane %v11272, %v11279
    %v11281 = vrot.slane %v11264, 4
    %v11282 = vsel %vm242, 0.0, %v11281
    %v11283 = vrot.slane %v11268, 4
    %v11284 = vsel %vm242, 0.0, %v11283
    %v11285 = vrot.slane %v11276, 4
    %v11286 = vsel %vm242, 0.0, %v11285
    %v11287 = vrot.slane %v11280, 4
    %v11288 = vsel %vm242, 0.0, %v11287
    %v11289 = vrot.slane %v10495, 4
    %v11290 = vsel %vm242, 0.0, %v11289
    %v11292 = vunpack.c.l.s4 1983009808
    %v11293 = vunpack.c.0.s8 %v11292
    %v11294 = vperm.slane %v10495, %v11293
    %v11296 = vunpack.c.l.s4 1983009808
    %v11297 = vunpack.c.0.s8 %v11296
    %v11298 = vperm.slane %v11290, %v11297
    %v11299 = vrot.slane %v10508, 4
    %v11300 = vsel %vm242, 0.0, %v11299
    %v11302 = vunpack.c.l.s4 1983009808
    %v11303 = vunpack.c.0.s8 %v11302
    %v11304 = vperm.slane %v10508, %v11303
    %v11306 = vunpack.c.l.s4 1983009808
    %v11307 = vunpack.c.0.s8 %v11306
    %v11308 = vperm.slane %v11300, %v11307
    %v11309 = vrot.slane %v11304, 4
    %v11310 = vsel %vm242, %v11309, %v11294
    %v11311 = vrot.slane %v11294, 4
    %v11312 = vsel %vm242, %v11304, %v11311
    %v11314 = vunpack.c.l.s4 1934713408
    %v11315 = vunpack.c.0.s8 %v11314
    %v11316 = vperm.slane %v11310, %v11315
    %v11318 = vunpack.c.l.s4 1934713408
    %v11319 = vunpack.c.0.s8 %v11318
    %v11320 = vperm.slane %v11312, %v11319
    %v11321 = vrot.slane %v11308, 4
    %v11322 = vsel %vm242, %v11321, %v11298
    %v11323 = vrot.slane %v11298, 4
    %v11324 = vsel %vm242, %v11308, %v11323
    %v11326 = vunpack.c.l.s4 1934713408
    %v11327 = vunpack.c.0.s8 %v11326
    %v11328 = vperm.slane %v11322, %v11327
    %v11330 = vunpack.c.l.s4 1934713408
    %v11331 = vunpack.c.0.s8 %v11330
    %v11332 = vperm.slane %v11324, %v11331
    %v11333 = vrot.slane %v11316, 4
    %v11334 = vsel %vm242, 0.0, %v11333
    %v11335 = vrot.slane %v11320, 4
    %v11336 = vsel %vm242, 0.0, %v11335
    %v11337 = vrot.slane %v11328, 4
    %v11338 = vsel %vm242, 0.0, %v11337
    %v11339 = vrot.slane %v11332, 4
    %v11340 = vsel %vm242, 0.0, %v11339
    %11349 = vrot.lane.b32.xlu0 %v10554, 2
    %v11350 = vpop.permute.xlu0 %11349
    %11351 = vrot.lane.b32.xlu0 %v10658, 2
    %v11352 = vpop.permute.xlu0 %11351
    %11353 = vrot.lane.b32.xlu0 %v10762, 2
    %v11354 = vpop.permute.xlu0 %11353
    %11355 = vrot.lane.b32.xlu0 %v10866, 2
    %v11356 = vpop.permute.xlu0 %11355
    %11357 = vrot.lane.b32.xlu0 %v10970, 2
    %v11358 = vpop.permute.xlu0 %11357
    %11359 = vrot.lane.b32.xlu0 %v11074, 2
    %v11360 = vpop.permute.xlu0 %11359
    %11361 = vrot.lane.b32.xlu0 %v11178, 2
    %v11362 = vpop.permute.xlu0 %11361
    %11363 = vrot.lane.b32.xlu0 %v11282, 2
    %v11364 = vpop.permute.xlu0 %11363
    %11381 = vrot.lane.b32.xlu0 %v10540, 4
    %v11382 = vpop.permute.xlu0 %11381
    %11383 = vrot.lane.b32.xlu0 %v10644, 4
    %v11384 = vpop.permute.xlu0 %11383
    %11385 = vrot.lane.b32.xlu0 %v10748, 4
    %v11386 = vpop.permute.xlu0 %11385
    %11387 = vrot.lane.b32.xlu0 %v10852, 4
    %v11388 = vpop.permute.xlu0 %11387
    %11389 = vrot.lane.b32.xlu0 %v10956, 4
    %v11390 = vpop.permute.xlu0 %11389
    %11391 = vrot.lane.b32.xlu0 %v11060, 4
    %v11392 = vpop.permute.xlu0 %11391
    %11393 = vrot.lane.b32.xlu0 %v11164, 4
    %v11394 = vpop.permute.xlu0 %11393
    %11395 = vrot.lane.b32.xlu0 %v11268, 4
    %v11396 = vpop.permute.xlu0 %11395
    %11413 = vrot.lane.b32.xlu0 %v10556, 6
    %v11414 = vpop.permute.xlu0 %11413
    %11415 = vrot.lane.b32.xlu0 %v10660, 6
    %v11416 = vpop.permute.xlu0 %11415
    %11417 = vrot.lane.b32.xlu0 %v10764, 6
    %v11418 = vpop.permute.xlu0 %11417
    %11419 = vrot.lane.b32.xlu0 %v10868, 6
    %v11420 = vpop.permute.xlu0 %11419
    %11421 = vrot.lane.b32.xlu0 %v10972, 6
    %v11422 = vpop.permute.xlu0 %11421
    %11423 = vrot.lane.b32.xlu0 %v11076, 6
    %v11424 = vpop.permute.xlu0 %11423
    %11425 = vrot.lane.b32.xlu0 %v11180, 6
    %v11426 = vpop.permute.xlu0 %11425
    %11427 = vrot.lane.b32.xlu0 %v11284, 6
    %v11428 = vpop.permute.xlu0 %11427
    %11445 = vrot.lane.b32.xlu0 %v10548, 8
    %v11446 = vpop.permute.xlu0 %11445
    %11447 = vrot.lane.b32.xlu0 %v10652, 8
    %v11448 = vpop.permute.xlu0 %11447
    %11449 = vrot.lane.b32.xlu0 %v10756, 8
    %v11450 = vpop.permute.xlu0 %11449
    %11451 = vrot.lane.b32.xlu0 %v10860, 8
    %v11452 = vpop.permute.xlu0 %11451
    %11453 = vrot.lane.b32.xlu0 %v10964, 8
    %v11454 = vpop.permute.xlu0 %11453
    %11455 = vrot.lane.b32.xlu0 %v11068, 8
    %v11456 = vpop.permute.xlu0 %11455
    %11457 = vrot.lane.b32.xlu0 %v11172, 8
    %v11458 = vpop.permute.xlu0 %11457
    %11459 = vrot.lane.b32.xlu0 %v11276, 8
    %v11460 = vpop.permute.xlu0 %11459
    %11477 = vrot.lane.b32.xlu0 %v10558, 10
    %v11478 = vpop.permute.xlu0 %11477
    %11479 = vrot.lane.b32.xlu0 %v10662, 10
    %v11480 = vpop.permute.xlu0 %11479
    %11481 = vrot.lane.b32.xlu0 %v10766, 10
    %v11482 = vpop.permute.xlu0 %11481
    %11483 = vrot.lane.b32.xlu0 %v10870, 10
    %v11484 = vpop.permute.xlu0 %11483
    %11485 = vrot.lane.b32.xlu0 %v10974, 10
    %v11486 = vpop.permute.xlu0 %11485
    %11487 = vrot.lane.b32.xlu0 %v11078, 10
    %v11488 = vpop.permute.xlu0 %11487
    %11489 = vrot.lane.b32.xlu0 %v11182, 10
    %v11490 = vpop.permute.xlu0 %11489
    %11491 = vrot.lane.b32.xlu0 %v11286, 10
    %v11492 = vpop.permute.xlu0 %11491
    %11509 = vrot.lane.b32.xlu0 %v10552, 12
    %v11510 = vpop.permute.xlu0 %11509
    %11511 = vrot.lane.b32.xlu0 %v10656, 12
    %v11512 = vpop.permute.xlu0 %11511
    %11513 = vrot.lane.b32.xlu0 %v10760, 12
    %v11514 = vpop.permute.xlu0 %11513
    %11515 = vrot.lane.b32.xlu0 %v10864, 12
    %v11516 = vpop.permute.xlu0 %11515
    %11517 = vrot.lane.b32.xlu0 %v10968, 12
    %v11518 = vpop.permute.xlu0 %11517
    %11519 = vrot.lane.b32.xlu0 %v11072, 12
    %v11520 = vpop.permute.xlu0 %11519
    %11521 = vrot.lane.b32.xlu0 %v11176, 12
    %v11522 = vpop.permute.xlu0 %11521
    %11523 = vrot.lane.b32.xlu0 %v11280, 12
    %v11524 = vpop.permute.xlu0 %11523
    %11541 = vrot.lane.b32.xlu0 %v10560, 14
    %v11542 = vpop.permute.xlu0 %11541
    %11543 = vrot.lane.b32.xlu0 %v10664, 14
    %v11544 = vpop.permute.xlu0 %11543
    %11545 = vrot.lane.b32.xlu0 %v10768, 14
    %v11546 = vpop.permute.xlu0 %11545
    %11547 = vrot.lane.b32.xlu0 %v10872, 14
    %v11548 = vpop.permute.xlu0 %11547
    %11549 = vrot.lane.b32.xlu0 %v10976, 14
    %v11550 = vpop.permute.xlu0 %11549
    %11551 = vrot.lane.b32.xlu0 %v11080, 14
    %v11552 = vpop.permute.xlu0 %11551
    %11553 = vrot.lane.b32.xlu0 %v11184, 14
    %v11554 = vpop.permute.xlu0 %11553
    %11555 = vrot.lane.b32.xlu0 %v11288, 14
    %v11556 = vpop.permute.xlu0 %11555
    %11573 = vrot.lane.b32.xlu0 %v10588, 16
    %v11574 = vpop.permute.xlu0 %11573
    %11575 = vrot.lane.b32.xlu0 %v10692, 16
    %v11576 = vpop.permute.xlu0 %11575
    %11577 = vrot.lane.b32.xlu0 %v10796, 16
    %v11578 = vpop.permute.xlu0 %11577
    %11579 = vrot.lane.b32.xlu0 %v10900, 16
    %v11580 = vpop.permute.xlu0 %11579
    %11581 = vrot.lane.b32.xlu0 %v11004, 16
    %v11582 = vpop.permute.xlu0 %11581
    %11583 = vrot.lane.b32.xlu0 %v11108, 16
    %v11584 = vpop.permute.xlu0 %11583
    %11585 = vrot.lane.b32.xlu0 %v11212, 16
    %v11586 = vpop.permute.xlu0 %11585
    %11587 = vrot.lane.b32.xlu0 %v11316, 16
    %v11588 = vpop.permute.xlu0 %11587
    %11605 = vrot.lane.b32.xlu0 %v10606, 18
    %v11606 = vpop.permute.xlu0 %11605
    %11607 = vrot.lane.b32.xlu0 %v10710, 18
    %v11608 = vpop.permute.xlu0 %11607
    %11609 = vrot.lane.b32.xlu0 %v10814, 18
    %v11610 = vpop.permute.xlu0 %11609
    %11611 = vrot.lane.b32.xlu0 %v10918, 18
    %v11612 = vpop.permute.xlu0 %11611
    %11613 = vrot.lane.b32.xlu0 %v11022, 18
    %v11614 = vpop.permute.xlu0 %11613
    %11615 = vrot.lane.b32.xlu0 %v11126, 18
    %v11616 = vpop.permute.xlu0 %11615
    %11617 = vrot.lane.b32.xlu0 %v11230, 18
    %v11618 = vpop.permute.xlu0 %11617
    %11619 = vrot.lane.b32.xlu0 %v11334, 18
    %v11620 = vpop.permute.xlu0 %11619
    %11637 = vrot.lane.b32.xlu0 %v10592, 20
    %v11638 = vpop.permute.xlu0 %11637
    %11639 = vrot.lane.b32.xlu0 %v10696, 20
    %v11640 = vpop.permute.xlu0 %11639
    %11641 = vrot.lane.b32.xlu0 %v10800, 20
    %v11642 = vpop.permute.xlu0 %11641
    %11643 = vrot.lane.b32.xlu0 %v10904, 20
    %v11644 = vpop.permute.xlu0 %11643
    %11645 = vrot.lane.b32.xlu0 %v11008, 20
    %v11646 = vpop.permute.xlu0 %11645
    %11647 = vrot.lane.b32.xlu0 %v11112, 20
    %v11648 = vpop.permute.xlu0 %11647
    %11649 = vrot.lane.b32.xlu0 %v11216, 20
    %v11650 = vpop.permute.xlu0 %11649
    %11651 = vrot.lane.b32.xlu0 %v11320, 20
    %v11652 = vpop.permute.xlu0 %11651
    %11669 = vrot.lane.b32.xlu0 %v10608, 22
    %v11670 = vpop.permute.xlu0 %11669
    %11671 = vrot.lane.b32.xlu0 %v10712, 22
    %v11672 = vpop.permute.xlu0 %11671
    %11673 = vrot.lane.b32.xlu0 %v10816, 22
    %v11674 = vpop.permute.xlu0 %11673
    %11675 = vrot.lane.b32.xlu0 %v10920, 22
    %v11676 = vpop.permute.xlu0 %11675
    %11677 = vrot.lane.b32.xlu0 %v11024, 22
    %v11678 = vpop.permute.xlu0 %11677
    %11679 = vrot.lane.b32.xlu0 %v11128, 22
    %v11680 = vpop.permute.xlu0 %11679
    %11681 = vrot.lane.b32.xlu0 %v11232, 22
    %v11682 = vpop.permute.xlu0 %11681
    %11683 = vrot.lane.b32.xlu0 %v11336, 22
    %v11684 = vpop.permute.xlu0 %11683
    %11701 = vrot.lane.b32.xlu0 %v10600, 24
    %v11702 = vpop.permute.xlu0 %11701
    %11703 = vrot.lane.b32.xlu0 %v10704, 24
    %v11704 = vpop.permute.xlu0 %11703
    %11705 = vrot.lane.b32.xlu0 %v10808, 24
    %v11706 = vpop.permute.xlu0 %11705
    %11707 = vrot.lane.b32.xlu0 %v10912, 24
    %v11708 = vpop.permute.xlu0 %11707
    %11709 = vrot.lane.b32.xlu0 %v11016, 24
    %v11710 = vpop.permute.xlu0 %11709
    %11711 = vrot.lane.b32.xlu0 %v11120, 24
    %v11712 = vpop.permute.xlu0 %11711
    %11713 = vrot.lane.b32.xlu0 %v11224, 24
    %v11714 = vpop.permute.xlu0 %11713
    %11715 = vrot.lane.b32.xlu0 %v11328, 24
    %v11716 = vpop.permute.xlu0 %11715
    %11733 = vrot.lane.b32.xlu0 %v10610, 26
    %v11734 = vpop.permute.xlu0 %11733
    %11735 = vrot.lane.b32.xlu0 %v10714, 26
    %v11736 = vpop.permute.xlu0 %11735
    %11737 = vrot.lane.b32.xlu0 %v10818, 26
    %v11738 = vpop.permute.xlu0 %11737
    %11739 = vrot.lane.b32.xlu0 %v10922, 26
    %v11740 = vpop.permute.xlu0 %11739
    %11741 = vrot.lane.b32.xlu0 %v11026, 26
    %v11742 = vpop.permute.xlu0 %11741
    %11743 = vrot.lane.b32.xlu0 %v11130, 26
    %v11744 = vpop.permute.xlu0 %11743
    %11745 = vrot.lane.b32.xlu0 %v11234, 26
    %v11746 = vpop.permute.xlu0 %11745
    %11747 = vrot.lane.b32.xlu0 %v11338, 26
    %v11748 = vpop.permute.xlu0 %11747
    %11765 = vrot.lane.b32.xlu0 %v10604, 28
    %v11766 = vpop.permute.xlu0 %11765
    %11767 = vrot.lane.b32.xlu0 %v10708, 28
    %v11768 = vpop.permute.xlu0 %11767
    %11769 = vrot.lane.b32.xlu0 %v10812, 28
    %v11770 = vpop.permute.xlu0 %11769
    %11771 = vrot.lane.b32.xlu0 %v10916, 28
    %v11772 = vpop.permute.xlu0 %11771
    %11773 = vrot.lane.b32.xlu0 %v11020, 28
    %v11774 = vpop.permute.xlu0 %11773
    %11775 = vrot.lane.b32.xlu0 %v11124, 28
    %v11776 = vpop.permute.xlu0 %11775
    %11777 = vrot.lane.b32.xlu0 %v11228, 28
    %v11778 = vpop.permute.xlu0 %11777
    %11779 = vrot.lane.b32.xlu0 %v11332, 28
    %v11780 = vpop.permute.xlu0 %11779
    %11797 = vrot.lane.b32.xlu0 %v10612, 30
    %v11798 = vpop.permute.xlu0 %11797
    %11799 = vrot.lane.b32.xlu0 %v10716, 30
    %v11800 = vpop.permute.xlu0 %11799
    %11801 = vrot.lane.b32.xlu0 %v10820, 30
    %v11802 = vpop.permute.xlu0 %11801
    %11803 = vrot.lane.b32.xlu0 %v10924, 30
    %v11804 = vpop.permute.xlu0 %11803
    %11805 = vrot.lane.b32.xlu0 %v11028, 30
    %v11806 = vpop.permute.xlu0 %11805
    %11807 = vrot.lane.b32.xlu0 %v11132, 30
    %v11808 = vpop.permute.xlu0 %11807
    %11809 = vrot.lane.b32.xlu0 %v11236, 30
    %v11810 = vpop.permute.xlu0 %11809
    %11811 = vrot.lane.b32.xlu0 %v11340, 30
    %v11812 = vpop.permute.xlu0 %11811
    %v11821 = vsel %vm1554, %v10536, %v11350
    %v11822 = vsel %vm1554, %v10640, %v11352
    %v11823 = vsel %vm1554, %v10744, %v11354
    %v11824 = vsel %vm1554, %v10848, %v11356
    %v11825 = vsel %vm1554, %v10952, %v11358
    %v11826 = vsel %vm1554, %v11056, %v11360
    %v11827 = vsel %vm1554, %v11160, %v11362
    %v11828 = vsel %vm1554, %v11264, %v11364
    %v11829 = vsel %vm1563, %v11821, %v11382
    %v11830 = vsel %vm1563, %v11822, %v11384
    %v11831 = vsel %vm1563, %v11823, %v11386
    %v11832 = vsel %vm1563, %v11824, %v11388
    %v11833 = vsel %vm1563, %v11825, %v11390
    %v11834 = vsel %vm1563, %v11826, %v11392
    %v11835 = vsel %vm1563, %v11827, %v11394
    %v11836 = vsel %vm1563, %v11828, %v11396
    %v11837 = vsel %vm1572, %v11829, %v11414
    %v11838 = vsel %vm1572, %v11830, %v11416
    %v11839 = vsel %vm1572, %v11831, %v11418
    %v11840 = vsel %vm1572, %v11832, %v11420
    %v11841 = vsel %vm1572, %v11833, %v11422
    %v11842 = vsel %vm1572, %v11834, %v11424
    %v11843 = vsel %vm1572, %v11835, %v11426
    %v11844 = vsel %vm1572, %v11836, %v11428
    %v11845 = vsel %vm1581, %v11837, %v11446
    %v11846 = vsel %vm1581, %v11838, %v11448
    %v11847 = vsel %vm1581, %v11839, %v11450
    %v11848 = vsel %vm1581, %v11840, %v11452
    %v11849 = vsel %vm1581, %v11841, %v11454
    %v11850 = vsel %vm1581, %v11842, %v11456
    %v11851 = vsel %vm1581, %v11843, %v11458
    %v11852 = vsel %vm1581, %v11844, %v11460
    %v11853 = vsel %vm1590, %v11845, %v11478
    %v11854 = vsel %vm1590, %v11846, %v11480
    %v11855 = vsel %vm1590, %v11847, %v11482
    %v11856 = vsel %vm1590, %v11848, %v11484
    %v11857 = vsel %vm1590, %v11849, %v11486
    %v11858 = vsel %vm1590, %v11850, %v11488
    %v11859 = vsel %vm1590, %v11851, %v11490
    %v11860 = vsel %vm1590, %v11852, %v11492
    %v11861 = vsel %vm1599, %v11853, %v11510
    %v11862 = vsel %vm1599, %v11854, %v11512
    %v11863 = vsel %vm1599, %v11855, %v11514
    %v11864 = vsel %vm1599, %v11856, %v11516
    %v11865 = vsel %vm1599, %v11857, %v11518
    %v11866 = vsel %vm1599, %v11858, %v11520
    %v11867 = vsel %vm1599, %v11859, %v11522
    %v11868 = vsel %vm1599, %v11860, %v11524
    %v11869 = vsel %vm1608, %v11861, %v11542
    %v11870 = vsel %vm1608, %v11862, %v11544
    %v11871 = vsel %vm1608, %v11863, %v11546
    %v11872 = vsel %vm1608, %v11864, %v11548
    %v11873 = vsel %vm1608, %v11865, %v11550
    %v11874 = vsel %vm1608, %v11866, %v11552
    %v11875 = vsel %vm1608, %v11867, %v11554
    %v11876 = vsel %vm1608, %v11868, %v11556
    %v11877 = vsel %vm1617, %v11869, %v11574
    %v11878 = vsel %vm1617, %v11870, %v11576
    %v11879 = vsel %vm1617, %v11871, %v11578
    %v11880 = vsel %vm1617, %v11872, %v11580
    %v11881 = vsel %vm1617, %v11873, %v11582
    %v11882 = vsel %vm1617, %v11874, %v11584
    %v11883 = vsel %vm1617, %v11875, %v11586
    %v11884 = vsel %vm1617, %v11876, %v11588
    %v11885 = vsel %vm1626, %v11877, %v11606
    %v11886 = vsel %vm1626, %v11878, %v11608
    %v11887 = vsel %vm1626, %v11879, %v11610
    %v11888 = vsel %vm1626, %v11880, %v11612
    %v11889 = vsel %vm1626, %v11881, %v11614
    %v11890 = vsel %vm1626, %v11882, %v11616
    %v11891 = vsel %vm1626, %v11883, %v11618
    %v11892 = vsel %vm1626, %v11884, %v11620
    %v11893 = vsel %vm1635, %v11885, %v11638
    %v11894 = vsel %vm1635, %v11886, %v11640
    %v11895 = vsel %vm1635, %v11887, %v11642
    %v11896 = vsel %vm1635, %v11888, %v11644
    %v11897 = vsel %vm1635, %v11889, %v11646
    %v11898 = vsel %vm1635, %v11890, %v11648
    %v11899 = vsel %vm1635, %v11891, %v11650
    %v11900 = vsel %vm1635, %v11892, %v11652
    %v11901 = vsel %vm1644, %v11893, %v11670
    %v11902 = vsel %vm1644, %v11894, %v11672
    %v11903 = vsel %vm1644, %v11895, %v11674
    %v11904 = vsel %vm1644, %v11896, %v11676
    %v11905 = vsel %vm1644, %v11897, %v11678
    %v11906 = vsel %vm1644, %v11898, %v11680
    %v11907 = vsel %vm1644, %v11899, %v11682
    %v11908 = vsel %vm1644, %v11900, %v11684
    %v11909 = vsel %vm1653, %v11901, %v11702
    %v11910 = vsel %vm1653, %v11902, %v11704
    %v11911 = vsel %vm1653, %v11903, %v11706
    %v11912 = vsel %vm1653, %v11904, %v11708
    %v11913 = vsel %vm1653, %v11905, %v11710
    %v11914 = vsel %vm1653, %v11906, %v11712
    %v11915 = vsel %vm1653, %v11907, %v11714
    %v11916 = vsel %vm1653, %v11908, %v11716
    %v11917 = vsel %vm1662, %v11909, %v11734
    %v11918 = vsel %vm1662, %v11910, %v11736
    %v11919 = vsel %vm1662, %v11911, %v11738
    %v11920 = vsel %vm1662, %v11912, %v11740
    %v11921 = vsel %vm1662, %v11913, %v11742
    %v11922 = vsel %vm1662, %v11914, %v11744
    %v11923 = vsel %vm1662, %v11915, %v11746
    %v11924 = vsel %vm1662, %v11916, %v11748
    %v11925 = vsel %vm1671, %v11917, %v11766
    %v11926 = vsel %vm1671, %v11918, %v11768
    %v11927 = vsel %vm1671, %v11919, %v11770
    %v11928 = vsel %vm1671, %v11920, %v11772
    %v11929 = vsel %vm1671, %v11921, %v11774
    %v11930 = vsel %vm1671, %v11922, %v11776
    %v11931 = vsel %vm1671, %v11923, %v11778
    %v11932 = vsel %vm1671, %v11924, %v11780
    %v11933 = vsel %vm1680, %v11925, %v11798
    %v11934 = vsel %vm1680, %v11926, %v11800
    %v11935 = vsel %vm1680, %v11927, %v11802
    %v11936 = vsel %vm1680, %v11928, %v11804
    %v11937 = vsel %vm1680, %v11929, %v11806
    %v11938 = vsel %vm1680, %v11930, %v11808
    %v11939 = vsel %vm1680, %v11931, %v11810
    %v11940 = vsel %vm1680, %v11932, %v11812
    %11941 = vst.msk [vmem:[#allocation5 + $0x6] sm:$0x3] %vm1689, %v11933
    %11942 = vst.msk [vmem:[#allocation5 + $0xe] sm:$0x3] %vm1689, %v11934
    %11943 = vst.msk [vmem:[#allocation5 + $0x16] sm:$0x3] %vm1689, %v11935
    %11944 = vst.msk [vmem:[#allocation5 + $0x1e] sm:$0x3] %vm1689, %v11936
    %11945 = vst.msk [vmem:[#allocation5 + $0x26] sm:$0x3] %vm1689, %v11937
    %11946 = vst.msk [vmem:[#allocation5 + $0x2e] sm:$0x3] %vm1689, %v11938
    %11947 = vst.msk [vmem:[#allocation5 + $0x36] sm:$0x3] %vm1689, %v11939
    %11948 = vst.msk [vmem:[#allocation5 + $0x3e] sm:$0x3] %vm1689, %v11940
    %11957 = vrot.lane.b32.xlu0 %v11933, 32
    %v11958 = vpop.permute.xlu0 %11957
    %11959 = vrot.lane.b32.xlu0 %v11934, 32
    %v11960 = vpop.permute.xlu0 %11959
    %11961 = vrot.lane.b32.xlu0 %v11935, 32
    %v11962 = vpop.permute.xlu0 %11961
    %11963 = vrot.lane.b32.xlu0 %v11936, 32
    %v11964 = vpop.permute.xlu0 %11963
    %11965 = vrot.lane.b32.xlu0 %v11937, 32
    %v11966 = vpop.permute.xlu0 %11965
    %11967 = vrot.lane.b32.xlu0 %v11938, 32
    %v11968 = vpop.permute.xlu0 %11967
    %11969 = vrot.lane.b32.xlu0 %v11939, 32
    %v11970 = vpop.permute.xlu0 %11969
    %11971 = vrot.lane.b32.xlu0 %v11940, 32
    %v11972 = vpop.permute.xlu0 %11971
    %11981 = vst.msk [vmem:[#allocation5 + $0x6] sm:$0x3] %vm1730, %v11958
    %11982 = vst.msk [vmem:[#allocation5 + $0xe] sm:$0x3] %vm1730, %v11960
    %11983 = vst.msk [vmem:[#allocation5 + $0x16] sm:$0x3] %vm1730, %v11962
    %11984 = vst.msk [vmem:[#allocation5 + $0x1e] sm:$0x3] %vm1730, %v11964
    %11985 = vst.msk [vmem:[#allocation5 + $0x26] sm:$0x3] %vm1730, %v11966
    %11986 = vst.msk [vmem:[#allocation5 + $0x2e] sm:$0x3] %vm1730, %v11968
    %11987 = vst.msk [vmem:[#allocation5 + $0x36] sm:$0x3] %vm1730, %v11970
    %11988 = vst.msk [vmem:[#allocation5 + $0x3e] sm:$0x3] %vm1730, %v11972
    %v11989 = vld [vmem:[#allocation2] sm:$0x3]
    %v11990 = vld [vmem:[#allocation2 + $0x2] sm:$0x3]
    %v11991 = vld [vmem:[#allocation2 + $0x4] sm:$0x3]
    %v11992 = vld [vmem:[#allocation2 + $0x6] sm:$0x3]
    %v11993 = vld [vmem:[#allocation2 + $0x8] sm:$0x3]
    %v11994 = vld [vmem:[#allocation2 + $0xa] sm:$0x3]
    %v11995 = vld [vmem:[#allocation2 + $0xc] sm:$0x3]
    %v11996 = vld [vmem:[#allocation2 + $0xe] sm:$0x3]
    %v11997 = vperm.slane %v11989, 0
    %v11998 = vlaneseq
    %v11999 = vshrl.u32 %v11998, 7
    %v12000 = vadd.s32 %v11999, 112
    %12001 = vset.pattern.permute.xlu0 %v12000
    %12002 = vperm.xlu0 %12001, %v11997
    %v12003 = vpop.permute.xlu0 %12002
    %v12004 = vlaneseq
    %v12005 = vshrl.u32 %v12004, 7
    %v12006 = vadd.s32 %v12005, 120
    %12007 = vset.pattern.permute.xlu0 %v12006
    %12008 = vperm.xlu0 %12007, %v11997
    %v12009 = vpop.permute.xlu0 %12008
    %v12010 = vperm.slane %v11989, 1
    %v12011 = vlaneseq
    %v12012 = vshrl.u32 %v12011, 7
    %v12013 = vadd.s32 %v12012, 112
    %12014 = vset.pattern.permute.xlu0 %v12013
    %12015 = vperm.xlu0 %12014, %v12010
    %v12016 = vpop.permute.xlu0 %12015
    %v12017 = vlaneseq
    %v12018 = vshrl.u32 %v12017, 7
    %v12019 = vadd.s32 %v12018, 120
    %12020 = vset.pattern.permute.xlu0 %v12019
    %12021 = vperm.xlu0 %12020, %v12010
    %v12022 = vpop.permute.xlu0 %12021
    %v12023 = vperm.slane %v11990, 0
    %v12024 = vlaneseq
    %v12025 = vshrl.u32 %v12024, 7
    %v12026 = vadd.s32 %v12025, 112
    %12027 = vset.pattern.permute.xlu0 %v12026
    %12028 = vperm.xlu0 %12027, %v12023
    %v12029 = vpop.permute.xlu0 %12028
    %v12030 = vlaneseq
    %v12031 = vshrl.u32 %v12030, 7
    %v12032 = vadd.s32 %v12031, 120
    %12033 = vset.pattern.permute.xlu0 %v12032
    %12034 = vperm.xlu0 %12033, %v12023
    %v12035 = vpop.permute.xlu0 %12034
    %v12036 = vperm.slane %v11990, 1
    %v12037 = vlaneseq
    %v12038 = vshrl.u32 %v12037, 7
    %v12039 = vadd.s32 %v12038, 112
    %12040 = vset.pattern.permute.xlu0 %v12039
    %12041 = vperm.xlu0 %12040, %v12036
    %v12042 = vpop.permute.xlu0 %12041
    %v12043 = vlaneseq
    %v12044 = vshrl.u32 %v12043, 7
    %v12045 = vadd.s32 %v12044, 120
    %12046 = vset.pattern.permute.xlu0 %v12045
    %12047 = vperm.xlu0 %12046, %v12036
    %v12048 = vpop.permute.xlu0 %12047
    %v12049 = vperm.slane %v11991, 0
    %v12050 = vlaneseq
    %v12051 = vshrl.u32 %v12050, 7
    %v12052 = vadd.s32 %v12051, 112
    %12053 = vset.pattern.permute.xlu0 %v12052
    %12054 = vperm.xlu0 %12053, %v12049
    %v12055 = vpop.permute.xlu0 %12054
    %v12056 = vlaneseq
    %v12057 = vshrl.u32 %v12056, 7
    %v12058 = vadd.s32 %v12057, 120
    %12059 = vset.pattern.permute.xlu0 %v12058
    %12060 = vperm.xlu0 %12059, %v12049
    %v12061 = vpop.permute.xlu0 %12060
    %v12062 = vperm.slane %v11991, 1
    %v12063 = vlaneseq
    %v12064 = vshrl.u32 %v12063, 7
    %v12065 = vadd.s32 %v12064, 112
    %12066 = vset.pattern.permute.xlu0 %v12065
    %12067 = vperm.xlu0 %12066, %v12062
    %v12068 = vpop.permute.xlu0 %12067
    %v12069 = vlaneseq
    %v12070 = vshrl.u32 %v12069, 7
    %v12071 = vadd.s32 %v12070, 120
    %12072 = vset.pattern.permute.xlu0 %v12071
    %12073 = vperm.xlu0 %12072, %v12062
    %v12074 = vpop.permute.xlu0 %12073
    %v12075 = vperm.slane %v11992, 0
    %v12076 = vlaneseq
    %v12077 = vshrl.u32 %v12076, 7
    %v12078 = vadd.s32 %v12077, 112
    %12079 = vset.pattern.permute.xlu0 %v12078
    %12080 = vperm.xlu0 %12079, %v12075
    %v12081 = vpop.permute.xlu0 %12080
    %v12082 = vlaneseq
    %v12083 = vshrl.u32 %v12082, 7
    %v12084 = vadd.s32 %v12083, 120
    %12085 = vset.pattern.permute.xlu0 %v12084
    %12086 = vperm.xlu0 %12085, %v12075
    %v12087 = vpop.permute.xlu0 %12086
    %v12088 = vperm.slane %v11992, 1
    %v12089 = vlaneseq
    %v12090 = vshrl.u32 %v12089, 7
    %v12091 = vadd.s32 %v12090, 112
    %12092 = vset.pattern.permute.xlu0 %v12091
    %12093 = vperm.xlu0 %12092, %v12088
    %v12094 = vpop.permute.xlu0 %12093
    %v12095 = vlaneseq
    %v12096 = vshrl.u32 %v12095, 7
    %v12097 = vadd.s32 %v12096, 120
    %12098 = vset.pattern.permute.xlu0 %v12097
    %12099 = vperm.xlu0 %12098, %v12088
    %v12100 = vpop.permute.xlu0 %12099
    %v12101 = vperm.slane %v11993, 0
    %v12102 = vlaneseq
    %v12103 = vshrl.u32 %v12102, 7
    %v12104 = vadd.s32 %v12103, 112
    %12105 = vset.pattern.permute.xlu0 %v12104
    %12106 = vperm.xlu0 %12105, %v12101
    %v12107 = vpop.permute.xlu0 %12106
    %v12108 = vlaneseq
    %v12109 = vshrl.u32 %v12108, 7
    %v12110 = vadd.s32 %v12109, 120
    %12111 = vset.pattern.permute.xlu0 %v12110
    %12112 = vperm.xlu0 %12111, %v12101
    %v12113 = vpop.permute.xlu0 %12112
    %v12114 = vperm.slane %v11993, 1
    %v12115 = vlaneseq
    %v12116 = vshrl.u32 %v12115, 7
    %v12117 = vadd.s32 %v12116, 112
    %12118 = vset.pattern.permute.xlu0 %v12117
    %12119 = vperm.xlu0 %12118, %v12114
    %v12120 = vpop.permute.xlu0 %12119
    %v12121 = vlaneseq
    %v12122 = vshrl.u32 %v12121, 7
    %v12123 = vadd.s32 %v12122, 120
    %12124 = vset.pattern.permute.xlu0 %v12123
    %12125 = vperm.xlu0 %12124, %v12114
    %v12126 = vpop.permute.xlu0 %12125
    %v12127 = vperm.slane %v11994, 0
    %v12128 = vlaneseq
    %v12129 = vshrl.u32 %v12128, 7
    %v12130 = vadd.s32 %v12129, 112
    %12131 = vset.pattern.permute.xlu0 %v12130
    %12132 = vperm.xlu0 %12131, %v12127
    %v12133 = vpop.permute.xlu0 %12132
    %v12134 = vlaneseq
    %v12135 = vshrl.u32 %v12134, 7
    %v12136 = vadd.s32 %v12135, 120
    %12137 = vset.pattern.permute.xlu0 %v12136
    %12138 = vperm.xlu0 %12137, %v12127
    %v12139 = vpop.permute.xlu0 %12138
    %v12140 = vperm.slane %v11994, 1
    %v12141 = vlaneseq
    %v12142 = vshrl.u32 %v12141, 7
    %v12143 = vadd.s32 %v12142, 112
    %12144 = vset.pattern.permute.xlu0 %v12143
    %12145 = vperm.xlu0 %12144, %v12140
    %v12146 = vpop.permute.xlu0 %12145
    %v12147 = vlaneseq
    %v12148 = vshrl.u32 %v12147, 7
    %v12149 = vadd.s32 %v12148, 120
    %12150 = vset.pattern.permute.xlu0 %v12149
    %12151 = vperm.xlu0 %12150, %v12140
    %v12152 = vpop.permute.xlu0 %12151
    %v12153 = vperm.slane %v11995, 0
    %v12154 = vlaneseq
    %v12155 = vshrl.u32 %v12154, 7
    %v12156 = vadd.s32 %v12155, 112
    %12157 = vset.pattern.permute.xlu0 %v12156
    %12158 = vperm.xlu0 %12157, %v12153
    %v12159 = vpop.permute.xlu0 %12158
    %v12160 = vlaneseq
    %v12161 = vshrl.u32 %v12160, 7
    %v12162 = vadd.s32 %v12161, 120
    %12163 = vset.pattern.permute.xlu0 %v12162
    %12164 = vperm.xlu0 %12163, %v12153
    %v12165 = vpop.permute.xlu0 %12164
    %v12166 = vperm.slane %v11995, 1
    %v12167 = vlaneseq
    %v12168 = vshrl.u32 %v12167, 7
    %v12169 = vadd.s32 %v12168, 112
    %12170 = vset.pattern.permute.xlu0 %v12169
    %12171 = vperm.xlu0 %12170, %v12166
    %v12172 = vpop.permute.xlu0 %12171
    %v12173 = vlaneseq
    %v12174 = vshrl.u32 %v12173, 7
    %v12175 = vadd.s32 %v12174, 120
    %12176 = vset.pattern.permute.xlu0 %v12175
    %12177 = vperm.xlu0 %12176, %v12166
    %v12178 = vpop.permute.xlu0 %12177
    %v12179 = vperm.slane %v11996, 0
    %v12180 = vlaneseq
    %v12181 = vshrl.u32 %v12180, 7
    %v12182 = vadd.s32 %v12181, 112
    %12183 = vset.pattern.permute.xlu0 %v12182
    %12184 = vperm.xlu0 %12183, %v12179
    %v12185 = vpop.permute.xlu0 %12184
    %v12186 = vlaneseq
    %v12187 = vshrl.u32 %v12186, 7
    %v12188 = vadd.s32 %v12187, 120
    %12189 = vset.pattern.permute.xlu0 %v12188
    %12190 = vperm.xlu0 %12189, %v12179
    %v12191 = vpop.permute.xlu0 %12190
    %v12192 = vperm.slane %v11996, 1
    %v12193 = vlaneseq
    %v12194 = vshrl.u32 %v12193, 7
    %v12195 = vadd.s32 %v12194, 112
    %12196 = vset.pattern.permute.xlu0 %v12195
    %12197 = vperm.xlu0 %12196, %v12192
    %v12198 = vpop.permute.xlu0 %12197
    %v12199 = vlaneseq
    %v12200 = vshrl.u32 %v12199, 7
    %v12201 = vadd.s32 %v12200, 120
    %12202 = vset.pattern.permute.xlu0 %v12201
    %12203 = vperm.xlu0 %12202, %v12192
    %v12204 = vpop.permute.xlu0 %12203
    %v12205 = vrot.slane %v12003, 4
    %v12206 = vsel %vm242, 0.0, %v12205
    %v12208 = vunpack.c.l.s4 1983009808
    %v12209 = vunpack.c.0.s8 %v12208
    %v12210 = vperm.slane %v12003, %v12209
    %v12212 = vunpack.c.l.s4 1983009808
    %v12213 = vunpack.c.0.s8 %v12212
    %v12214 = vperm.slane %v12206, %v12213
    %v12215 = vrot.slane %v12016, 4
    %v12216 = vsel %vm242, 0.0, %v12215
    %v12218 = vunpack.c.l.s4 1983009808
    %v12219 = vunpack.c.0.s8 %v12218
    %v12220 = vperm.slane %v12016, %v12219
    %v12222 = vunpack.c.l.s4 1983009808
    %v12223 = vunpack.c.0.s8 %v12222
    %v12224 = vperm.slane %v12216, %v12223
    %v12225 = vrot.slane %v12220, 4
    %v12226 = vsel %vm242, %v12225, %v12210
    %v12227 = vrot.slane %v12210, 4
    %v12228 = vsel %vm242, %v12220, %v12227
    %v12230 = vunpack.c.l.s4 1934713408
    %v12231 = vunpack.c.0.s8 %v12230
    %v12232 = vperm.slane %v12226, %v12231
    %v12234 = vunpack.c.l.s4 1934713408
    %v12235 = vunpack.c.0.s8 %v12234
    %v12236 = vperm.slane %v12228, %v12235
    %v12237 = vrot.slane %v12224, 4
    %v12238 = vsel %vm242, %v12237, %v12214
    %v12239 = vrot.slane %v12214, 4
    %v12240 = vsel %vm242, %v12224, %v12239
    %v12242 = vunpack.c.l.s4 1934713408
    %v12243 = vunpack.c.0.s8 %v12242
    %v12244 = vperm.slane %v12238, %v12243
    %v12246 = vunpack.c.l.s4 1934713408
    %v12247 = vunpack.c.0.s8 %v12246
    %v12248 = vperm.slane %v12240, %v12247
    %v12249 = vrot.slane %v12232, 4
    %v12250 = vsel %vm242, 0.0, %v12249
    %v12251 = vrot.slane %v12236, 4
    %v12252 = vsel %vm242, 0.0, %v12251
    %v12253 = vrot.slane %v12244, 4
    %v12254 = vsel %vm242, 0.0, %v12253
    %v12255 = vrot.slane %v12248, 4
    %v12256 = vsel %vm242, 0.0, %v12255
    %v12257 = vrot.slane %v12009, 4
    %v12258 = vsel %vm242, 0.0, %v12257
    %v12260 = vunpack.c.l.s4 1983009808
    %v12261 = vunpack.c.0.s8 %v12260
    %v12262 = vperm.slane %v12009, %v12261
    %v12264 = vunpack.c.l.s4 1983009808
    %v12265 = vunpack.c.0.s8 %v12264
    %v12266 = vperm.slane %v12258, %v12265
    %v12267 = vrot.slane %v12022, 4
    %v12268 = vsel %vm242, 0.0, %v12267
    %v12270 = vunpack.c.l.s4 1983009808
    %v12271 = vunpack.c.0.s8 %v12270
    %v12272 = vperm.slane %v12022, %v12271
    %v12274 = vunpack.c.l.s4 1983009808
    %v12275 = vunpack.c.0.s8 %v12274
    %v12276 = vperm.slane %v12268, %v12275
    %v12277 = vrot.slane %v12272, 4
    %v12278 = vsel %vm242, %v12277, %v12262
    %v12279 = vrot.slane %v12262, 4
    %v12280 = vsel %vm242, %v12272, %v12279
    %v12282 = vunpack.c.l.s4 1934713408
    %v12283 = vunpack.c.0.s8 %v12282
    %v12284 = vperm.slane %v12278, %v12283
    %v12286 = vunpack.c.l.s4 1934713408
    %v12287 = vunpack.c.0.s8 %v12286
    %v12288 = vperm.slane %v12280, %v12287
    %v12289 = vrot.slane %v12276, 4
    %v12290 = vsel %vm242, %v12289, %v12266
    %v12291 = vrot.slane %v12266, 4
    %v12292 = vsel %vm242, %v12276, %v12291
    %v12294 = vunpack.c.l.s4 1934713408
    %v12295 = vunpack.c.0.s8 %v12294
    %v12296 = vperm.slane %v12290, %v12295
    %v12298 = vunpack.c.l.s4 1934713408
    %v12299 = vunpack.c.0.s8 %v12298
    %v12300 = vperm.slane %v12292, %v12299
    %v12301 = vrot.slane %v12284, 4
    %v12302 = vsel %vm242, 0.0, %v12301
    %v12303 = vrot.slane %v12288, 4
    %v12304 = vsel %vm242, 0.0, %v12303
    %v12305 = vrot.slane %v12296, 4
    %v12306 = vsel %vm242, 0.0, %v12305
    %v12307 = vrot.slane %v12300, 4
    %v12308 = vsel %vm242, 0.0, %v12307
    %v12309 = vrot.slane %v12029, 4
    %v12310 = vsel %vm242, 0.0, %v12309
    %v12312 = vunpack.c.l.s4 1983009808
    %v12313 = vunpack.c.0.s8 %v12312
    %v12314 = vperm.slane %v12029, %v12313
    %v12316 = vunpack.c.l.s4 1983009808
    %v12317 = vunpack.c.0.s8 %v12316
    %v12318 = vperm.slane %v12310, %v12317
    %v12319 = vrot.slane %v12042, 4
    %v12320 = vsel %vm242, 0.0, %v12319
    %v12322 = vunpack.c.l.s4 1983009808
    %v12323 = vunpack.c.0.s8 %v12322
    %v12324 = vperm.slane %v12042, %v12323
    %v12326 = vunpack.c.l.s4 1983009808
    %v12327 = vunpack.c.0.s8 %v12326
    %v12328 = vperm.slane %v12320, %v12327
    %v12329 = vrot.slane %v12324, 4
    %v12330 = vsel %vm242, %v12329, %v12314
    %v12331 = vrot.slane %v12314, 4
    %v12332 = vsel %vm242, %v12324, %v12331
    %v12334 = vunpack.c.l.s4 1934713408
    %v12335 = vunpack.c.0.s8 %v12334
    %v12336 = vperm.slane %v12330, %v12335
    %v12338 = vunpack.c.l.s4 1934713408
    %v12339 = vunpack.c.0.s8 %v12338
    %v12340 = vperm.slane %v12332, %v12339
    %v12341 = vrot.slane %v12328, 4
    %v12342 = vsel %vm242, %v12341, %v12318
    %v12343 = vrot.slane %v12318, 4
    %v12344 = vsel %vm242, %v12328, %v12343
    %v12346 = vunpack.c.l.s4 1934713408
    %v12347 = vunpack.c.0.s8 %v12346
    %v12348 = vperm.slane %v12342, %v12347
    %v12350 = vunpack.c.l.s4 1934713408
    %v12351 = vunpack.c.0.s8 %v12350
    %v12352 = vperm.slane %v12344, %v12351
    %v12353 = vrot.slane %v12336, 4
    %v12354 = vsel %vm242, 0.0, %v12353
    %v12355 = vrot.slane %v12340, 4
    %v12356 = vsel %vm242, 0.0, %v12355
    %v12357 = vrot.slane %v12348, 4
    %v12358 = vsel %vm242, 0.0, %v12357
    %v12359 = vrot.slane %v12352, 4
    %v12360 = vsel %vm242, 0.0, %v12359
    %v12361 = vrot.slane %v12035, 4
    %v12362 = vsel %vm242, 0.0, %v12361
    %v12364 = vunpack.c.l.s4 1983009808
    %v12365 = vunpack.c.0.s8 %v12364
    %v12366 = vperm.slane %v12035, %v12365
    %v12368 = vunpack.c.l.s4 1983009808
    %v12369 = vunpack.c.0.s8 %v12368
    %v12370 = vperm.slane %v12362, %v12369
    %v12371 = vrot.slane %v12048, 4
    %v12372 = vsel %vm242, 0.0, %v12371
    %v12374 = vunpack.c.l.s4 1983009808
    %v12375 = vunpack.c.0.s8 %v12374
    %v12376 = vperm.slane %v12048, %v12375
    %v12378 = vunpack.c.l.s4 1983009808
    %v12379 = vunpack.c.0.s8 %v12378
    %v12380 = vperm.slane %v12372, %v12379
    %v12381 = vrot.slane %v12376, 4
    %v12382 = vsel %vm242, %v12381, %v12366
    %v12383 = vrot.slane %v12366, 4
    %v12384 = vsel %vm242, %v12376, %v12383
    %v12386 = vunpack.c.l.s4 1934713408
    %v12387 = vunpack.c.0.s8 %v12386
    %v12388 = vperm.slane %v12382, %v12387
    %v12390 = vunpack.c.l.s4 1934713408
    %v12391 = vunpack.c.0.s8 %v12390
    %v12392 = vperm.slane %v12384, %v12391
    %v12393 = vrot.slane %v12380, 4
    %v12394 = vsel %vm242, %v12393, %v12370
    %v12395 = vrot.slane %v12370, 4
    %v12396 = vsel %vm242, %v12380, %v12395
    %v12398 = vunpack.c.l.s4 1934713408
    %v12399 = vunpack.c.0.s8 %v12398
    %v12400 = vperm.slane %v12394, %v12399
    %v12402 = vunpack.c.l.s4 1934713408
    %v12403 = vunpack.c.0.s8 %v12402
    %v12404 = vperm.slane %v12396, %v12403
    %v12405 = vrot.slane %v12388, 4
    %v12406 = vsel %vm242, 0.0, %v12405
    %v12407 = vrot.slane %v12392, 4
    %v12408 = vsel %vm242, 0.0, %v12407
    %v12409 = vrot.slane %v12400, 4
    %v12410 = vsel %vm242, 0.0, %v12409
    %v12411 = vrot.slane %v12404, 4
    %v12412 = vsel %vm242, 0.0, %v12411
    %v12413 = vrot.slane %v12055, 4
    %v12414 = vsel %vm242, 0.0, %v12413
    %v12416 = vunpack.c.l.s4 1983009808
    %v12417 = vunpack.c.0.s8 %v12416
    %v12418 = vperm.slane %v12055, %v12417
    %v12420 = vunpack.c.l.s4 1983009808
    %v12421 = vunpack.c.0.s8 %v12420
    %v12422 = vperm.slane %v12414, %v12421
    %v12423 = vrot.slane %v12068, 4
    %v12424 = vsel %vm242, 0.0, %v12423
    %v12426 = vunpack.c.l.s4 1983009808
    %v12427 = vunpack.c.0.s8 %v12426
    %v12428 = vperm.slane %v12068, %v12427
    %v12430 = vunpack.c.l.s4 1983009808
    %v12431 = vunpack.c.0.s8 %v12430
    %v12432 = vperm.slane %v12424, %v12431
    %v12433 = vrot.slane %v12428, 4
    %v12434 = vsel %vm242, %v12433, %v12418
    %v12435 = vrot.slane %v12418, 4
    %v12436 = vsel %vm242, %v12428, %v12435
    %v12438 = vunpack.c.l.s4 1934713408
    %v12439 = vunpack.c.0.s8 %v12438
    %v12440 = vperm.slane %v12434, %v12439
    %v12442 = vunpack.c.l.s4 1934713408
    %v12443 = vunpack.c.0.s8 %v12442
    %v12444 = vperm.slane %v12436, %v12443
    %v12445 = vrot.slane %v12432, 4
    %v12446 = vsel %vm242, %v12445, %v12422
    %v12447 = vrot.slane %v12422, 4
    %v12448 = vsel %vm242, %v12432, %v12447
    %v12450 = vunpack.c.l.s4 1934713408
    %v12451 = vunpack.c.0.s8 %v12450
    %v12452 = vperm.slane %v12446, %v12451
    %v12454 = vunpack.c.l.s4 1934713408
    %v12455 = vunpack.c.0.s8 %v12454
    %v12456 = vperm.slane %v12448, %v12455
    %v12457 = vrot.slane %v12440, 4
    %v12458 = vsel %vm242, 0.0, %v12457
    %v12459 = vrot.slane %v12444, 4
    %v12460 = vsel %vm242, 0.0, %v12459
    %v12461 = vrot.slane %v12452, 4
    %v12462 = vsel %vm242, 0.0, %v12461
    %v12463 = vrot.slane %v12456, 4
    %v12464 = vsel %vm242, 0.0, %v12463
    %v12465 = vrot.slane %v12061, 4
    %v12466 = vsel %vm242, 0.0, %v12465
    %v12468 = vunpack.c.l.s4 1983009808
    %v12469 = vunpack.c.0.s8 %v12468
    %v12470 = vperm.slane %v12061, %v12469
    %v12472 = vunpack.c.l.s4 1983009808
    %v12473 = vunpack.c.0.s8 %v12472
    %v12474 = vperm.slane %v12466, %v12473
    %v12475 = vrot.slane %v12074, 4
    %v12476 = vsel %vm242, 0.0, %v12475
    %v12478 = vunpack.c.l.s4 1983009808
    %v12479 = vunpack.c.0.s8 %v12478
    %v12480 = vperm.slane %v12074, %v12479
    %v12482 = vunpack.c.l.s4 1983009808
    %v12483 = vunpack.c.0.s8 %v12482
    %v12484 = vperm.slane %v12476, %v12483
    %v12485 = vrot.slane %v12480, 4
    %v12486 = vsel %vm242, %v12485, %v12470
    %v12487 = vrot.slane %v12470, 4
    %v12488 = vsel %vm242, %v12480, %v12487
    %v12490 = vunpack.c.l.s4 1934713408
    %v12491 = vunpack.c.0.s8 %v12490
    %v12492 = vperm.slane %v12486, %v12491
    %v12494 = vunpack.c.l.s4 1934713408
    %v12495 = vunpack.c.0.s8 %v12494
    %v12496 = vperm.slane %v12488, %v12495
    %v12497 = vrot.slane %v12484, 4
    %v12498 = vsel %vm242, %v12497, %v12474
    %v12499 = vrot.slane %v12474, 4
    %v12500 = vsel %vm242, %v12484, %v12499
    %v12502 = vunpack.c.l.s4 1934713408
    %v12503 = vunpack.c.0.s8 %v12502
    %v12504 = vperm.slane %v12498, %v12503
    %v12506 = vunpack.c.l.s4 1934713408
    %v12507 = vunpack.c.0.s8 %v12506
    %v12508 = vperm.slane %v12500, %v12507
    %v12509 = vrot.slane %v12492, 4
    %v12510 = vsel %vm242, 0.0, %v12509
    %v12511 = vrot.slane %v12496, 4
    %v12512 = vsel %vm242, 0.0, %v12511
    %v12513 = vrot.slane %v12504, 4
    %v12514 = vsel %vm242, 0.0, %v12513
    %v12515 = vrot.slane %v12508, 4
    %v12516 = vsel %vm242, 0.0, %v12515
    %v12517 = vrot.slane %v12081, 4
    %v12518 = vsel %vm242, 0.0, %v12517
    %v12520 = vunpack.c.l.s4 1983009808
    %v12521 = vunpack.c.0.s8 %v12520
    %v12522 = vperm.slane %v12081, %v12521
    %v12524 = vunpack.c.l.s4 1983009808
    %v12525 = vunpack.c.0.s8 %v12524
    %v12526 = vperm.slane %v12518, %v12525
    %v12527 = vrot.slane %v12094, 4
    %v12528 = vsel %vm242, 0.0, %v12527
    %v12530 = vunpack.c.l.s4 1983009808
    %v12531 = vunpack.c.0.s8 %v12530
    %v12532 = vperm.slane %v12094, %v12531
    %v12534 = vunpack.c.l.s4 1983009808
    %v12535 = vunpack.c.0.s8 %v12534
    %v12536 = vperm.slane %v12528, %v12535
    %v12537 = vrot.slane %v12532, 4
    %v12538 = vsel %vm242, %v12537, %v12522
    %v12539 = vrot.slane %v12522, 4
    %v12540 = vsel %vm242, %v12532, %v12539
    %v12542 = vunpack.c.l.s4 1934713408
    %v12543 = vunpack.c.0.s8 %v12542
    %v12544 = vperm.slane %v12538, %v12543
    %v12546 = vunpack.c.l.s4 1934713408
    %v12547 = vunpack.c.0.s8 %v12546
    %v12548 = vperm.slane %v12540, %v12547
    %v12549 = vrot.slane %v12536, 4
    %v12550 = vsel %vm242, %v12549, %v12526
    %v12551 = vrot.slane %v12526, 4
    %v12552 = vsel %vm242, %v12536, %v12551
    %v12554 = vunpack.c.l.s4 1934713408
    %v12555 = vunpack.c.0.s8 %v12554
    %v12556 = vperm.slane %v12550, %v12555
    %v12558 = vunpack.c.l.s4 1934713408
    %v12559 = vunpack.c.0.s8 %v12558
    %v12560 = vperm.slane %v12552, %v12559
    %v12561 = vrot.slane %v12544, 4
    %v12562 = vsel %vm242, 0.0, %v12561
    %v12563 = vrot.slane %v12548, 4
    %v12564 = vsel %vm242, 0.0, %v12563
    %v12565 = vrot.slane %v12556, 4
    %v12566 = vsel %vm242, 0.0, %v12565
    %v12567 = vrot.slane %v12560, 4
    %v12568 = vsel %vm242, 0.0, %v12567
    %v12569 = vrot.slane %v12087, 4
    %v12570 = vsel %vm242, 0.0, %v12569
    %v12572 = vunpack.c.l.s4 1983009808
    %v12573 = vunpack.c.0.s8 %v12572
    %v12574 = vperm.slane %v12087, %v12573
    %v12576 = vunpack.c.l.s4 1983009808
    %v12577 = vunpack.c.0.s8 %v12576
    %v12578 = vperm.slane %v12570, %v12577
    %v12579 = vrot.slane %v12100, 4
    %v12580 = vsel %vm242, 0.0, %v12579
    %v12582 = vunpack.c.l.s4 1983009808
    %v12583 = vunpack.c.0.s8 %v12582
    %v12584 = vperm.slane %v12100, %v12583
    %v12586 = vunpack.c.l.s4 1983009808
    %v12587 = vunpack.c.0.s8 %v12586
    %v12588 = vperm.slane %v12580, %v12587
    %v12589 = vrot.slane %v12584, 4
    %v12590 = vsel %vm242, %v12589, %v12574
    %v12591 = vrot.slane %v12574, 4
    %v12592 = vsel %vm242, %v12584, %v12591
    %v12594 = vunpack.c.l.s4 1934713408
    %v12595 = vunpack.c.0.s8 %v12594
    %v12596 = vperm.slane %v12590, %v12595
    %v12598 = vunpack.c.l.s4 1934713408
    %v12599 = vunpack.c.0.s8 %v12598
    %v12600 = vperm.slane %v12592, %v12599
    %v12601 = vrot.slane %v12588, 4
    %v12602 = vsel %vm242, %v12601, %v12578
    %v12603 = vrot.slane %v12578, 4
    %v12604 = vsel %vm242, %v12588, %v12603
    %v12606 = vunpack.c.l.s4 1934713408
    %v12607 = vunpack.c.0.s8 %v12606
    %v12608 = vperm.slane %v12602, %v12607
    %v12610 = vunpack.c.l.s4 1934713408
    %v12611 = vunpack.c.0.s8 %v12610
    %v12612 = vperm.slane %v12604, %v12611
    %v12613 = vrot.slane %v12596, 4
    %v12614 = vsel %vm242, 0.0, %v12613
    %v12615 = vrot.slane %v12600, 4
    %v12616 = vsel %vm242, 0.0, %v12615
    %v12617 = vrot.slane %v12608, 4
    %v12618 = vsel %vm242, 0.0, %v12617
    %v12619 = vrot.slane %v12612, 4
    %v12620 = vsel %vm242, 0.0, %v12619
    %v12621 = vrot.slane %v12107, 4
    %v12622 = vsel %vm242, 0.0, %v12621
    %v12624 = vunpack.c.l.s4 1983009808
    %v12625 = vunpack.c.0.s8 %v12624
    %v12626 = vperm.slane %v12107, %v12625
    %v12628 = vunpack.c.l.s4 1983009808
    %v12629 = vunpack.c.0.s8 %v12628
    %v12630 = vperm.slane %v12622, %v12629
    %v12631 = vrot.slane %v12120, 4
    %v12632 = vsel %vm242, 0.0, %v12631
    %v12634 = vunpack.c.l.s4 1983009808
    %v12635 = vunpack.c.0.s8 %v12634
    %v12636 = vperm.slane %v12120, %v12635
    %v12638 = vunpack.c.l.s4 1983009808
    %v12639 = vunpack.c.0.s8 %v12638
    %v12640 = vperm.slane %v12632, %v12639
    %v12641 = vrot.slane %v12636, 4
    %v12642 = vsel %vm242, %v12641, %v12626
    %v12643 = vrot.slane %v12626, 4
    %v12644 = vsel %vm242, %v12636, %v12643
    %v12646 = vunpack.c.l.s4 1934713408
    %v12647 = vunpack.c.0.s8 %v12646
    %v12648 = vperm.slane %v12642, %v12647
    %v12650 = vunpack.c.l.s4 1934713408
    %v12651 = vunpack.c.0.s8 %v12650
    %v12652 = vperm.slane %v12644, %v12651
    %v12653 = vrot.slane %v12640, 4
    %v12654 = vsel %vm242, %v12653, %v12630
    %v12655 = vrot.slane %v12630, 4
    %v12656 = vsel %vm242, %v12640, %v12655
    %v12658 = vunpack.c.l.s4 1934713408
    %v12659 = vunpack.c.0.s8 %v12658
    %v12660 = vperm.slane %v12654, %v12659
    %v12662 = vunpack.c.l.s4 1934713408
    %v12663 = vunpack.c.0.s8 %v12662
    %v12664 = vperm.slane %v12656, %v12663
    %v12665 = vrot.slane %v12648, 4
    %v12666 = vsel %vm242, 0.0, %v12665
    %v12667 = vrot.slane %v12652, 4
    %v12668 = vsel %vm242, 0.0, %v12667
    %v12669 = vrot.slane %v12660, 4
    %v12670 = vsel %vm242, 0.0, %v12669
    %v12671 = vrot.slane %v12664, 4
    %v12672 = vsel %vm242, 0.0, %v12671
    %v12673 = vrot.slane %v12113, 4
    %v12674 = vsel %vm242, 0.0, %v12673
    %v12676 = vunpack.c.l.s4 1983009808
    %v12677 = vunpack.c.0.s8 %v12676
    %v12678 = vperm.slane %v12113, %v12677
    %v12680 = vunpack.c.l.s4 1983009808
    %v12681 = vunpack.c.0.s8 %v12680
    %v12682 = vperm.slane %v12674, %v12681
    %v12683 = vrot.slane %v12126, 4
    %v12684 = vsel %vm242, 0.0, %v12683
    %v12686 = vunpack.c.l.s4 1983009808
    %v12687 = vunpack.c.0.s8 %v12686
    %v12688 = vperm.slane %v12126, %v12687
    %v12690 = vunpack.c.l.s4 1983009808
    %v12691 = vunpack.c.0.s8 %v12690
    %v12692 = vperm.slane %v12684, %v12691
    %v12693 = vrot.slane %v12688, 4
    %v12694 = vsel %vm242, %v12693, %v12678
    %v12695 = vrot.slane %v12678, 4
    %v12696 = vsel %vm242, %v12688, %v12695
    %v12698 = vunpack.c.l.s4 1934713408
    %v12699 = vunpack.c.0.s8 %v12698
    %v12700 = vperm.slane %v12694, %v12699
    %v12702 = vunpack.c.l.s4 1934713408
    %v12703 = vunpack.c.0.s8 %v12702
    %v12704 = vperm.slane %v12696, %v12703
    %v12705 = vrot.slane %v12692, 4
    %v12706 = vsel %vm242, %v12705, %v12682
    %v12707 = vrot.slane %v12682, 4
    %v12708 = vsel %vm242, %v12692, %v12707
    %v12710 = vunpack.c.l.s4 1934713408
    %v12711 = vunpack.c.0.s8 %v12710
    %v12712 = vperm.slane %v12706, %v12711
    %v12714 = vunpack.c.l.s4 1934713408
    %v12715 = vunpack.c.0.s8 %v12714
    %v12716 = vperm.slane %v12708, %v12715
    %v12717 = vrot.slane %v12700, 4
    %v12718 = vsel %vm242, 0.0, %v12717
    %v12719 = vrot.slane %v12704, 4
    %v12720 = vsel %vm242, 0.0, %v12719
    %v12721 = vrot.slane %v12712, 4
    %v12722 = vsel %vm242, 0.0, %v12721
    %v12723 = vrot.slane %v12716, 4
    %v12724 = vsel %vm242, 0.0, %v12723
    %v12725 = vrot.slane %v12133, 4
    %v12726 = vsel %vm242, 0.0, %v12725
    %v12728 = vunpack.c.l.s4 1983009808
    %v12729 = vunpack.c.0.s8 %v12728
    %v12730 = vperm.slane %v12133, %v12729
    %v12732 = vunpack.c.l.s4 1983009808
    %v12733 = vunpack.c.0.s8 %v12732
    %v12734 = vperm.slane %v12726, %v12733
    %v12735 = vrot.slane %v12146, 4
    %v12736 = vsel %vm242, 0.0, %v12735
    %v12738 = vunpack.c.l.s4 1983009808
    %v12739 = vunpack.c.0.s8 %v12738
    %v12740 = vperm.slane %v12146, %v12739
    %v12742 = vunpack.c.l.s4 1983009808
    %v12743 = vunpack.c.0.s8 %v12742
    %v12744 = vperm.slane %v12736, %v12743
    %v12745 = vrot.slane %v12740, 4
    %v12746 = vsel %vm242, %v12745, %v12730
    %v12747 = vrot.slane %v12730, 4
    %v12748 = vsel %vm242, %v12740, %v12747
    %v12750 = vunpack.c.l.s4 1934713408
    %v12751 = vunpack.c.0.s8 %v12750
    %v12752 = vperm.slane %v12746, %v12751
    %v12754 = vunpack.c.l.s4 1934713408
    %v12755 = vunpack.c.0.s8 %v12754
    %v12756 = vperm.slane %v12748, %v12755
    %v12757 = vrot.slane %v12744, 4
    %v12758 = vsel %vm242, %v12757, %v12734
    %v12759 = vrot.slane %v12734, 4
    %v12760 = vsel %vm242, %v12744, %v12759
    %v12762 = vunpack.c.l.s4 1934713408
    %v12763 = vunpack.c.0.s8 %v12762
    %v12764 = vperm.slane %v12758, %v12763
    %v12766 = vunpack.c.l.s4 1934713408
    %v12767 = vunpack.c.0.s8 %v12766
    %v12768 = vperm.slane %v12760, %v12767
    %v12769 = vrot.slane %v12752, 4
    %v12770 = vsel %vm242, 0.0, %v12769
    %v12771 = vrot.slane %v12756, 4
    %v12772 = vsel %vm242, 0.0, %v12771
    %v12773 = vrot.slane %v12764, 4
    %v12774 = vsel %vm242, 0.0, %v12773
    %v12775 = vrot.slane %v12768, 4
    %v12776 = vsel %vm242, 0.0, %v12775
    %v12777 = vrot.slane %v12139, 4
    %v12778 = vsel %vm242, 0.0, %v12777
    %v12780 = vunpack.c.l.s4 1983009808
    %v12781 = vunpack.c.0.s8 %v12780
    %v12782 = vperm.slane %v12139, %v12781
    %v12784 = vunpack.c.l.s4 1983009808
    %v12785 = vunpack.c.0.s8 %v12784
    %v12786 = vperm.slane %v12778, %v12785
    %v12787 = vrot.slane %v12152, 4
    %v12788 = vsel %vm242, 0.0, %v12787
    %v12790 = vunpack.c.l.s4 1983009808
    %v12791 = vunpack.c.0.s8 %v12790
    %v12792 = vperm.slane %v12152, %v12791
    %v12794 = vunpack.c.l.s4 1983009808
    %v12795 = vunpack.c.0.s8 %v12794
    %v12796 = vperm.slane %v12788, %v12795
    %v12797 = vrot.slane %v12792, 4
    %v12798 = vsel %vm242, %v12797, %v12782
    %v12799 = vrot.slane %v12782, 4
    %v12800 = vsel %vm242, %v12792, %v12799
    %v12802 = vunpack.c.l.s4 1934713408
    %v12803 = vunpack.c.0.s8 %v12802
    %v12804 = vperm.slane %v12798, %v12803
    %v12806 = vunpack.c.l.s4 1934713408
    %v12807 = vunpack.c.0.s8 %v12806
    %v12808 = vperm.slane %v12800, %v12807
    %v12809 = vrot.slane %v12796, 4
    %v12810 = vsel %vm242, %v12809, %v12786
    %v12811 = vrot.slane %v12786, 4
    %v12812 = vsel %vm242, %v12796, %v12811
    %v12814 = vunpack.c.l.s4 1934713408
    %v12815 = vunpack.c.0.s8 %v12814
    %v12816 = vperm.slane %v12810, %v12815
    %v12818 = vunpack.c.l.s4 1934713408
    %v12819 = vunpack.c.0.s8 %v12818
    %v12820 = vperm.slane %v12812, %v12819
    %v12821 = vrot.slane %v12804, 4
    %v12822 = vsel %vm242, 0.0, %v12821
    %v12823 = vrot.slane %v12808, 4
    %v12824 = vsel %vm242, 0.0, %v12823
    %v12825 = vrot.slane %v12816, 4
    %v12826 = vsel %vm242, 0.0, %v12825
    %v12827 = vrot.slane %v12820, 4
    %v12828 = vsel %vm242, 0.0, %v12827
    %v12829 = vrot.slane %v12159, 4
    %v12830 = vsel %vm242, 0.0, %v12829
    %v12832 = vunpack.c.l.s4 1983009808
    %v12833 = vunpack.c.0.s8 %v12832
    %v12834 = vperm.slane %v12159, %v12833
    %v12836 = vunpack.c.l.s4 1983009808
    %v12837 = vunpack.c.0.s8 %v12836
    %v12838 = vperm.slane %v12830, %v12837
    %v12839 = vrot.slane %v12172, 4
    %v12840 = vsel %vm242, 0.0, %v12839
    %v12842 = vunpack.c.l.s4 1983009808
    %v12843 = vunpack.c.0.s8 %v12842
    %v12844 = vperm.slane %v12172, %v12843
    %v12846 = vunpack.c.l.s4 1983009808
    %v12847 = vunpack.c.0.s8 %v12846
    %v12848 = vperm.slane %v12840, %v12847
    %v12849 = vrot.slane %v12844, 4
    %v12850 = vsel %vm242, %v12849, %v12834
    %v12851 = vrot.slane %v12834, 4
    %v12852 = vsel %vm242, %v12844, %v12851
    %v12854 = vunpack.c.l.s4 1934713408
    %v12855 = vunpack.c.0.s8 %v12854
    %v12856 = vperm.slane %v12850, %v12855
    %v12858 = vunpack.c.l.s4 1934713408
    %v12859 = vunpack.c.0.s8 %v12858
    %v12860 = vperm.slane %v12852, %v12859
    %v12861 = vrot.slane %v12848, 4
    %v12862 = vsel %vm242, %v12861, %v12838
    %v12863 = vrot.slane %v12838, 4
    %v12864 = vsel %vm242, %v12848, %v12863
    %v12866 = vunpack.c.l.s4 1934713408
    %v12867 = vunpack.c.0.s8 %v12866
    %v12868 = vperm.slane %v12862, %v12867
    %v12870 = vunpack.c.l.s4 1934713408
    %v12871 = vunpack.c.0.s8 %v12870
    %v12872 = vperm.slane %v12864, %v12871
    %v12873 = vrot.slane %v12856, 4
    %v12874 = vsel %vm242, 0.0, %v12873
    %v12875 = vrot.slane %v12860, 4
    %v12876 = vsel %vm242, 0.0, %v12875
    %v12877 = vrot.slane %v12868, 4
    %v12878 = vsel %vm242, 0.0, %v12877
    %v12879 = vrot.slane %v12872, 4
    %v12880 = vsel %vm242, 0.0, %v12879
    %v12881 = vrot.slane %v12165, 4
    %v12882 = vsel %vm242, 0.0, %v12881
    %v12884 = vunpack.c.l.s4 1983009808
    %v12885 = vunpack.c.0.s8 %v12884
    %v12886 = vperm.slane %v12165, %v12885
    %v12888 = vunpack.c.l.s4 1983009808
    %v12889 = vunpack.c.0.s8 %v12888
    %v12890 = vperm.slane %v12882, %v12889
    %v12891 = vrot.slane %v12178, 4
    %v12892 = vsel %vm242, 0.0, %v12891
    %v12894 = vunpack.c.l.s4 1983009808
    %v12895 = vunpack.c.0.s8 %v12894
    %v12896 = vperm.slane %v12178, %v12895
    %v12898 = vunpack.c.l.s4 1983009808
    %v12899 = vunpack.c.0.s8 %v12898
    %v12900 = vperm.slane %v12892, %v12899
    %v12901 = vrot.slane %v12896, 4
    %v12902 = vsel %vm242, %v12901, %v12886
    %v12903 = vrot.slane %v12886, 4
    %v12904 = vsel %vm242, %v12896, %v12903
    %v12906 = vunpack.c.l.s4 1934713408
    %v12907 = vunpack.c.0.s8 %v12906
    %v12908 = vperm.slane %v12902, %v12907
    %v12910 = vunpack.c.l.s4 1934713408
    %v12911 = vunpack.c.0.s8 %v12910
    %v12912 = vperm.slane %v12904, %v12911
    %v12913 = vrot.slane %v12900, 4
    %v12914 = vsel %vm242, %v12913, %v12890
    %v12915 = vrot.slane %v12890, 4
    %v12916 = vsel %vm242, %v12900, %v12915
    %v12918 = vunpack.c.l.s4 1934713408
    %v12919 = vunpack.c.0.s8 %v12918
    %v12920 = vperm.slane %v12914, %v12919
    %v12922 = vunpack.c.l.s4 1934713408
    %v12923 = vunpack.c.0.s8 %v12922
    %v12924 = vperm.slane %v12916, %v12923
    %v12925 = vrot.slane %v12908, 4
    %v12926 = vsel %vm242, 0.0, %v12925
    %v12927 = vrot.slane %v12912, 4
    %v12928 = vsel %vm242, 0.0, %v12927
    %v12929 = vrot.slane %v12920, 4
    %v12930 = vsel %vm242, 0.0, %v12929
    %v12931 = vrot.slane %v12924, 4
    %v12932 = vsel %vm242, 0.0, %v12931
    %v12933 = vrot.slane %v12185, 4
    %v12934 = vsel %vm242, 0.0, %v12933
    %v12936 = vunpack.c.l.s4 1983009808
    %v12937 = vunpack.c.0.s8 %v12936
    %v12938 = vperm.slane %v12185, %v12937
    %v12940 = vunpack.c.l.s4 1983009808
    %v12941 = vunpack.c.0.s8 %v12940
    %v12942 = vperm.slane %v12934, %v12941
    %v12943 = vrot.slane %v12198, 4
    %v12944 = vsel %vm242, 0.0, %v12943
    %v12946 = vunpack.c.l.s4 1983009808
    %v12947 = vunpack.c.0.s8 %v12946
    %v12948 = vperm.slane %v12198, %v12947
    %v12950 = vunpack.c.l.s4 1983009808
    %v12951 = vunpack.c.0.s8 %v12950
    %v12952 = vperm.slane %v12944, %v12951
    %v12953 = vrot.slane %v12948, 4
    %v12954 = vsel %vm242, %v12953, %v12938
    %v12955 = vrot.slane %v12938, 4
    %v12956 = vsel %vm242, %v12948, %v12955
    %v12958 = vunpack.c.l.s4 1934713408
    %v12959 = vunpack.c.0.s8 %v12958
    %v12960 = vperm.slane %v12954, %v12959
    %v12962 = vunpack.c.l.s4 1934713408
    %v12963 = vunpack.c.0.s8 %v12962
    %v12964 = vperm.slane %v12956, %v12963
    %v12965 = vrot.slane %v12952, 4
    %v12966 = vsel %vm242, %v12965, %v12942
    %v12967 = vrot.slane %v12942, 4
    %v12968 = vsel %vm242, %v12952, %v12967
    %v12970 = vunpack.c.l.s4 1934713408
    %v12971 = vunpack.c.0.s8 %v12970
    %v12972 = vperm.slane %v12966, %v12971
    %v12974 = vunpack.c.l.s4 1934713408
    %v12975 = vunpack.c.0.s8 %v12974
    %v12976 = vperm.slane %v12968, %v12975
    %v12977 = vrot.slane %v12960, 4
    %v12978 = vsel %vm242, 0.0, %v12977
    %v12979 = vrot.slane %v12964, 4
    %v12980 = vsel %vm242, 0.0, %v12979
    %v12981 = vrot.slane %v12972, 4
    %v12982 = vsel %vm242, 0.0, %v12981
    %v12983 = vrot.slane %v12976, 4
    %v12984 = vsel %vm242, 0.0, %v12983
    %v12985 = vrot.slane %v12191, 4
    %v12986 = vsel %vm242, 0.0, %v12985
    %v12988 = vunpack.c.l.s4 1983009808
    %v12989 = vunpack.c.0.s8 %v12988
    %v12990 = vperm.slane %v12191, %v12989
    %v12992 = vunpack.c.l.s4 1983009808
    %v12993 = vunpack.c.0.s8 %v12992
    %v12994 = vperm.slane %v12986, %v12993
    %v12995 = vrot.slane %v12204, 4
    %v12996 = vsel %vm242, 0.0, %v12995
    %v12998 = vunpack.c.l.s4 1983009808
    %v12999 = vunpack.c.0.s8 %v12998
    %v13000 = vperm.slane %v12204, %v12999
    %v13002 = vunpack.c.l.s4 1983009808
    %v13003 = vunpack.c.0.s8 %v13002
    %v13004 = vperm.slane %v12996, %v13003
    %v13005 = vrot.slane %v13000, 4
    %v13006 = vsel %vm242, %v13005, %v12990
    %v13007 = vrot.slane %v12990, 4
    %v13008 = vsel %vm242, %v13000, %v13007
    %v13010 = vunpack.c.l.s4 1934713408
    %v13011 = vunpack.c.0.s8 %v13010
    %v13012 = vperm.slane %v13006, %v13011
    %v13014 = vunpack.c.l.s4 1934713408
    %v13015 = vunpack.c.0.s8 %v13014
    %v13016 = vperm.slane %v13008, %v13015
    %v13017 = vrot.slane %v13004, 4
    %v13018 = vsel %vm242, %v13017, %v12994
    %v13019 = vrot.slane %v12994, 4
    %v13020 = vsel %vm242, %v13004, %v13019
    %v13022 = vunpack.c.l.s4 1934713408
    %v13023 = vunpack.c.0.s8 %v13022
    %v13024 = vperm.slane %v13018, %v13023
    %v13026 = vunpack.c.l.s4 1934713408
    %v13027 = vunpack.c.0.s8 %v13026
    %v13028 = vperm.slane %v13020, %v13027
    %v13029 = vrot.slane %v13012, 4
    %v13030 = vsel %vm242, 0.0, %v13029
    %v13031 = vrot.slane %v13016, 4
    %v13032 = vsel %vm242, 0.0, %v13031
    %v13033 = vrot.slane %v13024, 4
    %v13034 = vsel %vm242, 0.0, %v13033
    %v13035 = vrot.slane %v13028, 4
    %v13036 = vsel %vm242, 0.0, %v13035
    %13045 = vrot.lane.b32.xlu0 %v12250, 2
    %v13046 = vpop.permute.xlu0 %13045
    %13047 = vrot.lane.b32.xlu0 %v12354, 2
    %v13048 = vpop.permute.xlu0 %13047
    %13049 = vrot.lane.b32.xlu0 %v12458, 2
    %v13050 = vpop.permute.xlu0 %13049
    %13051 = vrot.lane.b32.xlu0 %v12562, 2
    %v13052 = vpop.permute.xlu0 %13051
    %13053 = vrot.lane.b32.xlu0 %v12666, 2
    %v13054 = vpop.permute.xlu0 %13053
    %13055 = vrot.lane.b32.xlu0 %v12770, 2
    %v13056 = vpop.permute.xlu0 %13055
    %13057 = vrot.lane.b32.xlu0 %v12874, 2
    %v13058 = vpop.permute.xlu0 %13057
    %13059 = vrot.lane.b32.xlu0 %v12978, 2
    %v13060 = vpop.permute.xlu0 %13059
    %13077 = vrot.lane.b32.xlu0 %v12236, 4
    %v13078 = vpop.permute.xlu0 %13077
    %13079 = vrot.lane.b32.xlu0 %v12340, 4
    %v13080 = vpop.permute.xlu0 %13079
    %13081 = vrot.lane.b32.xlu0 %v12444, 4
    %v13082 = vpop.permute.xlu0 %13081
    %13083 = vrot.lane.b32.xlu0 %v12548, 4
    %v13084 = vpop.permute.xlu0 %13083
    %13085 = vrot.lane.b32.xlu0 %v12652, 4
    %v13086 = vpop.permute.xlu0 %13085
    %13087 = vrot.lane.b32.xlu0 %v12756, 4
    %v13088 = vpop.permute.xlu0 %13087
    %13089 = vrot.lane.b32.xlu0 %v12860, 4
    %v13090 = vpop.permute.xlu0 %13089
    %13091 = vrot.lane.b32.xlu0 %v12964, 4
    %v13092 = vpop.permute.xlu0 %13091
    %13109 = vrot.lane.b32.xlu0 %v12252, 6
    %v13110 = vpop.permute.xlu0 %13109
    %13111 = vrot.lane.b32.xlu0 %v12356, 6
    %v13112 = vpop.permute.xlu0 %13111
    %13113 = vrot.lane.b32.xlu0 %v12460, 6
    %v13114 = vpop.permute.xlu0 %13113
    %13115 = vrot.lane.b32.xlu0 %v12564, 6
    %v13116 = vpop.permute.xlu0 %13115
    %13117 = vrot.lane.b32.xlu0 %v12668, 6
    %v13118 = vpop.permute.xlu0 %13117
    %13119 = vrot.lane.b32.xlu0 %v12772, 6
    %v13120 = vpop.permute.xlu0 %13119
    %13121 = vrot.lane.b32.xlu0 %v12876, 6
    %v13122 = vpop.permute.xlu0 %13121
    %13123 = vrot.lane.b32.xlu0 %v12980, 6
    %v13124 = vpop.permute.xlu0 %13123
    %13141 = vrot.lane.b32.xlu0 %v12244, 8
    %v13142 = vpop.permute.xlu0 %13141
    %13143 = vrot.lane.b32.xlu0 %v12348, 8
    %v13144 = vpop.permute.xlu0 %13143
    %13145 = vrot.lane.b32.xlu0 %v12452, 8
    %v13146 = vpop.permute.xlu0 %13145
    %13147 = vrot.lane.b32.xlu0 %v12556, 8
    %v13148 = vpop.permute.xlu0 %13147
    %13149 = vrot.lane.b32.xlu0 %v12660, 8
    %v13150 = vpop.permute.xlu0 %13149
    %13151 = vrot.lane.b32.xlu0 %v12764, 8
    %v13152 = vpop.permute.xlu0 %13151
    %13153 = vrot.lane.b32.xlu0 %v12868, 8
    %v13154 = vpop.permute.xlu0 %13153
    %13155 = vrot.lane.b32.xlu0 %v12972, 8
    %v13156 = vpop.permute.xlu0 %13155
    %13173 = vrot.lane.b32.xlu0 %v12254, 10
    %v13174 = vpop.permute.xlu0 %13173
    %13175 = vrot.lane.b32.xlu0 %v12358, 10
    %v13176 = vpop.permute.xlu0 %13175
    %13177 = vrot.lane.b32.xlu0 %v12462, 10
    %v13178 = vpop.permute.xlu0 %13177
    %13179 = vrot.lane.b32.xlu0 %v12566, 10
    %v13180 = vpop.permute.xlu0 %13179
    %13181 = vrot.lane.b32.xlu0 %v12670, 10
    %v13182 = vpop.permute.xlu0 %13181
    %13183 = vrot.lane.b32.xlu0 %v12774, 10
    %v13184 = vpop.permute.xlu0 %13183
    %13185 = vrot.lane.b32.xlu0 %v12878, 10
    %v13186 = vpop.permute.xlu0 %13185
    %13187 = vrot.lane.b32.xlu0 %v12982, 10
    %v13188 = vpop.permute.xlu0 %13187
    %13205 = vrot.lane.b32.xlu0 %v12248, 12
    %v13206 = vpop.permute.xlu0 %13205
    %13207 = vrot.lane.b32.xlu0 %v12352, 12
    %v13208 = vpop.permute.xlu0 %13207
    %13209 = vrot.lane.b32.xlu0 %v12456, 12
    %v13210 = vpop.permute.xlu0 %13209
    %13211 = vrot.lane.b32.xlu0 %v12560, 12
    %v13212 = vpop.permute.xlu0 %13211
    %13213 = vrot.lane.b32.xlu0 %v12664, 12
    %v13214 = vpop.permute.xlu0 %13213
    %13215 = vrot.lane.b32.xlu0 %v12768, 12
    %v13216 = vpop.permute.xlu0 %13215
    %13217 = vrot.lane.b32.xlu0 %v12872, 12
    %v13218 = vpop.permute.xlu0 %13217
    %13219 = vrot.lane.b32.xlu0 %v12976, 12
    %v13220 = vpop.permute.xlu0 %13219
    %13237 = vrot.lane.b32.xlu0 %v12256, 14
    %v13238 = vpop.permute.xlu0 %13237
    %13239 = vrot.lane.b32.xlu0 %v12360, 14
    %v13240 = vpop.permute.xlu0 %13239
    %13241 = vrot.lane.b32.xlu0 %v12464, 14
    %v13242 = vpop.permute.xlu0 %13241
    %13243 = vrot.lane.b32.xlu0 %v12568, 14
    %v13244 = vpop.permute.xlu0 %13243
    %13245 = vrot.lane.b32.xlu0 %v12672, 14
    %v13246 = vpop.permute.xlu0 %13245
    %13247 = vrot.lane.b32.xlu0 %v12776, 14
    %v13248 = vpop.permute.xlu0 %13247
    %13249 = vrot.lane.b32.xlu0 %v12880, 14
    %v13250 = vpop.permute.xlu0 %13249
    %13251 = vrot.lane.b32.xlu0 %v12984, 14
    %v13252 = vpop.permute.xlu0 %13251
    %13269 = vrot.lane.b32.xlu0 %v12284, 16
    %v13270 = vpop.permute.xlu0 %13269
    %13271 = vrot.lane.b32.xlu0 %v12388, 16
    %v13272 = vpop.permute.xlu0 %13271
    %13273 = vrot.lane.b32.xlu0 %v12492, 16
    %v13274 = vpop.permute.xlu0 %13273
    %13275 = vrot.lane.b32.xlu0 %v12596, 16
    %v13276 = vpop.permute.xlu0 %13275
    %13277 = vrot.lane.b32.xlu0 %v12700, 16
    %v13278 = vpop.permute.xlu0 %13277
    %13279 = vrot.lane.b32.xlu0 %v12804, 16
    %v13280 = vpop.permute.xlu0 %13279
    %13281 = vrot.lane.b32.xlu0 %v12908, 16
    %v13282 = vpop.permute.xlu0 %13281
    %13283 = vrot.lane.b32.xlu0 %v13012, 16
    %v13284 = vpop.permute.xlu0 %13283
    %13301 = vrot.lane.b32.xlu0 %v12302, 18
    %v13302 = vpop.permute.xlu0 %13301
    %13303 = vrot.lane.b32.xlu0 %v12406, 18
    %v13304 = vpop.permute.xlu0 %13303
    %13305 = vrot.lane.b32.xlu0 %v12510, 18
    %v13306 = vpop.permute.xlu0 %13305
    %13307 = vrot.lane.b32.xlu0 %v12614, 18
    %v13308 = vpop.permute.xlu0 %13307
    %13309 = vrot.lane.b32.xlu0 %v12718, 18
    %v13310 = vpop.permute.xlu0 %13309
    %13311 = vrot.lane.b32.xlu0 %v12822, 18
    %v13312 = vpop.permute.xlu0 %13311
    %13313 = vrot.lane.b32.xlu0 %v12926, 18
    %v13314 = vpop.permute.xlu0 %13313
    %13315 = vrot.lane.b32.xlu0 %v13030, 18
    %v13316 = vpop.permute.xlu0 %13315
    %13333 = vrot.lane.b32.xlu0 %v12288, 20
    %v13334 = vpop.permute.xlu0 %13333
    %13335 = vrot.lane.b32.xlu0 %v12392, 20
    %v13336 = vpop.permute.xlu0 %13335
    %13337 = vrot.lane.b32.xlu0 %v12496, 20
    %v13338 = vpop.permute.xlu0 %13337
    %13339 = vrot.lane.b32.xlu0 %v12600, 20
    %v13340 = vpop.permute.xlu0 %13339
    %13341 = vrot.lane.b32.xlu0 %v12704, 20
    %v13342 = vpop.permute.xlu0 %13341
    %13343 = vrot.lane.b32.xlu0 %v12808, 20
    %v13344 = vpop.permute.xlu0 %13343
    %13345 = vrot.lane.b32.xlu0 %v12912, 20
    %v13346 = vpop.permute.xlu0 %13345
    %13347 = vrot.lane.b32.xlu0 %v13016, 20
    %v13348 = vpop.permute.xlu0 %13347
    %13365 = vrot.lane.b32.xlu0 %v12304, 22
    %v13366 = vpop.permute.xlu0 %13365
    %13367 = vrot.lane.b32.xlu0 %v12408, 22
    %v13368 = vpop.permute.xlu0 %13367
    %13369 = vrot.lane.b32.xlu0 %v12512, 22
    %v13370 = vpop.permute.xlu0 %13369
    %13371 = vrot.lane.b32.xlu0 %v12616, 22
    %v13372 = vpop.permute.xlu0 %13371
    %13373 = vrot.lane.b32.xlu0 %v12720, 22
    %v13374 = vpop.permute.xlu0 %13373
    %13375 = vrot.lane.b32.xlu0 %v12824, 22
    %v13376 = vpop.permute.xlu0 %13375
    %13377 = vrot.lane.b32.xlu0 %v12928, 22
    %v13378 = vpop.permute.xlu0 %13377
    %13379 = vrot.lane.b32.xlu0 %v13032, 22
    %v13380 = vpop.permute.xlu0 %13379
    %13397 = vrot.lane.b32.xlu0 %v12296, 24
    %v13398 = vpop.permute.xlu0 %13397
    %13399 = vrot.lane.b32.xlu0 %v12400, 24
    %v13400 = vpop.permute.xlu0 %13399
    %13401 = vrot.lane.b32.xlu0 %v12504, 24
    %v13402 = vpop.permute.xlu0 %13401
    %13403 = vrot.lane.b32.xlu0 %v12608, 24
    %v13404 = vpop.permute.xlu0 %13403
    %13405 = vrot.lane.b32.xlu0 %v12712, 24
    %v13406 = vpop.permute.xlu0 %13405
    %13407 = vrot.lane.b32.xlu0 %v12816, 24
    %v13408 = vpop.permute.xlu0 %13407
    %13409 = vrot.lane.b32.xlu0 %v12920, 24
    %v13410 = vpop.permute.xlu0 %13409
    %13411 = vrot.lane.b32.xlu0 %v13024, 24
    %v13412 = vpop.permute.xlu0 %13411
    %13429 = vrot.lane.b32.xlu0 %v12306, 26
    %v13430 = vpop.permute.xlu0 %13429
    %13431 = vrot.lane.b32.xlu0 %v12410, 26
    %v13432 = vpop.permute.xlu0 %13431
    %13433 = vrot.lane.b32.xlu0 %v12514, 26
    %v13434 = vpop.permute.xlu0 %13433
    %13435 = vrot.lane.b32.xlu0 %v12618, 26
    %v13436 = vpop.permute.xlu0 %13435
    %13437 = vrot.lane.b32.xlu0 %v12722, 26
    %v13438 = vpop.permute.xlu0 %13437
    %13439 = vrot.lane.b32.xlu0 %v12826, 26
    %v13440 = vpop.permute.xlu0 %13439
    %13441 = vrot.lane.b32.xlu0 %v12930, 26
    %v13442 = vpop.permute.xlu0 %13441
    %13443 = vrot.lane.b32.xlu0 %v13034, 26
    %v13444 = vpop.permute.xlu0 %13443
    %13461 = vrot.lane.b32.xlu0 %v12300, 28
    %v13462 = vpop.permute.xlu0 %13461
    %13463 = vrot.lane.b32.xlu0 %v12404, 28
    %v13464 = vpop.permute.xlu0 %13463
    %13465 = vrot.lane.b32.xlu0 %v12508, 28
    %v13466 = vpop.permute.xlu0 %13465
    %13467 = vrot.lane.b32.xlu0 %v12612, 28
    %v13468 = vpop.permute.xlu0 %13467
    %13469 = vrot.lane.b32.xlu0 %v12716, 28
    %v13470 = vpop.permute.xlu0 %13469
    %13471 = vrot.lane.b32.xlu0 %v12820, 28
    %v13472 = vpop.permute.xlu0 %13471
    %13473 = vrot.lane.b32.xlu0 %v12924, 28
    %v13474 = vpop.permute.xlu0 %13473
    %13475 = vrot.lane.b32.xlu0 %v13028, 28
    %v13476 = vpop.permute.xlu0 %13475
    %13493 = vrot.lane.b32.xlu0 %v12308, 30
    %v13494 = vpop.permute.xlu0 %13493
    %13495 = vrot.lane.b32.xlu0 %v12412, 30
    %v13496 = vpop.permute.xlu0 %13495
    %13497 = vrot.lane.b32.xlu0 %v12516, 30
    %v13498 = vpop.permute.xlu0 %13497
    %13499 = vrot.lane.b32.xlu0 %v12620, 30
    %v13500 = vpop.permute.xlu0 %13499
    %13501 = vrot.lane.b32.xlu0 %v12724, 30
    %v13502 = vpop.permute.xlu0 %13501
    %13503 = vrot.lane.b32.xlu0 %v12828, 30
    %v13504 = vpop.permute.xlu0 %13503
    %13505 = vrot.lane.b32.xlu0 %v12932, 30
    %v13506 = vpop.permute.xlu0 %13505
    %13507 = vrot.lane.b32.xlu0 %v13036, 30
    %v13508 = vpop.permute.xlu0 %13507
    %v13517 = vsel %vm1554, %v12232, %v13046
    %v13518 = vsel %vm1554, %v12336, %v13048
    %v13519 = vsel %vm1554, %v12440, %v13050
    %v13520 = vsel %vm1554, %v12544, %v13052
    %v13521 = vsel %vm1554, %v12648, %v13054
    %v13522 = vsel %vm1554, %v12752, %v13056
    %v13523 = vsel %vm1554, %v12856, %v13058
    %v13524 = vsel %vm1554, %v12960, %v13060
    %v13525 = vsel %vm1563, %v13517, %v13078
    %v13526 = vsel %vm1563, %v13518, %v13080
    %v13527 = vsel %vm1563, %v13519, %v13082
    %v13528 = vsel %vm1563, %v13520, %v13084
    %v13529 = vsel %vm1563, %v13521, %v13086
    %v13530 = vsel %vm1563, %v13522, %v13088
    %v13531 = vsel %vm1563, %v13523, %v13090
    %v13532 = vsel %vm1563, %v13524, %v13092
    %v13533 = vsel %vm1572, %v13525, %v13110
    %v13534 = vsel %vm1572, %v13526, %v13112
    %v13535 = vsel %vm1572, %v13527, %v13114
    %v13536 = vsel %vm1572, %v13528, %v13116
    %v13537 = vsel %vm1572, %v13529, %v13118
    %v13538 = vsel %vm1572, %v13530, %v13120
    %v13539 = vsel %vm1572, %v13531, %v13122
    %v13540 = vsel %vm1572, %v13532, %v13124
    %v13541 = vsel %vm1581, %v13533, %v13142
    %v13542 = vsel %vm1581, %v13534, %v13144
    %v13543 = vsel %vm1581, %v13535, %v13146
    %v13544 = vsel %vm1581, %v13536, %v13148
    %v13545 = vsel %vm1581, %v13537, %v13150
    %v13546 = vsel %vm1581, %v13538, %v13152
    %v13547 = vsel %vm1581, %v13539, %v13154
    %v13548 = vsel %vm1581, %v13540, %v13156
    %v13549 = vsel %vm1590, %v13541, %v13174
    %v13550 = vsel %vm1590, %v13542, %v13176
    %v13551 = vsel %vm1590, %v13543, %v13178
    %v13552 = vsel %vm1590, %v13544, %v13180
    %v13553 = vsel %vm1590, %v13545, %v13182
    %v13554 = vsel %vm1590, %v13546, %v13184
    %v13555 = vsel %vm1590, %v13547, %v13186
    %v13556 = vsel %vm1590, %v13548, %v13188
    %v13557 = vsel %vm1599, %v13549, %v13206
    %v13558 = vsel %vm1599, %v13550, %v13208
    %v13559 = vsel %vm1599, %v13551, %v13210
    %v13560 = vsel %vm1599, %v13552, %v13212
    %v13561 = vsel %vm1599, %v13553, %v13214
    %v13562 = vsel %vm1599, %v13554, %v13216
    %v13563 = vsel %vm1599, %v13555, %v13218
    %v13564 = vsel %vm1599, %v13556, %v13220
    %v13565 = vsel %vm1608, %v13557, %v13238
    %v13566 = vsel %vm1608, %v13558, %v13240
    %v13567 = vsel %vm1608, %v13559, %v13242
    %v13568 = vsel %vm1608, %v13560, %v13244
    %v13569 = vsel %vm1608, %v13561, %v13246
    %v13570 = vsel %vm1608, %v13562, %v13248
    %v13571 = vsel %vm1608, %v13563, %v13250
    %v13572 = vsel %vm1608, %v13564, %v13252
    %v13573 = vsel %vm1617, %v13565, %v13270
    %v13574 = vsel %vm1617, %v13566, %v13272
    %v13575 = vsel %vm1617, %v13567, %v13274
    %v13576 = vsel %vm1617, %v13568, %v13276
    %v13577 = vsel %vm1617, %v13569, %v13278
    %v13578 = vsel %vm1617, %v13570, %v13280
    %v13579 = vsel %vm1617, %v13571, %v13282
    %v13580 = vsel %vm1617, %v13572, %v13284
    %v13581 = vsel %vm1626, %v13573, %v13302
    %v13582 = vsel %vm1626, %v13574, %v13304
    %v13583 = vsel %vm1626, %v13575, %v13306
    %v13584 = vsel %vm1626, %v13576, %v13308
    %v13585 = vsel %vm1626, %v13577, %v13310
    %v13586 = vsel %vm1626, %v13578, %v13312
    %v13587 = vsel %vm1626, %v13579, %v13314
    %v13588 = vsel %vm1626, %v13580, %v13316
    %v13589 = vsel %vm1635, %v13581, %v13334
    %v13590 = vsel %vm1635, %v13582, %v13336
    %v13591 = vsel %vm1635, %v13583, %v13338
    %v13592 = vsel %vm1635, %v13584, %v13340
    %v13593 = vsel %vm1635, %v13585, %v13342
    %v13594 = vsel %vm1635, %v13586, %v13344
    %v13595 = vsel %vm1635, %v13587, %v13346
    %v13596 = vsel %vm1635, %v13588, %v13348
    %v13597 = vsel %vm1644, %v13589, %v13366
    %v13598 = vsel %vm1644, %v13590, %v13368
    %v13599 = vsel %vm1644, %v13591, %v13370
    %v13600 = vsel %vm1644, %v13592, %v13372
    %v13601 = vsel %vm1644, %v13593, %v13374
    %v13602 = vsel %vm1644, %v13594, %v13376
    %v13603 = vsel %vm1644, %v13595, %v13378
    %v13604 = vsel %vm1644, %v13596, %v13380
    %v13605 = vsel %vm1653, %v13597, %v13398
    %v13606 = vsel %vm1653, %v13598, %v13400
    %v13607 = vsel %vm1653, %v13599, %v13402
    %v13608 = vsel %vm1653, %v13600, %v13404
    %v13609 = vsel %vm1653, %v13601, %v13406
    %v13610 = vsel %vm1653, %v13602, %v13408
    %v13611 = vsel %vm1653, %v13603, %v13410
    %v13612 = vsel %vm1653, %v13604, %v13412
    %v13613 = vsel %vm1662, %v13605, %v13430
    %v13614 = vsel %vm1662, %v13606, %v13432
    %v13615 = vsel %vm1662, %v13607, %v13434
    %v13616 = vsel %vm1662, %v13608, %v13436
    %v13617 = vsel %vm1662, %v13609, %v13438
    %v13618 = vsel %vm1662, %v13610, %v13440
    %v13619 = vsel %vm1662, %v13611, %v13442
    %v13620 = vsel %vm1662, %v13612, %v13444
    %v13621 = vsel %vm1671, %v13613, %v13462
    %v13622 = vsel %vm1671, %v13614, %v13464
    %v13623 = vsel %vm1671, %v13615, %v13466
    %v13624 = vsel %vm1671, %v13616, %v13468
    %v13625 = vsel %vm1671, %v13617, %v13470
    %v13626 = vsel %vm1671, %v13618, %v13472
    %v13627 = vsel %vm1671, %v13619, %v13474
    %v13628 = vsel %vm1671, %v13620, %v13476
    %v13629 = vsel %vm1680, %v13621, %v13494
    %v13630 = vsel %vm1680, %v13622, %v13496
    %v13631 = vsel %vm1680, %v13623, %v13498
    %v13632 = vsel %vm1680, %v13624, %v13500
    %v13633 = vsel %vm1680, %v13625, %v13502
    %v13634 = vsel %vm1680, %v13626, %v13504
    %v13635 = vsel %vm1680, %v13627, %v13506
    %v13636 = vsel %vm1680, %v13628, %v13508
    %13645 = vrot.lane.b32.xlu0 %v13629, 64
    %v13646 = vpop.permute.xlu0 %13645
    %13647 = vrot.lane.b32.xlu0 %v13630, 64
    %v13648 = vpop.permute.xlu0 %13647
    %13649 = vrot.lane.b32.xlu0 %v13631, 64
    %v13650 = vpop.permute.xlu0 %13649
    %13651 = vrot.lane.b32.xlu0 %v13632, 64
    %v13652 = vpop.permute.xlu0 %13651
    %13653 = vrot.lane.b32.xlu0 %v13633, 64
    %v13654 = vpop.permute.xlu0 %13653
    %13655 = vrot.lane.b32.xlu0 %v13634, 64
    %v13656 = vpop.permute.xlu0 %13655
    %13657 = vrot.lane.b32.xlu0 %v13635, 64
    %v13658 = vpop.permute.xlu0 %13657
    %13659 = vrot.lane.b32.xlu0 %v13636, 64
    %v13660 = vpop.permute.xlu0 %13659
    %13669 = vst.msk [vmem:[#allocation5 + $0x6] sm:$0x3] %vm3419, %v13646
    %13670 = vst.msk [vmem:[#allocation5 + $0xe] sm:$0x3] %vm3419, %v13648
    %13671 = vst.msk [vmem:[#allocation5 + $0x16] sm:$0x3] %vm3419, %v13650
    %13672 = vst.msk [vmem:[#allocation5 + $0x1e] sm:$0x3] %vm3419, %v13652
    %13673 = vst.msk [vmem:[#allocation5 + $0x26] sm:$0x3] %vm3419, %v13654
    %13674 = vst.msk [vmem:[#allocation5 + $0x2e] sm:$0x3] %vm3419, %v13656
    %13675 = vst.msk [vmem:[#allocation5 + $0x36] sm:$0x3] %vm3419, %v13658
    %13676 = vst.msk [vmem:[#allocation5 + $0x3e] sm:$0x3] %vm3419, %v13660
    %13677 = vrot.lane.b32.xlu0 %v13629, 96
    %v13678 = vpop.permute.xlu0 %13677
    %13679 = vrot.lane.b32.xlu0 %v13630, 96
    %v13680 = vpop.permute.xlu0 %13679
    %13681 = vrot.lane.b32.xlu0 %v13631, 96
    %v13682 = vpop.permute.xlu0 %13681
    %13683 = vrot.lane.b32.xlu0 %v13632, 96
    %v13684 = vpop.permute.xlu0 %13683
    %13685 = vrot.lane.b32.xlu0 %v13633, 96
    %v13686 = vpop.permute.xlu0 %13685
    %13687 = vrot.lane.b32.xlu0 %v13634, 96
    %v13688 = vpop.permute.xlu0 %13687
    %13689 = vrot.lane.b32.xlu0 %v13635, 96
    %v13690 = vpop.permute.xlu0 %13689
    %13691 = vrot.lane.b32.xlu0 %v13636, 96
    %v13692 = vpop.permute.xlu0 %13691
    %13701 = vst.msk [vmem:[#allocation5 + $0x6] sm:$0x3] %vm3452, %v13678
    %13702 = vst.msk [vmem:[#allocation5 + $0xe] sm:$0x3] %vm3452, %v13680
    %13703 = vst.msk [vmem:[#allocation5 + $0x16] sm:$0x3] %vm3452, %v13682
    %13704 = vst.msk [vmem:[#allocation5 + $0x1e] sm:$0x3] %vm3452, %v13684
    %13705 = vst.msk [vmem:[#allocation5 + $0x26] sm:$0x3] %vm3452, %v13686
    %13706 = vst.msk [vmem:[#allocation5 + $0x2e] sm:$0x3] %vm3452, %v13688
    %13707 = vst.msk [vmem:[#allocation5 + $0x36] sm:$0x3] %vm3452, %v13690
    %13708 = vst.msk [vmem:[#allocation5 + $0x3e] sm:$0x3] %vm3452, %v13692
    // Predicated region
    $region10: #{tpu_custom_call.1} parent=1 // pred_check
      _
    $region11: #{tpu_custom_call.1} parent=1 // pred_check_branch
      %13710 = sbr.rel (0) target = $region13
    $region12: #{tpu_custom_call.1} parent=1 // pred_region
      %13712 = vsyncadd [#allocation4], 0
      %s13713 = sshll.u32 [#allocation5], 4
      %s13714 = int_to_ptr.vmem [resolvable:$true] %s13713
      %s13715 = sshll.u32 %s1, 4
      %s13716 = int_to_ptr.hbm [resolvable:$true] %s13715
      %13721 = dma.vmem_to_hbm [thread:$0]  %s13714, 1024, %s13716, [#allocation4], 128, 128, 8
    $region13: #{tpu_custom_call.1} parent=1 // pred_fallthru
      _
    // Predicated region
    $region14: #{tpu_custom_call.1} parent=1 // pred_check
      _
    $region15: #{tpu_custom_call.1} parent=1 // pred_check_branch
      %13723 = sbr.rel (0) target = $region17
    $region16: #{tpu_custom_call.1} parent=1 // pred_region
      %13725 = dma.done [#allocation4], 1024
    $region17: #{tpu_custom_call.1} parent=1 // pred_fallthru
      _
    %13726 = vsyncpa [#allocation3], 1
    %13727 = vsyncpa [#allocation4], 1

</llo_original>
